<compile_context>
chip_gen: v6e
topology: v6e:2x2x1
jax: 0.10.0
libtpu: 0.0.40
codegen_flags: <defaults>
</compile_context>

<pallas_src>
import functools
import numpy as np
import jax
import jax.numpy as jnp
from jax.experimental import pallas as pl
from jax.experimental.pallas import tpu as pltpu


# ----------------------------- fused GEMM kernels (per-conv path) -----------------------------

def _mm_first():
    return (pl.program_id(2) == 0) & (pl.program_id(3) == 0)


def _mm_last():
    return ((pl.program_id(2) == pl.num_programs(2) - 1)
            & (pl.program_id(3) == pl.num_programs(3) - 1))


def _mm_accumulate(a_ref, b_ref, acc_ref):
    @pl.when(_mm_first())
    def _():
        acc_ref[...] = jnp.zeros_like(acc_ref)
    acc_ref[...] += jnp.dot(a_ref[0], b_ref[0], preferred_element_type=jnp.float32)


def _mm_bn_relu_kernel(a_ref, b_ref, s_ref, t_ref, o_ref, acc_ref):
    """out = relu(A @ B * scale + shift)   (scale/shift per output column)."""
    _mm_accumulate(a_ref, b_ref, acc_ref)

    @pl.when(_mm_last())
    def _():
        y = acc_ref[...] * s_ref[...] + t_ref[...]
        o_ref[...] = jnp.maximum(y, 0.0).astype(o_ref.dtype)


def _mm_bn_kernel(a_ref, b_ref, s_ref, t_ref, o_ref, acc_ref):
    """out = A @ B * scale + shift."""
    _mm_accumulate(a_ref, b_ref, acc_ref)

    @pl.when(_mm_last())
    def _():
        o_ref[...] = (acc_ref[...] * s_ref[...] + t_ref[...]).astype(o_ref.dtype)


def _mm_bn_add_relu_kernel(a_ref, b_ref, s_ref, t_ref, r_ref, o_ref, acc_ref):
    """out = relu(A @ B * scale + shift + residual)  (bottleneck tail, fully fused)."""
    _mm_accumulate(a_ref, b_ref, acc_ref)

    @pl.when(_mm_last())
    def _():
        y = acc_ref[...] * s_ref[...] + t_ref[...] + r_ref[...].astype(jnp.float32)
        o_ref[...] = jnp.maximum(y, 0.0).astype(o_ref.dtype)


# ----------------------------- whole-bottleneck fused kernel -----------------------------

def _bottleneck_kernel(dims, has_ds, x_ref, w1_ref, s1_ref, t1_ref,
                       w2_ref, s2_ref, t2_ref, w3_ref, s3_ref, t3_ref, *rest):
    """Full bottleneck block (stride 1): conv1x1+BN+ReLU -> conv3x3(pad1)+BN+ReLU ->
    conv1x1+BN + residual + ReLU.  Intermediates live entirely in VMEM."""
    if has_ds:
        dsw_ref, dss_ref, dst_ref, o_ref, h1p_ref = rest
    else:
        o_ref, h1p_ref = rest
    N, H, W = dims
    M = N * H * W
    Cw = w1_ref.shape[2]

    x2d = x_ref[...]                                                    # (M, Cin) bf16

    # conv1 (1x1) + BN + ReLU, kept in f32
    h = jnp.dot(x2d, w1_ref[0], preferred_element_type=jnp.float32)
    h = jnp.maximum(h * s1_ref[...] + t1_ref[...], 0.0)

    # zero-haloed padded copy in VMEM scratch; data starts at sublane-aligned column 8
    h1p_ref[...] = jnp.zeros_like(h1p_ref)
    h1p_ref[:, 1:H + 1, 8:8 + W, :] = h.reshape(N, H, W, Cw)

    # conv2 (3x3, stride 1, pad 1) + BN + ReLU: 9 shifted-window matmuls, f32 accumulation
    acc = None
    for t in range(9):
        di, dj = divmod(t, 3)
        a = h1p_ref[:, di:di + H, 7 + dj:7 + dj + W, :].reshape(M, Cw).astype(jnp.bfloat16)
        d = jnp.dot(a, w2_ref[t], preferred_element_type=jnp.float32)
        acc = d if acc is None else acc + d
    h2 = jnp.maximum(acc * s2_ref[...] + t2_ref[...], 0.0).astype(jnp.bfloat16)

    # conv3 (1x1) + BN + residual + ReLU
    y = jnp.dot(h2, w3_ref[0], preferred_element_type=jnp.float32)
    y = y * s3_ref[...] + t3_ref[...]
    if has_ds:
        idn = jnp.dot(x2d, dsw_ref[0], preferred_element_type=jnp.float32)
        idn = idn * dss_ref[...] + dst_ref[...]
    else:
        idn = x2d.astype(jnp.float32)
    o_ref[...] = jnp.maximum(y + idn, 0.0).astype(o_ref.dtype)


# ----------------------------- head (avgpool + fc1 + fc2) kernel -----------------------------

def _head_kernel(x_ref, w1_ref, b1_ref, w2_ref, b2_ref, o_ref):
    """global avgpool -> resnet fc (2048->1024 lane-padded) -> Linear (1024->128 lane-padded)."""
    xm = jnp.mean(x_ref[...].astype(jnp.float32), axis=1)              # (N, C)
    h = jnp.dot(xm.astype(jnp.bfloat16), w1_ref[...],
                preferred_element_type=jnp.float32) + b1_ref[...]
    y = jnp.dot(h.astype(jnp.bfloat16), w2_ref[...],
                preferred_element_type=jnp.float32) + b2_ref[...]
    o_ref[...] = y


# ----------------------------- maxpool kernel -----------------------------

def _maxpool3x3s2_kernel(x0_ref, x1_ref, x2_ref, o_ref):
    """3x3/stride-2 max pool; x0/x1/x2 are the three W-phase views (N,Hp,Wo,C)."""
    h = jnp.maximum(jnp.maximum(x0_ref[0], x1_ref[0]), x2_ref[0])       # (Hp, Wo, C)
    ho = o_ref.shape[1]
    v = jnp.maximum(jnp.maximum(h[0:2 * ho:2], h[1:2 * ho:2]), h[2:2 * ho + 2:2])
    o_ref[0] = v


# ----------------------------- tiling helpers -----------------------------

def _round_up(x, m):
    return (x + m - 1) // m * m


def _pick_div_tile(dim, cap, align):
    """Largest multiple of `align` that divides `dim`, capped at `cap`.
    Ragged dims (dim % align != 0) fall back to a single full-dim block."""
    if dim % align != 0:
        return dim
    t = min(cap, dim)
    t -= t % align
    while dim % t:
        t -= align
    return t


# ----------------------------- fused GEMM wrapper -----------------------------

def fused_matmul(a, b, scale, shift, residual=None, *, relu=True, out_dtype=jnp.bfloat16):
    """A (T,M,K) x B (T,K,N), summed over taps T and K, with fused per-column scale/shift
    (+residual) (+ReLU).  bf16 operands on the MXU, f32 accumulation in VMEM scratch."""
    T, M, K = a.shape
    Tb, Kb, N = b.shape
    assert T == Tb and K == Kb, (a.shape, b.shape)
    a = a.astype(jnp.bfloat16)
    b = b.astype(jnp.bfloat16)

    tn = _pick_div_tile(N, 256, 128)      # <= N/2 for the wide late layers (v7x dual-core)
    tk = _pick_div_tile(K, 1024, 128)
    pM = _round_up(M, 16)                 # bf16 sublane packing
    tm = _pick_div_tile(pM, 2048, 16)     # M grid == 1 for every layer at this problem size
    if pM != M:
        a = jnp.pad(a, ((0, 0), (0, pM - M), (0, 0)))
        if residual is not None:
            residual = jnp.pad(residual, ((0, pM - M), (0, 0)))

    s2 = scale.reshape(1, N).astype(jnp.float32)
    t2 = shift.reshape(1, N).astype(jnp.float32)

    in_specs = [pl.BlockSpec((1, tm, tk), lambda i, j, t, k: (t, i, k)),
                pl.BlockSpec((1, tk, tn), lambda i, j, t, k: (t, k, j)),
                pl.BlockSpec((1, tn), lambda i, j, t, k: (0, j)),
                pl.BlockSpec((1, tn), lambda i, j, t, k: (0, j))]
    operands = [a, b, s2, t2]
    res_bytes = 0
    if residual is not None:
        in_specs.append(pl.BlockSpec((tm, tn), lambda i, j, t, k: (i, j)))
        operands.append(residual.astype(jnp.bfloat16))
        res_bytes = residual.size * 2
        kernel = _mm_bn_add_relu_kernel
    else:
        kernel = _mm_bn_relu_kernel if relu else _mm_bn_kernel

    cost = pl.CostEstimate(
        flops=2 * pM * N * K * T,
        transcendentals=0,
        bytes_accessed=2 * (a.size + b.size) + pM * N * jnp.dtype(out_dtype).itemsize
        + 8 * N + res_bytes)

    out = pl.pallas_call(
        kernel,
        out_shape=jax.ShapeDtypeStruct((pM, N), out_dtype),
        grid_spec=pltpu.PrefetchScalarGridSpec(
            num_scalar_prefetch=0,
            grid=(pM // tm, N // tn, T, K // tk),
            in_specs=in_specs,
            out_specs=pl.BlockSpec((tm, tn), lambda i, j, t, k: (i, j)),
            scratch_shapes=[pltpu.VMEM((tm, tn), jnp.float32)]),
        compiler_params=pltpu.CompilerParams(
            dimension_semantics=("parallel", "parallel", "arbitrary", "arbitrary")),
        cost_estimate=cost,
    )(*operands)
    if pM != M:
        out = out[:M]
    return out


# ----------------------------- layer wrappers -----------------------------

@functools.partial(jax.jit, static_argnames=("ksize", "stride", "padding", "relu"))
def conv_bn(x, w, bn, residual=None, *, ksize, stride, padding, relu=True):
    """x: NHWC bf16; w: (k*k, Cin, O) bf16 tap-major; bn: folded (scale, shift) each (1, O).
    Single fused pallas_call: matmul + BN (+residual) (+ReLU)."""
    N, H, W, C = x.shape
    O = w.shape[-1]
    Ho = (H + 2 * padding - ksize) // stride + 1
    Wo = (W + 2 * padding - ksize) // stride + 1
    M = N * Ho * Wo
    if ksize == 1:
        # TODO(synk): strided slice for stride-2 1x1 downsample is still a (tiny) XLA copy.
        xs = x if stride == 1 else x[:, ::stride, ::stride, :]
        a = xs.reshape(1, M, C)
        b = w
    elif C % 128 != 0:
        # stem 7x7 with Cin=3: classic interleaved im2col (input is only ~24 KB).
        xp = jnp.pad(x, ((0, 0), (padding, padding), (padding, padding), (0, 0)))
        cols = [xp[:, i:i + stride * Ho:stride, j:j + stride * Wo:stride, :]
                for i in range(ksize) for j in range(ksize)]
        a = jnp.stack(cols, axis=3).reshape(1, M, ksize * ksize * C)
        b = w.reshape(1, ksize * ksize * C, O)
    else:
        # tap-major A (T, M, C): the reduction grid runs over taps; no interleave transpose.
        xp = jnp.pad(x, ((0, 0), (padding, padding), (padding, padding), (0, 0)))
        a = jnp.stack([xp[:, i:i + stride * Ho:stride, j:j + stride * Wo:stride, :].reshape(M, C)
                       for i in range(ksize) for j in range(ksize)], axis=0)
        b = w
    res2 = None if residual is None else residual.reshape(M, O)
    y = fused_matmul(a, b, bn[0], bn[1], res2, relu=relu)
    return y.reshape(N, Ho, Wo, O)


@jax.jit
def _fused_block(x, w1, s1, t1, w2, s2, t2, w3, s3, t3, ds):
    """Whole bottleneck block (stride 1) in one pallas_call; ds is None or (dsw, dss, dst)."""
    N, H, W, C = x.shape
    M = N * H * W
    Cw = w1.shape[2]
    Cout = w3.shape[2]
    operands = [x.reshape(M, C).astype(jnp.bfloat16),
                w1, s1, t1, w2, s2, t2, w3, s3, t3]
    if ds is not None:
        operands += list(ds)
    out = pl.pallas_call(
        functools.partial(_bottleneck_kernel, (N, H, W), ds is not None),
        out_shape=jax.ShapeDtypeStruct((M, Cout), jnp.bfloat16),
        scratch_shapes=[pltpu.VMEM((N, H + 2, W + 16, Cw), jnp.float32)],
    )(*operands)
    return out.reshape(N, H, W, Cout)


@jax.jit
def maxpool2d_3x3s2(x):
    """3x3 / stride 2 / pad 1 max pool (the only pool in ResNet).
    TODO(synk): the three W-phase views are still materialized by XLA (~1.5x input bytes);
    an in-kernel sublane-strided read would remove that but is a riskier lowering path."""
    N, H, W, C = x.shape
    assert H % 2 == 0 and W % 2 == 0, "kernel assumes even spatial dims (standard ResNet sizes)"
    Ho, Wo = (H - 1) // 2 + 1, (W - 1) // 2 + 1
    Hp = H + 2
    xp = jnp.pad(x, ((0, 0), (1, 1), (1, 1), (0, 0)), constant_values=-jnp.inf)
    x0 = xp[:, :, 0:2 * Wo:2, :]
    x1 = xp[:, :, 1:2 * Wo + 1:2, :]
    x2 = xp[:, :, 2:2 * Wo + 2:2, :]
    in_spec = pl.BlockSpec((1, Hp, Wo, C), lambda n: (n, 0, 0, 0))
    return pl.pallas_call(
        _maxpool3x3s2_kernel,
        out_shape=jax.ShapeDtypeStruct((N, Ho, Wo, C), x.dtype),
        grid_spec=pltpu.PrefetchScalarGridSpec(
            num_scalar_prefetch=0,
            grid=(N,),
            in_specs=[in_spec, in_spec, in_spec],
            out_specs=pl.BlockSpec((1, Ho, Wo, C), lambda n: (n, 0, 0, 0))),
        compiler_params=pltpu.CompilerParams(dimension_semantics=("parallel",)),
    )(x0, x1, x2)


@functools.partial(jax.jit, static_argnames=("n_classes",))
def head(x, w1, b1, w2, b2, *, n_classes):
    """global avgpool + resnet fc + Linear(1000, 50) fused into a single pallas_call."""
    N, H, W, C = x.shape
    out = pl.pallas_call(
        _head_kernel,
        out_shape=jax.ShapeDtypeStruct((N, w2.shape[1]), jnp.float32),
    )(x.reshape(N, H * W, C), w1, b1, w2, b2)
    return out[:, :n_classes]


# ----------------------------- parameters (synthetic, deterministic) -----------------------------

def _conv_w(key, cin, cout, k):
    """He-init conv weight, pre-reshaped ONCE into tap-major matmul layout (k*k, cin, cout), bf16."""
    fan_in = cin * k * k
    w = (jax.random.normal(key, (cout, cin, k, k), jnp.float32)
         * np.float32(np.sqrt(2.0 / fan_in)))
    return jnp.transpose(w, (2, 3, 1, 0)).reshape(k * k, cin, cout).astype(jnp.bfloat16)


def _bn(key, c, eps=1e-5):
    kg, kb, km, kv = jax.random.split(key, 4)
    gamma = 1.0 + 0.05 * jax.random.normal(kg, (c,), jnp.float32)
    beta = 0.05 * jax.random.normal(kb, (c,), jnp.float32)
    mean = 0.05 * jax.random.normal(km, (c,), jnp.float32)
    var = 1.0 + 0.05 * jax.random.uniform(kv, (c,), jnp.float32)
    scale = gamma / jnp.sqrt(var + eps)          # inference-mode BN folded to scale/shift
    shift = beta - mean * scale
    return (scale.reshape(1, c), shift.reshape(1, c))


def build_params(key):
    # TODO(synk): pretrained IMAGENET1K_V2 weights cannot be loaded here; synthetic init instead.
    keys = iter(jax.random.split(key, 512))
    nk = lambda: next(keys)
    params = {"conv1_w": _conv_w(nk(), 3, 64, 7), "bn1": _bn(nk(), 64)}
    layers = []
    inplanes = 64
    # wide_resnet50_2: Bottleneck blocks [3,4,6,3], base_width=128 -> width = planes*2, expansion=4
    for planes, nblocks, stride in [(64, 3, 1), (128, 4, 2), (256, 6, 2), (512, 3, 2)]:
        width, outp = planes * 2, planes * 4
        blocks = []
        for bi in range(nblocks):
            s = stride if bi == 0 else 1
            has_ds = (bi == 0) and (s != 1 or inplanes != outp)
            bp = {
                "conv1_w": _conv_w(nk(), inplanes, width, 1), "bn1": _bn(nk(), width),
                "conv2_w": _conv_w(nk(), width, width, 3),    "bn2": _bn(nk(), width),
                "conv3_w": _conv_w(nk(), width, outp, 1),     "bn3": _bn(nk(), outp),
                "stride": s, "has_ds": has_ds,
            }
            if has_ds:
                bp["ds_w"] = _conv_w(nk(), inplanes, outp, 1)
                bp["ds_bn"] = _bn(nk(), outp)
            blocks.append(bp)
            inplanes = outp
        layers.append(blocks)
    params["layers"] = layers
    # FC weights pre-transposed to (F, O) bf16 and zero-padded to lane-dense shapes
    # (1000 -> 1024 hidden, 50 -> 128 logits).  Padded fc1 columns and fc2 rows are zero, so
    # the first 50 logits are identical to the unpadded computation (sliced after the head).
    fc1_w = 0.02 * jax.random.normal(nk(), (1000, 2048), jnp.float32)
    fc1_b = 0.02 * jax.random.normal(nk(), (1000,), jnp.float32)
    fc2_w = 0.02 * jax.random.normal(nk(), (50, 1000), jnp.float32)
    fc2_b = 0.02 * jax.random.normal(nk(), (50,), jnp.float32)
    params["fc1_w"] = jnp.pad(fc1_w.T, ((0, 0), (0, 24))).astype(jnp.bfloat16)    # (2048, 1024)
    params["fc1_b"] = jnp.pad(fc1_b, (0, 24)).reshape(1, 1024).astype(jnp.float32)
    params["fc2_w"] = jnp.pad(fc2_w.T, ((0, 24), (0, 78))).astype(jnp.bfloat16)   # (1024, 128)
    params["fc2_b"] = jnp.pad(fc2_b, (0, 78)).reshape(1, 128).astype(jnp.float32)
    return params


# ----------------------------- forward pass -----------------------------

_FUSE_WEIGHT_BUDGET = 8 * 1024 * 1024   # bf16 conv-weight bytes / block kept whole in VMEM
_fused_block_ok = True


def _block_weight_bytes(bp):
    n = bp["conv1_w"].size + bp["conv2_w"].size + bp["conv3_w"].size
    if bp["has_ds"]:
        n += bp["ds_w"].size
    return 2 * n


def bottleneck(x, bp):
    global _fused_block_ok
    N, H, W, _ = x.shape
    fuse = (_fused_block_ok and bp["stride"] == 1 and H % 8 == 0 and W % 8 == 0
            and _block_weight_bytes(bp) <= _FUSE_WEIGHT_BUDGET)
    if fuse:
        ds = (bp["ds_w"], bp["ds_bn"][0], bp["ds_bn"][1]) if bp["has_ds"] else None
        try:
            return _fused_block(x, bp["conv1_w"], bp["bn1"][0], bp["bn1"][1],
                                bp["conv2_w"], bp["bn2"][0], bp["bn2"][1],
                                bp["conv3_w"], bp["bn3"][0], bp["bn3"][1], ds)
        except Exception:
            # Conservative fallback: if the whole-block kernel fails to lower on this chip,
            # use the per-conv fused-GEMM path (numerically equivalent) for all blocks.
            _fused_block_ok = False
    if bp["has_ds"]:
        identity = conv_bn(x, bp["ds_w"], bp["ds_bn"],
                           ksize=1, stride=bp["stride"], padding=0, relu=False)
    else:
        identity = x
    out = conv_bn(x, bp["conv1_w"], bp["bn1"], ksize=1, stride=1, padding=0, relu=True)
    out = conv_bn(out, bp["conv2_w"], bp["bn2"],
                  ksize=3, stride=bp["stride"], padding=1, relu=True)
    # conv3 + bn3 + residual add + relu in ONE fused kernel epilogue
    out = conv_bn(out, bp["conv3_w"], bp["bn3"], identity,
                  ksize=1, stride=1, padding=0, relu=True)
    return out


def resnet50_forward(params, x_nchw):
    # layout: NCHW (PyTorch) input -> NHWC bf16 internally (channels on the lane axis)
    x = jnp.transpose(x_nchw, (0, 2, 3, 1)).astype(jnp.bfloat16)
    x = conv_bn(x, params["conv1_w"], params["bn1"], ksize=7, stride=2, padding=3, relu=True)
    x = maxpool2d_3x3s2(x)
    for blocks in params["layers"]:
        for bp in blocks:
            x = bottleneck(x, bp)
    # global avgpool + resnet fc (-> 1000) + flatten (no-op) + Linear(1000, 50), fused
    x = head(x, params["fc1_w"], params["fc1_b"], params["fc2_w"], params["fc2_b"], n_classes=50)
    return x


if __name__ == "__main__":
    key = jax.random.PRNGKey(0)
    pk, xk = jax.random.split(key)
    params = build_params(pk)
    x = jax.random.normal(xk, (2, 3, 64, 64), jnp.float32)   # small NCHW image batch
    out = resnet50_forward(params, x)
    out = jax.block_until_ready(out)
    assert out.shape == (2, 50), out.shape
    assert bool(jnp.all(jnp.isfinite(out)))
    print("KERNEL_OK")
</pallas_src>

<mosaic_0001>
module attributes {stable_mosaic.version = 11 : i64} {
  func.func @_mm_bn_relu_kernel(%arg0: i32, %arg1: i32, %arg2: i32, %arg3: i32, %arg4: memref<1x2048x147xbf16, #tpu.memory_space<vmem>>, %arg5: memref<1x147x64xbf16, #tpu.memory_space<vmem>>, %arg6: memref<1x64xf32, #tpu.memory_space<vmem>>, %arg7: memref<1x64xf32, #tpu.memory_space<vmem>>, %arg8: memref<2048x64xbf16, #tpu.memory_space<vmem>>, %arg9: memref<2048x64xf32, #tpu.memory_space<vmem>>) attributes {dimension_semantics = [#tpu.dimension_semantics<parallel>, #tpu.dimension_semantics<parallel>, #tpu.dimension_semantics<arbitrary>, #tpu.dimension_semantics<arbitrary>], iteration_bounds = array<i64: 1, 1, 1, 1>, scalar_prefetch = 0 : i64, scratch_operands = 1 : i64, tpu.core_type = #tpu.core_type<tc>, window_params = [{transform_indices = @transform_0, window_bounds = array<i64: 1, 2048, 147>}, {transform_indices = @transform_1, window_bounds = array<i64: 1, 147, 64>}, {transform_indices = @transform_2, window_bounds = array<i64: 1, 64>}, {transform_indices = @transform_3, window_bounds = array<i64: 1, 64>}, {transform_indices = @transform_4, window_bounds = array<i64: 2048, 64>}]} {
    %c0_i32 = arith.constant 0 : i32
    %0 = arith.cmpi eq, %arg2, %c0_i32 : i32
    %c0_i32_0 = arith.constant 0 : i32
    %1 = arith.cmpi eq, %arg3, %c0_i32_0 : i32
    %2 = arith.andi %0, %1 : i1
    %3 = arith.extui %2 : i1 to i32
    %c0_i32_1 = arith.constant 0 : i32
    %4 = arith.cmpi ne, %3, %c0_i32_1 : i32
    scf.if %4 {
      %cst_14 = arith.constant 0.000000e+00 : f32
      %18 = vector.broadcast %cst_14 : f32 to vector<2048x64xf32>
      %c0_15 = arith.constant 0 : index
      %c0_16 = arith.constant 0 : index
      %19 = vector.load %arg9[%c0_15, %c0_16] : memref<2048x64xf32, #tpu.memory_space<vmem>>, vector<2048x64xf32>
      tpu.vector_store %arg9[%c0_15, %c0_16], %18 {strides = array<i32>} : memref<2048x64xf32, #tpu.memory_space<vmem>>, vector<2048x64xf32>,
    } else {
    }
    %c0 = arith.constant 0 : index
    %c0_2 = arith.constant 0 : index
    %5 = vector.load %arg9[%c0, %c0_2] : memref<2048x64xf32, #tpu.memory_space<vmem>>, vector<2048x64xf32>
    %c0_3 = arith.constant 0 : index
    %c0_4 = arith.constant 0 : index
    %c0_5 = arith.constant 0 : index
    %6 = vector.load %arg4[%c0_3, %c0_4, %c0_5] : memref<1x2048x147xbf16, #tpu.memory_space<vmem>>, vector<1x2048x147xbf16>
    %7 = vector.shape_cast %6 : vector<1x2048x147xbf16> to vector<2048x147xbf16>
    %c0_6 = arith.constant 0 : index
    %c0_7 = arith.constant 0 : index
    %c0_8 = arith.constant 0 : index
    %8 = vector.load %arg5[%c0_6, %c0_7, %c0_8] : memref<1x147x64xbf16, #tpu.memory_space<vmem>>, vector<1x147x64xbf16>
    %9 = vector.shape_cast %8 : vector<1x147x64xbf16> to vector<147x64xbf16>
    %cst = arith.constant dense<0.000000e+00> : vector<2048x64xf32>
    %10 = tpu.matmul %7, %9, %cst {dimension_numbers = #tpu.dot_dimension_numbers<[1], [0], [0], [1], [0, 0, 1, 1], [], []>} : vector<2048x147xbf16>, vector<147x64xbf16>, vector<2048x64xf32> -> vector<2048x64xf32>
    %11 = arith.addf %5, %10 : vector<2048x64xf32>
    %c0_9 = arith.constant 0 : index
    %c0_10 = arith.constant 0 : index
    %12 = vector.load %arg9[%c0_9, %c0_10] : memref<2048x64xf32, #tpu.memory_space<vmem>>, vector<2048x64xf32>
    tpu.vector_store %arg9[%c0_9, %c0_10], %11 {strides = array<i32>} : memref<2048x64xf32, #tpu.memory_space<vmem>>, vector<2048x64xf32>,
    %c0_i32_11 = arith.constant 0 : i32
    %13 = arith.cmpi eq, %arg2, %c0_i32_11 : i32
    %c0_i32_12 = arith.constant 0 : i32
    %14 = arith.cmpi eq, %arg3, %c0_i32_12 : i32
    %15 = arith.andi %13, %14 : i1
    %16 = arith.extui %15 : i1 to i32
    %c0_i32_13 = arith.constant 0 : i32
    %17 = arith.cmpi ne, %16, %c0_i32_13 : i32
    scf.if %17 {
      %c0_14 = arith.constant 0 : index
      %c0_15 = arith.constant 0 : index
      %18 = vector.load %arg9[%c0_14, %c0_15] : memref<2048x64xf32, #tpu.memory_space<vmem>>, vector<2048x64xf32>
      %c0_16 = arith.constant 0 : index
      %c0_17 = arith.constant 0 : index
      %19 = vector.load %arg6[%c0_16, %c0_17] : memref<1x64xf32, #tpu.memory_space<vmem>>, vector<1x64xf32>
      %20 = vector.broadcast %19 : vector<1x64xf32> to vector<2048x64xf32>
      %21 = arith.mulf %18, %20 : vector<2048x64xf32>
      %c0_18 = arith.constant 0 : index
      %c0_19 = arith.constant 0 : index
      %22 = vector.load %arg7[%c0_18, %c0_19] : memref<1x64xf32, #tpu.memory_space<vmem>>, vector<1x64xf32>
      %23 = vector.broadcast %22 : vector<1x64xf32> to vector<2048x64xf32>
      %24 = arith.addf %21, %23 : vector<2048x64xf32>
      %cst_20 = arith.constant 0.000000e+00 : f32
      %25 = vector.broadcast %cst_20 : f32 to vector<2048x64xf32>
      %26 = arith.maximumf %24, %25 : vector<2048x64xf32>
      %27 = arith.truncf %26 : vector<2048x64xf32> to vector<2048x64xbf16>
      %c0_21 = arith.constant 0 : index
      %c0_22 = arith.constant 0 : index
      %28 = vector.load %arg8[%c0_21, %c0_22] : memref<2048x64xbf16, #tpu.memory_space<vmem>>, vector<2048x64xbf16>
      tpu.vector_store %arg8[%c0_21, %c0_22], %27 {strides = array<i32>} : memref<2048x64xbf16, #tpu.memory_space<vmem>>, vector<2048x64xbf16>,
    } else {
    }
    return
  }
  func.func @transform_0(%arg0: i32, %arg1: i32, %arg2: i32, %arg3: i32) -> (i32, i32, i32) {
    %c0_i32 = arith.constant 0 : i32
    return %arg2, %arg0, %arg3 : i32, i32, i32
  }
  func.func @transform_1(%arg0: i32, %arg1: i32, %arg2: i32, %arg3: i32) -> (i32, i32, i32) {
    %c0_i32 = arith.constant 0 : i32
    return %arg2, %arg3, %arg1 : i32, i32, i32
  }
  func.func @transform_2(%arg0: i32, %arg1: i32, %arg2: i32, %arg3: i32) -> (i32, i32) {
    %c0_i32 = arith.constant 0 : i32
    %c0_i32_0 = arith.constant 0 : i32
    return %c0_i32, %arg1 : i32, i32
  }
  func.func @transform_3(%arg0: i32, %arg1: i32, %arg2: i32, %arg3: i32) -> (i32, i32) {
    %c0_i32 = arith.constant 0 : i32
    %c0_i32_0 = arith.constant 0 : i32
    return %c0_i32, %arg1 : i32, i32
  }
  func.func @transform_4(%arg0: i32, %arg1: i32, %arg2: i32, %arg3: i32) -> (i32, i32) {
    %c0_i32 = arith.constant 0 : i32
    return %arg0, %arg1 : i32, i32
  }
}

</mosaic_0001>

<llo_original>
// kernel: conv_bn.1
$region0: #{conv_bn.1}
  #allocation0 [shape = 'u32[]', space=smem, size = 0x4, offset = 0x4, fixed_abs, tag = 'smem constant byte address 0x4 - core index']
  #allocation1 [shape = 'u32[144,128]{1,0:T(1,128)}', space=vmem, size = 0x12000, scoped, tag = 'internal scratch']
  #allocation2 [shape = 'f32[2048,64]{1,0:T(8,128)}', space=vmem, size = 0x100000, scoped, tag = 'scratch operand']
  %s0 = inlined_call_operand.vmem [shape: bf16[1,2048,147], index: 0, kind: input, shape index: {}]
  %s1 = inlined_call_operand.vmem [shape: bf16[1,147,64], index: 1, kind: input, shape index: {}]
  %s2 = inlined_call_operand.vmem [shape: f32[1,64], index: 2, kind: input, shape index: {}]
  %s3 = inlined_call_operand.vmem [shape: f32[1,64], index: 3, kind: input, shape index: {}]
  %s4 = inlined_call_operand.hbm [shape: bf16[2048,64], index: 4, kind: output, shape index: {}]
  %s5 = sld [smem:[#allocation0]]
  $region34: #{conv_bn.1} parent=0
    _
  %s7 = ssub.s32 1, %s5
  %s8 = scalar_select 0, %s7, %s5
  $region1: #{conv_bn.1} parent=0
    #allocation3 [shape = 'u8[524288]{0}', space=vmem, size = 0x80000, scoped, tag = 'output window, operand 0, single buffered']
    #allocation4 [shape = 's32[1]{0}', space=sflag, size = 0x4, scoped, tag = 'scoped memory for conv_bn.1']
    %9 = vsyncpa [#allocation4], 0
    // Predicated region
    $region2: #{conv_bn.1} parent=1 // pred_check
      _
    $region3: #{conv_bn.1} parent=1 // pred_check_branch
      %11 = sbr.rel (0) target = $region5
    $region4: #{conv_bn.1} parent=1 // pred_region
      _
    $region5: #{conv_bn.1} parent=1 // pred_fallthru
      _
    // Predicated region
    $region6: #{conv_bn.1} parent=1 // pred_check
      _
    $region7: #{conv_bn.1} parent=1 // pred_check_branch
      %13 = sbr.rel (0) target = $region9
    $region8: #{conv_bn.1} parent=1 // pred_region
      _
    $region9: #{conv_bn.1} parent=1 // pred_fallthru
      _
    // Predicated region
    $region10: #{conv_bn.1} parent=1 // pred_check
      _
    $region11: #{conv_bn.1} parent=1 // pred_check_branch
      %15 = sbr.rel (0) target = $region13
    $region12: #{conv_bn.1} parent=1 // pred_region
      _
    $region13: #{conv_bn.1} parent=1 // pred_fallthru
      _
    // Predicated region
    $region14: #{conv_bn.1} parent=1 // pred_check
      _
    $region15: #{conv_bn.1} parent=1 // pred_check_branch
      %17 = sbr.rel (0) target = $region17
    $region16: #{conv_bn.1} parent=1 // pred_region
      _
    $region17: #{conv_bn.1} parent=1 // pred_fallthru
      _
    %p19 = scmp.eq.s32.totalorder 0, 0
    %p20 = scmp.eq.s32.totalorder 0, 0
    %p21 = pnand %p19, %p20
    %p22 = pneg %p21
    // Predicated region
    $region18: #{conv_bn.1} parent=1 // pred_check
      _
    $region19: #{conv_bn.1} parent=1 // pred_check_branch
      %24 = sbr.rel (%p21) target = $region21
    $region20: #{conv_bn.1} parent=1 // pred_region
      %vm25 = vcmask 523264
      %26 = vst.msk [vmem:[#allocation2] sm:$0xff] %vm25, 0.0
      %27 = vst.msk [vmem:[#allocation2 + $0x8] sm:$0xff] %vm25, 0.0
      %28 = vst.msk [vmem:[#allocation2 + $0x10] sm:$0xff] %vm25, 0.0
      %29 = vst.msk [vmem:[#allocation2 + $0x18] sm:$0xff] %vm25, 0.0
      %30 = vst.msk [vmem:[#allocation2 + $0x20] sm:$0xff] %vm25, 0.0
      %31 = vst.msk [vmem:[#allocation2 + $0x28] sm:$0xff] %vm25, 0.0
      %32 = vst.msk [vmem:[#allocation2 + $0x30] sm:$0xff] %vm25, 0.0
      %33 = vst.msk [vmem:[#allocation2 + $0x38] sm:$0xff] %vm25, 0.0
      %34 = vst.msk [vmem:[#allocation2 + $0x40] sm:$0xff] %vm25, 0.0
      %35 = vst.msk [vmem:[#allocation2 + $0x48] sm:$0xff] %vm25, 0.0
      %36 = vst.msk [vmem:[#allocation2 + $0x50] sm:$0xff] %vm25, 0.0
      %37 = vst.msk [vmem:[#allocation2 + $0x58] sm:$0xff] %vm25, 0.0
      %38 = vst.msk [vmem:[#allocation2 + $0x60] sm:$0xff] %vm25, 0.0
      %39 = vst.msk [vmem:[#allocation2 + $0x68] sm:$0xff] %vm25, 0.0
      %40 = vst.msk [vmem:[#allocation2 + $0x70] sm:$0xff] %vm25, 0.0
      %41 = vst.msk [vmem:[#allocation2 + $0x78] sm:$0xff] %vm25, 0.0
      %42 = vst.msk [vmem:[#allocation2 + $0x80] sm:$0xff] %vm25, 0.0
      %43 = vst.msk [vmem:[#allocation2 + $0x88] sm:$0xff] %vm25, 0.0
      %44 = vst.msk [vmem:[#allocation2 + $0x90] sm:$0xff] %vm25, 0.0
      %45 = vst.msk [vmem:[#allocation2 + $0x98] sm:$0xff] %vm25, 0.0
      %46 = vst.msk [vmem:[#allocation2 + $0xa0] sm:$0xff] %vm25, 0.0
      %47 = vst.msk [vmem:[#allocation2 + $0xa8] sm:$0xff] %vm25, 0.0
      %48 = vst.msk [vmem:[#allocation2 + $0xb0] sm:$0xff] %vm25, 0.0
      %49 = vst.msk [vmem:[#allocation2 + $0xb8] sm:$0xff] %vm25, 0.0
      %50 = vst.msk [vmem:[#allocation2 + $0xc0] sm:$0xff] %vm25, 0.0
      %51 = vst.msk [vmem:[#allocation2 + $0xc8] sm:$0xff] %vm25, 0.0
      %52 = vst.msk [vmem:[#allocation2 + $0xd0] sm:$0xff] %vm25, 0.0
      %53 = vst.msk [vmem:[#allocation2 + $0xd8] sm:$0xff] %vm25, 0.0
      %54 = vst.msk [vmem:[#allocation2 + $0xe0] sm:$0xff] %vm25, 0.0
      %55 = vst.msk [vmem:[#allocation2 + $0xe8] sm:$0xff] %vm25, 0.0
      %56 = vst.msk [vmem:[#allocation2 + $0xf0] sm:$0xff] %vm25, 0.0
      %57 = vst.msk [vmem:[#allocation2 + $0xf8] sm:$0xff] %vm25, 0.0
      %58 = vst.msk [vmem:[#allocation2 + $0x100] sm:$0xff] %vm25, 0.0
      %59 = vst.msk [vmem:[#allocation2 + $0x108] sm:$0xff] %vm25, 0.0
      %60 = vst.msk [vmem:[#allocation2 + $0x110] sm:$0xff] %vm25, 0.0
      %61 = vst.msk [vmem:[#allocation2 + $0x118] sm:$0xff] %vm25, 0.0
      %62 = vst.msk [vmem:[#allocation2 + $0x120] sm:$0xff] %vm25, 0.0
      %63 = vst.msk [vmem:[#allocation2 + $0x128] sm:$0xff] %vm25, 0.0
      %64 = vst.msk [vmem:[#allocation2 + $0x130] sm:$0xff] %vm25, 0.0
      %65 = vst.msk [vmem:[#allocation2 + $0x138] sm:$0xff] %vm25, 0.0
      %66 = vst.msk [vmem:[#allocation2 + $0x140] sm:$0xff] %vm25, 0.0
      %67 = vst.msk [vmem:[#allocation2 + $0x148] sm:$0xff] %vm25, 0.0
      %68 = vst.msk [vmem:[#allocation2 + $0x150] sm:$0xff] %vm25, 0.0
      %69 = vst.msk [vmem:[#allocation2 + $0x158] sm:$0xff] %vm25, 0.0
      %70 = vst.msk [vmem:[#allocation2 + $0x160] sm:$0xff] %vm25, 0.0
      %71 = vst.msk [vmem:[#allocation2 + $0x168] sm:$0xff] %vm25, 0.0
      %72 = vst.msk [vmem:[#allocation2 + $0x170] sm:$0xff] %vm25, 0.0
      %73 = vst.msk [vmem:[#allocation2 + $0x178] sm:$0xff] %vm25, 0.0
      %74 = vst.msk [vmem:[#allocation2 + $0x180] sm:$0xff] %vm25, 0.0
      %75 = vst.msk [vmem:[#allocation2 + $0x188] sm:$0xff] %vm25, 0.0
      %76 = vst.msk [vmem:[#allocation2 + $0x190] sm:$0xff] %vm25, 0.0
      %77 = vst.msk [vmem:[#allocation2 + $0x198] sm:$0xff] %vm25, 0.0
      %78 = vst.msk [vmem:[#allocation2 + $0x1a0] sm:$0xff] %vm25, 0.0
      %79 = vst.msk [vmem:[#allocation2 + $0x1a8] sm:$0xff] %vm25, 0.0
      %80 = vst.msk [vmem:[#allocation2 + $0x1b0] sm:$0xff] %vm25, 0.0
      %81 = vst.msk [vmem:[#allocation2 + $0x1b8] sm:$0xff] %vm25, 0.0
      %82 = vst.msk [vmem:[#allocation2 + $0x1c0] sm:$0xff] %vm25, 0.0
      %83 = vst.msk [vmem:[#allocation2 + $0x1c8] sm:$0xff] %vm25, 0.0
      %84 = vst.msk [vmem:[#allocation2 + $0x1d0] sm:$0xff] %vm25, 0.0
      %85 = vst.msk [vmem:[#allocation2 + $0x1d8] sm:$0xff] %vm25, 0.0
      %86 = vst.msk [vmem:[#allocation2 + $0x1e0] sm:$0xff] %vm25, 0.0
      %87 = vst.msk [vmem:[#allocation2 + $0x1e8] sm:$0xff] %vm25, 0.0
      %88 = vst.msk [vmem:[#allocation2 + $0x1f0] sm:$0xff] %vm25, 0.0
      %89 = vst.msk [vmem:[#allocation2 + $0x1f8] sm:$0xff] %vm25, 0.0
      %90 = vst.msk [vmem:[#allocation2 + $0x200] sm:$0xff] %vm25, 0.0
      %91 = vst.msk [vmem:[#allocation2 + $0x208] sm:$0xff] %vm25, 0.0
      %92 = vst.msk [vmem:[#allocation2 + $0x210] sm:$0xff] %vm25, 0.0
      %93 = vst.msk [vmem:[#allocation2 + $0x218] sm:$0xff] %vm25, 0.0
      %94 = vst.msk [vmem:[#allocation2 + $0x220] sm:$0xff] %vm25, 0.0
      %95 = vst.msk [vmem:[#allocation2 + $0x228] sm:$0xff] %vm25, 0.0
      %96 = vst.msk [vmem:[#allocation2 + $0x230] sm:$0xff] %vm25, 0.0
      %97 = vst.msk [vmem:[#allocation2 + $0x238] sm:$0xff] %vm25, 0.0
      %98 = vst.msk [vmem:[#allocation2 + $0x240] sm:$0xff] %vm25, 0.0
      %99 = vst.msk [vmem:[#allocation2 + $0x248] sm:$0xff] %vm25, 0.0
      %100 = vst.msk [vmem:[#allocation2 + $0x250] sm:$0xff] %vm25, 0.0
      %101 = vst.msk [vmem:[#allocation2 + $0x258] sm:$0xff] %vm25, 0.0
      %102 = vst.msk [vmem:[#allocation2 + $0x260] sm:$0xff] %vm25, 0.0
      %103 = vst.msk [vmem:[#allocation2 + $0x268] sm:$0xff] %vm25, 0.0
      %104 = vst.msk [vmem:[#allocation2 + $0x270] sm:$0xff] %vm25, 0.0
      %105 = vst.msk [vmem:[#allocation2 + $0x278] sm:$0xff] %vm25, 0.0
      %106 = vst.msk [vmem:[#allocation2 + $0x280] sm:$0xff] %vm25, 0.0
      %107 = vst.msk [vmem:[#allocation2 + $0x288] sm:$0xff] %vm25, 0.0
      %108 = vst.msk [vmem:[#allocation2 + $0x290] sm:$0xff] %vm25, 0.0
      %109 = vst.msk [vmem:[#allocation2 + $0x298] sm:$0xff] %vm25, 0.0
      %110 = vst.msk [vmem:[#allocation2 + $0x2a0] sm:$0xff] %vm25, 0.0
      %111 = vst.msk [vmem:[#allocation2 + $0x2a8] sm:$0xff] %vm25, 0.0
      %112 = vst.msk [vmem:[#allocation2 + $0x2b0] sm:$0xff] %vm25, 0.0
      %113 = vst.msk [vmem:[#allocation2 + $0x2b8] sm:$0xff] %vm25, 0.0
      %114 = vst.msk [vmem:[#allocation2 + $0x2c0] sm:$0xff] %vm25, 0.0
      %115 = vst.msk [vmem:[#allocation2 + $0x2c8] sm:$0xff] %vm25, 0.0
      %116 = vst.msk [vmem:[#allocation2 + $0x2d0] sm:$0xff] %vm25, 0.0
      %117 = vst.msk [vmem:[#allocation2 + $0x2d8] sm:$0xff] %vm25, 0.0
      %118 = vst.msk [vmem:[#allocation2 + $0x2e0] sm:$0xff] %vm25, 0.0
      %119 = vst.msk [vmem:[#allocation2 + $0x2e8] sm:$0xff] %vm25, 0.0
      %120 = vst.msk [vmem:[#allocation2 + $0x2f0] sm:$0xff] %vm25, 0.0
      %121 = vst.msk [vmem:[#allocation2 + $0x2f8] sm:$0xff] %vm25, 0.0
      %122 = vst.msk [vmem:[#allocation2 + $0x300] sm:$0xff] %vm25, 0.0
      %123 = vst.msk [vmem:[#allocation2 + $0x308] sm:$0xff] %vm25, 0.0
      %124 = vst.msk [vmem:[#allocation2 + $0x310] sm:$0xff] %vm25, 0.0
      %125 = vst.msk [vmem:[#allocation2 + $0x318] sm:$0xff] %vm25, 0.0
      %126 = vst.msk [vmem:[#allocation2 + $0x320] sm:$0xff] %vm25, 0.0
      %127 = vst.msk [vmem:[#allocation2 + $0x328] sm:$0xff] %vm25, 0.0
      %128 = vst.msk [vmem:[#allocation2 + $0x330] sm:$0xff] %vm25, 0.0
      %129 = vst.msk [vmem:[#allocation2 + $0x338] sm:$0xff] %vm25, 0.0
      %130 = vst.msk [vmem:[#allocation2 + $0x340] sm:$0xff] %vm25, 0.0
      %131 = vst.msk [vmem:[#allocation2 + $0x348] sm:$0xff] %vm25, 0.0
      %132 = vst.msk [vmem:[#allocation2 + $0x350] sm:$0xff] %vm25, 0.0
      %133 = vst.msk [vmem:[#allocation2 + $0x358] sm:$0xff] %vm25, 0.0
      %134 = vst.msk [vmem:[#allocation2 + $0x360] sm:$0xff] %vm25, 0.0
      %135 = vst.msk [vmem:[#allocation2 + $0x368] sm:$0xff] %vm25, 0.0
      %136 = vst.msk [vmem:[#allocation2 + $0x370] sm:$0xff] %vm25, 0.0
      %137 = vst.msk [vmem:[#allocation2 + $0x378] sm:$0xff] %vm25, 0.0
      %138 = vst.msk [vmem:[#allocation2 + $0x380] sm:$0xff] %vm25, 0.0
      %139 = vst.msk [vmem:[#allocation2 + $0x388] sm:$0xff] %vm25, 0.0
      %140 = vst.msk [vmem:[#allocation2 + $0x390] sm:$0xff] %vm25, 0.0
      %141 = vst.msk [vmem:[#allocation2 + $0x398] sm:$0xff] %vm25, 0.0
      %142 = vst.msk [vmem:[#allocation2 + $0x3a0] sm:$0xff] %vm25, 0.0
      %143 = vst.msk [vmem:[#allocation2 + $0x3a8] sm:$0xff] %vm25, 0.0
      %144 = vst.msk [vmem:[#allocation2 + $0x3b0] sm:$0xff] %vm25, 0.0
      %145 = vst.msk [vmem:[#allocation2 + $0x3b8] sm:$0xff] %vm25, 0.0
      %146 = vst.msk [vmem:[#allocation2 + $0x3c0] sm:$0xff] %vm25, 0.0
      %147 = vst.msk [vmem:[#allocation2 + $0x3c8] sm:$0xff] %vm25, 0.0
      %148 = vst.msk [vmem:[#allocation2 + $0x3d0] sm:$0xff] %vm25, 0.0
      %149 = vst.msk [vmem:[#allocation2 + $0x3d8] sm:$0xff] %vm25, 0.0
      %150 = vst.msk [vmem:[#allocation2 + $0x3e0] sm:$0xff] %vm25, 0.0
      %151 = vst.msk [vmem:[#allocation2 + $0x3e8] sm:$0xff] %vm25, 0.0
      %152 = vst.msk [vmem:[#allocation2 + $0x3f0] sm:$0xff] %vm25, 0.0
      %153 = vst.msk [vmem:[#allocation2 + $0x3f8] sm:$0xff] %vm25, 0.0
      %154 = vst.msk [vmem:[#allocation2 + $0x400] sm:$0xff] %vm25, 0.0
      %155 = vst.msk [vmem:[#allocation2 + $0x408] sm:$0xff] %vm25, 0.0
      %156 = vst.msk [vmem:[#allocation2 + $0x410] sm:$0xff] %vm25, 0.0
      %157 = vst.msk [vmem:[#allocation2 + $0x418] sm:$0xff] %vm25, 0.0
      %158 = vst.msk [vmem:[#allocation2 + $0x420] sm:$0xff] %vm25, 0.0
      %159 = vst.msk [vmem:[#allocation2 + $0x428] sm:$0xff] %vm25, 0.0
      %160 = vst.msk [vmem:[#allocation2 + $0x430] sm:$0xff] %vm25, 0.0
      %161 = vst.msk [vmem:[#allocation2 + $0x438] sm:$0xff] %vm25, 0.0
      %162 = vst.msk [vmem:[#allocation2 + $0x440] sm:$0xff] %vm25, 0.0
      %163 = vst.msk [vmem:[#allocation2 + $0x448] sm:$0xff] %vm25, 0.0
      %164 = vst.msk [vmem:[#allocation2 + $0x450] sm:$0xff] %vm25, 0.0
      %165 = vst.msk [vmem:[#allocation2 + $0x458] sm:$0xff] %vm25, 0.0
      %166 = vst.msk [vmem:[#allocation2 + $0x460] sm:$0xff] %vm25, 0.0
      %167 = vst.msk [vmem:[#allocation2 + $0x468] sm:$0xff] %vm25, 0.0
      %168 = vst.msk [vmem:[#allocation2 + $0x470] sm:$0xff] %vm25, 0.0
      %169 = vst.msk [vmem:[#allocation2 + $0x478] sm:$0xff] %vm25, 0.0
      %170 = vst.msk [vmem:[#allocation2 + $0x480] sm:$0xff] %vm25, 0.0
      %171 = vst.msk [vmem:[#allocation2 + $0x488] sm:$0xff] %vm25, 0.0
      %172 = vst.msk [vmem:[#allocation2 + $0x490] sm:$0xff] %vm25, 0.0
      %173 = vst.msk [vmem:[#allocation2 + $0x498] sm:$0xff] %vm25, 0.0
      %174 = vst.msk [vmem:[#allocation2 + $0x4a0] sm:$0xff] %vm25, 0.0
      %175 = vst.msk [vmem:[#allocation2 + $0x4a8] sm:$0xff] %vm25, 0.0
      %176 = vst.msk [vmem:[#allocation2 + $0x4b0] sm:$0xff] %vm25, 0.0
      %177 = vst.msk [vmem:[#allocation2 + $0x4b8] sm:$0xff] %vm25, 0.0
      %178 = vst.msk [vmem:[#allocation2 + $0x4c0] sm:$0xff] %vm25, 0.0
      %179 = vst.msk [vmem:[#allocation2 + $0x4c8] sm:$0xff] %vm25, 0.0
      %180 = vst.msk [vmem:[#allocation2 + $0x4d0] sm:$0xff] %vm25, 0.0
      %181 = vst.msk [vmem:[#allocation2 + $0x4d8] sm:$0xff] %vm25, 0.0
      %182 = vst.msk [vmem:[#allocation2 + $0x4e0] sm:$0xff] %vm25, 0.0
      %183 = vst.msk [vmem:[#allocation2 + $0x4e8] sm:$0xff] %vm25, 0.0
      %184 = vst.msk [vmem:[#allocation2 + $0x4f0] sm:$0xff] %vm25, 0.0
      %185 = vst.msk [vmem:[#allocation2 + $0x4f8] sm:$0xff] %vm25, 0.0
      %186 = vst.msk [vmem:[#allocation2 + $0x500] sm:$0xff] %vm25, 0.0
      %187 = vst.msk [vmem:[#allocation2 + $0x508] sm:$0xff] %vm25, 0.0
      %188 = vst.msk [vmem:[#allocation2 + $0x510] sm:$0xff] %vm25, 0.0
      %189 = vst.msk [vmem:[#allocation2 + $0x518] sm:$0xff] %vm25, 0.0
      %190 = vst.msk [vmem:[#allocation2 + $0x520] sm:$0xff] %vm25, 0.0
      %191 = vst.msk [vmem:[#allocation2 + $0x528] sm:$0xff] %vm25, 0.0
      %192 = vst.msk [vmem:[#allocation2 + $0x530] sm:$0xff] %vm25, 0.0
      %193 = vst.msk [vmem:[#allocation2 + $0x538] sm:$0xff] %vm25, 0.0
      %194 = vst.msk [vmem:[#allocation2 + $0x540] sm:$0xff] %vm25, 0.0
      %195 = vst.msk [vmem:[#allocation2 + $0x548] sm:$0xff] %vm25, 0.0
      %196 = vst.msk [vmem:[#allocation2 + $0x550] sm:$0xff] %vm25, 0.0
      %197 = vst.msk [vmem:[#allocation2 + $0x558] sm:$0xff] %vm25, 0.0
      %198 = vst.msk [vmem:[#allocation2 + $0x560] sm:$0xff] %vm25, 0.0
      %199 = vst.msk [vmem:[#allocation2 + $0x568] sm:$0xff] %vm25, 0.0
      %200 = vst.msk [vmem:[#allocation2 + $0x570] sm:$0xff] %vm25, 0.0
      %201 = vst.msk [vmem:[#allocation2 + $0x578] sm:$0xff] %vm25, 0.0
      %202 = vst.msk [vmem:[#allocation2 + $0x580] sm:$0xff] %vm25, 0.0
      %203 = vst.msk [vmem:[#allocation2 + $0x588] sm:$0xff] %vm25, 0.0
      %204 = vst.msk [vmem:[#allocation2 + $0x590] sm:$0xff] %vm25, 0.0
      %205 = vst.msk [vmem:[#allocation2 + $0x598] sm:$0xff] %vm25, 0.0
      %206 = vst.msk [vmem:[#allocation2 + $0x5a0] sm:$0xff] %vm25, 0.0
      %207 = vst.msk [vmem:[#allocation2 + $0x5a8] sm:$0xff] %vm25, 0.0
      %208 = vst.msk [vmem:[#allocation2 + $0x5b0] sm:$0xff] %vm25, 0.0
      %209 = vst.msk [vmem:[#allocation2 + $0x5b8] sm:$0xff] %vm25, 0.0
      %210 = vst.msk [vmem:[#allocation2 + $0x5c0] sm:$0xff] %vm25, 0.0
      %211 = vst.msk [vmem:[#allocation2 + $0x5c8] sm:$0xff] %vm25, 0.0
      %212 = vst.msk [vmem:[#allocation2 + $0x5d0] sm:$0xff] %vm25, 0.0
      %213 = vst.msk [vmem:[#allocation2 + $0x5d8] sm:$0xff] %vm25, 0.0
      %214 = vst.msk [vmem:[#allocation2 + $0x5e0] sm:$0xff] %vm25, 0.0
      %215 = vst.msk [vmem:[#allocation2 + $0x5e8] sm:$0xff] %vm25, 0.0
      %216 = vst.msk [vmem:[#allocation2 + $0x5f0] sm:$0xff] %vm25, 0.0
      %217 = vst.msk [vmem:[#allocation2 + $0x5f8] sm:$0xff] %vm25, 0.0
      %218 = vst.msk [vmem:[#allocation2 + $0x600] sm:$0xff] %vm25, 0.0
      %219 = vst.msk [vmem:[#allocation2 + $0x608] sm:$0xff] %vm25, 0.0
      %220 = vst.msk [vmem:[#allocation2 + $0x610] sm:$0xff] %vm25, 0.0
      %221 = vst.msk [vmem:[#allocation2 + $0x618] sm:$0xff] %vm25, 0.0
      %222 = vst.msk [vmem:[#allocation2 + $0x620] sm:$0xff] %vm25, 0.0
      %223 = vst.msk [vmem:[#allocation2 + $0x628] sm:$0xff] %vm25, 0.0
      %224 = vst.msk [vmem:[#allocation2 + $0x630] sm:$0xff] %vm25, 0.0
      %225 = vst.msk [vmem:[#allocation2 + $0x638] sm:$0xff] %vm25, 0.0
      %226 = vst.msk [vmem:[#allocation2 + $0x640] sm:$0xff] %vm25, 0.0
      %227 = vst.msk [vmem:[#allocation2 + $0x648] sm:$0xff] %vm25, 0.0
      %228 = vst.msk [vmem:[#allocation2 + $0x650] sm:$0xff] %vm25, 0.0
      %229 = vst.msk [vmem:[#allocation2 + $0x658] sm:$0xff] %vm25, 0.0
      %230 = vst.msk [vmem:[#allocation2 + $0x660] sm:$0xff] %vm25, 0.0
      %231 = vst.msk [vmem:[#allocation2 + $0x668] sm:$0xff] %vm25, 0.0
      %232 = vst.msk [vmem:[#allocation2 + $0x670] sm:$0xff] %vm25, 0.0
      %233 = vst.msk [vmem:[#allocation2 + $0x678] sm:$0xff] %vm25, 0.0
      %234 = vst.msk [vmem:[#allocation2 + $0x680] sm:$0xff] %vm25, 0.0
      %235 = vst.msk [vmem:[#allocation2 + $0x688] sm:$0xff] %vm25, 0.0
      %236 = vst.msk [vmem:[#allocation2 + $0x690] sm:$0xff] %vm25, 0.0
      %237 = vst.msk [vmem:[#allocation2 + $0x698] sm:$0xff] %vm25, 0.0
      %238 = vst.msk [vmem:[#allocation2 + $0x6a0] sm:$0xff] %vm25, 0.0
      %239 = vst.msk [vmem:[#allocation2 + $0x6a8] sm:$0xff] %vm25, 0.0
      %240 = vst.msk [vmem:[#allocation2 + $0x6b0] sm:$0xff] %vm25, 0.0
      %241 = vst.msk [vmem:[#allocation2 + $0x6b8] sm:$0xff] %vm25, 0.0
      %242 = vst.msk [vmem:[#allocation2 + $0x6c0] sm:$0xff] %vm25, 0.0
      %243 = vst.msk [vmem:[#allocation2 + $0x6c8] sm:$0xff] %vm25, 0.0
      %244 = vst.msk [vmem:[#allocation2 + $0x6d0] sm:$0xff] %vm25, 0.0
      %245 = vst.msk [vmem:[#allocation2 + $0x6d8] sm:$0xff] %vm25, 0.0
      %246 = vst.msk [vmem:[#allocation2 + $0x6e0] sm:$0xff] %vm25, 0.0
      %247 = vst.msk [vmem:[#allocation2 + $0x6e8] sm:$0xff] %vm25, 0.0
      %248 = vst.msk [vmem:[#allocation2 + $0x6f0] sm:$0xff] %vm25, 0.0
      %249 = vst.msk [vmem:[#allocation2 + $0x6f8] sm:$0xff] %vm25, 0.0
      %250 = vst.msk [vmem:[#allocation2 + $0x700] sm:$0xff] %vm25, 0.0
      %251 = vst.msk [vmem:[#allocation2 + $0x708] sm:$0xff] %vm25, 0.0
      %252 = vst.msk [vmem:[#allocation2 + $0x710] sm:$0xff] %vm25, 0.0
      %253 = vst.msk [vmem:[#allocation2 + $0x718] sm:$0xff] %vm25, 0.0
      %254 = vst.msk [vmem:[#allocation2 + $0x720] sm:$0xff] %vm25, 0.0
      %255 = vst.msk [vmem:[#allocation2 + $0x728] sm:$0xff] %vm25, 0.0
      %256 = vst.msk [vmem:[#allocation2 + $0x730] sm:$0xff] %vm25, 0.0
      %257 = vst.msk [vmem:[#allocation2 + $0x738] sm:$0xff] %vm25, 0.0
      %258 = vst.msk [vmem:[#allocation2 + $0x740] sm:$0xff] %vm25, 0.0
      %259 = vst.msk [vmem:[#allocation2 + $0x748] sm:$0xff] %vm25, 0.0
      %260 = vst.msk [vmem:[#allocation2 + $0x750] sm:$0xff] %vm25, 0.0
      %261 = vst.msk [vmem:[#allocation2 + $0x758] sm:$0xff] %vm25, 0.0
      %262 = vst.msk [vmem:[#allocation2 + $0x760] sm:$0xff] %vm25, 0.0
      %263 = vst.msk [vmem:[#allocation2 + $0x768] sm:$0xff] %vm25, 0.0
      %264 = vst.msk [vmem:[#allocation2 + $0x770] sm:$0xff] %vm25, 0.0
      %265 = vst.msk [vmem:[#allocation2 + $0x778] sm:$0xff] %vm25, 0.0
      %266 = vst.msk [vmem:[#allocation2 + $0x780] sm:$0xff] %vm25, 0.0
      %267 = vst.msk [vmem:[#allocation2 + $0x788] sm:$0xff] %vm25, 0.0
      %268 = vst.msk [vmem:[#allocation2 + $0x790] sm:$0xff] %vm25, 0.0
      %269 = vst.msk [vmem:[#allocation2 + $0x798] sm:$0xff] %vm25, 0.0
      %270 = vst.msk [vmem:[#allocation2 + $0x7a0] sm:$0xff] %vm25, 0.0
      %271 = vst.msk [vmem:[#allocation2 + $0x7a8] sm:$0xff] %vm25, 0.0
      %272 = vst.msk [vmem:[#allocation2 + $0x7b0] sm:$0xff] %vm25, 0.0
      %273 = vst.msk [vmem:[#allocation2 + $0x7b8] sm:$0xff] %vm25, 0.0
      %274 = vst.msk [vmem:[#allocation2 + $0x7c0] sm:$0xff] %vm25, 0.0
      %275 = vst.msk [vmem:[#allocation2 + $0x7c8] sm:$0xff] %vm25, 0.0
      %276 = vst.msk [vmem:[#allocation2 + $0x7d0] sm:$0xff] %vm25, 0.0
      %277 = vst.msk [vmem:[#allocation2 + $0x7d8] sm:$0xff] %vm25, 0.0
      %278 = vst.msk [vmem:[#allocation2 + $0x7e0] sm:$0xff] %vm25, 0.0
      %279 = vst.msk [vmem:[#allocation2 + $0x7e8] sm:$0xff] %vm25, 0.0
      %280 = vst.msk [vmem:[#allocation2 + $0x7f0] sm:$0xff] %vm25, 0.0
      %281 = vst.msk [vmem:[#allocation2 + $0x7f8] sm:$0xff] %vm25, 0.0
    $region21: #{conv_bn.1} parent=1 // pred_fallthru
      _
    %v282 = vld [vmem:[#allocation2] sm:$0xff]
    %v283 = vld [vmem:[#allocation2 + $0x8] sm:$0xff]
    %v284 = vld [vmem:[#allocation2 + $0x10] sm:$0xff]
    %v285 = vld [vmem:[#allocation2 + $0x18] sm:$0xff]
    %v286 = vld [vmem:[#allocation2 + $0x20] sm:$0xff]
    %v287 = vld [vmem:[#allocation2 + $0x28] sm:$0xff]
    %v288 = vld [vmem:[#allocation2 + $0x30] sm:$0xff]
    %v289 = vld [vmem:[#allocation2 + $0x38] sm:$0xff]
    %v290 = vld [vmem:[#allocation2 + $0x40] sm:$0xff]
    %v291 = vld [vmem:[#allocation2 + $0x48] sm:$0xff]
    %v292 = vld [vmem:[#allocation2 + $0x50] sm:$0xff]
    %v293 = vld [vmem:[#allocation2 + $0x58] sm:$0xff]
    %v294 = vld [vmem:[#allocation2 + $0x60] sm:$0xff]
    %v295 = vld [vmem:[#allocation2 + $0x68] sm:$0xff]
    %v296 = vld [vmem:[#allocation2 + $0x70] sm:$0xff]
    %v297 = vld [vmem:[#allocation2 + $0x78] sm:$0xff]
    %v298 = vld [vmem:[#allocation2 + $0x80] sm:$0xff]
    %v299 = vld [vmem:[#allocation2 + $0x88] sm:$0xff]
    %v300 = vld [vmem:[#allocation2 + $0x90] sm:$0xff]
    %v301 = vld [vmem:[#allocation2 + $0x98] sm:$0xff]
    %v302 = vld [vmem:[#allocation2 + $0xa0] sm:$0xff]
    %v303 = vld [vmem:[#allocation2 + $0xa8] sm:$0xff]
    %v304 = vld [vmem:[#allocation2 + $0xb0] sm:$0xff]
    %v305 = vld [vmem:[#allocation2 + $0xb8] sm:$0xff]
    %v306 = vld [vmem:[#allocation2 + $0xc0] sm:$0xff]
    %v307 = vld [vmem:[#allocation2 + $0xc8] sm:$0xff]
    %v308 = vld [vmem:[#allocation2 + $0xd0] sm:$0xff]
    %v309 = vld [vmem:[#allocation2 + $0xd8] sm:$0xff]
    %v310 = vld [vmem:[#allocation2 + $0xe0] sm:$0xff]
    %v311 = vld [vmem:[#allocation2 + $0xe8] sm:$0xff]
    %v312 = vld [vmem:[#allocation2 + $0xf0] sm:$0xff]
    %v313 = vld [vmem:[#allocation2 + $0xf8] sm:$0xff]
    %v314 = vld [vmem:[#allocation2 + $0x100] sm:$0xff]
    %v315 = vld [vmem:[#allocation2 + $0x108] sm:$0xff]
    %v316 = vld [vmem:[#allocation2 + $0x110] sm:$0xff]
    %v317 = vld [vmem:[#allocation2 + $0x118] sm:$0xff]
    %v318 = vld [vmem:[#allocation2 + $0x120] sm:$0xff]
    %v319 = vld [vmem:[#allocation2 + $0x128] sm:$0xff]
    %v320 = vld [vmem:[#allocation2 + $0x130] sm:$0xff]
    %v321 = vld [vmem:[#allocation2 + $0x138] sm:$0xff]
    %v322 = vld [vmem:[#allocation2 + $0x140] sm:$0xff]
    %v323 = vld [vmem:[#allocation2 + $0x148] sm:$0xff]
    %v324 = vld [vmem:[#allocation2 + $0x150] sm:$0xff]
    %v325 = vld [vmem:[#allocation2 + $0x158] sm:$0xff]
    %v326 = vld [vmem:[#allocation2 + $0x160] sm:$0xff]
    %v327 = vld [vmem:[#allocation2 + $0x168] sm:$0xff]
    %v328 = vld [vmem:[#allocation2 + $0x170] sm:$0xff]
    %v329 = vld [vmem:[#allocation2 + $0x178] sm:$0xff]
    %v330 = vld [vmem:[#allocation2 + $0x180] sm:$0xff]
    %v331 = vld [vmem:[#allocation2 + $0x188] sm:$0xff]
    %v332 = vld [vmem:[#allocation2 + $0x190] sm:$0xff]
    %v333 = vld [vmem:[#allocation2 + $0x198] sm:$0xff]
    %v334 = vld [vmem:[#allocation2 + $0x1a0] sm:$0xff]
    %v335 = vld [vmem:[#allocation2 + $0x1a8] sm:$0xff]
    %v336 = vld [vmem:[#allocation2 + $0x1b0] sm:$0xff]
    %v337 = vld [vmem:[#allocation2 + $0x1b8] sm:$0xff]
    %v338 = vld [vmem:[#allocation2 + $0x1c0] sm:$0xff]
    %v339 = vld [vmem:[#allocation2 + $0x1c8] sm:$0xff]
    %v340 = vld [vmem:[#allocation2 + $0x1d0] sm:$0xff]
    %v341 = vld [vmem:[#allocation2 + $0x1d8] sm:$0xff]
    %v342 = vld [vmem:[#allocation2 + $0x1e0] sm:$0xff]
    %v343 = vld [vmem:[#allocation2 + $0x1e8] sm:$0xff]
    %v344 = vld [vmem:[#allocation2 + $0x1f0] sm:$0xff]
    %v345 = vld [vmem:[#allocation2 + $0x1f8] sm:$0xff]
    %v346 = vld [vmem:[#allocation2 + $0x200] sm:$0xff]
    %v347 = vld [vmem:[#allocation2 + $0x208] sm:$0xff]
    %v348 = vld [vmem:[#allocation2 + $0x210] sm:$0xff]
    %v349 = vld [vmem:[#allocation2 + $0x218] sm:$0xff]
    %v350 = vld [vmem:[#allocation2 + $0x220] sm:$0xff]
    %v351 = vld [vmem:[#allocation2 + $0x228] sm:$0xff]
    %v352 = vld [vmem:[#allocation2 + $0x230] sm:$0xff]
    %v353 = vld [vmem:[#allocation2 + $0x238] sm:$0xff]
    %v354 = vld [vmem:[#allocation2 + $0x240] sm:$0xff]
    %v355 = vld [vmem:[#allocation2 + $0x248] sm:$0xff]
    %v356 = vld [vmem:[#allocation2 + $0x250] sm:$0xff]
    %v357 = vld [vmem:[#allocation2 + $0x258] sm:$0xff]
    %v358 = vld [vmem:[#allocation2 + $0x260] sm:$0xff]
    %v359 = vld [vmem:[#allocation2 + $0x268] sm:$0xff]
    %v360 = vld [vmem:[#allocation2 + $0x270] sm:$0xff]
    %v361 = vld [vmem:[#allocation2 + $0x278] sm:$0xff]
    %v362 = vld [vmem:[#allocation2 + $0x280] sm:$0xff]
    %v363 = vld [vmem:[#allocation2 + $0x288] sm:$0xff]
    %v364 = vld [vmem:[#allocation2 + $0x290] sm:$0xff]
    %v365 = vld [vmem:[#allocation2 + $0x298] sm:$0xff]
    %v366 = vld [vmem:[#allocation2 + $0x2a0] sm:$0xff]
    %v367 = vld [vmem:[#allocation2 + $0x2a8] sm:$0xff]
    %v368 = vld [vmem:[#allocation2 + $0x2b0] sm:$0xff]
    %v369 = vld [vmem:[#allocation2 + $0x2b8] sm:$0xff]
    %v370 = vld [vmem:[#allocation2 + $0x2c0] sm:$0xff]
    %v371 = vld [vmem:[#allocation2 + $0x2c8] sm:$0xff]
    %v372 = vld [vmem:[#allocation2 + $0x2d0] sm:$0xff]
    %v373 = vld [vmem:[#allocation2 + $0x2d8] sm:$0xff]
    %v374 = vld [vmem:[#allocation2 + $0x2e0] sm:$0xff]
    %v375 = vld [vmem:[#allocation2 + $0x2e8] sm:$0xff]
    %v376 = vld [vmem:[#allocation2 + $0x2f0] sm:$0xff]
    %v377 = vld [vmem:[#allocation2 + $0x2f8] sm:$0xff]
    %v378 = vld [vmem:[#allocation2 + $0x300] sm:$0xff]
    %v379 = vld [vmem:[#allocation2 + $0x308] sm:$0xff]
    %v380 = vld [vmem:[#allocation2 + $0x310] sm:$0xff]
    %v381 = vld [vmem:[#allocation2 + $0x318] sm:$0xff]
    %v382 = vld [vmem:[#allocation2 + $0x320] sm:$0xff]
    %v383 = vld [vmem:[#allocation2 + $0x328] sm:$0xff]
    %v384 = vld [vmem:[#allocation2 + $0x330] sm:$0xff]
    %v385 = vld [vmem:[#allocation2 + $0x338] sm:$0xff]
    %v386 = vld [vmem:[#allocation2 + $0x340] sm:$0xff]
    %v387 = vld [vmem:[#allocation2 + $0x348] sm:$0xff]
    %v388 = vld [vmem:[#allocation2 + $0x350] sm:$0xff]
    %v389 = vld [vmem:[#allocation2 + $0x358] sm:$0xff]
    %v390 = vld [vmem:[#allocation2 + $0x360] sm:$0xff]
    %v391 = vld [vmem:[#allocation2 + $0x368] sm:$0xff]
    %v392 = vld [vmem:[#allocation2 + $0x370] sm:$0xff]
    %v393 = vld [vmem:[#allocation2 + $0x378] sm:$0xff]
    %v394 = vld [vmem:[#allocation2 + $0x380] sm:$0xff]
    %v395 = vld [vmem:[#allocation2 + $0x388] sm:$0xff]
    %v396 = vld [vmem:[#allocation2 + $0x390] sm:$0xff]
    %v397 = vld [vmem:[#allocation2 + $0x398] sm:$0xff]
    %v398 = vld [vmem:[#allocation2 + $0x3a0] sm:$0xff]
    %v399 = vld [vmem:[#allocation2 + $0x3a8] sm:$0xff]
    %v400 = vld [vmem:[#allocation2 + $0x3b0] sm:$0xff]
    %v401 = vld [vmem:[#allocation2 + $0x3b8] sm:$0xff]
    %v402 = vld [vmem:[#allocation2 + $0x3c0] sm:$0xff]
    %v403 = vld [vmem:[#allocation2 + $0x3c8] sm:$0xff]
    %v404 = vld [vmem:[#allocation2 + $0x3d0] sm:$0xff]
    %v405 = vld [vmem:[#allocation2 + $0x3d8] sm:$0xff]
    %v406 = vld [vmem:[#allocation2 + $0x3e0] sm:$0xff]
    %v407 = vld [vmem:[#allocation2 + $0x3e8] sm:$0xff]
    %v408 = vld [vmem:[#allocation2 + $0x3f0] sm:$0xff]
    %v409 = vld [vmem:[#allocation2 + $0x3f8] sm:$0xff]
    %v410 = vld [vmem:[#allocation2 + $0x400] sm:$0xff]
    %v411 = vld [vmem:[#allocation2 + $0x408] sm:$0xff]
    %v412 = vld [vmem:[#allocation2 + $0x410] sm:$0xff]
    %v413 = vld [vmem:[#allocation2 + $0x418] sm:$0xff]
    %v414 = vld [vmem:[#allocation2 + $0x420] sm:$0xff]
    %v415 = vld [vmem:[#allocation2 + $0x428] sm:$0xff]
    %v416 = vld [vmem:[#allocation2 + $0x430] sm:$0xff]
    %v417 = vld [vmem:[#allocation2 + $0x438] sm:$0xff]
    %v418 = vld [vmem:[#allocation2 + $0x440] sm:$0xff]
    %v419 = vld [vmem:[#allocation2 + $0x448] sm:$0xff]
    %v420 = vld [vmem:[#allocation2 + $0x450] sm:$0xff]
    %v421 = vld [vmem:[#allocation2 + $0x458] sm:$0xff]
    %v422 = vld [vmem:[#allocation2 + $0x460] sm:$0xff]
    %v423 = vld [vmem:[#allocation2 + $0x468] sm:$0xff]
    %v424 = vld [vmem:[#allocation2 + $0x470] sm:$0xff]
    %v425 = vld [vmem:[#allocation2 + $0x478] sm:$0xff]
    %v426 = vld [vmem:[#allocation2 + $0x480] sm:$0xff]
    %v427 = vld [vmem:[#allocation2 + $0x488] sm:$0xff]
    %v428 = vld [vmem:[#allocation2 + $0x490] sm:$0xff]
    %v429 = vld [vmem:[#allocation2 + $0x498] sm:$0xff]
    %v430 = vld [vmem:[#allocation2 + $0x4a0] sm:$0xff]
    %v431 = vld [vmem:[#allocation2 + $0x4a8] sm:$0xff]
    %v432 = vld [vmem:[#allocation2 + $0x4b0] sm:$0xff]
    %v433 = vld [vmem:[#allocation2 + $0x4b8] sm:$0xff]
    %v434 = vld [vmem:[#allocation2 + $0x4c0] sm:$0xff]
    %v435 = vld [vmem:[#allocation2 + $0x4c8] sm:$0xff]
    %v436 = vld [vmem:[#allocation2 + $0x4d0] sm:$0xff]
    %v437 = vld [vmem:[#allocation2 + $0x4d8] sm:$0xff]
    %v438 = vld [vmem:[#allocation2 + $0x4e0] sm:$0xff]
    %v439 = vld [vmem:[#allocation2 + $0x4e8] sm:$0xff]
    %v440 = vld [vmem:[#allocation2 + $0x4f0] sm:$0xff]
    %v441 = vld [vmem:[#allocation2 + $0x4f8] sm:$0xff]
    %v442 = vld [vmem:[#allocation2 + $0x500] sm:$0xff]
    %v443 = vld [vmem:[#allocation2 + $0x508] sm:$0xff]
    %v444 = vld [vmem:[#allocation2 + $0x510] sm:$0xff]
    %v445 = vld [vmem:[#allocation2 + $0x518] sm:$0xff]
    %v446 = vld [vmem:[#allocation2 + $0x520] sm:$0xff]
    %v447 = vld [vmem:[#allocation2 + $0x528] sm:$0xff]
    %v448 = vld [vmem:[#allocation2 + $0x530] sm:$0xff]
    %v449 = vld [vmem:[#allocation2 + $0x538] sm:$0xff]
    %v450 = vld [vmem:[#allocation2 + $0x540] sm:$0xff]
    %v451 = vld [vmem:[#allocation2 + $0x548] sm:$0xff]
    %v452 = vld [vmem:[#allocation2 + $0x550] sm:$0xff]
    %v453 = vld [vmem:[#allocation2 + $0x558] sm:$0xff]
    %v454 = vld [vmem:[#allocation2 + $0x560] sm:$0xff]
    %v455 = vld [vmem:[#allocation2 + $0x568] sm:$0xff]
    %v456 = vld [vmem:[#allocation2 + $0x570] sm:$0xff]
    %v457 = vld [vmem:[#allocation2 + $0x578] sm:$0xff]
    %v458 = vld [vmem:[#allocation2 + $0x580] sm:$0xff]
    %v459 = vld [vmem:[#allocation2 + $0x588] sm:$0xff]
    %v460 = vld [vmem:[#allocation2 + $0x590] sm:$0xff]
    %v461 = vld [vmem:[#allocation2 + $0x598] sm:$0xff]
    %v462 = vld [vmem:[#allocation2 + $0x5a0] sm:$0xff]
    %v463 = vld [vmem:[#allocation2 + $0x5a8] sm:$0xff]
    %v464 = vld [vmem:[#allocation2 + $0x5b0] sm:$0xff]
    %v465 = vld [vmem:[#allocation2 + $0x5b8] sm:$0xff]
    %v466 = vld [vmem:[#allocation2 + $0x5c0] sm:$0xff]
    %v467 = vld [vmem:[#allocation2 + $0x5c8] sm:$0xff]
    %v468 = vld [vmem:[#allocation2 + $0x5d0] sm:$0xff]
    %v469 = vld [vmem:[#allocation2 + $0x5d8] sm:$0xff]
    %v470 = vld [vmem:[#allocation2 + $0x5e0] sm:$0xff]
    %v471 = vld [vmem:[#allocation2 + $0x5e8] sm:$0xff]
    %v472 = vld [vmem:[#allocation2 + $0x5f0] sm:$0xff]
    %v473 = vld [vmem:[#allocation2 + $0x5f8] sm:$0xff]
    %v474 = vld [vmem:[#allocation2 + $0x600] sm:$0xff]
    %v475 = vld [vmem:[#allocation2 + $0x608] sm:$0xff]
    %v476 = vld [vmem:[#allocation2 + $0x610] sm:$0xff]
    %v477 = vld [vmem:[#allocation2 + $0x618] sm:$0xff]
    %v478 = vld [vmem:[#allocation2 + $0x620] sm:$0xff]
    %v479 = vld [vmem:[#allocation2 + $0x628] sm:$0xff]
    %v480 = vld [vmem:[#allocation2 + $0x630] sm:$0xff]
    %v481 = vld [vmem:[#allocation2 + $0x638] sm:$0xff]
    %v482 = vld [vmem:[#allocation2 + $0x640] sm:$0xff]
    %v483 = vld [vmem:[#allocation2 + $0x648] sm:$0xff]
    %v484 = vld [vmem:[#allocation2 + $0x650] sm:$0xff]
    %v485 = vld [vmem:[#allocation2 + $0x658] sm:$0xff]
    %v486 = vld [vmem:[#allocation2 + $0x660] sm:$0xff]
    %v487 = vld [vmem:[#allocation2 + $0x668] sm:$0xff]
    %v488 = vld [vmem:[#allocation2 + $0x670] sm:$0xff]
    %v489 = vld [vmem:[#allocation2 + $0x678] sm:$0xff]
    %v490 = vld [vmem:[#allocation2 + $0x680] sm:$0xff]
    %v491 = vld [vmem:[#allocation2 + $0x688] sm:$0xff]
    %v492 = vld [vmem:[#allocation2 + $0x690] sm:$0xff]
    %v493 = vld [vmem:[#allocation2 + $0x698] sm:$0xff]
    %v494 = vld [vmem:[#allocation2 + $0x6a0] sm:$0xff]
    %v495 = vld [vmem:[#allocation2 + $0x6a8] sm:$0xff]
    %v496 = vld [vmem:[#allocation2 + $0x6b0] sm:$0xff]
    %v497 = vld [vmem:[#allocation2 + $0x6b8] sm:$0xff]
    %v498 = vld [vmem:[#allocation2 + $0x6c0] sm:$0xff]
    %v499 = vld [vmem:[#allocation2 + $0x6c8] sm:$0xff]
    %v500 = vld [vmem:[#allocation2 + $0x6d0] sm:$0xff]
    %v501 = vld [vmem:[#allocation2 + $0x6d8] sm:$0xff]
    %v502 = vld [vmem:[#allocation2 + $0x6e0] sm:$0xff]
    %v503 = vld [vmem:[#allocation2 + $0x6e8] sm:$0xff]
    %v504 = vld [vmem:[#allocation2 + $0x6f0] sm:$0xff]
    %v505 = vld [vmem:[#allocation2 + $0x6f8] sm:$0xff]
    %v506 = vld [vmem:[#allocation2 + $0x700] sm:$0xff]
    %v507 = vld [vmem:[#allocation2 + $0x708] sm:$0xff]
    %v508 = vld [vmem:[#allocation2 + $0x710] sm:$0xff]
    %v509 = vld [vmem:[#allocation2 + $0x718] sm:$0xff]
    %v510 = vld [vmem:[#allocation2 + $0x720] sm:$0xff]
    %v511 = vld [vmem:[#allocation2 + $0x728] sm:$0xff]
    %v512 = vld [vmem:[#allocation2 + $0x730] sm:$0xff]
    %v513 = vld [vmem:[#allocation2 + $0x738] sm:$0xff]
    %v514 = vld [vmem:[#allocation2 + $0x740] sm:$0xff]
    %v515 = vld [vmem:[#allocation2 + $0x748] sm:$0xff]
    %v516 = vld [vmem:[#allocation2 + $0x750] sm:$0xff]
    %v517 = vld [vmem:[#allocation2 + $0x758] sm:$0xff]
    %v518 = vld [vmem:[#allocation2 + $0x760] sm:$0xff]
    %v519 = vld [vmem:[#allocation2 + $0x768] sm:$0xff]
    %v520 = vld [vmem:[#allocation2 + $0x770] sm:$0xff]
    %v521 = vld [vmem:[#allocation2 + $0x778] sm:$0xff]
    %v522 = vld [vmem:[#allocation2 + $0x780] sm:$0xff]
    %v523 = vld [vmem:[#allocation2 + $0x788] sm:$0xff]
    %v524 = vld [vmem:[#allocation2 + $0x790] sm:$0xff]
    %v525 = vld [vmem:[#allocation2 + $0x798] sm:$0xff]
    %v526 = vld [vmem:[#allocation2 + $0x7a0] sm:$0xff]
    %v527 = vld [vmem:[#allocation2 + $0x7a8] sm:$0xff]
    %v528 = vld [vmem:[#allocation2 + $0x7b0] sm:$0xff]
    %v529 = vld [vmem:[#allocation2 + $0x7b8] sm:$0xff]
    %v530 = vld [vmem:[#allocation2 + $0x7c0] sm:$0xff]
    %v531 = vld [vmem:[#allocation2 + $0x7c8] sm:$0xff]
    %v532 = vld [vmem:[#allocation2 + $0x7d0] sm:$0xff]
    %v533 = vld [vmem:[#allocation2 + $0x7d8] sm:$0xff]
    %v534 = vld [vmem:[#allocation2 + $0x7e0] sm:$0xff]
    %v535 = vld [vmem:[#allocation2 + $0x7e8] sm:$0xff]
    %v536 = vld [vmem:[#allocation2 + $0x7f0] sm:$0xff]
    %v537 = vld [vmem:[#allocation2 + $0x7f8] sm:$0xff]
    %v538 = vld [vmem:[%s0] sm:$0xff]
    %v539 = vld [vmem:[%s0 + $0x8] sm:$0xff]
    %v540 = vld [vmem:[%s0 + $0x10] sm:$0xff]
    %v541 = vld [vmem:[%s0 + $0x18] sm:$0xff]
    %v542 = vld [vmem:[%s0 + $0x20] sm:$0xff]
    %v543 = vld [vmem:[%s0 + $0x28] sm:$0xff]
    %v544 = vld [vmem:[%s0 + $0x30] sm:$0xff]
    %v545 = vld [vmem:[%s0 + $0x38] sm:$0xff]
    %v546 = vld [vmem:[%s0 + $0x40] sm:$0xff]
    %v547 = vld [vmem:[%s0 + $0x48] sm:$0xff]
    %v548 = vld [vmem:[%s0 + $0x50] sm:$0xff]
    %v549 = vld [vmem:[%s0 + $0x58] sm:$0xff]
    %v550 = vld [vmem:[%s0 + $0x60] sm:$0xff]
    %v551 = vld [vmem:[%s0 + $0x68] sm:$0xff]
    %v552 = vld [vmem:[%s0 + $0x70] sm:$0xff]
    %v553 = vld [vmem:[%s0 + $0x78] sm:$0xff]
    %v554 = vld [vmem:[%s0 + $0x80] sm:$0xff]
    %v555 = vld [vmem:[%s0 + $0x88] sm:$0xff]
    %v556 = vld [vmem:[%s0 + $0x90] sm:$0xff]
    %v557 = vld [vmem:[%s0 + $0x98] sm:$0xff]
    %v558 = vld [vmem:[%s0 + $0xa0] sm:$0xff]
    %v559 = vld [vmem:[%s0 + $0xa8] sm:$0xff]
    %v560 = vld [vmem:[%s0 + $0xb0] sm:$0xff]
    %v561 = vld [vmem:[%s0 + $0xb8] sm:$0xff]
    %v562 = vld [vmem:[%s0 + $0xc0] sm:$0xff]
    %v563 = vld [vmem:[%s0 + $0xc8] sm:$0xff]
    %v564 = vld [vmem:[%s0 + $0xd0] sm:$0xff]
    %v565 = vld [vmem:[%s0 + $0xd8] sm:$0xff]
    %v566 = vld [vmem:[%s0 + $0xe0] sm:$0xff]
    %v567 = vld [vmem:[%s0 + $0xe8] sm:$0xff]
    %v568 = vld [vmem:[%s0 + $0xf0] sm:$0xff]
    %v569 = vld [vmem:[%s0 + $0xf8] sm:$0xff]
    %v570 = vld [vmem:[%s0 + $0x100] sm:$0xff]
    %v571 = vld [vmem:[%s0 + $0x108] sm:$0xff]
    %v572 = vld [vmem:[%s0 + $0x110] sm:$0xff]
    %v573 = vld [vmem:[%s0 + $0x118] sm:$0xff]
    %v574 = vld [vmem:[%s0 + $0x120] sm:$0xff]
    %v575 = vld [vmem:[%s0 + $0x128] sm:$0xff]
    %v576 = vld [vmem:[%s0 + $0x130] sm:$0xff]
    %v577 = vld [vmem:[%s0 + $0x138] sm:$0xff]
    %v578 = vld [vmem:[%s0 + $0x140] sm:$0xff]
    %v579 = vld [vmem:[%s0 + $0x148] sm:$0xff]
    %v580 = vld [vmem:[%s0 + $0x150] sm:$0xff]
    %v581 = vld [vmem:[%s0 + $0x158] sm:$0xff]
    %v582 = vld [vmem:[%s0 + $0x160] sm:$0xff]
    %v583 = vld [vmem:[%s0 + $0x168] sm:$0xff]
    %v584 = vld [vmem:[%s0 + $0x170] sm:$0xff]
    %v585 = vld [vmem:[%s0 + $0x178] sm:$0xff]
    %v586 = vld [vmem:[%s0 + $0x180] sm:$0xff]
    %v587 = vld [vmem:[%s0 + $0x188] sm:$0xff]
    %v588 = vld [vmem:[%s0 + $0x190] sm:$0xff]
    %v589 = vld [vmem:[%s0 + $0x198] sm:$0xff]
    %v590 = vld [vmem:[%s0 + $0x1a0] sm:$0xff]
    %v591 = vld [vmem:[%s0 + $0x1a8] sm:$0xff]
    %v592 = vld [vmem:[%s0 + $0x1b0] sm:$0xff]
    %v593 = vld [vmem:[%s0 + $0x1b8] sm:$0xff]
    %v594 = vld [vmem:[%s0 + $0x1c0] sm:$0xff]
    %v595 = vld [vmem:[%s0 + $0x1c8] sm:$0xff]
    %v596 = vld [vmem:[%s0 + $0x1d0] sm:$0xff]
    %v597 = vld [vmem:[%s0 + $0x1d8] sm:$0xff]
    %v598 = vld [vmem:[%s0 + $0x1e0] sm:$0xff]
    %v599 = vld [vmem:[%s0 + $0x1e8] sm:$0xff]
    %v600 = vld [vmem:[%s0 + $0x1f0] sm:$0xff]
    %v601 = vld [vmem:[%s0 + $0x1f8] sm:$0xff]
    %v602 = vld [vmem:[%s0 + $0x200] sm:$0xff]
    %v603 = vld [vmem:[%s0 + $0x208] sm:$0xff]
    %v604 = vld [vmem:[%s0 + $0x210] sm:$0xff]
    %v605 = vld [vmem:[%s0 + $0x218] sm:$0xff]
    %v606 = vld [vmem:[%s0 + $0x220] sm:$0xff]
    %v607 = vld [vmem:[%s0 + $0x228] sm:$0xff]
    %v608 = vld [vmem:[%s0 + $0x230] sm:$0xff]
    %v609 = vld [vmem:[%s0 + $0x238] sm:$0xff]
    %v610 = vld [vmem:[%s0 + $0x240] sm:$0xff]
    %v611 = vld [vmem:[%s0 + $0x248] sm:$0xff]
    %v612 = vld [vmem:[%s0 + $0x250] sm:$0xff]
    %v613 = vld [vmem:[%s0 + $0x258] sm:$0xff]
    %v614 = vld [vmem:[%s0 + $0x260] sm:$0xff]
    %v615 = vld [vmem:[%s0 + $0x268] sm:$0xff]
    %v616 = vld [vmem:[%s0 + $0x270] sm:$0xff]
    %v617 = vld [vmem:[%s0 + $0x278] sm:$0xff]
    %v618 = vld [vmem:[%s0 + $0x280] sm:$0xff]
    %v619 = vld [vmem:[%s0 + $0x288] sm:$0xff]
    %v620 = vld [vmem:[%s0 + $0x290] sm:$0xff]
    %v621 = vld [vmem:[%s0 + $0x298] sm:$0xff]
    %v622 = vld [vmem:[%s0 + $0x2a0] sm:$0xff]
    %v623 = vld [vmem:[%s0 + $0x2a8] sm:$0xff]
    %v624 = vld [vmem:[%s0 + $0x2b0] sm:$0xff]
    %v625 = vld [vmem:[%s0 + $0x2b8] sm:$0xff]
    %v626 = vld [vmem:[%s0 + $0x2c0] sm:$0xff]
    %v627 = vld [vmem:[%s0 + $0x2c8] sm:$0xff]
    %v628 = vld [vmem:[%s0 + $0x2d0] sm:$0xff]
    %v629 = vld [vmem:[%s0 + $0x2d8] sm:$0xff]
    %v630 = vld [vmem:[%s0 + $0x2e0] sm:$0xff]
    %v631 = vld [vmem:[%s0 + $0x2e8] sm:$0xff]
    %v632 = vld [vmem:[%s0 + $0x2f0] sm:$0xff]
    %v633 = vld [vmem:[%s0 + $0x2f8] sm:$0xff]
    %v634 = vld [vmem:[%s0 + $0x300] sm:$0xff]
    %v635 = vld [vmem:[%s0 + $0x308] sm:$0xff]
    %v636 = vld [vmem:[%s0 + $0x310] sm:$0xff]
    %v637 = vld [vmem:[%s0 + $0x318] sm:$0xff]
    %v638 = vld [vmem:[%s0 + $0x320] sm:$0xff]
    %v639 = vld [vmem:[%s0 + $0x328] sm:$0xff]
    %v640 = vld [vmem:[%s0 + $0x330] sm:$0xff]
    %v641 = vld [vmem:[%s0 + $0x338] sm:$0xff]
    %v642 = vld [vmem:[%s0 + $0x340] sm:$0xff]
    %v643 = vld [vmem:[%s0 + $0x348] sm:$0xff]
    %v644 = vld [vmem:[%s0 + $0x350] sm:$0xff]
    %v645 = vld [vmem:[%s0 + $0x358] sm:$0xff]
    %v646 = vld [vmem:[%s0 + $0x360] sm:$0xff]
    %v647 = vld [vmem:[%s0 + $0x368] sm:$0xff]
    %v648 = vld [vmem:[%s0 + $0x370] sm:$0xff]
    %v649 = vld [vmem:[%s0 + $0x378] sm:$0xff]
    %v650 = vld [vmem:[%s0 + $0x380] sm:$0xff]
    %v651 = vld [vmem:[%s0 + $0x388] sm:$0xff]
    %v652 = vld [vmem:[%s0 + $0x390] sm:$0xff]
    %v653 = vld [vmem:[%s0 + $0x398] sm:$0xff]
    %v654 = vld [vmem:[%s0 + $0x3a0] sm:$0xff]
    %v655 = vld [vmem:[%s0 + $0x3a8] sm:$0xff]
    %v656 = vld [vmem:[%s0 + $0x3b0] sm:$0xff]
    %v657 = vld [vmem:[%s0 + $0x3b8] sm:$0xff]
    %v658 = vld [vmem:[%s0 + $0x3c0] sm:$0xff]
    %v659 = vld [vmem:[%s0 + $0x3c8] sm:$0xff]
    %v660 = vld [vmem:[%s0 + $0x3d0] sm:$0xff]
    %v661 = vld [vmem:[%s0 + $0x3d8] sm:$0xff]
    %v662 = vld [vmem:[%s0 + $0x3e0] sm:$0xff]
    %v663 = vld [vmem:[%s0 + $0x3e8] sm:$0xff]
    %v664 = vld [vmem:[%s0 + $0x3f0] sm:$0xff]
    %v665 = vld [vmem:[%s0 + $0x3f8] sm:$0xff]
    %v666 = vld [vmem:[%s0 + $0x400] sm:$0xff]
    %v667 = vld [vmem:[%s0 + $0x408] sm:$0xff]
    %v668 = vld [vmem:[%s0 + $0x410] sm:$0xff]
    %v669 = vld [vmem:[%s0 + $0x418] sm:$0xff]
    %v670 = vld [vmem:[%s0 + $0x420] sm:$0xff]
    %v671 = vld [vmem:[%s0 + $0x428] sm:$0xff]
    %v672 = vld [vmem:[%s0 + $0x430] sm:$0xff]
    %v673 = vld [vmem:[%s0 + $0x438] sm:$0xff]
    %v674 = vld [vmem:[%s0 + $0x440] sm:$0xff]
    %v675 = vld [vmem:[%s0 + $0x448] sm:$0xff]
    %v676 = vld [vmem:[%s0 + $0x450] sm:$0xff]
    %v677 = vld [vmem:[%s0 + $0x458] sm:$0xff]
    %v678 = vld [vmem:[%s0 + $0x460] sm:$0xff]
    %v679 = vld [vmem:[%s0 + $0x468] sm:$0xff]
    %v680 = vld [vmem:[%s0 + $0x470] sm:$0xff]
    %v681 = vld [vmem:[%s0 + $0x478] sm:$0xff]
    %v682 = vld [vmem:[%s0 + $0x480] sm:$0xff]
    %v683 = vld [vmem:[%s0 + $0x488] sm:$0xff]
    %v684 = vld [vmem:[%s0 + $0x490] sm:$0xff]
    %v685 = vld [vmem:[%s0 + $0x498] sm:$0xff]
    %v686 = vld [vmem:[%s0 + $0x4a0] sm:$0xff]
    %v687 = vld [vmem:[%s0 + $0x4a8] sm:$0xff]
    %v688 = vld [vmem:[%s0 + $0x4b0] sm:$0xff]
    %v689 = vld [vmem:[%s0 + $0x4b8] sm:$0xff]
    %v690 = vld [vmem:[%s0 + $0x4c0] sm:$0xff]
    %v691 = vld [vmem:[%s0 + $0x4c8] sm:$0xff]
    %v692 = vld [vmem:[%s0 + $0x4d0] sm:$0xff]
    %v693 = vld [vmem:[%s0 + $0x4d8] sm:$0xff]
    %v694 = vld [vmem:[%s0 + $0x4e0] sm:$0xff]
    %v695 = vld [vmem:[%s0 + $0x4e8] sm:$0xff]
    %v696 = vld [vmem:[%s0 + $0x4f0] sm:$0xff]
    %v697 = vld [vmem:[%s0 + $0x4f8] sm:$0xff]
    %v698 = vld [vmem:[%s0 + $0x500] sm:$0xff]
    %v699 = vld [vmem:[%s0 + $0x508] sm:$0xff]
    %v700 = vld [vmem:[%s0 + $0x510] sm:$0xff]
    %v701 = vld [vmem:[%s0 + $0x518] sm:$0xff]
    %v702 = vld [vmem:[%s0 + $0x520] sm:$0xff]
    %v703 = vld [vmem:[%s0 + $0x528] sm:$0xff]
    %v704 = vld [vmem:[%s0 + $0x530] sm:$0xff]
    %v705 = vld [vmem:[%s0 + $0x538] sm:$0xff]
    %v706 = vld [vmem:[%s0 + $0x540] sm:$0xff]
    %v707 = vld [vmem:[%s0 + $0x548] sm:$0xff]
    %v708 = vld [vmem:[%s0 + $0x550] sm:$0xff]
    %v709 = vld [vmem:[%s0 + $0x558] sm:$0xff]
    %v710 = vld [vmem:[%s0 + $0x560] sm:$0xff]
    %v711 = vld [vmem:[%s0 + $0x568] sm:$0xff]
    %v712 = vld [vmem:[%s0 + $0x570] sm:$0xff]
    %v713 = vld [vmem:[%s0 + $0x578] sm:$0xff]
    %v714 = vld [vmem:[%s0 + $0x580] sm:$0xff]
    %v715 = vld [vmem:[%s0 + $0x588] sm:$0xff]
    %v716 = vld [vmem:[%s0 + $0x590] sm:$0xff]
    %v717 = vld [vmem:[%s0 + $0x598] sm:$0xff]
    %v718 = vld [vmem:[%s0 + $0x5a0] sm:$0xff]
    %v719 = vld [vmem:[%s0 + $0x5a8] sm:$0xff]
    %v720 = vld [vmem:[%s0 + $0x5b0] sm:$0xff]
    %v721 = vld [vmem:[%s0 + $0x5b8] sm:$0xff]
    %v722 = vld [vmem:[%s0 + $0x5c0] sm:$0xff]
    %v723 = vld [vmem:[%s0 + $0x5c8] sm:$0xff]
    %v724 = vld [vmem:[%s0 + $0x5d0] sm:$0xff]
    %v725 = vld [vmem:[%s0 + $0x5d8] sm:$0xff]
    %v726 = vld [vmem:[%s0 + $0x5e0] sm:$0xff]
    %v727 = vld [vmem:[%s0 + $0x5e8] sm:$0xff]
    %v728 = vld [vmem:[%s0 + $0x5f0] sm:$0xff]
    %v729 = vld [vmem:[%s0 + $0x5f8] sm:$0xff]
    %v730 = vld [vmem:[%s0 + $0x600] sm:$0xff]
    %v731 = vld [vmem:[%s0 + $0x608] sm:$0xff]
    %v732 = vld [vmem:[%s0 + $0x610] sm:$0xff]
    %v733 = vld [vmem:[%s0 + $0x618] sm:$0xff]
    %v734 = vld [vmem:[%s0 + $0x620] sm:$0xff]
    %v735 = vld [vmem:[%s0 + $0x628] sm:$0xff]
    %v736 = vld [vmem:[%s0 + $0x630] sm:$0xff]
    %v737 = vld [vmem:[%s0 + $0x638] sm:$0xff]
    %v738 = vld [vmem:[%s0 + $0x640] sm:$0xff]
    %v739 = vld [vmem:[%s0 + $0x648] sm:$0xff]
    %v740 = vld [vmem:[%s0 + $0x650] sm:$0xff]
    %v741 = vld [vmem:[%s0 + $0x658] sm:$0xff]
    %v742 = vld [vmem:[%s0 + $0x660] sm:$0xff]
    %v743 = vld [vmem:[%s0 + $0x668] sm:$0xff]
    %v744 = vld [vmem:[%s0 + $0x670] sm:$0xff]
    %v745 = vld [vmem:[%s0 + $0x678] sm:$0xff]
    %v746 = vld [vmem:[%s0 + $0x680] sm:$0xff]
    %v747 = vld [vmem:[%s0 + $0x688] sm:$0xff]
    %v748 = vld [vmem:[%s0 + $0x690] sm:$0xff]
    %v749 = vld [vmem:[%s0 + $0x698] sm:$0xff]
    %v750 = vld [vmem:[%s0 + $0x6a0] sm:$0xff]
    %v751 = vld [vmem:[%s0 + $0x6a8] sm:$0xff]
    %v752 = vld [vmem:[%s0 + $0x6b0] sm:$0xff]
    %v753 = vld [vmem:[%s0 + $0x6b8] sm:$0xff]
    %v754 = vld [vmem:[%s0 + $0x6c0] sm:$0xff]
    %v755 = vld [vmem:[%s0 + $0x6c8] sm:$0xff]
    %v756 = vld [vmem:[%s0 + $0x6d0] sm:$0xff]
    %v757 = vld [vmem:[%s0 + $0x6d8] sm:$0xff]
    %v758 = vld [vmem:[%s0 + $0x6e0] sm:$0xff]
    %v759 = vld [vmem:[%s0 + $0x6e8] sm:$0xff]
    %v760 = vld [vmem:[%s0 + $0x6f0] sm:$0xff]
    %v761 = vld [vmem:[%s0 + $0x6f8] sm:$0xff]
    %v762 = vld [vmem:[%s0 + $0x700] sm:$0xff]
    %v763 = vld [vmem:[%s0 + $0x708] sm:$0xff]
    %v764 = vld [vmem:[%s0 + $0x710] sm:$0xff]
    %v765 = vld [vmem:[%s0 + $0x718] sm:$0xff]
    %v766 = vld [vmem:[%s0 + $0x720] sm:$0xff]
    %v767 = vld [vmem:[%s0 + $0x728] sm:$0xff]
    %v768 = vld [vmem:[%s0 + $0x730] sm:$0xff]
    %v769 = vld [vmem:[%s0 + $0x738] sm:$0xff]
    %v770 = vld [vmem:[%s0 + $0x740] sm:$0xff]
    %v771 = vld [vmem:[%s0 + $0x748] sm:$0xff]
    %v772 = vld [vmem:[%s0 + $0x750] sm:$0xff]
    %v773 = vld [vmem:[%s0 + $0x758] sm:$0xff]
    %v774 = vld [vmem:[%s0 + $0x760] sm:$0xff]
    %v775 = vld [vmem:[%s0 + $0x768] sm:$0xff]
    %v776 = vld [vmem:[%s0 + $0x770] sm:$0xff]
    %v777 = vld [vmem:[%s0 + $0x778] sm:$0xff]
    %v778 = vld [vmem:[%s0 + $0x780] sm:$0xff]
    %v779 = vld [vmem:[%s0 + $0x788] sm:$0xff]
    %v780 = vld [vmem:[%s0 + $0x790] sm:$0xff]
    %v781 = vld [vmem:[%s0 + $0x798] sm:$0xff]
    %v782 = vld [vmem:[%s0 + $0x7a0] sm:$0xff]
    %v783 = vld [vmem:[%s0 + $0x7a8] sm:$0xff]
    %v784 = vld [vmem:[%s0 + $0x7b0] sm:$0xff]
    %v785 = vld [vmem:[%s0 + $0x7b8] sm:$0xff]
    %v786 = vld [vmem:[%s0 + $0x7c0] sm:$0xff]
    %v787 = vld [vmem:[%s0 + $0x7c8] sm:$0xff]
    %v788 = vld [vmem:[%s0 + $0x7d0] sm:$0xff]
    %v789 = vld [vmem:[%s0 + $0x7d8] sm:$0xff]
    %v790 = vld [vmem:[%s0 + $0x7e0] sm:$0xff]
    %v791 = vld [vmem:[%s0 + $0x7e8] sm:$0xff]
    %v792 = vld [vmem:[%s0 + $0x7f0] sm:$0xff]
    %v793 = vld [vmem:[%s0 + $0x7f8] sm:$0xff]
    %v794 = vld [vmem:[%s1] sm:$0xf]
    %v795 = vld [vmem:[%s1 + $0x4] sm:$0xf]
    %v796 = vld [vmem:[%s1 + $0x8] sm:$0xf]
    %v797 = vld [vmem:[%s1 + $0xc] sm:$0xf]
    %v798 = vld [vmem:[%s1 + $0x10] sm:$0xf]
    %v799 = vld [vmem:[%s1 + $0x14] sm:$0xf]
    %v800 = vld [vmem:[%s1 + $0x18] sm:$0xf]
    %v801 = vld [vmem:[%s1 + $0x1c] sm:$0xf]
    %v802 = vld [vmem:[%s1 + $0x20] sm:$0xf]
    %v803 = vld [vmem:[%s1 + $0x24] sm:$0xf]
    %v804 = vld [vmem:[%s1 + $0x28] sm:$0xf]
    %v805 = vld [vmem:[%s1 + $0x2c] sm:$0xf]
    %v806 = vld [vmem:[%s1 + $0x30] sm:$0xf]
    %v807 = vld [vmem:[%s1 + $0x34] sm:$0xf]
    %v808 = vld [vmem:[%s1 + $0x38] sm:$0xf]
    %v809 = vld [vmem:[%s1 + $0x3c] sm:$0xf]
    %v810 = vld [vmem:[%s1 + $0x40] sm:$0xf]
    %v811 = vld [vmem:[%s1 + $0x44] sm:$0xf]
    %v812 = vld [vmem:[%s1 + $0x48] sm:$0x3]
    %v1069 = vunpack.c.l.b16 %v538
    %v1070 = vunpack.c.h.b16 %v538
    %v1071 = vunpack.c.l.b16 %v539
    %v1072 = vunpack.c.h.b16 %v539
    %v1073 = vunpack.c.l.b16 %v540
    %v1074 = vunpack.c.h.b16 %v540
    %v1075 = vunpack.c.l.b16 %v541
    %v1076 = vunpack.c.h.b16 %v541
    %v1077 = vunpack.c.l.b16 %v542
    %v1078 = vunpack.c.h.b16 %v542
    %v1079 = vunpack.c.l.b16 %v543
    %v1080 = vunpack.c.h.b16 %v543
    %v1081 = vunpack.c.l.b16 %v544
    %v1082 = vunpack.c.h.b16 %v544
    %v1083 = vunpack.c.l.b16 %v545
    %v1084 = vunpack.c.h.b16 %v545
    %v1085 = vunpack.c.l.b16 %v546
    %v1086 = vunpack.c.h.b16 %v546
    %v1087 = vunpack.c.l.b16 %v547
    %v1088 = vunpack.c.h.b16 %v547
    %v1089 = vunpack.c.l.b16 %v548
    %v1090 = vunpack.c.h.b16 %v548
    %v1091 = vunpack.c.l.b16 %v549
    %v1092 = vunpack.c.h.b16 %v549
    %v1093 = vunpack.c.l.b16 %v550
    %v1094 = vunpack.c.h.b16 %v550
    %v1095 = vunpack.c.l.b16 %v551
    %v1096 = vunpack.c.h.b16 %v551
    %v1097 = vunpack.c.l.b16 %v552
    %v1098 = vunpack.c.h.b16 %v552
    %v1099 = vunpack.c.l.b16 %v553
    %v1100 = vunpack.c.h.b16 %v553
    %v1101 = vunpack.c.l.b16 %v554
    %v1102 = vunpack.c.h.b16 %v554
    %v1103 = vunpack.c.l.b16 %v555
    %v1104 = vunpack.c.h.b16 %v555
    %v1105 = vunpack.c.l.b16 %v556
    %v1106 = vunpack.c.h.b16 %v556
    %v1107 = vunpack.c.l.b16 %v557
    %v1108 = vunpack.c.h.b16 %v557
    %v1109 = vunpack.c.l.b16 %v558
    %v1110 = vunpack.c.h.b16 %v558
    %v1111 = vunpack.c.l.b16 %v559
    %v1112 = vunpack.c.h.b16 %v559
    %v1113 = vunpack.c.l.b16 %v560
    %v1114 = vunpack.c.h.b16 %v560
    %v1115 = vunpack.c.l.b16 %v561
    %v1116 = vunpack.c.h.b16 %v561
    %v1117 = vunpack.c.l.b16 %v562
    %v1118 = vunpack.c.h.b16 %v562
    %v1119 = vunpack.c.l.b16 %v563
    %v1120 = vunpack.c.h.b16 %v563
    %v1121 = vunpack.c.l.b16 %v564
    %v1122 = vunpack.c.h.b16 %v564
    %v1123 = vunpack.c.l.b16 %v565
    %v1124 = vunpack.c.h.b16 %v565
    %v1125 = vunpack.c.l.b16 %v566
    %v1126 = vunpack.c.h.b16 %v566
    %v1127 = vunpack.c.l.b16 %v567
    %v1128 = vunpack.c.h.b16 %v567
    %v1129 = vunpack.c.l.b16 %v568
    %v1130 = vunpack.c.h.b16 %v568
    %v1131 = vunpack.c.l.b16 %v569
    %v1132 = vunpack.c.h.b16 %v569
    %v1133 = vunpack.c.l.b16 %v570
    %v1134 = vunpack.c.h.b16 %v570
    %v1135 = vunpack.c.l.b16 %v571
    %v1136 = vunpack.c.h.b16 %v571
    %v1137 = vunpack.c.l.b16 %v572
    %v1138 = vunpack.c.h.b16 %v572
    %v1139 = vunpack.c.l.b16 %v573
    %v1140 = vunpack.c.h.b16 %v573
    %v1141 = vunpack.c.l.b16 %v574
    %v1142 = vunpack.c.h.b16 %v574
    %v1143 = vunpack.c.l.b16 %v575
    %v1144 = vunpack.c.h.b16 %v575
    %v1145 = vunpack.c.l.b16 %v576
    %v1146 = vunpack.c.h.b16 %v576
    %v1147 = vunpack.c.l.b16 %v577
    %v1148 = vunpack.c.h.b16 %v577
    %v1149 = vunpack.c.l.b16 %v578
    %v1150 = vunpack.c.h.b16 %v578
    %v1151 = vunpack.c.l.b16 %v579
    %v1152 = vunpack.c.h.b16 %v579
    %v1153 = vunpack.c.l.b16 %v580
    %v1154 = vunpack.c.h.b16 %v580
    %v1155 = vunpack.c.l.b16 %v581
    %v1156 = vunpack.c.h.b16 %v581
    %v1157 = vunpack.c.l.b16 %v582
    %v1158 = vunpack.c.h.b16 %v582
    %v1159 = vunpack.c.l.b16 %v583
    %v1160 = vunpack.c.h.b16 %v583
    %v1161 = vunpack.c.l.b16 %v584
    %v1162 = vunpack.c.h.b16 %v584
    %v1163 = vunpack.c.l.b16 %v585
    %v1164 = vunpack.c.h.b16 %v585
    %v1165 = vunpack.c.l.b16 %v586
    %v1166 = vunpack.c.h.b16 %v586
    %v1167 = vunpack.c.l.b16 %v587
    %v1168 = vunpack.c.h.b16 %v587
    %v1169 = vunpack.c.l.b16 %v588
    %v1170 = vunpack.c.h.b16 %v588
    %v1171 = vunpack.c.l.b16 %v589
    %v1172 = vunpack.c.h.b16 %v589
    %v1173 = vunpack.c.l.b16 %v590
    %v1174 = vunpack.c.h.b16 %v590
    %v1175 = vunpack.c.l.b16 %v591
    %v1176 = vunpack.c.h.b16 %v591
    %v1177 = vunpack.c.l.b16 %v592
    %v1178 = vunpack.c.h.b16 %v592
    %v1179 = vunpack.c.l.b16 %v593
    %v1180 = vunpack.c.h.b16 %v593
    %v1181 = vunpack.c.l.b16 %v594
    %v1182 = vunpack.c.h.b16 %v594
    %v1183 = vunpack.c.l.b16 %v595
    %v1184 = vunpack.c.h.b16 %v595
    %v1185 = vunpack.c.l.b16 %v596
    %v1186 = vunpack.c.h.b16 %v596
    %v1187 = vunpack.c.l.b16 %v597
    %v1188 = vunpack.c.h.b16 %v597
    %v1189 = vunpack.c.l.b16 %v598
    %v1190 = vunpack.c.h.b16 %v598
    %v1191 = vunpack.c.l.b16 %v599
    %v1192 = vunpack.c.h.b16 %v599
    %v1193 = vunpack.c.l.b16 %v600
    %v1194 = vunpack.c.h.b16 %v600
    %v1195 = vunpack.c.l.b16 %v601
    %v1196 = vunpack.c.h.b16 %v601
    %v1197 = vunpack.c.l.b16 %v602
    %v1198 = vunpack.c.h.b16 %v602
    %v1199 = vunpack.c.l.b16 %v603
    %v1200 = vunpack.c.h.b16 %v603
    %v1201 = vunpack.c.l.b16 %v604
    %v1202 = vunpack.c.h.b16 %v604
    %v1203 = vunpack.c.l.b16 %v605
    %v1204 = vunpack.c.h.b16 %v605
    %v1205 = vunpack.c.l.b16 %v606
    %v1206 = vunpack.c.h.b16 %v606
    %v1207 = vunpack.c.l.b16 %v607
    %v1208 = vunpack.c.h.b16 %v607
    %v1209 = vunpack.c.l.b16 %v608
    %v1210 = vunpack.c.h.b16 %v608
    %v1211 = vunpack.c.l.b16 %v609
    %v1212 = vunpack.c.h.b16 %v609
    %v1213 = vunpack.c.l.b16 %v610
    %v1214 = vunpack.c.h.b16 %v610
    %v1215 = vunpack.c.l.b16 %v611
    %v1216 = vunpack.c.h.b16 %v611
    %v1217 = vunpack.c.l.b16 %v612
    %v1218 = vunpack.c.h.b16 %v612
    %v1219 = vunpack.c.l.b16 %v613
    %v1220 = vunpack.c.h.b16 %v613
    %v1221 = vunpack.c.l.b16 %v614
    %v1222 = vunpack.c.h.b16 %v614
    %v1223 = vunpack.c.l.b16 %v615
    %v1224 = vunpack.c.h.b16 %v615
    %v1225 = vunpack.c.l.b16 %v616
    %v1226 = vunpack.c.h.b16 %v616
    %v1227 = vunpack.c.l.b16 %v617
    %v1228 = vunpack.c.h.b16 %v617
    %v1229 = vunpack.c.l.b16 %v618
    %v1230 = vunpack.c.h.b16 %v618
    %v1231 = vunpack.c.l.b16 %v619
    %v1232 = vunpack.c.h.b16 %v619
    %v1233 = vunpack.c.l.b16 %v620
    %v1234 = vunpack.c.h.b16 %v620
    %v1235 = vunpack.c.l.b16 %v621
    %v1236 = vunpack.c.h.b16 %v621
    %v1237 = vunpack.c.l.b16 %v622
    %v1238 = vunpack.c.h.b16 %v622
    %v1239 = vunpack.c.l.b16 %v623
    %v1240 = vunpack.c.h.b16 %v623
    %v1241 = vunpack.c.l.b16 %v624
    %v1242 = vunpack.c.h.b16 %v624
    %v1243 = vunpack.c.l.b16 %v625
    %v1244 = vunpack.c.h.b16 %v625
    %v1245 = vunpack.c.l.b16 %v626
    %v1246 = vunpack.c.h.b16 %v626
    %v1247 = vunpack.c.l.b16 %v627
    %v1248 = vunpack.c.h.b16 %v627
    %v1249 = vunpack.c.l.b16 %v628
    %v1250 = vunpack.c.h.b16 %v628
    %v1251 = vunpack.c.l.b16 %v629
    %v1252 = vunpack.c.h.b16 %v629
    %v1253 = vunpack.c.l.b16 %v630
    %v1254 = vunpack.c.h.b16 %v630
    %v1255 = vunpack.c.l.b16 %v631
    %v1256 = vunpack.c.h.b16 %v631
    %v1257 = vunpack.c.l.b16 %v632
    %v1258 = vunpack.c.h.b16 %v632
    %v1259 = vunpack.c.l.b16 %v633
    %v1260 = vunpack.c.h.b16 %v633
    %v1261 = vunpack.c.l.b16 %v634
    %v1262 = vunpack.c.h.b16 %v634
    %v1263 = vunpack.c.l.b16 %v635
    %v1264 = vunpack.c.h.b16 %v635
    %v1265 = vunpack.c.l.b16 %v636
    %v1266 = vunpack.c.h.b16 %v636
    %v1267 = vunpack.c.l.b16 %v637
    %v1268 = vunpack.c.h.b16 %v637
    %v1269 = vunpack.c.l.b16 %v638
    %v1270 = vunpack.c.h.b16 %v638
    %v1271 = vunpack.c.l.b16 %v639
    %v1272 = vunpack.c.h.b16 %v639
    %v1273 = vunpack.c.l.b16 %v640
    %v1274 = vunpack.c.h.b16 %v640
    %v1275 = vunpack.c.l.b16 %v641
    %v1276 = vunpack.c.h.b16 %v641
    %v1277 = vunpack.c.l.b16 %v642
    %v1278 = vunpack.c.h.b16 %v642
    %v1279 = vunpack.c.l.b16 %v643
    %v1280 = vunpack.c.h.b16 %v643
    %v1281 = vunpack.c.l.b16 %v644
    %v1282 = vunpack.c.h.b16 %v644
    %v1283 = vunpack.c.l.b16 %v645
    %v1284 = vunpack.c.h.b16 %v645
    %v1285 = vunpack.c.l.b16 %v646
    %v1286 = vunpack.c.h.b16 %v646
    %v1287 = vunpack.c.l.b16 %v647
    %v1288 = vunpack.c.h.b16 %v647
    %v1289 = vunpack.c.l.b16 %v648
    %v1290 = vunpack.c.h.b16 %v648
    %v1291 = vunpack.c.l.b16 %v649
    %v1292 = vunpack.c.h.b16 %v649
    %v1293 = vunpack.c.l.b16 %v650
    %v1294 = vunpack.c.h.b16 %v650
    %v1295 = vunpack.c.l.b16 %v651
    %v1296 = vunpack.c.h.b16 %v651
    %v1297 = vunpack.c.l.b16 %v652
    %v1298 = vunpack.c.h.b16 %v652
    %v1299 = vunpack.c.l.b16 %v653
    %v1300 = vunpack.c.h.b16 %v653
    %v1301 = vunpack.c.l.b16 %v654
    %v1302 = vunpack.c.h.b16 %v654
    %v1303 = vunpack.c.l.b16 %v655
    %v1304 = vunpack.c.h.b16 %v655
    %v1305 = vunpack.c.l.b16 %v656
    %v1306 = vunpack.c.h.b16 %v656
    %v1307 = vunpack.c.l.b16 %v657
    %v1308 = vunpack.c.h.b16 %v657
    %v1309 = vunpack.c.l.b16 %v658
    %v1310 = vunpack.c.h.b16 %v658
    %v1311 = vunpack.c.l.b16 %v659
    %v1312 = vunpack.c.h.b16 %v659
    %v1313 = vunpack.c.l.b16 %v660
    %v1314 = vunpack.c.h.b16 %v660
    %v1315 = vunpack.c.l.b16 %v661
    %v1316 = vunpack.c.h.b16 %v661
    %v1317 = vunpack.c.l.b16 %v662
    %v1318 = vunpack.c.h.b16 %v662
    %v1319 = vunpack.c.l.b16 %v663
    %v1320 = vunpack.c.h.b16 %v663
    %v1321 = vunpack.c.l.b16 %v664
    %v1322 = vunpack.c.h.b16 %v664
    %v1323 = vunpack.c.l.b16 %v665
    %v1324 = vunpack.c.h.b16 %v665
    %v1325 = vunpack.c.l.b16 %v666
    %v1326 = vunpack.c.h.b16 %v666
    %v1327 = vunpack.c.l.b16 %v667
    %v1328 = vunpack.c.h.b16 %v667
    %v1329 = vunpack.c.l.b16 %v668
    %v1330 = vunpack.c.h.b16 %v668
    %v1331 = vunpack.c.l.b16 %v669
    %v1332 = vunpack.c.h.b16 %v669
    %v1333 = vunpack.c.l.b16 %v670
    %v1334 = vunpack.c.h.b16 %v670
    %v1335 = vunpack.c.l.b16 %v671
    %v1336 = vunpack.c.h.b16 %v671
    %v1337 = vunpack.c.l.b16 %v672
    %v1338 = vunpack.c.h.b16 %v672
    %v1339 = vunpack.c.l.b16 %v673
    %v1340 = vunpack.c.h.b16 %v673
    %v1341 = vunpack.c.l.b16 %v674
    %v1342 = vunpack.c.h.b16 %v674
    %v1343 = vunpack.c.l.b16 %v675
    %v1344 = vunpack.c.h.b16 %v675
    %v1345 = vunpack.c.l.b16 %v676
    %v1346 = vunpack.c.h.b16 %v676
    %v1347 = vunpack.c.l.b16 %v677
    %v1348 = vunpack.c.h.b16 %v677
    %v1349 = vunpack.c.l.b16 %v678
    %v1350 = vunpack.c.h.b16 %v678
    %v1351 = vunpack.c.l.b16 %v679
    %v1352 = vunpack.c.h.b16 %v679
    %v1353 = vunpack.c.l.b16 %v680
    %v1354 = vunpack.c.h.b16 %v680
    %v1355 = vunpack.c.l.b16 %v681
    %v1356 = vunpack.c.h.b16 %v681
    %v1357 = vunpack.c.l.b16 %v682
    %v1358 = vunpack.c.h.b16 %v682
    %v1359 = vunpack.c.l.b16 %v683
    %v1360 = vunpack.c.h.b16 %v683
    %v1361 = vunpack.c.l.b16 %v684
    %v1362 = vunpack.c.h.b16 %v684
    %v1363 = vunpack.c.l.b16 %v685
    %v1364 = vunpack.c.h.b16 %v685
    %v1365 = vunpack.c.l.b16 %v686
    %v1366 = vunpack.c.h.b16 %v686
    %v1367 = vunpack.c.l.b16 %v687
    %v1368 = vunpack.c.h.b16 %v687
    %v1369 = vunpack.c.l.b16 %v688
    %v1370 = vunpack.c.h.b16 %v688
    %v1371 = vunpack.c.l.b16 %v689
    %v1372 = vunpack.c.h.b16 %v689
    %v1373 = vunpack.c.l.b16 %v690
    %v1374 = vunpack.c.h.b16 %v690
    %v1375 = vunpack.c.l.b16 %v691
    %v1376 = vunpack.c.h.b16 %v691
    %v1377 = vunpack.c.l.b16 %v692
    %v1378 = vunpack.c.h.b16 %v692
    %v1379 = vunpack.c.l.b16 %v693
    %v1380 = vunpack.c.h.b16 %v693
    %v1381 = vunpack.c.l.b16 %v694
    %v1382 = vunpack.c.h.b16 %v694
    %v1383 = vunpack.c.l.b16 %v695
    %v1384 = vunpack.c.h.b16 %v695
    %v1385 = vunpack.c.l.b16 %v696
    %v1386 = vunpack.c.h.b16 %v696
    %v1387 = vunpack.c.l.b16 %v697
    %v1388 = vunpack.c.h.b16 %v697
    %v1389 = vunpack.c.l.b16 %v698
    %v1390 = vunpack.c.h.b16 %v698
    %v1391 = vunpack.c.l.b16 %v699
    %v1392 = vunpack.c.h.b16 %v699
    %v1393 = vunpack.c.l.b16 %v700
    %v1394 = vunpack.c.h.b16 %v700
    %v1395 = vunpack.c.l.b16 %v701
    %v1396 = vunpack.c.h.b16 %v701
    %v1397 = vunpack.c.l.b16 %v702
    %v1398 = vunpack.c.h.b16 %v702
    %v1399 = vunpack.c.l.b16 %v703
    %v1400 = vunpack.c.h.b16 %v703
    %v1401 = vunpack.c.l.b16 %v704
    %v1402 = vunpack.c.h.b16 %v704
    %v1403 = vunpack.c.l.b16 %v705
    %v1404 = vunpack.c.h.b16 %v705
    %v1405 = vunpack.c.l.b16 %v706
    %v1406 = vunpack.c.h.b16 %v706
    %v1407 = vunpack.c.l.b16 %v707
    %v1408 = vunpack.c.h.b16 %v707
    %v1409 = vunpack.c.l.b16 %v708
    %v1410 = vunpack.c.h.b16 %v708
    %v1411 = vunpack.c.l.b16 %v709
    %v1412 = vunpack.c.h.b16 %v709
    %v1413 = vunpack.c.l.b16 %v710
    %v1414 = vunpack.c.h.b16 %v710
    %v1415 = vunpack.c.l.b16 %v711
    %v1416 = vunpack.c.h.b16 %v711
    %v1417 = vunpack.c.l.b16 %v712
    %v1418 = vunpack.c.h.b16 %v712
    %v1419 = vunpack.c.l.b16 %v713
    %v1420 = vunpack.c.h.b16 %v713
    %v1421 = vunpack.c.l.b16 %v714
    %v1422 = vunpack.c.h.b16 %v714
    %v1423 = vunpack.c.l.b16 %v715
    %v1424 = vunpack.c.h.b16 %v715
    %v1425 = vunpack.c.l.b16 %v716
    %v1426 = vunpack.c.h.b16 %v716
    %v1427 = vunpack.c.l.b16 %v717
    %v1428 = vunpack.c.h.b16 %v717
    %v1429 = vunpack.c.l.b16 %v718
    %v1430 = vunpack.c.h.b16 %v718
    %v1431 = vunpack.c.l.b16 %v719
    %v1432 = vunpack.c.h.b16 %v719
    %v1433 = vunpack.c.l.b16 %v720
    %v1434 = vunpack.c.h.b16 %v720
    %v1435 = vunpack.c.l.b16 %v721
    %v1436 = vunpack.c.h.b16 %v721
    %v1437 = vunpack.c.l.b16 %v722
    %v1438 = vunpack.c.h.b16 %v722
    %v1439 = vunpack.c.l.b16 %v723
    %v1440 = vunpack.c.h.b16 %v723
    %v1441 = vunpack.c.l.b16 %v724
    %v1442 = vunpack.c.h.b16 %v724
    %v1443 = vunpack.c.l.b16 %v725
    %v1444 = vunpack.c.h.b16 %v725
    %v1445 = vunpack.c.l.b16 %v726
    %v1446 = vunpack.c.h.b16 %v726
    %v1447 = vunpack.c.l.b16 %v727
    %v1448 = vunpack.c.h.b16 %v727
    %v1449 = vunpack.c.l.b16 %v728
    %v1450 = vunpack.c.h.b16 %v728
    %v1451 = vunpack.c.l.b16 %v729
    %v1452 = vunpack.c.h.b16 %v729
    %v1453 = vunpack.c.l.b16 %v730
    %v1454 = vunpack.c.h.b16 %v730
    %v1455 = vunpack.c.l.b16 %v731
    %v1456 = vunpack.c.h.b16 %v731
    %v1457 = vunpack.c.l.b16 %v732
    %v1458 = vunpack.c.h.b16 %v732
    %v1459 = vunpack.c.l.b16 %v733
    %v1460 = vunpack.c.h.b16 %v733
    %v1461 = vunpack.c.l.b16 %v734
    %v1462 = vunpack.c.h.b16 %v734
    %v1463 = vunpack.c.l.b16 %v735
    %v1464 = vunpack.c.h.b16 %v735
    %v1465 = vunpack.c.l.b16 %v736
    %v1466 = vunpack.c.h.b16 %v736
    %v1467 = vunpack.c.l.b16 %v737
    %v1468 = vunpack.c.h.b16 %v737
    %v1469 = vunpack.c.l.b16 %v738
    %v1470 = vunpack.c.h.b16 %v738
    %v1471 = vunpack.c.l.b16 %v739
    %v1472 = vunpack.c.h.b16 %v739
    %v1473 = vunpack.c.l.b16 %v740
    %v1474 = vunpack.c.h.b16 %v740
    %v1475 = vunpack.c.l.b16 %v741
    %v1476 = vunpack.c.h.b16 %v741
    %v1477 = vunpack.c.l.b16 %v742
    %v1478 = vunpack.c.h.b16 %v742
    %v1479 = vunpack.c.l.b16 %v743
    %v1480 = vunpack.c.h.b16 %v743
    %v1481 = vunpack.c.l.b16 %v744
    %v1482 = vunpack.c.h.b16 %v744
    %v1483 = vunpack.c.l.b16 %v745
    %v1484 = vunpack.c.h.b16 %v745
    %v1485 = vunpack.c.l.b16 %v746
    %v1486 = vunpack.c.h.b16 %v746
    %v1487 = vunpack.c.l.b16 %v747
    %v1488 = vunpack.c.h.b16 %v747
    %v1489 = vunpack.c.l.b16 %v748
    %v1490 = vunpack.c.h.b16 %v748
    %v1491 = vunpack.c.l.b16 %v749
    %v1492 = vunpack.c.h.b16 %v749
    %v1493 = vunpack.c.l.b16 %v750
    %v1494 = vunpack.c.h.b16 %v750
    %v1495 = vunpack.c.l.b16 %v751
    %v1496 = vunpack.c.h.b16 %v751
    %v1497 = vunpack.c.l.b16 %v752
    %v1498 = vunpack.c.h.b16 %v752
    %v1499 = vunpack.c.l.b16 %v753
    %v1500 = vunpack.c.h.b16 %v753
    %v1501 = vunpack.c.l.b16 %v754
    %v1502 = vunpack.c.h.b16 %v754
    %v1503 = vunpack.c.l.b16 %v755
    %v1504 = vunpack.c.h.b16 %v755
    %v1505 = vunpack.c.l.b16 %v756
    %v1506 = vunpack.c.h.b16 %v756
    %v1507 = vunpack.c.l.b16 %v757
    %v1508 = vunpack.c.h.b16 %v757
    %v1509 = vunpack.c.l.b16 %v758
    %v1510 = vunpack.c.h.b16 %v758
    %v1511 = vunpack.c.l.b16 %v759
    %v1512 = vunpack.c.h.b16 %v759
    %v1513 = vunpack.c.l.b16 %v760
    %v1514 = vunpack.c.h.b16 %v760
    %v1515 = vunpack.c.l.b16 %v761
    %v1516 = vunpack.c.h.b16 %v761
    %v1517 = vunpack.c.l.b16 %v762
    %v1518 = vunpack.c.h.b16 %v762
    %v1519 = vunpack.c.l.b16 %v763
    %v1520 = vunpack.c.h.b16 %v763
    %v1521 = vunpack.c.l.b16 %v764
    %v1522 = vunpack.c.h.b16 %v764
    %v1523 = vunpack.c.l.b16 %v765
    %v1524 = vunpack.c.h.b16 %v765
    %v1525 = vunpack.c.l.b16 %v766
    %v1526 = vunpack.c.h.b16 %v766
    %v1527 = vunpack.c.l.b16 %v767
    %v1528 = vunpack.c.h.b16 %v767
    %v1529 = vunpack.c.l.b16 %v768
    %v1530 = vunpack.c.h.b16 %v768
    %v1531 = vunpack.c.l.b16 %v769
    %v1532 = vunpack.c.h.b16 %v769
    %v1533 = vunpack.c.l.b16 %v770
    %v1534 = vunpack.c.h.b16 %v770
    %v1535 = vunpack.c.l.b16 %v771
    %v1536 = vunpack.c.h.b16 %v771
    %v1537 = vunpack.c.l.b16 %v772
    %v1538 = vunpack.c.h.b16 %v772
    %v1539 = vunpack.c.l.b16 %v773
    %v1540 = vunpack.c.h.b16 %v773
    %v1541 = vunpack.c.l.b16 %v774
    %v1542 = vunpack.c.h.b16 %v774
    %v1543 = vunpack.c.l.b16 %v775
    %v1544 = vunpack.c.h.b16 %v775
    %v1545 = vunpack.c.l.b16 %v776
    %v1546 = vunpack.c.h.b16 %v776
    %v1547 = vunpack.c.l.b16 %v777
    %v1548 = vunpack.c.h.b16 %v777
    %v1549 = vunpack.c.l.b16 %v778
    %v1550 = vunpack.c.h.b16 %v778
    %v1551 = vunpack.c.l.b16 %v779
    %v1552 = vunpack.c.h.b16 %v779
    %v1553 = vunpack.c.l.b16 %v780
    %v1554 = vunpack.c.h.b16 %v780
    %v1555 = vunpack.c.l.b16 %v781
    %v1556 = vunpack.c.h.b16 %v781
    %v1557 = vunpack.c.l.b16 %v782
    %v1558 = vunpack.c.h.b16 %v782
    %v1559 = vunpack.c.l.b16 %v783
    %v1560 = vunpack.c.h.b16 %v783
    %v1561 = vunpack.c.l.b16 %v784
    %v1562 = vunpack.c.h.b16 %v784
    %v1563 = vunpack.c.l.b16 %v785
    %v1564 = vunpack.c.h.b16 %v785
    %v1565 = vunpack.c.l.b16 %v786
    %v1566 = vunpack.c.h.b16 %v786
    %v1567 = vunpack.c.l.b16 %v787
    %v1568 = vunpack.c.h.b16 %v787
    %v1569 = vunpack.c.l.b16 %v788
    %v1570 = vunpack.c.h.b16 %v788
    %v1571 = vunpack.c.l.b16 %v789
    %v1572 = vunpack.c.h.b16 %v789
    %v1573 = vunpack.c.l.b16 %v790
    %v1574 = vunpack.c.h.b16 %v790
    %v1575 = vunpack.c.l.b16 %v791
    %v1576 = vunpack.c.h.b16 %v791
    %v1577 = vunpack.c.l.b16 %v792
    %v1578 = vunpack.c.h.b16 %v792
    %v1579 = vunpack.c.l.b16 %v793
    %v1580 = vunpack.c.h.b16 %v793
    %v1581 = vpack.c.b16 %v1071, %v1069
    %v1582 = vpack.c.b16 %v1072, %v1070
    %v1583 = vpack.c.b16 %v1075, %v1073
    %v1584 = vpack.c.b16 %v1076, %v1074
    %v1585 = vpack.c.b16 %v1079, %v1077
    %v1586 = vpack.c.b16 %v1080, %v1078
    %v1587 = vpack.c.b16 %v1083, %v1081
    %v1588 = vpack.c.b16 %v1084, %v1082
    %v1589 = vpack.c.b16 %v1087, %v1085
    %v1590 = vpack.c.b16 %v1088, %v1086
    %v1591 = vpack.c.b16 %v1091, %v1089
    %v1592 = vpack.c.b16 %v1092, %v1090
    %v1593 = vpack.c.b16 %v1095, %v1093
    %v1594 = vpack.c.b16 %v1096, %v1094
    %v1595 = vpack.c.b16 %v1099, %v1097
    %v1596 = vpack.c.b16 %v1100, %v1098
    %v1597 = vpack.c.b16 %v1103, %v1101
    %v1598 = vpack.c.b16 %v1104, %v1102
    %v1599 = vpack.c.b16 %v1107, %v1105
    %v1600 = vpack.c.b16 %v1108, %v1106
    %v1601 = vpack.c.b16 %v1111, %v1109
    %v1602 = vpack.c.b16 %v1112, %v1110
    %v1603 = vpack.c.b16 %v1115, %v1113
    %v1604 = vpack.c.b16 %v1116, %v1114
    %v1605 = vpack.c.b16 %v1119, %v1117
    %v1606 = vpack.c.b16 %v1120, %v1118
    %v1607 = vpack.c.b16 %v1123, %v1121
    %v1608 = vpack.c.b16 %v1124, %v1122
    %v1609 = vpack.c.b16 %v1127, %v1125
    %v1610 = vpack.c.b16 %v1128, %v1126
    %v1611 = vpack.c.b16 %v1131, %v1129
    %v1612 = vpack.c.b16 %v1132, %v1130
    %v1613 = vpack.c.b16 %v1135, %v1133
    %v1614 = vpack.c.b16 %v1136, %v1134
    %v1615 = vpack.c.b16 %v1139, %v1137
    %v1616 = vpack.c.b16 %v1140, %v1138
    %v1617 = vpack.c.b16 %v1143, %v1141
    %v1618 = vpack.c.b16 %v1144, %v1142
    %v1619 = vpack.c.b16 %v1147, %v1145
    %v1620 = vpack.c.b16 %v1148, %v1146
    %v1621 = vpack.c.b16 %v1151, %v1149
    %v1622 = vpack.c.b16 %v1152, %v1150
    %v1623 = vpack.c.b16 %v1155, %v1153
    %v1624 = vpack.c.b16 %v1156, %v1154
    %v1625 = vpack.c.b16 %v1159, %v1157
    %v1626 = vpack.c.b16 %v1160, %v1158
    %v1627 = vpack.c.b16 %v1163, %v1161
    %v1628 = vpack.c.b16 %v1164, %v1162
    %v1629 = vpack.c.b16 %v1167, %v1165
    %v1630 = vpack.c.b16 %v1168, %v1166
    %v1631 = vpack.c.b16 %v1171, %v1169
    %v1632 = vpack.c.b16 %v1172, %v1170
    %v1633 = vpack.c.b16 %v1175, %v1173
    %v1634 = vpack.c.b16 %v1176, %v1174
    %v1635 = vpack.c.b16 %v1179, %v1177
    %v1636 = vpack.c.b16 %v1180, %v1178
    %v1637 = vpack.c.b16 %v1183, %v1181
    %v1638 = vpack.c.b16 %v1184, %v1182
    %v1639 = vpack.c.b16 %v1187, %v1185
    %v1640 = vpack.c.b16 %v1188, %v1186
    %v1641 = vpack.c.b16 %v1191, %v1189
    %v1642 = vpack.c.b16 %v1192, %v1190
    %v1643 = vpack.c.b16 %v1195, %v1193
    %v1644 = vpack.c.b16 %v1196, %v1194
    %v1645 = vpack.c.b16 %v1199, %v1197
    %v1646 = vpack.c.b16 %v1200, %v1198
    %v1647 = vpack.c.b16 %v1203, %v1201
    %v1648 = vpack.c.b16 %v1204, %v1202
    %v1649 = vpack.c.b16 %v1207, %v1205
    %v1650 = vpack.c.b16 %v1208, %v1206
    %v1651 = vpack.c.b16 %v1211, %v1209
    %v1652 = vpack.c.b16 %v1212, %v1210
    %v1653 = vpack.c.b16 %v1215, %v1213
    %v1654 = vpack.c.b16 %v1216, %v1214
    %v1655 = vpack.c.b16 %v1219, %v1217
    %v1656 = vpack.c.b16 %v1220, %v1218
    %v1657 = vpack.c.b16 %v1223, %v1221
    %v1658 = vpack.c.b16 %v1224, %v1222
    %v1659 = vpack.c.b16 %v1227, %v1225
    %v1660 = vpack.c.b16 %v1228, %v1226
    %v1661 = vpack.c.b16 %v1231, %v1229
    %v1662 = vpack.c.b16 %v1232, %v1230
    %v1663 = vpack.c.b16 %v1235, %v1233
    %v1664 = vpack.c.b16 %v1236, %v1234
    %v1665 = vpack.c.b16 %v1239, %v1237
    %v1666 = vpack.c.b16 %v1240, %v1238
    %v1667 = vpack.c.b16 %v1243, %v1241
    %v1668 = vpack.c.b16 %v1244, %v1242
    %v1669 = vpack.c.b16 %v1247, %v1245
    %v1670 = vpack.c.b16 %v1248, %v1246
    %v1671 = vpack.c.b16 %v1251, %v1249
    %v1672 = vpack.c.b16 %v1252, %v1250
    %v1673 = vpack.c.b16 %v1255, %v1253
    %v1674 = vpack.c.b16 %v1256, %v1254
    %v1675 = vpack.c.b16 %v1259, %v1257
    %v1676 = vpack.c.b16 %v1260, %v1258
    %v1677 = vpack.c.b16 %v1263, %v1261
    %v1678 = vpack.c.b16 %v1264, %v1262
    %v1679 = vpack.c.b16 %v1267, %v1265
    %v1680 = vpack.c.b16 %v1268, %v1266
    %v1681 = vpack.c.b16 %v1271, %v1269
    %v1682 = vpack.c.b16 %v1272, %v1270
    %v1683 = vpack.c.b16 %v1275, %v1273
    %v1684 = vpack.c.b16 %v1276, %v1274
    %v1685 = vpack.c.b16 %v1279, %v1277
    %v1686 = vpack.c.b16 %v1280, %v1278
    %v1687 = vpack.c.b16 %v1283, %v1281
    %v1688 = vpack.c.b16 %v1284, %v1282
    %v1689 = vpack.c.b16 %v1287, %v1285
    %v1690 = vpack.c.b16 %v1288, %v1286
    %v1691 = vpack.c.b16 %v1291, %v1289
    %v1692 = vpack.c.b16 %v1292, %v1290
    %v1693 = vpack.c.b16 %v1295, %v1293
    %v1694 = vpack.c.b16 %v1296, %v1294
    %v1695 = vpack.c.b16 %v1299, %v1297
    %v1696 = vpack.c.b16 %v1300, %v1298
    %v1697 = vpack.c.b16 %v1303, %v1301
    %v1698 = vpack.c.b16 %v1304, %v1302
    %v1699 = vpack.c.b16 %v1307, %v1305
    %v1700 = vpack.c.b16 %v1308, %v1306
    %v1701 = vpack.c.b16 %v1311, %v1309
    %v1702 = vpack.c.b16 %v1312, %v1310
    %v1703 = vpack.c.b16 %v1315, %v1313
    %v1704 = vpack.c.b16 %v1316, %v1314
    %v1705 = vpack.c.b16 %v1319, %v1317
    %v1706 = vpack.c.b16 %v1320, %v1318
    %v1707 = vpack.c.b16 %v1323, %v1321
    %v1708 = vpack.c.b16 %v1324, %v1322
    %v1709 = vpack.c.b16 %v1327, %v1325
    %v1710 = vpack.c.b16 %v1328, %v1326
    %v1711 = vpack.c.b16 %v1331, %v1329
    %v1712 = vpack.c.b16 %v1332, %v1330
    %v1713 = vpack.c.b16 %v1335, %v1333
    %v1714 = vpack.c.b16 %v1336, %v1334
    %v1715 = vpack.c.b16 %v1339, %v1337
    %v1716 = vpack.c.b16 %v1340, %v1338
    %v1717 = vpack.c.b16 %v1343, %v1341
    %v1718 = vpack.c.b16 %v1344, %v1342
    %v1719 = vpack.c.b16 %v1347, %v1345
    %v1720 = vpack.c.b16 %v1348, %v1346
    %v1721 = vpack.c.b16 %v1351, %v1349
    %v1722 = vpack.c.b16 %v1352, %v1350
    %v1723 = vpack.c.b16 %v1355, %v1353
    %v1724 = vpack.c.b16 %v1356, %v1354
    %v1725 = vpack.c.b16 %v1359, %v1357
    %v1726 = vpack.c.b16 %v1360, %v1358
    %v1727 = vpack.c.b16 %v1363, %v1361
    %v1728 = vpack.c.b16 %v1364, %v1362
    %v1729 = vpack.c.b16 %v1367, %v1365
    %v1730 = vpack.c.b16 %v1368, %v1366
    %v1731 = vpack.c.b16 %v1371, %v1369
    %v1732 = vpack.c.b16 %v1372, %v1370
    %v1733 = vpack.c.b16 %v1375, %v1373
    %v1734 = vpack.c.b16 %v1376, %v1374
    %v1735 = vpack.c.b16 %v1379, %v1377
    %v1736 = vpack.c.b16 %v1380, %v1378
    %v1737 = vpack.c.b16 %v1383, %v1381
    %v1738 = vpack.c.b16 %v1384, %v1382
    %v1739 = vpack.c.b16 %v1387, %v1385
    %v1740 = vpack.c.b16 %v1388, %v1386
    %v1741 = vpack.c.b16 %v1391, %v1389
    %v1742 = vpack.c.b16 %v1392, %v1390
    %v1743 = vpack.c.b16 %v1395, %v1393
    %v1744 = vpack.c.b16 %v1396, %v1394
    %v1745 = vpack.c.b16 %v1399, %v1397
    %v1746 = vpack.c.b16 %v1400, %v1398
    %v1747 = vpack.c.b16 %v1403, %v1401
    %v1748 = vpack.c.b16 %v1404, %v1402
    %v1749 = vpack.c.b16 %v1407, %v1405
    %v1750 = vpack.c.b16 %v1408, %v1406
    %v1751 = vpack.c.b16 %v1411, %v1409
    %v1752 = vpack.c.b16 %v1412, %v1410
    %v1753 = vpack.c.b16 %v1415, %v1413
    %v1754 = vpack.c.b16 %v1416, %v1414
    %v1755 = vpack.c.b16 %v1419, %v1417
    %v1756 = vpack.c.b16 %v1420, %v1418
    %v1757 = vpack.c.b16 %v1423, %v1421
    %v1758 = vpack.c.b16 %v1424, %v1422
    %v1759 = vpack.c.b16 %v1427, %v1425
    %v1760 = vpack.c.b16 %v1428, %v1426
    %v1761 = vpack.c.b16 %v1431, %v1429
    %v1762 = vpack.c.b16 %v1432, %v1430
    %v1763 = vpack.c.b16 %v1435, %v1433
    %v1764 = vpack.c.b16 %v1436, %v1434
    %v1765 = vpack.c.b16 %v1439, %v1437
    %v1766 = vpack.c.b16 %v1440, %v1438
    %v1767 = vpack.c.b16 %v1443, %v1441
    %v1768 = vpack.c.b16 %v1444, %v1442
    %v1769 = vpack.c.b16 %v1447, %v1445
    %v1770 = vpack.c.b16 %v1448, %v1446
    %v1771 = vpack.c.b16 %v1451, %v1449
    %v1772 = vpack.c.b16 %v1452, %v1450
    %v1773 = vpack.c.b16 %v1455, %v1453
    %v1774 = vpack.c.b16 %v1456, %v1454
    %v1775 = vpack.c.b16 %v1459, %v1457
    %v1776 = vpack.c.b16 %v1460, %v1458
    %v1777 = vpack.c.b16 %v1463, %v1461
    %v1778 = vpack.c.b16 %v1464, %v1462
    %v1779 = vpack.c.b16 %v1467, %v1465
    %v1780 = vpack.c.b16 %v1468, %v1466
    %v1781 = vpack.c.b16 %v1471, %v1469
    %v1782 = vpack.c.b16 %v1472, %v1470
    %v1783 = vpack.c.b16 %v1475, %v1473
    %v1784 = vpack.c.b16 %v1476, %v1474
    %v1785 = vpack.c.b16 %v1479, %v1477
    %v1786 = vpack.c.b16 %v1480, %v1478
    %v1787 = vpack.c.b16 %v1483, %v1481
    %v1788 = vpack.c.b16 %v1484, %v1482
    %v1789 = vpack.c.b16 %v1487, %v1485
    %v1790 = vpack.c.b16 %v1488, %v1486
    %v1791 = vpack.c.b16 %v1491, %v1489
    %v1792 = vpack.c.b16 %v1492, %v1490
    %v1793 = vpack.c.b16 %v1495, %v1493
    %v1794 = vpack.c.b16 %v1496, %v1494
    %v1795 = vpack.c.b16 %v1499, %v1497
    %v1796 = vpack.c.b16 %v1500, %v1498
    %v1797 = vpack.c.b16 %v1503, %v1501
    %v1798 = vpack.c.b16 %v1504, %v1502
    %v1799 = vpack.c.b16 %v1507, %v1505
    %v1800 = vpack.c.b16 %v1508, %v1506
    %v1801 = vpack.c.b16 %v1511, %v1509
    %v1802 = vpack.c.b16 %v1512, %v1510
    %v1803 = vpack.c.b16 %v1515, %v1513
    %v1804 = vpack.c.b16 %v1516, %v1514
    %v1805 = vpack.c.b16 %v1519, %v1517
    %v1806 = vpack.c.b16 %v1520, %v1518
    %v1807 = vpack.c.b16 %v1523, %v1521
    %v1808 = vpack.c.b16 %v1524, %v1522
    %v1809 = vpack.c.b16 %v1527, %v1525
    %v1810 = vpack.c.b16 %v1528, %v1526
    %v1811 = vpack.c.b16 %v1531, %v1529
    %v1812 = vpack.c.b16 %v1532, %v1530
    %v1813 = vpack.c.b16 %v1535, %v1533
    %v1814 = vpack.c.b16 %v1536, %v1534
    %v1815 = vpack.c.b16 %v1539, %v1537
    %v1816 = vpack.c.b16 %v1540, %v1538
    %v1817 = vpack.c.b16 %v1543, %v1541
    %v1818 = vpack.c.b16 %v1544, %v1542
    %v1819 = vpack.c.b16 %v1547, %v1545
    %v1820 = vpack.c.b16 %v1548, %v1546
    %v1821 = vpack.c.b16 %v1551, %v1549
    %v1822 = vpack.c.b16 %v1552, %v1550
    %v1823 = vpack.c.b16 %v1555, %v1553
    %v1824 = vpack.c.b16 %v1556, %v1554
    %v1825 = vpack.c.b16 %v1559, %v1557
    %v1826 = vpack.c.b16 %v1560, %v1558
    %v1827 = vpack.c.b16 %v1563, %v1561
    %v1828 = vpack.c.b16 %v1564, %v1562
    %v1829 = vpack.c.b16 %v1567, %v1565
    %v1830 = vpack.c.b16 %v1568, %v1566
    %v1831 = vpack.c.b16 %v1571, %v1569
    %v1832 = vpack.c.b16 %v1572, %v1570
    %v1833 = vpack.c.b16 %v1575, %v1573
    %v1834 = vpack.c.b16 %v1576, %v1574
    %v1835 = vpack.c.b16 %v1579, %v1577
    %v1836 = vpack.c.b16 %v1580, %v1578
    %v1984 = vunpack.c.l.b16 %v794
    %v1985 = vunpack.c.l.b16 %v795
    %v1986 = vunpack.c.l.b16 %v796
    %v1987 = vunpack.c.l.b16 %v797
    %v1988 = vunpack.c.l.b16 %v798
    %v1989 = vunpack.c.l.b16 %v799
    %v1990 = vunpack.c.l.b16 %v800
    %v1991 = vunpack.c.l.b16 %v801
    %v1992 = vunpack.c.l.b16 %v802
    %v1993 = vunpack.c.l.b16 %v803
    %v1994 = vunpack.c.l.b16 %v804
    %v1995 = vunpack.c.l.b16 %v805
    %v1996 = vunpack.c.l.b16 %v806
    %v1997 = vunpack.c.l.b16 %v807
    %v1998 = vunpack.c.l.b16 %v808
    %v1999 = vunpack.c.l.b16 %v809
    %v2000 = vunpack.c.l.b16 %v810
    %v2001 = vunpack.c.l.b16 %v811
    %v2002 = vunpack.c.l.b16 %v812
    %v2003 = vpack.c.b16 %v1985, %v1984
    %v2004 = vpack.c.b16 %v1987, %v1986
    %v2005 = vpack.c.b16 %v1989, %v1988
    %v2006 = vpack.c.b16 %v1991, %v1990
    %v2007 = vpack.c.b16 %v1993, %v1992
    %v2008 = vpack.c.b16 %v1995, %v1994
    %v2009 = vpack.c.b16 %v1997, %v1996
    %v2010 = vpack.c.b16 %v1999, %v1998
    %v2011 = vpack.c.b16 %v2001, %v2000
    %v2012 = vpack.c.b16 %v2002, %v2002
    %vm2022 = vcmask 154624
    %v2024 = vsel %vm2022, %v1582, 0
    %v2027 = vsel %vm2022, %v1584, 0
    %v2030 = vsel %vm2022, %v1586, 0
    %v2033 = vsel %vm2022, %v1588, 0
    %v2036 = vsel %vm2022, %v1590, 0
    %v2039 = vsel %vm2022, %v1592, 0
    %v2042 = vsel %vm2022, %v1594, 0
    %v2045 = vsel %vm2022, %v1596, 0
    %v2048 = vsel %vm2022, %v1598, 0
    %v2051 = vsel %vm2022, %v1600, 0
    %v2054 = vsel %vm2022, %v1602, 0
    %v2057 = vsel %vm2022, %v1604, 0
    %v2060 = vsel %vm2022, %v1606, 0
    %v2063 = vsel %vm2022, %v1608, 0
    %v2066 = vsel %vm2022, %v1610, 0
    %v2069 = vsel %vm2022, %v1612, 0
    %v2072 = vsel %vm2022, %v1614, 0
    %v2075 = vsel %vm2022, %v1616, 0
    %v2078 = vsel %vm2022, %v1618, 0
    %v2081 = vsel %vm2022, %v1620, 0
    %v2084 = vsel %vm2022, %v1622, 0
    %v2087 = vsel %vm2022, %v1624, 0
    %v2090 = vsel %vm2022, %v1626, 0
    %v2093 = vsel %vm2022, %v1628, 0
    %v2096 = vsel %vm2022, %v1630, 0
    %v2099 = vsel %vm2022, %v1632, 0
    %v2102 = vsel %vm2022, %v1634, 0
    %v2105 = vsel %vm2022, %v1636, 0
    %v2108 = vsel %vm2022, %v1638, 0
    %v2111 = vsel %vm2022, %v1640, 0
    %v2114 = vsel %vm2022, %v1642, 0
    %v2117 = vsel %vm2022, %v1644, 0
    %v2120 = vsel %vm2022, %v1646, 0
    %v2123 = vsel %vm2022, %v1648, 0
    %v2126 = vsel %vm2022, %v1650, 0
    %v2129 = vsel %vm2022, %v1652, 0
    %v2132 = vsel %vm2022, %v1654, 0
    %v2135 = vsel %vm2022, %v1656, 0
    %v2138 = vsel %vm2022, %v1658, 0
    %v2141 = vsel %vm2022, %v1660, 0
    %v2144 = vsel %vm2022, %v1662, 0
    %v2147 = vsel %vm2022, %v1664, 0
    %v2150 = vsel %vm2022, %v1666, 0
    %v2153 = vsel %vm2022, %v1668, 0
    %v2156 = vsel %vm2022, %v1670, 0
    %v2159 = vsel %vm2022, %v1672, 0
    %v2162 = vsel %vm2022, %v1674, 0
    %v2165 = vsel %vm2022, %v1676, 0
    %v2168 = vsel %vm2022, %v1678, 0
    %v2171 = vsel %vm2022, %v1680, 0
    %v2174 = vsel %vm2022, %v1682, 0
    %v2177 = vsel %vm2022, %v1684, 0
    %v2180 = vsel %vm2022, %v1686, 0
    %v2183 = vsel %vm2022, %v1688, 0
    %v2186 = vsel %vm2022, %v1690, 0
    %v2189 = vsel %vm2022, %v1692, 0
    %v2192 = vsel %vm2022, %v1694, 0
    %v2195 = vsel %vm2022, %v1696, 0
    %v2198 = vsel %vm2022, %v1698, 0
    %v2201 = vsel %vm2022, %v1700, 0
    %v2204 = vsel %vm2022, %v1702, 0
    %v2207 = vsel %vm2022, %v1704, 0
    %v2210 = vsel %vm2022, %v1706, 0
    %v2213 = vsel %vm2022, %v1708, 0
    %v2216 = vsel %vm2022, %v1710, 0
    %v2219 = vsel %vm2022, %v1712, 0
    %v2222 = vsel %vm2022, %v1714, 0
    %v2225 = vsel %vm2022, %v1716, 0
    %v2228 = vsel %vm2022, %v1718, 0
    %v2231 = vsel %vm2022, %v1720, 0
    %v2234 = vsel %vm2022, %v1722, 0
    %v2237 = vsel %vm2022, %v1724, 0
    %v2240 = vsel %vm2022, %v1726, 0
    %v2243 = vsel %vm2022, %v1728, 0
    %v2246 = vsel %vm2022, %v1730, 0
    %v2249 = vsel %vm2022, %v1732, 0
    %v2252 = vsel %vm2022, %v1734, 0
    %v2255 = vsel %vm2022, %v1736, 0
    %v2258 = vsel %vm2022, %v1738, 0
    %v2261 = vsel %vm2022, %v1740, 0
    %v2264 = vsel %vm2022, %v1742, 0
    %v2267 = vsel %vm2022, %v1744, 0
    %v2270 = vsel %vm2022, %v1746, 0
    %v2273 = vsel %vm2022, %v1748, 0
    %v2276 = vsel %vm2022, %v1750, 0
    %v2279 = vsel %vm2022, %v1752, 0
    %v2282 = vsel %vm2022, %v1754, 0
    %v2285 = vsel %vm2022, %v1756, 0
    %v2288 = vsel %vm2022, %v1758, 0
    %v2291 = vsel %vm2022, %v1760, 0
    %v2294 = vsel %vm2022, %v1762, 0
    %v2297 = vsel %vm2022, %v1764, 0
    %v2300 = vsel %vm2022, %v1766, 0
    %v2303 = vsel %vm2022, %v1768, 0
    %v2306 = vsel %vm2022, %v1770, 0
    %v2309 = vsel %vm2022, %v1772, 0
    %v2312 = vsel %vm2022, %v1774, 0
    %v2315 = vsel %vm2022, %v1776, 0
    %v2318 = vsel %vm2022, %v1778, 0
    %v2321 = vsel %vm2022, %v1780, 0
    %v2324 = vsel %vm2022, %v1782, 0
    %v2327 = vsel %vm2022, %v1784, 0
    %v2330 = vsel %vm2022, %v1786, 0
    %v2333 = vsel %vm2022, %v1788, 0
    %v2336 = vsel %vm2022, %v1790, 0
    %v2339 = vsel %vm2022, %v1792, 0
    %v2342 = vsel %vm2022, %v1794, 0
    %v2345 = vsel %vm2022, %v1796, 0
    %v2348 = vsel %vm2022, %v1798, 0
    %v2351 = vsel %vm2022, %v1800, 0
    %v2354 = vsel %vm2022, %v1802, 0
    %v2357 = vsel %vm2022, %v1804, 0
    %v2360 = vsel %vm2022, %v1806, 0
    %v2363 = vsel %vm2022, %v1808, 0
    %v2366 = vsel %vm2022, %v1810, 0
    %v2369 = vsel %vm2022, %v1812, 0
    %v2372 = vsel %vm2022, %v1814, 0
    %v2375 = vsel %vm2022, %v1816, 0
    %v2378 = vsel %vm2022, %v1818, 0
    %v2381 = vsel %vm2022, %v1820, 0
    %v2384 = vsel %vm2022, %v1822, 0
    %v2387 = vsel %vm2022, %v1824, 0
    %v2390 = vsel %vm2022, %v1826, 0
    %v2393 = vsel %vm2022, %v1828, 0
    %v2396 = vsel %vm2022, %v1830, 0
    %v2399 = vsel %vm2022, %v1832, 0
    %v2402 = vsel %vm2022, %v1834, 0
    %v2405 = vsel %vm2022, %v1836, 0
    %vm2407 = vcmask 1040384
    %vm2408 = vcmask 1041408
    %v2409 = vsel %vm2407, 4294967295, 65535
    %v2410 = vsel %vm2408, %v2409, 0
    %v2412 = vand.u32 %v2012, %v2410
    %2414 = vmatprep.subr.bf16.mxu0 0
    %2415 = vmatpush1.bf16.msra.mxu0 %v2010
    %2416 = vmatprep.subr.bf16.mxu0 0
    %2417 = vmatpush1.bf16.msra.mxu0 %v2009
    %2418 = vmatprep.subr.bf16.mxu0 0
    %2419 = vmatpush1.bf16.msra.mxu0 %v2008
    %2420 = vmatprep.subr.bf16.mxu0 0
    %2421 = vmatpush1.bf16.msra.mxu0 %v2007
    %2422 = vmatprep.subr.bf16.mxu0 0
    %2423 = vmatpush1.bf16.msra.mxu0 %v2006
    %2424 = vmatprep.subr.bf16.mxu0 0
    %2425 = vmatpush1.bf16.msra.mxu0 %v2005
    %2426 = vmatprep.subr.bf16.mxu0 0
    %2427 = vmatpush1.bf16.msra.mxu0 %v2004
    %2428 = vmatprep.subr.bf16.mxu0 0
    %2429 = vmatpush1.bf16.msra.mxu0 %v2003
    %2430 = vmatprep.subr.bf16.mxu0 0
    %2431 = vmatpush2.bf16.msra.mxu0 0
    %2432 = vmatprep.subr.bf16.mxu0 0
    %2433 = vmatpush2.bf16.msra.mxu0 0
    %2434 = vmatprep.subr.bf16.mxu0 0
    %2435 = vmatpush2.bf16.msra.mxu0 0
    %2436 = vmatprep.subr.bf16.mxu0 0
    %2437 = vmatpush2.bf16.msra.mxu0 0
    %2438 = vmatprep.subr.bf16.mxu0 0
    %2439 = vmatpush2.bf16.msra.mxu0 0
    %2440 = vmatprep.subr.bf16.mxu0 0
    %2441 = vmatpush2.bf16.msra.mxu0 0
    %2442 = vmatprep.subr.bf16.mxu0 0
    %2443 = vmatpush2.bf16.msra.mxu0 %v2412
    %2444 = vmatprep.subr.bf16.mxu0 0
    %2445 = vmatpush2.bf16.msra.mxu0 %v2011
    %2446 = vmatprep.mubr.bf16.mxu0 %v2024
    %2447 = vmatmul.mubr.bf16.gmra.mxu0 %v1581
    %v2448 = vpop.f32.mrf.mxu0
    %v2449 = vadd.f32 0.0, %v2448
    %v2450 = vpop.f32.mrf.mxu0
    %v2451 = vpop.f32.mrf.mxu0
    %v2452 = vadd.f32 0.0, %v2451
    %v2453 = vpop.f32.mrf.mxu0
    %2454 = vmatprep.mubr.bf16.mxu0 %v2027
    %2455 = vmatmul.mubr.bf16.gmra.mxu0 %v1583
    %v2456 = vpop.f32.mrf.mxu0
    %v2457 = vadd.f32 0.0, %v2456
    %v2458 = vpop.f32.mrf.mxu0
    %v2459 = vpop.f32.mrf.mxu0
    %v2460 = vadd.f32 0.0, %v2459
    %v2461 = vpop.f32.mrf.mxu0
    %2462 = vmatprep.mubr.bf16.mxu0 %v2030
    %2463 = vmatmul.mubr.bf16.gmra.mxu0 %v1585
    %v2464 = vpop.f32.mrf.mxu0
    %v2465 = vadd.f32 0.0, %v2464
    %v2466 = vpop.f32.mrf.mxu0
    %v2467 = vpop.f32.mrf.mxu0
    %v2468 = vadd.f32 0.0, %v2467
    %v2469 = vpop.f32.mrf.mxu0
    %2470 = vmatprep.mubr.bf16.mxu0 %v2033
    %2471 = vmatmul.mubr.bf16.gmra.mxu0 %v1587
    %v2472 = vpop.f32.mrf.mxu0
    %v2473 = vadd.f32 0.0, %v2472
    %v2474 = vpop.f32.mrf.mxu0
    %v2475 = vpop.f32.mrf.mxu0
    %v2476 = vadd.f32 0.0, %v2475
    %v2477 = vpop.f32.mrf.mxu0
    %2478 = vmatprep.mubr.bf16.mxu0 %v2036
    %2479 = vmatmul.mubr.bf16.gmra.mxu0 %v1589
    %v2480 = vpop.f32.mrf.mxu0
    %v2481 = vadd.f32 0.0, %v2480
    %v2482 = vpop.f32.mrf.mxu0
    %v2483 = vpop.f32.mrf.mxu0
    %v2484 = vadd.f32 0.0, %v2483
    %v2485 = vpop.f32.mrf.mxu0
    %2486 = vmatprep.mubr.bf16.mxu0 %v2039
    %2487 = vmatmul.mubr.bf16.gmra.mxu0 %v1591
    %v2488 = vpop.f32.mrf.mxu0
    %v2489 = vadd.f32 0.0, %v2488
    %v2490 = vpop.f32.mrf.mxu0
    %v2491 = vpop.f32.mrf.mxu0
    %v2492 = vadd.f32 0.0, %v2491
    %v2493 = vpop.f32.mrf.mxu0
    %2494 = vmatprep.mubr.bf16.mxu0 %v2042
    %2495 = vmatmul.mubr.bf16.gmra.mxu0 %v1593
    %v2496 = vpop.f32.mrf.mxu0
    %v2497 = vadd.f32 0.0, %v2496
    %v2498 = vpop.f32.mrf.mxu0
    %v2499 = vpop.f32.mrf.mxu0
    %v2500 = vadd.f32 0.0, %v2499
    %v2501 = vpop.f32.mrf.mxu0
    %2502 = vmatprep.mubr.bf16.mxu0 %v2045
    %2503 = vmatmul.mubr.bf16.gmra.mxu0 %v1595
    %v2504 = vpop.f32.mrf.mxu0
    %v2505 = vadd.f32 0.0, %v2504
    %v2506 = vpop.f32.mrf.mxu0
    %v2507 = vpop.f32.mrf.mxu0
    %v2508 = vadd.f32 0.0, %v2507
    %v2509 = vpop.f32.mrf.mxu0
    %2510 = vmatprep.mubr.bf16.mxu0 %v2048
    %2511 = vmatmul.mubr.bf16.gmra.mxu0 %v1597
    %v2512 = vpop.f32.mrf.mxu0
    %v2513 = vadd.f32 0.0, %v2512
    %v2514 = vpop.f32.mrf.mxu0
    %v2515 = vpop.f32.mrf.mxu0
    %v2516 = vadd.f32 0.0, %v2515
    %v2517 = vpop.f32.mrf.mxu0
    %2518 = vmatprep.mubr.bf16.mxu0 %v2051
    %2519 = vmatmul.mubr.bf16.gmra.mxu0 %v1599
    %v2520 = vpop.f32.mrf.mxu0
    %v2521 = vadd.f32 0.0, %v2520
    %v2522 = vpop.f32.mrf.mxu0
    %v2523 = vpop.f32.mrf.mxu0
    %v2524 = vadd.f32 0.0, %v2523
    %v2525 = vpop.f32.mrf.mxu0
    %2526 = vmatprep.mubr.bf16.mxu0 %v2054
    %2527 = vmatmul.mubr.bf16.gmra.mxu0 %v1601
    %v2528 = vpop.f32.mrf.mxu0
    %v2529 = vadd.f32 0.0, %v2528
    %v2530 = vpop.f32.mrf.mxu0
    %v2531 = vpop.f32.mrf.mxu0
    %v2532 = vadd.f32 0.0, %v2531
    %v2533 = vpop.f32.mrf.mxu0
    %2534 = vmatprep.mubr.bf16.mxu0 %v2057
    %2535 = vmatmul.mubr.bf16.gmra.mxu0 %v1603
    %v2536 = vpop.f32.mrf.mxu0
    %v2537 = vadd.f32 0.0, %v2536
    %v2538 = vpop.f32.mrf.mxu0
    %v2539 = vpop.f32.mrf.mxu0
    %v2540 = vadd.f32 0.0, %v2539
    %v2541 = vpop.f32.mrf.mxu0
    %2542 = vmatprep.mubr.bf16.mxu0 %v2060
    %2543 = vmatmul.mubr.bf16.gmra.mxu0 %v1605
    %v2544 = vpop.f32.mrf.mxu0
    %v2545 = vadd.f32 0.0, %v2544
    %v2546 = vpop.f32.mrf.mxu0
    %v2547 = vpop.f32.mrf.mxu0
    %v2548 = vadd.f32 0.0, %v2547
    %v2549 = vpop.f32.mrf.mxu0
    %2550 = vmatprep.mubr.bf16.mxu0 %v2063
    %2551 = vmatmul.mubr.bf16.gmra.mxu0 %v1607
    %v2552 = vpop.f32.mrf.mxu0
    %v2553 = vadd.f32 0.0, %v2552
    %v2554 = vpop.f32.mrf.mxu0
    %v2555 = vpop.f32.mrf.mxu0
    %v2556 = vadd.f32 0.0, %v2555
    %v2557 = vpop.f32.mrf.mxu0
    %2558 = vmatprep.mubr.bf16.mxu0 %v2066
    %2559 = vmatmul.mubr.bf16.gmra.mxu0 %v1609
    %v2560 = vpop.f32.mrf.mxu0
    %v2561 = vadd.f32 0.0, %v2560
    %v2562 = vpop.f32.mrf.mxu0
    %v2563 = vpop.f32.mrf.mxu0
    %v2564 = vadd.f32 0.0, %v2563
    %v2565 = vpop.f32.mrf.mxu0
    %2566 = vmatprep.mubr.bf16.mxu0 %v2069
    %2567 = vmatmul.mubr.bf16.gmra.mxu0 %v1611
    %v2568 = vpop.f32.mrf.mxu0
    %v2569 = vadd.f32 0.0, %v2568
    %v2570 = vpop.f32.mrf.mxu0
    %v2571 = vpop.f32.mrf.mxu0
    %v2572 = vadd.f32 0.0, %v2571
    %v2573 = vpop.f32.mrf.mxu0
    %2574 = vmatprep.mubr.bf16.mxu0 %v2072
    %2575 = vmatmul.mubr.bf16.gmra.mxu0 %v1613
    %v2576 = vpop.f32.mrf.mxu0
    %v2577 = vadd.f32 0.0, %v2576
    %v2578 = vpop.f32.mrf.mxu0
    %v2579 = vpop.f32.mrf.mxu0
    %v2580 = vadd.f32 0.0, %v2579
    %v2581 = vpop.f32.mrf.mxu0
    %2582 = vmatprep.mubr.bf16.mxu0 %v2075
    %2583 = vmatmul.mubr.bf16.gmra.mxu0 %v1615
    %v2584 = vpop.f32.mrf.mxu0
    %v2585 = vadd.f32 0.0, %v2584
    %v2586 = vpop.f32.mrf.mxu0
    %v2587 = vpop.f32.mrf.mxu0
    %v2588 = vadd.f32 0.0, %v2587
    %v2589 = vpop.f32.mrf.mxu0
    %2590 = vmatprep.mubr.bf16.mxu0 %v2078
    %2591 = vmatmul.mubr.bf16.gmra.mxu0 %v1617
    %v2592 = vpop.f32.mrf.mxu0
    %v2593 = vadd.f32 0.0, %v2592
    %v2594 = vpop.f32.mrf.mxu0
    %v2595 = vpop.f32.mrf.mxu0
    %v2596 = vadd.f32 0.0, %v2595
    %v2597 = vpop.f32.mrf.mxu0
    %2598 = vmatprep.mubr.bf16.mxu0 %v2081
    %2599 = vmatmul.mubr.bf16.gmra.mxu0 %v1619
    %v2600 = vpop.f32.mrf.mxu0
    %v2601 = vadd.f32 0.0, %v2600
    %v2602 = vpop.f32.mrf.mxu0
    %v2603 = vpop.f32.mrf.mxu0
    %v2604 = vadd.f32 0.0, %v2603
    %v2605 = vpop.f32.mrf.mxu0
    %2606 = vmatprep.mubr.bf16.mxu0 %v2084
    %2607 = vmatmul.mubr.bf16.gmra.mxu0 %v1621
    %v2608 = vpop.f32.mrf.mxu0
    %v2609 = vadd.f32 0.0, %v2608
    %v2610 = vpop.f32.mrf.mxu0
    %v2611 = vpop.f32.mrf.mxu0
    %v2612 = vadd.f32 0.0, %v2611
    %v2613 = vpop.f32.mrf.mxu0
    %2614 = vmatprep.mubr.bf16.mxu0 %v2087
    %2615 = vmatmul.mubr.bf16.gmra.mxu0 %v1623
    %v2616 = vpop.f32.mrf.mxu0
    %v2617 = vadd.f32 0.0, %v2616
    %v2618 = vpop.f32.mrf.mxu0
    %v2619 = vpop.f32.mrf.mxu0
    %v2620 = vadd.f32 0.0, %v2619
    %v2621 = vpop.f32.mrf.mxu0
    %2622 = vmatprep.mubr.bf16.mxu0 %v2090
    %2623 = vmatmul.mubr.bf16.gmra.mxu0 %v1625
    %v2624 = vpop.f32.mrf.mxu0
    %v2625 = vadd.f32 0.0, %v2624
    %v2626 = vpop.f32.mrf.mxu0
    %v2627 = vpop.f32.mrf.mxu0
    %v2628 = vadd.f32 0.0, %v2627
    %v2629 = vpop.f32.mrf.mxu0
    %2630 = vmatprep.mubr.bf16.mxu0 %v2093
    %2631 = vmatmul.mubr.bf16.gmra.mxu0 %v1627
    %v2632 = vpop.f32.mrf.mxu0
    %v2633 = vadd.f32 0.0, %v2632
    %v2634 = vpop.f32.mrf.mxu0
    %v2635 = vpop.f32.mrf.mxu0
    %v2636 = vadd.f32 0.0, %v2635
    %v2637 = vpop.f32.mrf.mxu0
    %2638 = vmatprep.mubr.bf16.mxu0 %v2096
    %2639 = vmatmul.mubr.bf16.gmra.mxu0 %v1629
    %v2640 = vpop.f32.mrf.mxu0
    %v2641 = vadd.f32 0.0, %v2640
    %v2642 = vpop.f32.mrf.mxu0
    %v2643 = vpop.f32.mrf.mxu0
    %v2644 = vadd.f32 0.0, %v2643
    %v2645 = vpop.f32.mrf.mxu0
    %2646 = vmatprep.mubr.bf16.mxu0 %v2099
    %2647 = vmatmul.mubr.bf16.gmra.mxu0 %v1631
    %v2648 = vpop.f32.mrf.mxu0
    %v2649 = vadd.f32 0.0, %v2648
    %v2650 = vpop.f32.mrf.mxu0
    %v2651 = vpop.f32.mrf.mxu0
    %v2652 = vadd.f32 0.0, %v2651
    %v2653 = vpop.f32.mrf.mxu0
    %2654 = vmatprep.mubr.bf16.mxu0 %v2102
    %2655 = vmatmul.mubr.bf16.gmra.mxu0 %v1633
    %v2656 = vpop.f32.mrf.mxu0
    %v2657 = vadd.f32 0.0, %v2656
    %v2658 = vpop.f32.mrf.mxu0
    %v2659 = vpop.f32.mrf.mxu0
    %v2660 = vadd.f32 0.0, %v2659
    %v2661 = vpop.f32.mrf.mxu0
    %2662 = vmatprep.mubr.bf16.mxu0 %v2105
    %2663 = vmatmul.mubr.bf16.gmra.mxu0 %v1635
    %v2664 = vpop.f32.mrf.mxu0
    %v2665 = vadd.f32 0.0, %v2664
    %v2666 = vpop.f32.mrf.mxu0
    %v2667 = vpop.f32.mrf.mxu0
    %v2668 = vadd.f32 0.0, %v2667
    %v2669 = vpop.f32.mrf.mxu0
    %2670 = vmatprep.mubr.bf16.mxu0 %v2108
    %2671 = vmatmul.mubr.bf16.gmra.mxu0 %v1637
    %v2672 = vpop.f32.mrf.mxu0
    %v2673 = vadd.f32 0.0, %v2672
    %v2674 = vpop.f32.mrf.mxu0
    %v2675 = vpop.f32.mrf.mxu0
    %v2676 = vadd.f32 0.0, %v2675
    %v2677 = vpop.f32.mrf.mxu0
    %2678 = vmatprep.mubr.bf16.mxu0 %v2111
    %2679 = vmatmul.mubr.bf16.gmra.mxu0 %v1639
    %v2680 = vpop.f32.mrf.mxu0
    %v2681 = vadd.f32 0.0, %v2680
    %v2682 = vpop.f32.mrf.mxu0
    %v2683 = vpop.f32.mrf.mxu0
    %v2684 = vadd.f32 0.0, %v2683
    %v2685 = vpop.f32.mrf.mxu0
    %2686 = vmatprep.mubr.bf16.mxu0 %v2114
    %2687 = vmatmul.mubr.bf16.gmra.mxu0 %v1641
    %v2688 = vpop.f32.mrf.mxu0
    %v2689 = vadd.f32 0.0, %v2688
    %v2690 = vpop.f32.mrf.mxu0
    %v2691 = vpop.f32.mrf.mxu0
    %v2692 = vadd.f32 0.0, %v2691
    %v2693 = vpop.f32.mrf.mxu0
    %2694 = vmatprep.mubr.bf16.mxu0 %v2117
    %2695 = vmatmul.mubr.bf16.gmra.mxu0 %v1643
    %v2696 = vpop.f32.mrf.mxu0
    %v2697 = vadd.f32 0.0, %v2696
    %v2698 = vpop.f32.mrf.mxu0
    %v2699 = vpop.f32.mrf.mxu0
    %v2700 = vadd.f32 0.0, %v2699
    %v2701 = vpop.f32.mrf.mxu0
    %2702 = vmatprep.mubr.bf16.mxu0 %v2120
    %2703 = vmatmul.mubr.bf16.gmra.mxu0 %v1645
    %v2704 = vpop.f32.mrf.mxu0
    %v2705 = vadd.f32 0.0, %v2704
    %v2706 = vpop.f32.mrf.mxu0
    %v2707 = vpop.f32.mrf.mxu0
    %v2708 = vadd.f32 0.0, %v2707
    %v2709 = vpop.f32.mrf.mxu0
    %2710 = vmatprep.mubr.bf16.mxu0 %v2123
    %2711 = vmatmul.mubr.bf16.gmra.mxu0 %v1647
    %v2712 = vpop.f32.mrf.mxu0
    %v2713 = vadd.f32 0.0, %v2712
    %v2714 = vpop.f32.mrf.mxu0
    %v2715 = vpop.f32.mrf.mxu0
    %v2716 = vadd.f32 0.0, %v2715
    %v2717 = vpop.f32.mrf.mxu0
    %2718 = vmatprep.mubr.bf16.mxu0 %v2126
    %2719 = vmatmul.mubr.bf16.gmra.mxu0 %v1649
    %v2720 = vpop.f32.mrf.mxu0
    %v2721 = vadd.f32 0.0, %v2720
    %v2722 = vpop.f32.mrf.mxu0
    %v2723 = vpop.f32.mrf.mxu0
    %v2724 = vadd.f32 0.0, %v2723
    %v2725 = vpop.f32.mrf.mxu0
    %2726 = vmatprep.mubr.bf16.mxu0 %v2129
    %2727 = vmatmul.mubr.bf16.gmra.mxu0 %v1651
    %v2728 = vpop.f32.mrf.mxu0
    %v2729 = vadd.f32 0.0, %v2728
    %v2730 = vpop.f32.mrf.mxu0
    %v2731 = vpop.f32.mrf.mxu0
    %v2732 = vadd.f32 0.0, %v2731
    %v2733 = vpop.f32.mrf.mxu0
    %2734 = vmatprep.mubr.bf16.mxu0 %v2132
    %2735 = vmatmul.mubr.bf16.gmra.mxu0 %v1653
    %v2736 = vpop.f32.mrf.mxu0
    %v2737 = vadd.f32 0.0, %v2736
    %v2738 = vpop.f32.mrf.mxu0
    %v2739 = vpop.f32.mrf.mxu0
    %v2740 = vadd.f32 0.0, %v2739
    %v2741 = vpop.f32.mrf.mxu0
    %2742 = vmatprep.mubr.bf16.mxu0 %v2135
    %2743 = vmatmul.mubr.bf16.gmra.mxu0 %v1655
    %v2744 = vpop.f32.mrf.mxu0
    %v2745 = vadd.f32 0.0, %v2744
    %v2746 = vpop.f32.mrf.mxu0
    %v2747 = vpop.f32.mrf.mxu0
    %v2748 = vadd.f32 0.0, %v2747
    %v2749 = vpop.f32.mrf.mxu0
    %2750 = vmatprep.mubr.bf16.mxu0 %v2138
    %2751 = vmatmul.mubr.bf16.gmra.mxu0 %v1657
    %v2752 = vpop.f32.mrf.mxu0
    %v2753 = vadd.f32 0.0, %v2752
    %v2754 = vpop.f32.mrf.mxu0
    %v2755 = vpop.f32.mrf.mxu0
    %v2756 = vadd.f32 0.0, %v2755
    %v2757 = vpop.f32.mrf.mxu0
    %2758 = vmatprep.mubr.bf16.mxu0 %v2141
    %2759 = vmatmul.mubr.bf16.gmra.mxu0 %v1659
    %v2760 = vpop.f32.mrf.mxu0
    %v2761 = vadd.f32 0.0, %v2760
    %v2762 = vpop.f32.mrf.mxu0
    %v2763 = vpop.f32.mrf.mxu0
    %v2764 = vadd.f32 0.0, %v2763
    %v2765 = vpop.f32.mrf.mxu0
    %2766 = vmatprep.mubr.bf16.mxu0 %v2144
    %2767 = vmatmul.mubr.bf16.gmra.mxu0 %v1661
    %v2768 = vpop.f32.mrf.mxu0
    %v2769 = vadd.f32 0.0, %v2768
    %v2770 = vpop.f32.mrf.mxu0
    %v2771 = vpop.f32.mrf.mxu0
    %v2772 = vadd.f32 0.0, %v2771
    %v2773 = vpop.f32.mrf.mxu0
    %2774 = vmatprep.mubr.bf16.mxu0 %v2147
    %2775 = vmatmul.mubr.bf16.gmra.mxu0 %v1663
    %v2776 = vpop.f32.mrf.mxu0
    %v2777 = vadd.f32 0.0, %v2776
    %v2778 = vpop.f32.mrf.mxu0
    %v2779 = vpop.f32.mrf.mxu0
    %v2780 = vadd.f32 0.0, %v2779
    %v2781 = vpop.f32.mrf.mxu0
    %2782 = vmatprep.mubr.bf16.mxu0 %v2150
    %2783 = vmatmul.mubr.bf16.gmra.mxu0 %v1665
    %v2784 = vpop.f32.mrf.mxu0
    %v2785 = vadd.f32 0.0, %v2784
    %v2786 = vpop.f32.mrf.mxu0
    %v2787 = vpop.f32.mrf.mxu0
    %v2788 = vadd.f32 0.0, %v2787
    %v2789 = vpop.f32.mrf.mxu0
    %2790 = vmatprep.mubr.bf16.mxu0 %v2153
    %2791 = vmatmul.mubr.bf16.gmra.mxu0 %v1667
    %v2792 = vpop.f32.mrf.mxu0
    %v2793 = vadd.f32 0.0, %v2792
    %v2794 = vpop.f32.mrf.mxu0
    %v2795 = vpop.f32.mrf.mxu0
    %v2796 = vadd.f32 0.0, %v2795
    %v2797 = vpop.f32.mrf.mxu0
    %2798 = vmatprep.mubr.bf16.mxu0 %v2156
    %2799 = vmatmul.mubr.bf16.gmra.mxu0 %v1669
    %v2800 = vpop.f32.mrf.mxu0
    %v2801 = vadd.f32 0.0, %v2800
    %v2802 = vpop.f32.mrf.mxu0
    %v2803 = vpop.f32.mrf.mxu0
    %v2804 = vadd.f32 0.0, %v2803
    %v2805 = vpop.f32.mrf.mxu0
    %2806 = vmatprep.mubr.bf16.mxu0 %v2159
    %2807 = vmatmul.mubr.bf16.gmra.mxu0 %v1671
    %v2808 = vpop.f32.mrf.mxu0
    %v2809 = vadd.f32 0.0, %v2808
    %v2810 = vpop.f32.mrf.mxu0
    %v2811 = vpop.f32.mrf.mxu0
    %v2812 = vadd.f32 0.0, %v2811
    %v2813 = vpop.f32.mrf.mxu0
    %2814 = vmatprep.mubr.bf16.mxu0 %v2162
    %2815 = vmatmul.mubr.bf16.gmra.mxu0 %v1673
    %v2816 = vpop.f32.mrf.mxu0
    %v2817 = vadd.f32 0.0, %v2816
    %v2818 = vpop.f32.mrf.mxu0
    %v2819 = vpop.f32.mrf.mxu0
    %v2820 = vadd.f32 0.0, %v2819
    %v2821 = vpop.f32.mrf.mxu0
    %2822 = vmatprep.mubr.bf16.mxu0 %v2165
    %2823 = vmatmul.mubr.bf16.gmra.mxu0 %v1675
    %v2824 = vpop.f32.mrf.mxu0
    %v2825 = vadd.f32 0.0, %v2824
    %v2826 = vpop.f32.mrf.mxu0
    %v2827 = vpop.f32.mrf.mxu0
    %v2828 = vadd.f32 0.0, %v2827
    %v2829 = vpop.f32.mrf.mxu0
    %2830 = vmatprep.mubr.bf16.mxu0 %v2168
    %2831 = vmatmul.mubr.bf16.gmra.mxu0 %v1677
    %v2832 = vpop.f32.mrf.mxu0
    %v2833 = vadd.f32 0.0, %v2832
    %v2834 = vpop.f32.mrf.mxu0
    %v2835 = vpop.f32.mrf.mxu0
    %v2836 = vadd.f32 0.0, %v2835
    %v2837 = vpop.f32.mrf.mxu0
    %2838 = vmatprep.mubr.bf16.mxu0 %v2171
    %2839 = vmatmul.mubr.bf16.gmra.mxu0 %v1679
    %v2840 = vpop.f32.mrf.mxu0
    %v2841 = vadd.f32 0.0, %v2840
    %v2842 = vpop.f32.mrf.mxu0
    %v2843 = vpop.f32.mrf.mxu0
    %v2844 = vadd.f32 0.0, %v2843
    %v2845 = vpop.f32.mrf.mxu0
    %2846 = vmatprep.mubr.bf16.mxu0 %v2174
    %2847 = vmatmul.mubr.bf16.gmra.mxu0 %v1681
    %v2848 = vpop.f32.mrf.mxu0
    %v2849 = vadd.f32 0.0, %v2848
    %v2850 = vpop.f32.mrf.mxu0
    %v2851 = vpop.f32.mrf.mxu0
    %v2852 = vadd.f32 0.0, %v2851
    %v2853 = vpop.f32.mrf.mxu0
    %2854 = vmatprep.mubr.bf16.mxu0 %v2177
    %2855 = vmatmul.mubr.bf16.gmra.mxu0 %v1683
    %v2856 = vpop.f32.mrf.mxu0
    %v2857 = vadd.f32 0.0, %v2856
    %v2858 = vpop.f32.mrf.mxu0
    %v2859 = vpop.f32.mrf.mxu0
    %v2860 = vadd.f32 0.0, %v2859
    %v2861 = vpop.f32.mrf.mxu0
    %2862 = vmatprep.mubr.bf16.mxu0 %v2180
    %2863 = vmatmul.mubr.bf16.gmra.mxu0 %v1685
    %v2864 = vpop.f32.mrf.mxu0
    %v2865 = vadd.f32 0.0, %v2864
    %v2866 = vpop.f32.mrf.mxu0
    %v2867 = vpop.f32.mrf.mxu0
    %v2868 = vadd.f32 0.0, %v2867
    %v2869 = vpop.f32.mrf.mxu0
    %2870 = vmatprep.mubr.bf16.mxu0 %v2183
    %2871 = vmatmul.mubr.bf16.gmra.mxu0 %v1687
    %v2872 = vpop.f32.mrf.mxu0
    %v2873 = vadd.f32 0.0, %v2872
    %v2874 = vpop.f32.mrf.mxu0
    %v2875 = vpop.f32.mrf.mxu0
    %v2876 = vadd.f32 0.0, %v2875
    %v2877 = vpop.f32.mrf.mxu0
    %2878 = vmatprep.mubr.bf16.mxu0 %v2186
    %2879 = vmatmul.mubr.bf16.gmra.mxu0 %v1689
    %v2880 = vpop.f32.mrf.mxu0
    %v2881 = vadd.f32 0.0, %v2880
    %v2882 = vpop.f32.mrf.mxu0
    %v2883 = vpop.f32.mrf.mxu0
    %v2884 = vadd.f32 0.0, %v2883
    %v2885 = vpop.f32.mrf.mxu0
    %2886 = vmatprep.mubr.bf16.mxu0 %v2189
    %2887 = vmatmul.mubr.bf16.gmra.mxu0 %v1691
    %v2888 = vpop.f32.mrf.mxu0
    %v2889 = vadd.f32 0.0, %v2888
    %v2890 = vpop.f32.mrf.mxu0
    %v2891 = vpop.f32.mrf.mxu0
    %v2892 = vadd.f32 0.0, %v2891
    %v2893 = vpop.f32.mrf.mxu0
    %2894 = vmatprep.mubr.bf16.mxu0 %v2192
    %2895 = vmatmul.mubr.bf16.gmra.mxu0 %v1693
    %v2896 = vpop.f32.mrf.mxu0
    %v2897 = vadd.f32 0.0, %v2896
    %v2898 = vpop.f32.mrf.mxu0
    %v2899 = vpop.f32.mrf.mxu0
    %v2900 = vadd.f32 0.0, %v2899
    %v2901 = vpop.f32.mrf.mxu0
    %2902 = vmatprep.mubr.bf16.mxu0 %v2195
    %2903 = vmatmul.mubr.bf16.gmra.mxu0 %v1695
    %v2904 = vpop.f32.mrf.mxu0
    %v2905 = vadd.f32 0.0, %v2904
    %v2906 = vpop.f32.mrf.mxu0
    %v2907 = vpop.f32.mrf.mxu0
    %v2908 = vadd.f32 0.0, %v2907
    %v2909 = vpop.f32.mrf.mxu0
    %2910 = vmatprep.mubr.bf16.mxu0 %v2198
    %2911 = vmatmul.mubr.bf16.gmra.mxu0 %v1697
    %v2912 = vpop.f32.mrf.mxu0
    %v2913 = vadd.f32 0.0, %v2912
    %v2914 = vpop.f32.mrf.mxu0
    %v2915 = vpop.f32.mrf.mxu0
    %v2916 = vadd.f32 0.0, %v2915
    %v2917 = vpop.f32.mrf.mxu0
    %2918 = vmatprep.mubr.bf16.mxu0 %v2201
    %2919 = vmatmul.mubr.bf16.gmra.mxu0 %v1699
    %v2920 = vpop.f32.mrf.mxu0
    %v2921 = vadd.f32 0.0, %v2920
    %v2922 = vpop.f32.mrf.mxu0
    %v2923 = vpop.f32.mrf.mxu0
    %v2924 = vadd.f32 0.0, %v2923
    %v2925 = vpop.f32.mrf.mxu0
    %2926 = vmatprep.mubr.bf16.mxu0 %v2204
    %2927 = vmatmul.mubr.bf16.gmra.mxu0 %v1701
    %v2928 = vpop.f32.mrf.mxu0
    %v2929 = vadd.f32 0.0, %v2928
    %v2930 = vpop.f32.mrf.mxu0
    %v2931 = vpop.f32.mrf.mxu0
    %v2932 = vadd.f32 0.0, %v2931
    %v2933 = vpop.f32.mrf.mxu0
    %2934 = vmatprep.mubr.bf16.mxu0 %v2207
    %2935 = vmatmul.mubr.bf16.gmra.mxu0 %v1703
    %v2936 = vpop.f32.mrf.mxu0
    %v2937 = vadd.f32 0.0, %v2936
    %v2938 = vpop.f32.mrf.mxu0
    %v2939 = vpop.f32.mrf.mxu0
    %v2940 = vadd.f32 0.0, %v2939
    %v2941 = vpop.f32.mrf.mxu0
    %2942 = vmatprep.mubr.bf16.mxu0 %v2210
    %2943 = vmatmul.mubr.bf16.gmra.mxu0 %v1705
    %v2944 = vpop.f32.mrf.mxu0
    %v2945 = vadd.f32 0.0, %v2944
    %v2946 = vpop.f32.mrf.mxu0
    %v2947 = vpop.f32.mrf.mxu0
    %v2948 = vadd.f32 0.0, %v2947
    %v2949 = vpop.f32.mrf.mxu0
    %2950 = vmatprep.mubr.bf16.mxu0 %v2213
    %2951 = vmatmul.mubr.bf16.gmra.mxu0 %v1707
    %v2952 = vpop.f32.mrf.mxu0
    %v2953 = vadd.f32 0.0, %v2952
    %v2954 = vpop.f32.mrf.mxu0
    %v2955 = vpop.f32.mrf.mxu0
    %v2956 = vadd.f32 0.0, %v2955
    %v2957 = vpop.f32.mrf.mxu0
    %2958 = vmatprep.mubr.bf16.mxu0 %v2216
    %2959 = vmatmul.mubr.bf16.gmra.mxu0 %v1709
    %v2960 = vpop.f32.mrf.mxu0
    %v2961 = vadd.f32 0.0, %v2960
    %v2962 = vpop.f32.mrf.mxu0
    %v2963 = vpop.f32.mrf.mxu0
    %v2964 = vadd.f32 0.0, %v2963
    %v2965 = vpop.f32.mrf.mxu0
    %2966 = vmatprep.mubr.bf16.mxu0 %v2219
    %2967 = vmatmul.mubr.bf16.gmra.mxu0 %v1711
    %v2968 = vpop.f32.mrf.mxu0
    %v2969 = vadd.f32 0.0, %v2968
    %v2970 = vpop.f32.mrf.mxu0
    %v2971 = vpop.f32.mrf.mxu0
    %v2972 = vadd.f32 0.0, %v2971
    %v2973 = vpop.f32.mrf.mxu0
    %2974 = vmatprep.mubr.bf16.mxu0 %v2222
    %2975 = vmatmul.mubr.bf16.gmra.mxu0 %v1713
    %v2976 = vpop.f32.mrf.mxu0
    %v2977 = vadd.f32 0.0, %v2976
    %v2978 = vpop.f32.mrf.mxu0
    %v2979 = vpop.f32.mrf.mxu0
    %v2980 = vadd.f32 0.0, %v2979
    %v2981 = vpop.f32.mrf.mxu0
    %2982 = vmatprep.mubr.bf16.mxu0 %v2225
    %2983 = vmatmul.mubr.bf16.gmra.mxu0 %v1715
    %v2984 = vpop.f32.mrf.mxu0
    %v2985 = vadd.f32 0.0, %v2984
    %v2986 = vpop.f32.mrf.mxu0
    %v2987 = vpop.f32.mrf.mxu0
    %v2988 = vadd.f32 0.0, %v2987
    %v2989 = vpop.f32.mrf.mxu0
    %2990 = vmatprep.mubr.bf16.mxu0 %v2228
    %2991 = vmatmul.mubr.bf16.gmra.mxu0 %v1717
    %v2992 = vpop.f32.mrf.mxu0
    %v2993 = vadd.f32 0.0, %v2992
    %v2994 = vpop.f32.mrf.mxu0
    %v2995 = vpop.f32.mrf.mxu0
    %v2996 = vadd.f32 0.0, %v2995
    %v2997 = vpop.f32.mrf.mxu0
    %2998 = vmatprep.mubr.bf16.mxu0 %v2231
    %2999 = vmatmul.mubr.bf16.gmra.mxu0 %v1719
    %v3000 = vpop.f32.mrf.mxu0
    %v3001 = vadd.f32 0.0, %v3000
    %v3002 = vpop.f32.mrf.mxu0
    %v3003 = vpop.f32.mrf.mxu0
    %v3004 = vadd.f32 0.0, %v3003
    %v3005 = vpop.f32.mrf.mxu0
    %3006 = vmatprep.mubr.bf16.mxu0 %v2234
    %3007 = vmatmul.mubr.bf16.gmra.mxu0 %v1721
    %v3008 = vpop.f32.mrf.mxu0
    %v3009 = vadd.f32 0.0, %v3008
    %v3010 = vpop.f32.mrf.mxu0
    %v3011 = vpop.f32.mrf.mxu0
    %v3012 = vadd.f32 0.0, %v3011
    %v3013 = vpop.f32.mrf.mxu0
    %3014 = vmatprep.mubr.bf16.mxu0 %v2237
    %3015 = vmatmul.mubr.bf16.gmra.mxu0 %v1723
    %v3016 = vpop.f32.mrf.mxu0
    %v3017 = vadd.f32 0.0, %v3016
    %v3018 = vpop.f32.mrf.mxu0
    %v3019 = vpop.f32.mrf.mxu0
    %v3020 = vadd.f32 0.0, %v3019
    %v3021 = vpop.f32.mrf.mxu0
    %3022 = vmatprep.mubr.bf16.mxu0 %v2240
    %3023 = vmatmul.mubr.bf16.gmra.mxu0 %v1725
    %v3024 = vpop.f32.mrf.mxu0
    %v3025 = vadd.f32 0.0, %v3024
    %v3026 = vpop.f32.mrf.mxu0
    %v3027 = vpop.f32.mrf.mxu0
    %v3028 = vadd.f32 0.0, %v3027
    %v3029 = vpop.f32.mrf.mxu0
    %3030 = vmatprep.mubr.bf16.mxu0 %v2243
    %3031 = vmatmul.mubr.bf16.gmra.mxu0 %v1727
    %v3032 = vpop.f32.mrf.mxu0
    %v3033 = vadd.f32 0.0, %v3032
    %v3034 = vpop.f32.mrf.mxu0
    %v3035 = vpop.f32.mrf.mxu0
    %v3036 = vadd.f32 0.0, %v3035
    %v3037 = vpop.f32.mrf.mxu0
    %3038 = vmatprep.mubr.bf16.mxu0 %v2246
    %3039 = vmatmul.mubr.bf16.gmra.mxu0 %v1729
    %v3040 = vpop.f32.mrf.mxu0
    %v3041 = vadd.f32 0.0, %v3040
    %v3042 = vpop.f32.mrf.mxu0
    %v3043 = vpop.f32.mrf.mxu0
    %v3044 = vadd.f32 0.0, %v3043
    %v3045 = vpop.f32.mrf.mxu0
    %3046 = vmatprep.mubr.bf16.mxu0 %v2249
    %3047 = vmatmul.mubr.bf16.gmra.mxu0 %v1731
    %v3048 = vpop.f32.mrf.mxu0
    %v3049 = vadd.f32 0.0, %v3048
    %v3050 = vpop.f32.mrf.mxu0
    %v3051 = vpop.f32.mrf.mxu0
    %v3052 = vadd.f32 0.0, %v3051
    %v3053 = vpop.f32.mrf.mxu0
    %3054 = vmatprep.mubr.bf16.mxu0 %v2252
    %3055 = vmatmul.mubr.bf16.gmra.mxu0 %v1733
    %v3056 = vpop.f32.mrf.mxu0
    %v3057 = vadd.f32 0.0, %v3056
    %v3058 = vpop.f32.mrf.mxu0
    %v3059 = vpop.f32.mrf.mxu0
    %v3060 = vadd.f32 0.0, %v3059
    %v3061 = vpop.f32.mrf.mxu0
    %3062 = vmatprep.mubr.bf16.mxu0 %v2255
    %3063 = vmatmul.mubr.bf16.gmra.mxu0 %v1735
    %v3064 = vpop.f32.mrf.mxu0
    %v3065 = vadd.f32 0.0, %v3064
    %v3066 = vpop.f32.mrf.mxu0
    %v3067 = vpop.f32.mrf.mxu0
    %v3068 = vadd.f32 0.0, %v3067
    %v3069 = vpop.f32.mrf.mxu0
    %3070 = vmatprep.mubr.bf16.mxu0 %v2258
    %3071 = vmatmul.mubr.bf16.gmra.mxu0 %v1737
    %v3072 = vpop.f32.mrf.mxu0
    %v3073 = vadd.f32 0.0, %v3072
    %v3074 = vpop.f32.mrf.mxu0
    %v3075 = vpop.f32.mrf.mxu0
    %v3076 = vadd.f32 0.0, %v3075
    %v3077 = vpop.f32.mrf.mxu0
    %3078 = vmatprep.mubr.bf16.mxu0 %v2261
    %3079 = vmatmul.mubr.bf16.gmra.mxu0 %v1739
    %v3080 = vpop.f32.mrf.mxu0
    %v3081 = vadd.f32 0.0, %v3080
    %v3082 = vpop.f32.mrf.mxu0
    %v3083 = vpop.f32.mrf.mxu0
    %v3084 = vadd.f32 0.0, %v3083
    %v3085 = vpop.f32.mrf.mxu0
    %3086 = vmatprep.mubr.bf16.mxu0 %v2264
    %3087 = vmatmul.mubr.bf16.gmra.mxu0 %v1741
    %v3088 = vpop.f32.mrf.mxu0
    %v3089 = vadd.f32 0.0, %v3088
    %v3090 = vpop.f32.mrf.mxu0
    %v3091 = vpop.f32.mrf.mxu0
    %v3092 = vadd.f32 0.0, %v3091
    %v3093 = vpop.f32.mrf.mxu0
    %3094 = vmatprep.mubr.bf16.mxu0 %v2267
    %3095 = vmatmul.mubr.bf16.gmra.mxu0 %v1743
    %v3096 = vpop.f32.mrf.mxu0
    %v3097 = vadd.f32 0.0, %v3096
    %v3098 = vpop.f32.mrf.mxu0
    %v3099 = vpop.f32.mrf.mxu0
    %v3100 = vadd.f32 0.0, %v3099
    %v3101 = vpop.f32.mrf.mxu0
    %3102 = vmatprep.mubr.bf16.mxu0 %v2270
    %3103 = vmatmul.mubr.bf16.gmra.mxu0 %v1745
    %v3104 = vpop.f32.mrf.mxu0
    %v3105 = vadd.f32 0.0, %v3104
    %v3106 = vpop.f32.mrf.mxu0
    %v3107 = vpop.f32.mrf.mxu0
    %v3108 = vadd.f32 0.0, %v3107
    %v3109 = vpop.f32.mrf.mxu0
    %3110 = vmatprep.mubr.bf16.mxu0 %v2273
    %3111 = vmatmul.mubr.bf16.gmra.mxu0 %v1747
    %v3112 = vpop.f32.mrf.mxu0
    %v3113 = vadd.f32 0.0, %v3112
    %v3114 = vpop.f32.mrf.mxu0
    %v3115 = vpop.f32.mrf.mxu0
    %v3116 = vadd.f32 0.0, %v3115
    %v3117 = vpop.f32.mrf.mxu0
    %3118 = vmatprep.mubr.bf16.mxu0 %v2276
    %3119 = vmatmul.mubr.bf16.gmra.mxu0 %v1749
    %v3120 = vpop.f32.mrf.mxu0
    %v3121 = vadd.f32 0.0, %v3120
    %v3122 = vpop.f32.mrf.mxu0
    %v3123 = vpop.f32.mrf.mxu0
    %v3124 = vadd.f32 0.0, %v3123
    %v3125 = vpop.f32.mrf.mxu0
    %3126 = vmatprep.mubr.bf16.mxu0 %v2279
    %3127 = vmatmul.mubr.bf16.gmra.mxu0 %v1751
    %v3128 = vpop.f32.mrf.mxu0
    %v3129 = vadd.f32 0.0, %v3128
    %v3130 = vpop.f32.mrf.mxu0
    %v3131 = vpop.f32.mrf.mxu0
    %v3132 = vadd.f32 0.0, %v3131
    %v3133 = vpop.f32.mrf.mxu0
    %3134 = vmatprep.mubr.bf16.mxu0 %v2282
    %3135 = vmatmul.mubr.bf16.gmra.mxu0 %v1753
    %v3136 = vpop.f32.mrf.mxu0
    %v3137 = vadd.f32 0.0, %v3136
    %v3138 = vpop.f32.mrf.mxu0
    %v3139 = vpop.f32.mrf.mxu0
    %v3140 = vadd.f32 0.0, %v3139
    %v3141 = vpop.f32.mrf.mxu0
    %3142 = vmatprep.mubr.bf16.mxu0 %v2285
    %3143 = vmatmul.mubr.bf16.gmra.mxu0 %v1755
    %v3144 = vpop.f32.mrf.mxu0
    %v3145 = vadd.f32 0.0, %v3144
    %v3146 = vpop.f32.mrf.mxu0
    %v3147 = vpop.f32.mrf.mxu0
    %v3148 = vadd.f32 0.0, %v3147
    %v3149 = vpop.f32.mrf.mxu0
    %3150 = vmatprep.mubr.bf16.mxu0 %v2288
    %3151 = vmatmul.mubr.bf16.gmra.mxu0 %v1757
    %v3152 = vpop.f32.mrf.mxu0
    %v3153 = vadd.f32 0.0, %v3152
    %v3154 = vpop.f32.mrf.mxu0
    %v3155 = vpop.f32.mrf.mxu0
    %v3156 = vadd.f32 0.0, %v3155
    %v3157 = vpop.f32.mrf.mxu0
    %3158 = vmatprep.mubr.bf16.mxu0 %v2291
    %3159 = vmatmul.mubr.bf16.gmra.mxu0 %v1759
    %v3160 = vpop.f32.mrf.mxu0
    %v3161 = vadd.f32 0.0, %v3160
    %v3162 = vpop.f32.mrf.mxu0
    %v3163 = vpop.f32.mrf.mxu0
    %v3164 = vadd.f32 0.0, %v3163
    %v3165 = vpop.f32.mrf.mxu0
    %3166 = vmatprep.mubr.bf16.mxu0 %v2294
    %3167 = vmatmul.mubr.bf16.gmra.mxu0 %v1761
    %v3168 = vpop.f32.mrf.mxu0
    %v3169 = vadd.f32 0.0, %v3168
    %v3170 = vpop.f32.mrf.mxu0
    %v3171 = vpop.f32.mrf.mxu0
    %v3172 = vadd.f32 0.0, %v3171
    %v3173 = vpop.f32.mrf.mxu0
    %3174 = vmatprep.mubr.bf16.mxu0 %v2297
    %3175 = vmatmul.mubr.bf16.gmra.mxu0 %v1763
    %v3176 = vpop.f32.mrf.mxu0
    %v3177 = vadd.f32 0.0, %v3176
    %v3178 = vpop.f32.mrf.mxu0
    %v3179 = vpop.f32.mrf.mxu0
    %v3180 = vadd.f32 0.0, %v3179
    %v3181 = vpop.f32.mrf.mxu0
    %3182 = vmatprep.mubr.bf16.mxu0 %v2300
    %3183 = vmatmul.mubr.bf16.gmra.mxu0 %v1765
    %v3184 = vpop.f32.mrf.mxu0
    %v3185 = vadd.f32 0.0, %v3184
    %v3186 = vpop.f32.mrf.mxu0
    %v3187 = vpop.f32.mrf.mxu0
    %v3188 = vadd.f32 0.0, %v3187
    %v3189 = vpop.f32.mrf.mxu0
    %3190 = vmatprep.mubr.bf16.mxu0 %v2303
    %3191 = vmatmul.mubr.bf16.gmra.mxu0 %v1767
    %v3192 = vpop.f32.mrf.mxu0
    %v3193 = vadd.f32 0.0, %v3192
    %v3194 = vpop.f32.mrf.mxu0
    %v3195 = vpop.f32.mrf.mxu0
    %v3196 = vadd.f32 0.0, %v3195
    %v3197 = vpop.f32.mrf.mxu0
    %3198 = vmatprep.mubr.bf16.mxu0 %v2306
    %3199 = vmatmul.mubr.bf16.gmra.mxu0 %v1769
    %v3200 = vpop.f32.mrf.mxu0
    %v3201 = vadd.f32 0.0, %v3200
    %v3202 = vpop.f32.mrf.mxu0
    %v3203 = vpop.f32.mrf.mxu0
    %v3204 = vadd.f32 0.0, %v3203
    %v3205 = vpop.f32.mrf.mxu0
    %3206 = vmatprep.mubr.bf16.mxu0 %v2309
    %3207 = vmatmul.mubr.bf16.gmra.mxu0 %v1771
    %v3208 = vpop.f32.mrf.mxu0
    %v3209 = vadd.f32 0.0, %v3208
    %v3210 = vpop.f32.mrf.mxu0
    %v3211 = vpop.f32.mrf.mxu0
    %v3212 = vadd.f32 0.0, %v3211
    %v3213 = vpop.f32.mrf.mxu0
    %3214 = vmatprep.mubr.bf16.mxu0 %v2312
    %3215 = vmatmul.mubr.bf16.gmra.mxu0 %v1773
    %v3216 = vpop.f32.mrf.mxu0
    %v3217 = vadd.f32 0.0, %v3216
    %v3218 = vpop.f32.mrf.mxu0
    %v3219 = vpop.f32.mrf.mxu0
    %v3220 = vadd.f32 0.0, %v3219
    %v3221 = vpop.f32.mrf.mxu0
    %3222 = vmatprep.mubr.bf16.mxu0 %v2315
    %3223 = vmatmul.mubr.bf16.gmra.mxu0 %v1775
    %v3224 = vpop.f32.mrf.mxu0
    %v3225 = vadd.f32 0.0, %v3224
    %v3226 = vpop.f32.mrf.mxu0
    %v3227 = vpop.f32.mrf.mxu0
    %v3228 = vadd.f32 0.0, %v3227
    %v3229 = vpop.f32.mrf.mxu0
    %3230 = vmatprep.mubr.bf16.mxu0 %v2318
    %3231 = vmatmul.mubr.bf16.gmra.mxu0 %v1777
    %v3232 = vpop.f32.mrf.mxu0
    %v3233 = vadd.f32 0.0, %v3232
    %v3234 = vpop.f32.mrf.mxu0
    %v3235 = vpop.f32.mrf.mxu0
    %v3236 = vadd.f32 0.0, %v3235
    %v3237 = vpop.f32.mrf.mxu0
    %3238 = vmatprep.mubr.bf16.mxu0 %v2321
    %3239 = vmatmul.mubr.bf16.gmra.mxu0 %v1779
    %v3240 = vpop.f32.mrf.mxu0
    %v3241 = vadd.f32 0.0, %v3240
    %v3242 = vpop.f32.mrf.mxu0
    %v3243 = vpop.f32.mrf.mxu0
    %v3244 = vadd.f32 0.0, %v3243
    %v3245 = vpop.f32.mrf.mxu0
    %3246 = vmatprep.mubr.bf16.mxu0 %v2324
    %3247 = vmatmul.mubr.bf16.gmra.mxu0 %v1781
    %v3248 = vpop.f32.mrf.mxu0
    %v3249 = vadd.f32 0.0, %v3248
    %v3250 = vpop.f32.mrf.mxu0
    %v3251 = vpop.f32.mrf.mxu0
    %v3252 = vadd.f32 0.0, %v3251
    %v3253 = vpop.f32.mrf.mxu0
    %3254 = vmatprep.mubr.bf16.mxu0 %v2327
    %3255 = vmatmul.mubr.bf16.gmra.mxu0 %v1783
    %v3256 = vpop.f32.mrf.mxu0
    %v3257 = vadd.f32 0.0, %v3256
    %v3258 = vpop.f32.mrf.mxu0
    %v3259 = vpop.f32.mrf.mxu0
    %v3260 = vadd.f32 0.0, %v3259
    %v3261 = vpop.f32.mrf.mxu0
    %3262 = vmatprep.mubr.bf16.mxu0 %v2330
    %3263 = vmatmul.mubr.bf16.gmra.mxu0 %v1785
    %v3264 = vpop.f32.mrf.mxu0
    %v3265 = vadd.f32 0.0, %v3264
    %v3266 = vpop.f32.mrf.mxu0
    %v3267 = vpop.f32.mrf.mxu0
    %v3268 = vadd.f32 0.0, %v3267
    %v3269 = vpop.f32.mrf.mxu0
    %3270 = vmatprep.mubr.bf16.mxu0 %v2333
    %3271 = vmatmul.mubr.bf16.gmra.mxu0 %v1787
    %v3272 = vpop.f32.mrf.mxu0
    %v3273 = vadd.f32 0.0, %v3272
    %v3274 = vpop.f32.mrf.mxu0
    %v3275 = vpop.f32.mrf.mxu0
    %v3276 = vadd.f32 0.0, %v3275
    %v3277 = vpop.f32.mrf.mxu0
    %3278 = vmatprep.mubr.bf16.mxu0 %v2336
    %3279 = vmatmul.mubr.bf16.gmra.mxu0 %v1789
    %v3280 = vpop.f32.mrf.mxu0
    %v3281 = vadd.f32 0.0, %v3280
    %v3282 = vpop.f32.mrf.mxu0
    %v3283 = vpop.f32.mrf.mxu0
    %v3284 = vadd.f32 0.0, %v3283
    %v3285 = vpop.f32.mrf.mxu0
    %3286 = vmatprep.mubr.bf16.mxu0 %v2339
    %3287 = vmatmul.mubr.bf16.gmra.mxu0 %v1791
    %v3288 = vpop.f32.mrf.mxu0
    %v3289 = vadd.f32 0.0, %v3288
    %v3290 = vpop.f32.mrf.mxu0
    %v3291 = vpop.f32.mrf.mxu0
    %v3292 = vadd.f32 0.0, %v3291
    %v3293 = vpop.f32.mrf.mxu0
    %3294 = vmatprep.mubr.bf16.mxu0 %v2342
    %3295 = vmatmul.mubr.bf16.gmra.mxu0 %v1793
    %v3296 = vpop.f32.mrf.mxu0
    %v3297 = vadd.f32 0.0, %v3296
    %v3298 = vpop.f32.mrf.mxu0
    %v3299 = vpop.f32.mrf.mxu0
    %v3300 = vadd.f32 0.0, %v3299
    %v3301 = vpop.f32.mrf.mxu0
    %3302 = vmatprep.mubr.bf16.mxu0 %v2345
    %3303 = vmatmul.mubr.bf16.gmra.mxu0 %v1795
    %v3304 = vpop.f32.mrf.mxu0
    %v3305 = vadd.f32 0.0, %v3304
    %v3306 = vpop.f32.mrf.mxu0
    %v3307 = vpop.f32.mrf.mxu0
    %v3308 = vadd.f32 0.0, %v3307
    %v3309 = vpop.f32.mrf.mxu0
    %3310 = vmatprep.mubr.bf16.mxu0 %v2348
    %3311 = vmatmul.mubr.bf16.gmra.mxu0 %v1797
    %v3312 = vpop.f32.mrf.mxu0
    %v3313 = vadd.f32 0.0, %v3312
    %v3314 = vpop.f32.mrf.mxu0
    %v3315 = vpop.f32.mrf.mxu0
    %v3316 = vadd.f32 0.0, %v3315
    %v3317 = vpop.f32.mrf.mxu0
    %3318 = vmatprep.mubr.bf16.mxu0 %v2351
    %3319 = vmatmul.mubr.bf16.gmra.mxu0 %v1799
    %v3320 = vpop.f32.mrf.mxu0
    %v3321 = vadd.f32 0.0, %v3320
    %v3322 = vpop.f32.mrf.mxu0
    %v3323 = vpop.f32.mrf.mxu0
    %v3324 = vadd.f32 0.0, %v3323
    %v3325 = vpop.f32.mrf.mxu0
    %3326 = vmatprep.mubr.bf16.mxu0 %v2354
    %3327 = vmatmul.mubr.bf16.gmra.mxu0 %v1801
    %v3328 = vpop.f32.mrf.mxu0
    %v3329 = vadd.f32 0.0, %v3328
    %v3330 = vpop.f32.mrf.mxu0
    %v3331 = vpop.f32.mrf.mxu0
    %v3332 = vadd.f32 0.0, %v3331
    %v3333 = vpop.f32.mrf.mxu0
    %3334 = vmatprep.mubr.bf16.mxu0 %v2357
    %3335 = vmatmul.mubr.bf16.gmra.mxu0 %v1803
    %v3336 = vpop.f32.mrf.mxu0
    %v3337 = vadd.f32 0.0, %v3336
    %v3338 = vpop.f32.mrf.mxu0
    %v3339 = vpop.f32.mrf.mxu0
    %v3340 = vadd.f32 0.0, %v3339
    %v3341 = vpop.f32.mrf.mxu0
    %3342 = vmatprep.mubr.bf16.mxu0 %v2360
    %3343 = vmatmul.mubr.bf16.gmra.mxu0 %v1805
    %v3344 = vpop.f32.mrf.mxu0
    %v3345 = vadd.f32 0.0, %v3344
    %v3346 = vpop.f32.mrf.mxu0
    %v3347 = vpop.f32.mrf.mxu0
    %v3348 = vadd.f32 0.0, %v3347
    %v3349 = vpop.f32.mrf.mxu0
    %3350 = vmatprep.mubr.bf16.mxu0 %v2363
    %3351 = vmatmul.mubr.bf16.gmra.mxu0 %v1807
    %v3352 = vpop.f32.mrf.mxu0
    %v3353 = vadd.f32 0.0, %v3352
    %v3354 = vpop.f32.mrf.mxu0
    %v3355 = vpop.f32.mrf.mxu0
    %v3356 = vadd.f32 0.0, %v3355
    %v3357 = vpop.f32.mrf.mxu0
    %3358 = vmatprep.mubr.bf16.mxu0 %v2366
    %3359 = vmatmul.mubr.bf16.gmra.mxu0 %v1809
    %v3360 = vpop.f32.mrf.mxu0
    %v3361 = vadd.f32 0.0, %v3360
    %v3362 = vpop.f32.mrf.mxu0
    %v3363 = vpop.f32.mrf.mxu0
    %v3364 = vadd.f32 0.0, %v3363
    %v3365 = vpop.f32.mrf.mxu0
    %3366 = vmatprep.mubr.bf16.mxu0 %v2369
    %3367 = vmatmul.mubr.bf16.gmra.mxu0 %v1811
    %v3368 = vpop.f32.mrf.mxu0
    %v3369 = vadd.f32 0.0, %v3368
    %v3370 = vpop.f32.mrf.mxu0
    %v3371 = vpop.f32.mrf.mxu0
    %v3372 = vadd.f32 0.0, %v3371
    %v3373 = vpop.f32.mrf.mxu0
    %3374 = vmatprep.mubr.bf16.mxu0 %v2372
    %3375 = vmatmul.mubr.bf16.gmra.mxu0 %v1813
    %v3376 = vpop.f32.mrf.mxu0
    %v3377 = vadd.f32 0.0, %v3376
    %v3378 = vpop.f32.mrf.mxu0
    %v3379 = vpop.f32.mrf.mxu0
    %v3380 = vadd.f32 0.0, %v3379
    %v3381 = vpop.f32.mrf.mxu0
    %3382 = vmatprep.mubr.bf16.mxu0 %v2375
    %3383 = vmatmul.mubr.bf16.gmra.mxu0 %v1815
    %v3384 = vpop.f32.mrf.mxu0
    %v3385 = vadd.f32 0.0, %v3384
    %v3386 = vpop.f32.mrf.mxu0
    %v3387 = vpop.f32.mrf.mxu0
    %v3388 = vadd.f32 0.0, %v3387
    %v3389 = vpop.f32.mrf.mxu0
    %3390 = vmatprep.mubr.bf16.mxu0 %v2378
    %3391 = vmatmul.mubr.bf16.gmra.mxu0 %v1817
    %v3392 = vpop.f32.mrf.mxu0
    %v3393 = vadd.f32 0.0, %v3392
    %v3394 = vpop.f32.mrf.mxu0
    %v3395 = vpop.f32.mrf.mxu0
    %v3396 = vadd.f32 0.0, %v3395
    %v3397 = vpop.f32.mrf.mxu0
    %3398 = vmatprep.mubr.bf16.mxu0 %v2381
    %3399 = vmatmul.mubr.bf16.gmra.mxu0 %v1819
    %v3400 = vpop.f32.mrf.mxu0
    %v3401 = vadd.f32 0.0, %v3400
    %v3402 = vpop.f32.mrf.mxu0
    %v3403 = vpop.f32.mrf.mxu0
    %v3404 = vadd.f32 0.0, %v3403
    %v3405 = vpop.f32.mrf.mxu0
    %3406 = vmatprep.mubr.bf16.mxu0 %v2384
    %3407 = vmatmul.mubr.bf16.gmra.mxu0 %v1821
    %v3408 = vpop.f32.mrf.mxu0
    %v3409 = vadd.f32 0.0, %v3408
    %v3410 = vpop.f32.mrf.mxu0
    %v3411 = vpop.f32.mrf.mxu0
    %v3412 = vadd.f32 0.0, %v3411
    %v3413 = vpop.f32.mrf.mxu0
    %3414 = vmatprep.mubr.bf16.mxu0 %v2387
    %3415 = vmatmul.mubr.bf16.gmra.mxu0 %v1823
    %v3416 = vpop.f32.mrf.mxu0
    %v3417 = vadd.f32 0.0, %v3416
    %v3418 = vpop.f32.mrf.mxu0
    %v3419 = vpop.f32.mrf.mxu0
    %v3420 = vadd.f32 0.0, %v3419
    %v3421 = vpop.f32.mrf.mxu0
    %3422 = vmatprep.mubr.bf16.mxu0 %v2390
    %3423 = vmatmul.mubr.bf16.gmra.mxu0 %v1825
    %v3424 = vpop.f32.mrf.mxu0
    %v3425 = vadd.f32 0.0, %v3424
    %v3426 = vpop.f32.mrf.mxu0
    %v3427 = vpop.f32.mrf.mxu0
    %v3428 = vadd.f32 0.0, %v3427
    %v3429 = vpop.f32.mrf.mxu0
    %3430 = vmatprep.mubr.bf16.mxu0 %v2393
    %3431 = vmatmul.mubr.bf16.gmra.mxu0 %v1827
    %v3432 = vpop.f32.mrf.mxu0
    %v3433 = vadd.f32 0.0, %v3432
    %v3434 = vpop.f32.mrf.mxu0
    %v3435 = vpop.f32.mrf.mxu0
    %v3436 = vadd.f32 0.0, %v3435
    %v3437 = vpop.f32.mrf.mxu0
    %3438 = vmatprep.mubr.bf16.mxu0 %v2396
    %3439 = vmatmul.mubr.bf16.gmra.mxu0 %v1829
    %v3440 = vpop.f32.mrf.mxu0
    %v3441 = vadd.f32 0.0, %v3440
    %v3442 = vpop.f32.mrf.mxu0
    %v3443 = vpop.f32.mrf.mxu0
    %v3444 = vadd.f32 0.0, %v3443
    %v3445 = vpop.f32.mrf.mxu0
    %3446 = vmatprep.mubr.bf16.mxu0 %v2399
    %3447 = vmatmul.mubr.bf16.gmra.mxu0 %v1831
    %v3448 = vpop.f32.mrf.mxu0
    %v3449 = vadd.f32 0.0, %v3448
    %v3450 = vpop.f32.mrf.mxu0
    %v3451 = vpop.f32.mrf.mxu0
    %v3452 = vadd.f32 0.0, %v3451
    %v3453 = vpop.f32.mrf.mxu0
    %3454 = vmatprep.mubr.bf16.mxu0 %v2402
    %3455 = vmatmul.mubr.bf16.gmra.mxu0 %v1833
    %v3456 = vpop.f32.mrf.mxu0
    %v3457 = vadd.f32 0.0, %v3456
    %v3458 = vpop.f32.mrf.mxu0
    %v3459 = vpop.f32.mrf.mxu0
    %v3460 = vadd.f32 0.0, %v3459
    %v3461 = vpop.f32.mrf.mxu0
    %3462 = vmatprep.mubr.bf16.mxu0 %v2405
    %3463 = vmatmul.mubr.bf16.gmra.mxu0 %v1835
    %v3464 = vpop.f32.mrf.mxu0
    %v3465 = vadd.f32 0.0, %v3464
    %v3466 = vpop.f32.mrf.mxu0
    %v3467 = vpop.f32.mrf.mxu0
    %v3468 = vadd.f32 0.0, %v3467
    %v3469 = vpop.f32.mrf.mxu0
    %3470 = vdwg.mxu0
    %v3471 = vadd.f32 %v282, %v2449
    %v3472 = vadd.f32 %v283, %v2452
    %v3473 = vadd.f32 %v284, %v2457
    %v3474 = vadd.f32 %v285, %v2460
    %v3475 = vadd.f32 %v286, %v2465
    %v3476 = vadd.f32 %v287, %v2468
    %v3477 = vadd.f32 %v288, %v2473
    %v3478 = vadd.f32 %v289, %v2476
    %v3479 = vadd.f32 %v290, %v2481
    %v3480 = vadd.f32 %v291, %v2484
    %v3481 = vadd.f32 %v292, %v2489
    %v3482 = vadd.f32 %v293, %v2492
    %v3483 = vadd.f32 %v294, %v2497
    %v3484 = vadd.f32 %v295, %v2500
    %v3485 = vadd.f32 %v296, %v2505
    %v3486 = vadd.f32 %v297, %v2508
    %v3487 = vadd.f32 %v298, %v2513
    %v3488 = vadd.f32 %v299, %v2516
    %v3489 = vadd.f32 %v300, %v2521
    %v3490 = vadd.f32 %v301, %v2524
    %v3491 = vadd.f32 %v302, %v2529
    %v3492 = vadd.f32 %v303, %v2532
    %v3493 = vadd.f32 %v304, %v2537
    %v3494 = vadd.f32 %v305, %v2540
    %v3495 = vadd.f32 %v306, %v2545
    %v3496 = vadd.f32 %v307, %v2548
    %v3497 = vadd.f32 %v308, %v2553
    %v3498 = vadd.f32 %v309, %v2556
    %v3499 = vadd.f32 %v310, %v2561
    %v3500 = vadd.f32 %v311, %v2564
    %v3501 = vadd.f32 %v312, %v2569
    %v3502 = vadd.f32 %v313, %v2572
    %v3503 = vadd.f32 %v314, %v2577
    %v3504 = vadd.f32 %v315, %v2580
    %v3505 = vadd.f32 %v316, %v2585
    %v3506 = vadd.f32 %v317, %v2588
    %v3507 = vadd.f32 %v318, %v2593
    %v3508 = vadd.f32 %v319, %v2596
    %v3509 = vadd.f32 %v320, %v2601
    %v3510 = vadd.f32 %v321, %v2604
    %v3511 = vadd.f32 %v322, %v2609
    %v3512 = vadd.f32 %v323, %v2612
    %v3513 = vadd.f32 %v324, %v2617
    %v3514 = vadd.f32 %v325, %v2620
    %v3515 = vadd.f32 %v326, %v2625
    %v3516 = vadd.f32 %v327, %v2628
    %v3517 = vadd.f32 %v328, %v2633
    %v3518 = vadd.f32 %v329, %v2636
    %v3519 = vadd.f32 %v330, %v2641
    %v3520 = vadd.f32 %v331, %v2644
    %v3521 = vadd.f32 %v332, %v2649
    %v3522 = vadd.f32 %v333, %v2652
    %v3523 = vadd.f32 %v334, %v2657
    %v3524 = vadd.f32 %v335, %v2660
    %v3525 = vadd.f32 %v336, %v2665
    %v3526 = vadd.f32 %v337, %v2668
    %v3527 = vadd.f32 %v338, %v2673
    %v3528 = vadd.f32 %v339, %v2676
    %v3529 = vadd.f32 %v340, %v2681
    %v3530 = vadd.f32 %v341, %v2684
    %v3531 = vadd.f32 %v342, %v2689
    %v3532 = vadd.f32 %v343, %v2692
    %v3533 = vadd.f32 %v344, %v2697
    %v3534 = vadd.f32 %v345, %v2700
    %v3535 = vadd.f32 %v346, %v2705
    %v3536 = vadd.f32 %v347, %v2708
    %v3537 = vadd.f32 %v348, %v2713
    %v3538 = vadd.f32 %v349, %v2716
    %v3539 = vadd.f32 %v350, %v2721
    %v3540 = vadd.f32 %v351, %v2724
    %v3541 = vadd.f32 %v352, %v2729
    %v3542 = vadd.f32 %v353, %v2732
    %v3543 = vadd.f32 %v354, %v2737
    %v3544 = vadd.f32 %v355, %v2740
    %v3545 = vadd.f32 %v356, %v2745
    %v3546 = vadd.f32 %v357, %v2748
    %v3547 = vadd.f32 %v358, %v2753
    %v3548 = vadd.f32 %v359, %v2756
    %v3549 = vadd.f32 %v360, %v2761
    %v3550 = vadd.f32 %v361, %v2764
    %v3551 = vadd.f32 %v362, %v2769
    %v3552 = vadd.f32 %v363, %v2772
    %v3553 = vadd.f32 %v364, %v2777
    %v3554 = vadd.f32 %v365, %v2780
    %v3555 = vadd.f32 %v366, %v2785
    %v3556 = vadd.f32 %v367, %v2788
    %v3557 = vadd.f32 %v368, %v2793
    %v3558 = vadd.f32 %v369, %v2796
    %v3559 = vadd.f32 %v370, %v2801
    %v3560 = vadd.f32 %v371, %v2804
    %v3561 = vadd.f32 %v372, %v2809
    %v3562 = vadd.f32 %v373, %v2812
    %v3563 = vadd.f32 %v374, %v2817
    %v3564 = vadd.f32 %v375, %v2820
    %v3565 = vadd.f32 %v376, %v2825
    %v3566 = vadd.f32 %v377, %v2828
    %v3567 = vadd.f32 %v378, %v2833
    %v3568 = vadd.f32 %v379, %v2836
    %v3569 = vadd.f32 %v380, %v2841
    %v3570 = vadd.f32 %v381, %v2844
    %v3571 = vadd.f32 %v382, %v2849
    %v3572 = vadd.f32 %v383, %v2852
    %v3573 = vadd.f32 %v384, %v2857
    %v3574 = vadd.f32 %v385, %v2860
    %v3575 = vadd.f32 %v386, %v2865
    %v3576 = vadd.f32 %v387, %v2868
    %v3577 = vadd.f32 %v388, %v2873
    %v3578 = vadd.f32 %v389, %v2876
    %v3579 = vadd.f32 %v390, %v2881
    %v3580 = vadd.f32 %v391, %v2884
    %v3581 = vadd.f32 %v392, %v2889
    %v3582 = vadd.f32 %v393, %v2892
    %v3583 = vadd.f32 %v394, %v2897
    %v3584 = vadd.f32 %v395, %v2900
    %v3585 = vadd.f32 %v396, %v2905
    %v3586 = vadd.f32 %v397, %v2908
    %v3587 = vadd.f32 %v398, %v2913
    %v3588 = vadd.f32 %v399, %v2916
    %v3589 = vadd.f32 %v400, %v2921
    %v3590 = vadd.f32 %v401, %v2924
    %v3591 = vadd.f32 %v402, %v2929
    %v3592 = vadd.f32 %v403, %v2932
    %v3593 = vadd.f32 %v404, %v2937
    %v3594 = vadd.f32 %v405, %v2940
    %v3595 = vadd.f32 %v406, %v2945
    %v3596 = vadd.f32 %v407, %v2948
    %v3597 = vadd.f32 %v408, %v2953
    %v3598 = vadd.f32 %v409, %v2956
    %v3599 = vadd.f32 %v410, %v2961
    %v3600 = vadd.f32 %v411, %v2964
    %v3601 = vadd.f32 %v412, %v2969
    %v3602 = vadd.f32 %v413, %v2972
    %v3603 = vadd.f32 %v414, %v2977
    %v3604 = vadd.f32 %v415, %v2980
    %v3605 = vadd.f32 %v416, %v2985
    %v3606 = vadd.f32 %v417, %v2988
    %v3607 = vadd.f32 %v418, %v2993
    %v3608 = vadd.f32 %v419, %v2996
    %v3609 = vadd.f32 %v420, %v3001
    %v3610 = vadd.f32 %v421, %v3004
    %v3611 = vadd.f32 %v422, %v3009
    %v3612 = vadd.f32 %v423, %v3012
    %v3613 = vadd.f32 %v424, %v3017
    %v3614 = vadd.f32 %v425, %v3020
    %v3615 = vadd.f32 %v426, %v3025
    %v3616 = vadd.f32 %v427, %v3028
    %v3617 = vadd.f32 %v428, %v3033
    %v3618 = vadd.f32 %v429, %v3036
    %v3619 = vadd.f32 %v430, %v3041
    %v3620 = vadd.f32 %v431, %v3044
    %v3621 = vadd.f32 %v432, %v3049
    %v3622 = vadd.f32 %v433, %v3052
    %v3623 = vadd.f32 %v434, %v3057
    %v3624 = vadd.f32 %v435, %v3060
    %v3625 = vadd.f32 %v436, %v3065
    %v3626 = vadd.f32 %v437, %v3068
    %v3627 = vadd.f32 %v438, %v3073
    %v3628 = vadd.f32 %v439, %v3076
    %v3629 = vadd.f32 %v440, %v3081
    %v3630 = vadd.f32 %v441, %v3084
    %v3631 = vadd.f32 %v442, %v3089
    %v3632 = vadd.f32 %v443, %v3092
    %v3633 = vadd.f32 %v444, %v3097
    %v3634 = vadd.f32 %v445, %v3100
    %v3635 = vadd.f32 %v446, %v3105
    %v3636 = vadd.f32 %v447, %v3108
    %v3637 = vadd.f32 %v448, %v3113
    %v3638 = vadd.f32 %v449, %v3116
    %v3639 = vadd.f32 %v450, %v3121
    %v3640 = vadd.f32 %v451, %v3124
    %v3641 = vadd.f32 %v452, %v3129
    %v3642 = vadd.f32 %v453, %v3132
    %v3643 = vadd.f32 %v454, %v3137
    %v3644 = vadd.f32 %v455, %v3140
    %v3645 = vadd.f32 %v456, %v3145
    %v3646 = vadd.f32 %v457, %v3148
    %v3647 = vadd.f32 %v458, %v3153
    %v3648 = vadd.f32 %v459, %v3156
    %v3649 = vadd.f32 %v460, %v3161
    %v3650 = vadd.f32 %v461, %v3164
    %v3651 = vadd.f32 %v462, %v3169
    %v3652 = vadd.f32 %v463, %v3172
    %v3653 = vadd.f32 %v464, %v3177
    %v3654 = vadd.f32 %v465, %v3180
    %v3655 = vadd.f32 %v466, %v3185
    %v3656 = vadd.f32 %v467, %v3188
    %v3657 = vadd.f32 %v468, %v3193
    %v3658 = vadd.f32 %v469, %v3196
    %v3659 = vadd.f32 %v470, %v3201
    %v3660 = vadd.f32 %v471, %v3204
    %v3661 = vadd.f32 %v472, %v3209
    %v3662 = vadd.f32 %v473, %v3212
    %v3663 = vadd.f32 %v474, %v3217
    %v3664 = vadd.f32 %v475, %v3220
    %v3665 = vadd.f32 %v476, %v3225
    %v3666 = vadd.f32 %v477, %v3228
    %v3667 = vadd.f32 %v478, %v3233
    %v3668 = vadd.f32 %v479, %v3236
    %v3669 = vadd.f32 %v480, %v3241
    %v3670 = vadd.f32 %v481, %v3244
    %v3671 = vadd.f32 %v482, %v3249
    %v3672 = vadd.f32 %v483, %v3252
    %v3673 = vadd.f32 %v484, %v3257
    %v3674 = vadd.f32 %v485, %v3260
    %v3675 = vadd.f32 %v486, %v3265
    %v3676 = vadd.f32 %v487, %v3268
    %v3677 = vadd.f32 %v488, %v3273
    %v3678 = vadd.f32 %v489, %v3276
    %v3679 = vadd.f32 %v490, %v3281
    %v3680 = vadd.f32 %v491, %v3284
    %v3681 = vadd.f32 %v492, %v3289
    %v3682 = vadd.f32 %v493, %v3292
    %v3683 = vadd.f32 %v494, %v3297
    %v3684 = vadd.f32 %v495, %v3300
    %v3685 = vadd.f32 %v496, %v3305
    %v3686 = vadd.f32 %v497, %v3308
    %v3687 = vadd.f32 %v498, %v3313
    %v3688 = vadd.f32 %v499, %v3316
    %v3689 = vadd.f32 %v500, %v3321
    %v3690 = vadd.f32 %v501, %v3324
    %v3691 = vadd.f32 %v502, %v3329
    %v3692 = vadd.f32 %v503, %v3332
    %v3693 = vadd.f32 %v504, %v3337
    %v3694 = vadd.f32 %v505, %v3340
    %v3695 = vadd.f32 %v506, %v3345
    %v3696 = vadd.f32 %v507, %v3348
    %v3697 = vadd.f32 %v508, %v3353
    %v3698 = vadd.f32 %v509, %v3356
    %v3699 = vadd.f32 %v510, %v3361
    %v3700 = vadd.f32 %v511, %v3364
    %v3701 = vadd.f32 %v512, %v3369
    %v3702 = vadd.f32 %v513, %v3372
    %v3703 = vadd.f32 %v514, %v3377
    %v3704 = vadd.f32 %v515, %v3380
    %v3705 = vadd.f32 %v516, %v3385
    %v3706 = vadd.f32 %v517, %v3388
    %v3707 = vadd.f32 %v518, %v3393
    %v3708 = vadd.f32 %v519, %v3396
    %v3709 = vadd.f32 %v520, %v3401
    %v3710 = vadd.f32 %v521, %v3404
    %v3711 = vadd.f32 %v522, %v3409
    %v3712 = vadd.f32 %v523, %v3412
    %v3713 = vadd.f32 %v524, %v3417
    %v3714 = vadd.f32 %v525, %v3420
    %v3715 = vadd.f32 %v526, %v3425
    %v3716 = vadd.f32 %v527, %v3428
    %v3717 = vadd.f32 %v528, %v3433
    %v3718 = vadd.f32 %v529, %v3436
    %v3719 = vadd.f32 %v530, %v3441
    %v3720 = vadd.f32 %v531, %v3444
    %v3721 = vadd.f32 %v532, %v3449
    %v3722 = vadd.f32 %v533, %v3452
    %v3723 = vadd.f32 %v534, %v3457
    %v3724 = vadd.f32 %v535, %v3460
    %v3725 = vadd.f32 %v536, %v3465
    %v3726 = vadd.f32 %v537, %v3468
    %vm3727 = vcmask 523264
    %3728 = vst.msk [vmem:[#allocation2] sm:$0xff] %vm3727, %v3471
    %3729 = vst.msk [vmem:[#allocation2 + $0x8] sm:$0xff] %vm3727, %v3472
    %3730 = vst.msk [vmem:[#allocation2 + $0x10] sm:$0xff] %vm3727, %v3473
    %3731 = vst.msk [vmem:[#allocation2 + $0x18] sm:$0xff] %vm3727, %v3474
    %3732 = vst.msk [vmem:[#allocation2 + $0x20] sm:$0xff] %vm3727, %v3475
    %3733 = vst.msk [vmem:[#allocation2 + $0x28] sm:$0xff] %vm3727, %v3476
    %3734 = vst.msk [vmem:[#allocation2 + $0x30] sm:$0xff] %vm3727, %v3477
    %3735 = vst.msk [vmem:[#allocation2 + $0x38] sm:$0xff] %vm3727, %v3478
    %3736 = vst.msk [vmem:[#allocation2 + $0x40] sm:$0xff] %vm3727, %v3479
    %3737 = vst.msk [vmem:[#allocation2 + $0x48] sm:$0xff] %vm3727, %v3480
    %3738 = vst.msk [vmem:[#allocation2 + $0x50] sm:$0xff] %vm3727, %v3481
    %3739 = vst.msk [vmem:[#allocation2 + $0x58] sm:$0xff] %vm3727, %v3482
    %3740 = vst.msk [vmem:[#allocation2 + $0x60] sm:$0xff] %vm3727, %v3483
    %3741 = vst.msk [vmem:[#allocation2 + $0x68] sm:$0xff] %vm3727, %v3484
    %3742 = vst.msk [vmem:[#allocation2 + $0x70] sm:$0xff] %vm3727, %v3485
    %3743 = vst.msk [vmem:[#allocation2 + $0x78] sm:$0xff] %vm3727, %v3486
    %3744 = vst.msk [vmem:[#allocation2 + $0x80] sm:$0xff] %vm3727, %v3487
    %3745 = vst.msk [vmem:[#allocation2 + $0x88] sm:$0xff] %vm3727, %v3488
    %3746 = vst.msk [vmem:[#allocation2 + $0x90] sm:$0xff] %vm3727, %v3489
    %3747 = vst.msk [vmem:[#allocation2 + $0x98] sm:$0xff] %vm3727, %v3490
    %3748 = vst.msk [vmem:[#allocation2 + $0xa0] sm:$0xff] %vm3727, %v3491
    %3749 = vst.msk [vmem:[#allocation2 + $0xa8] sm:$0xff] %vm3727, %v3492
    %3750 = vst.msk [vmem:[#allocation2 + $0xb0] sm:$0xff] %vm3727, %v3493
    %3751 = vst.msk [vmem:[#allocation2 + $0xb8] sm:$0xff] %vm3727, %v3494
    %3752 = vst.msk [vmem:[#allocation2 + $0xc0] sm:$0xff] %vm3727, %v3495
    %3753 = vst.msk [vmem:[#allocation2 + $0xc8] sm:$0xff] %vm3727, %v3496
    %3754 = vst.msk [vmem:[#allocation2 + $0xd0] sm:$0xff] %vm3727, %v3497
    %3755 = vst.msk [vmem:[#allocation2 + $0xd8] sm:$0xff] %vm3727, %v3498
    %3756 = vst.msk [vmem:[#allocation2 + $0xe0] sm:$0xff] %vm3727, %v3499
    %3757 = vst.msk [vmem:[#allocation2 + $0xe8] sm:$0xff] %vm3727, %v3500
    %3758 = vst.msk [vmem:[#allocation2 + $0xf0] sm:$0xff] %vm3727, %v3501
    %3759 = vst.msk [vmem:[#allocation2 + $0xf8] sm:$0xff] %vm3727, %v3502
    %3760 = vst.msk [vmem:[#allocation2 + $0x100] sm:$0xff] %vm3727, %v3503
    %3761 = vst.msk [vmem:[#allocation2 + $0x108] sm:$0xff] %vm3727, %v3504
    %3762 = vst.msk [vmem:[#allocation2 + $0x110] sm:$0xff] %vm3727, %v3505
    %3763 = vst.msk [vmem:[#allocation2 + $0x118] sm:$0xff] %vm3727, %v3506
    %3764 = vst.msk [vmem:[#allocation2 + $0x120] sm:$0xff] %vm3727, %v3507
    %3765 = vst.msk [vmem:[#allocation2 + $0x128] sm:$0xff] %vm3727, %v3508
    %3766 = vst.msk [vmem:[#allocation2 + $0x130] sm:$0xff] %vm3727, %v3509
    %3767 = vst.msk [vmem:[#allocation2 + $0x138] sm:$0xff] %vm3727, %v3510
    %3768 = vst.msk [vmem:[#allocation2 + $0x140] sm:$0xff] %vm3727, %v3511
    %3769 = vst.msk [vmem:[#allocation2 + $0x148] sm:$0xff] %vm3727, %v3512
    %3770 = vst.msk [vmem:[#allocation2 + $0x150] sm:$0xff] %vm3727, %v3513
    %3771 = vst.msk [vmem:[#allocation2 + $0x158] sm:$0xff] %vm3727, %v3514
    %3772 = vst.msk [vmem:[#allocation2 + $0x160] sm:$0xff] %vm3727, %v3515
    %3773 = vst.msk [vmem:[#allocation2 + $0x168] sm:$0xff] %vm3727, %v3516
    %3774 = vst.msk [vmem:[#allocation2 + $0x170] sm:$0xff] %vm3727, %v3517
    %3775 = vst.msk [vmem:[#allocation2 + $0x178] sm:$0xff] %vm3727, %v3518
    %3776 = vst.msk [vmem:[#allocation2 + $0x180] sm:$0xff] %vm3727, %v3519
    %3777 = vst.msk [vmem:[#allocation2 + $0x188] sm:$0xff] %vm3727, %v3520
    %3778 = vst.msk [vmem:[#allocation2 + $0x190] sm:$0xff] %vm3727, %v3521
    %3779 = vst.msk [vmem:[#allocation2 + $0x198] sm:$0xff] %vm3727, %v3522
    %3780 = vst.msk [vmem:[#allocation2 + $0x1a0] sm:$0xff] %vm3727, %v3523
    %3781 = vst.msk [vmem:[#allocation2 + $0x1a8] sm:$0xff] %vm3727, %v3524
    %3782 = vst.msk [vmem:[#allocation2 + $0x1b0] sm:$0xff] %vm3727, %v3525
    %3783 = vst.msk [vmem:[#allocation2 + $0x1b8] sm:$0xff] %vm3727, %v3526
    %3784 = vst.msk [vmem:[#allocation2 + $0x1c0] sm:$0xff] %vm3727, %v3527
    %3785 = vst.msk [vmem:[#allocation2 + $0x1c8] sm:$0xff] %vm3727, %v3528
    %3786 = vst.msk [vmem:[#allocation2 + $0x1d0] sm:$0xff] %vm3727, %v3529
    %3787 = vst.msk [vmem:[#allocation2 + $0x1d8] sm:$0xff] %vm3727, %v3530
    %3788 = vst.msk [vmem:[#allocation2 + $0x1e0] sm:$0xff] %vm3727, %v3531
    %3789 = vst.msk [vmem:[#allocation2 + $0x1e8] sm:$0xff] %vm3727, %v3532
    %3790 = vst.msk [vmem:[#allocation2 + $0x1f0] sm:$0xff] %vm3727, %v3533
    %3791 = vst.msk [vmem:[#allocation2 + $0x1f8] sm:$0xff] %vm3727, %v3534
    %3792 = vst.msk [vmem:[#allocation2 + $0x200] sm:$0xff] %vm3727, %v3535
    %3793 = vst.msk [vmem:[#allocation2 + $0x208] sm:$0xff] %vm3727, %v3536
    %3794 = vst.msk [vmem:[#allocation2 + $0x210] sm:$0xff] %vm3727, %v3537
    %3795 = vst.msk [vmem:[#allocation2 + $0x218] sm:$0xff] %vm3727, %v3538
    %3796 = vst.msk [vmem:[#allocation2 + $0x220] sm:$0xff] %vm3727, %v3539
    %3797 = vst.msk [vmem:[#allocation2 + $0x228] sm:$0xff] %vm3727, %v3540
    %3798 = vst.msk [vmem:[#allocation2 + $0x230] sm:$0xff] %vm3727, %v3541
    %3799 = vst.msk [vmem:[#allocation2 + $0x238] sm:$0xff] %vm3727, %v3542
    %3800 = vst.msk [vmem:[#allocation2 + $0x240] sm:$0xff] %vm3727, %v3543
    %3801 = vst.msk [vmem:[#allocation2 + $0x248] sm:$0xff] %vm3727, %v3544
    %3802 = vst.msk [vmem:[#allocation2 + $0x250] sm:$0xff] %vm3727, %v3545
    %3803 = vst.msk [vmem:[#allocation2 + $0x258] sm:$0xff] %vm3727, %v3546
    %3804 = vst.msk [vmem:[#allocation2 + $0x260] sm:$0xff] %vm3727, %v3547
    %3805 = vst.msk [vmem:[#allocation2 + $0x268] sm:$0xff] %vm3727, %v3548
    %3806 = vst.msk [vmem:[#allocation2 + $0x270] sm:$0xff] %vm3727, %v3549
    %3807 = vst.msk [vmem:[#allocation2 + $0x278] sm:$0xff] %vm3727, %v3550
    %3808 = vst.msk [vmem:[#allocation2 + $0x280] sm:$0xff] %vm3727, %v3551
    %3809 = vst.msk [vmem:[#allocation2 + $0x288] sm:$0xff] %vm3727, %v3552
    %3810 = vst.msk [vmem:[#allocation2 + $0x290] sm:$0xff] %vm3727, %v3553
    %3811 = vst.msk [vmem:[#allocation2 + $0x298] sm:$0xff] %vm3727, %v3554
    %3812 = vst.msk [vmem:[#allocation2 + $0x2a0] sm:$0xff] %vm3727, %v3555
    %3813 = vst.msk [vmem:[#allocation2 + $0x2a8] sm:$0xff] %vm3727, %v3556
    %3814 = vst.msk [vmem:[#allocation2 + $0x2b0] sm:$0xff] %vm3727, %v3557
    %3815 = vst.msk [vmem:[#allocation2 + $0x2b8] sm:$0xff] %vm3727, %v3558
    %3816 = vst.msk [vmem:[#allocation2 + $0x2c0] sm:$0xff] %vm3727, %v3559
    %3817 = vst.msk [vmem:[#allocation2 + $0x2c8] sm:$0xff] %vm3727, %v3560
    %3818 = vst.msk [vmem:[#allocation2 + $0x2d0] sm:$0xff] %vm3727, %v3561
    %3819 = vst.msk [vmem:[#allocation2 + $0x2d8] sm:$0xff] %vm3727, %v3562
    %3820 = vst.msk [vmem:[#allocation2 + $0x2e0] sm:$0xff] %vm3727, %v3563
    %3821 = vst.msk [vmem:[#allocation2 + $0x2e8] sm:$0xff] %vm3727, %v3564
    %3822 = vst.msk [vmem:[#allocation2 + $0x2f0] sm:$0xff] %vm3727, %v3565
    %3823 = vst.msk [vmem:[#allocation2 + $0x2f8] sm:$0xff] %vm3727, %v3566
    %3824 = vst.msk [vmem:[#allocation2 + $0x300] sm:$0xff] %vm3727, %v3567
    %3825 = vst.msk [vmem:[#allocation2 + $0x308] sm:$0xff] %vm3727, %v3568
    %3826 = vst.msk [vmem:[#allocation2 + $0x310] sm:$0xff] %vm3727, %v3569
    %3827 = vst.msk [vmem:[#allocation2 + $0x318] sm:$0xff] %vm3727, %v3570
    %3828 = vst.msk [vmem:[#allocation2 + $0x320] sm:$0xff] %vm3727, %v3571
    %3829 = vst.msk [vmem:[#allocation2 + $0x328] sm:$0xff] %vm3727, %v3572
    %3830 = vst.msk [vmem:[#allocation2 + $0x330] sm:$0xff] %vm3727, %v3573
    %3831 = vst.msk [vmem:[#allocation2 + $0x338] sm:$0xff] %vm3727, %v3574
    %3832 = vst.msk [vmem:[#allocation2 + $0x340] sm:$0xff] %vm3727, %v3575
    %3833 = vst.msk [vmem:[#allocation2 + $0x348] sm:$0xff] %vm3727, %v3576
    %3834 = vst.msk [vmem:[#allocation2 + $0x350] sm:$0xff] %vm3727, %v3577
    %3835 = vst.msk [vmem:[#allocation2 + $0x358] sm:$0xff] %vm3727, %v3578
    %3836 = vst.msk [vmem:[#allocation2 + $0x360] sm:$0xff] %vm3727, %v3579
    %3837 = vst.msk [vmem:[#allocation2 + $0x368] sm:$0xff] %vm3727, %v3580
    %3838 = vst.msk [vmem:[#allocation2 + $0x370] sm:$0xff] %vm3727, %v3581
    %3839 = vst.msk [vmem:[#allocation2 + $0x378] sm:$0xff] %vm3727, %v3582
    %3840 = vst.msk [vmem:[#allocation2 + $0x380] sm:$0xff] %vm3727, %v3583
    %3841 = vst.msk [vmem:[#allocation2 + $0x388] sm:$0xff] %vm3727, %v3584
    %3842 = vst.msk [vmem:[#allocation2 + $0x390] sm:$0xff] %vm3727, %v3585
    %3843 = vst.msk [vmem:[#allocation2 + $0x398] sm:$0xff] %vm3727, %v3586
    %3844 = vst.msk [vmem:[#allocation2 + $0x3a0] sm:$0xff] %vm3727, %v3587
    %3845 = vst.msk [vmem:[#allocation2 + $0x3a8] sm:$0xff] %vm3727, %v3588
    %3846 = vst.msk [vmem:[#allocation2 + $0x3b0] sm:$0xff] %vm3727, %v3589
    %3847 = vst.msk [vmem:[#allocation2 + $0x3b8] sm:$0xff] %vm3727, %v3590
    %3848 = vst.msk [vmem:[#allocation2 + $0x3c0] sm:$0xff] %vm3727, %v3591
    %3849 = vst.msk [vmem:[#allocation2 + $0x3c8] sm:$0xff] %vm3727, %v3592
    %3850 = vst.msk [vmem:[#allocation2 + $0x3d0] sm:$0xff] %vm3727, %v3593
    %3851 = vst.msk [vmem:[#allocation2 + $0x3d8] sm:$0xff] %vm3727, %v3594
    %3852 = vst.msk [vmem:[#allocation2 + $0x3e0] sm:$0xff] %vm3727, %v3595
    %3853 = vst.msk [vmem:[#allocation2 + $0x3e8] sm:$0xff] %vm3727, %v3596
    %3854 = vst.msk [vmem:[#allocation2 + $0x3f0] sm:$0xff] %vm3727, %v3597
    %3855 = vst.msk [vmem:[#allocation2 + $0x3f8] sm:$0xff] %vm3727, %v3598
    %3856 = vst.msk [vmem:[#allocation2 + $0x400] sm:$0xff] %vm3727, %v3599
    %3857 = vst.msk [vmem:[#allocation2 + $0x408] sm:$0xff] %vm3727, %v3600
    %3858 = vst.msk [vmem:[#allocation2 + $0x410] sm:$0xff] %vm3727, %v3601
    %3859 = vst.msk [vmem:[#allocation2 + $0x418] sm:$0xff] %vm3727, %v3602
    %3860 = vst.msk [vmem:[#allocation2 + $0x420] sm:$0xff] %vm3727, %v3603
    %3861 = vst.msk [vmem:[#allocation2 + $0x428] sm:$0xff] %vm3727, %v3604
    %3862 = vst.msk [vmem:[#allocation2 + $0x430] sm:$0xff] %vm3727, %v3605
    %3863 = vst.msk [vmem:[#allocation2 + $0x438] sm:$0xff] %vm3727, %v3606
    %3864 = vst.msk [vmem:[#allocation2 + $0x440] sm:$0xff] %vm3727, %v3607
    %3865 = vst.msk [vmem:[#allocation2 + $0x448] sm:$0xff] %vm3727, %v3608
    %3866 = vst.msk [vmem:[#allocation2 + $0x450] sm:$0xff] %vm3727, %v3609
    %3867 = vst.msk [vmem:[#allocation2 + $0x458] sm:$0xff] %vm3727, %v3610
    %3868 = vst.msk [vmem:[#allocation2 + $0x460] sm:$0xff] %vm3727, %v3611
    %3869 = vst.msk [vmem:[#allocation2 + $0x468] sm:$0xff] %vm3727, %v3612
    %3870 = vst.msk [vmem:[#allocation2 + $0x470] sm:$0xff] %vm3727, %v3613
    %3871 = vst.msk [vmem:[#allocation2 + $0x478] sm:$0xff] %vm3727, %v3614
    %3872 = vst.msk [vmem:[#allocation2 + $0x480] sm:$0xff] %vm3727, %v3615
    %3873 = vst.msk [vmem:[#allocation2 + $0x488] sm:$0xff] %vm3727, %v3616
    %3874 = vst.msk [vmem:[#allocation2 + $0x490] sm:$0xff] %vm3727, %v3617
    %3875 = vst.msk [vmem:[#allocation2 + $0x498] sm:$0xff] %vm3727, %v3618
    %3876 = vst.msk [vmem:[#allocation2 + $0x4a0] sm:$0xff] %vm3727, %v3619
    %3877 = vst.msk [vmem:[#allocation2 + $0x4a8] sm:$0xff] %vm3727, %v3620
    %3878 = vst.msk [vmem:[#allocation2 + $0x4b0] sm:$0xff] %vm3727, %v3621
    %3879 = vst.msk [vmem:[#allocation2 + $0x4b8] sm:$0xff] %vm3727, %v3622
    %3880 = vst.msk [vmem:[#allocation2 + $0x4c0] sm:$0xff] %vm3727, %v3623
    %3881 = vst.msk [vmem:[#allocation2 + $0x4c8] sm:$0xff] %vm3727, %v3624
    %3882 = vst.msk [vmem:[#allocation2 + $0x4d0] sm:$0xff] %vm3727, %v3625
    %3883 = vst.msk [vmem:[#allocation2 + $0x4d8] sm:$0xff] %vm3727, %v3626
    %3884 = vst.msk [vmem:[#allocation2 + $0x4e0] sm:$0xff] %vm3727, %v3627
    %3885 = vst.msk [vmem:[#allocation2 + $0x4e8] sm:$0xff] %vm3727, %v3628
    %3886 = vst.msk [vmem:[#allocation2 + $0x4f0] sm:$0xff] %vm3727, %v3629
    %3887 = vst.msk [vmem:[#allocation2 + $0x4f8] sm:$0xff] %vm3727, %v3630
    %3888 = vst.msk [vmem:[#allocation2 + $0x500] sm:$0xff] %vm3727, %v3631
    %3889 = vst.msk [vmem:[#allocation2 + $0x508] sm:$0xff] %vm3727, %v3632
    %3890 = vst.msk [vmem:[#allocation2 + $0x510] sm:$0xff] %vm3727, %v3633
    %3891 = vst.msk [vmem:[#allocation2 + $0x518] sm:$0xff] %vm3727, %v3634
    %3892 = vst.msk [vmem:[#allocation2 + $0x520] sm:$0xff] %vm3727, %v3635
    %3893 = vst.msk [vmem:[#allocation2 + $0x528] sm:$0xff] %vm3727, %v3636
    %3894 = vst.msk [vmem:[#allocation2 + $0x530] sm:$0xff] %vm3727, %v3637
    %3895 = vst.msk [vmem:[#allocation2 + $0x538] sm:$0xff] %vm3727, %v3638
    %3896 = vst.msk [vmem:[#allocation2 + $0x540] sm:$0xff] %vm3727, %v3639
    %3897 = vst.msk [vmem:[#allocation2 + $0x548] sm:$0xff] %vm3727, %v3640
    %3898 = vst.msk [vmem:[#allocation2 + $0x550] sm:$0xff] %vm3727, %v3641
    %3899 = vst.msk [vmem:[#allocation2 + $0x558] sm:$0xff] %vm3727, %v3642
    %3900 = vst.msk [vmem:[#allocation2 + $0x560] sm:$0xff] %vm3727, %v3643
    %3901 = vst.msk [vmem:[#allocation2 + $0x568] sm:$0xff] %vm3727, %v3644
    %3902 = vst.msk [vmem:[#allocation2 + $0x570] sm:$0xff] %vm3727, %v3645
    %3903 = vst.msk [vmem:[#allocation2 + $0x578] sm:$0xff] %vm3727, %v3646
    %3904 = vst.msk [vmem:[#allocation2 + $0x580] sm:$0xff] %vm3727, %v3647
    %3905 = vst.msk [vmem:[#allocation2 + $0x588] sm:$0xff] %vm3727, %v3648
    %3906 = vst.msk [vmem:[#allocation2 + $0x590] sm:$0xff] %vm3727, %v3649
    %3907 = vst.msk [vmem:[#allocation2 + $0x598] sm:$0xff] %vm3727, %v3650
    %3908 = vst.msk [vmem:[#allocation2 + $0x5a0] sm:$0xff] %vm3727, %v3651
    %3909 = vst.msk [vmem:[#allocation2 + $0x5a8] sm:$0xff] %vm3727, %v3652
    %3910 = vst.msk [vmem:[#allocation2 + $0x5b0] sm:$0xff] %vm3727, %v3653
    %3911 = vst.msk [vmem:[#allocation2 + $0x5b8] sm:$0xff] %vm3727, %v3654
    %3912 = vst.msk [vmem:[#allocation2 + $0x5c0] sm:$0xff] %vm3727, %v3655
    %3913 = vst.msk [vmem:[#allocation2 + $0x5c8] sm:$0xff] %vm3727, %v3656
    %3914 = vst.msk [vmem:[#allocation2 + $0x5d0] sm:$0xff] %vm3727, %v3657
    %3915 = vst.msk [vmem:[#allocation2 + $0x5d8] sm:$0xff] %vm3727, %v3658
    %3916 = vst.msk [vmem:[#allocation2 + $0x5e0] sm:$0xff] %vm3727, %v3659
    %3917 = vst.msk [vmem:[#allocation2 + $0x5e8] sm:$0xff] %vm3727, %v3660
    %3918 = vst.msk [vmem:[#allocation2 + $0x5f0] sm:$0xff] %vm3727, %v3661
    %3919 = vst.msk [vmem:[#allocation2 + $0x5f8] sm:$0xff] %vm3727, %v3662
    %3920 = vst.msk [vmem:[#allocation2 + $0x600] sm:$0xff] %vm3727, %v3663
    %3921 = vst.msk [vmem:[#allocation2 + $0x608] sm:$0xff] %vm3727, %v3664
    %3922 = vst.msk [vmem:[#allocation2 + $0x610] sm:$0xff] %vm3727, %v3665
    %3923 = vst.msk [vmem:[#allocation2 + $0x618] sm:$0xff] %vm3727, %v3666
    %3924 = vst.msk [vmem:[#allocation2 + $0x620] sm:$0xff] %vm3727, %v3667
    %3925 = vst.msk [vmem:[#allocation2 + $0x628] sm:$0xff] %vm3727, %v3668
    %3926 = vst.msk [vmem:[#allocation2 + $0x630] sm:$0xff] %vm3727, %v3669
    %3927 = vst.msk [vmem:[#allocation2 + $0x638] sm:$0xff] %vm3727, %v3670
    %3928 = vst.msk [vmem:[#allocation2 + $0x640] sm:$0xff] %vm3727, %v3671
    %3929 = vst.msk [vmem:[#allocation2 + $0x648] sm:$0xff] %vm3727, %v3672
    %3930 = vst.msk [vmem:[#allocation2 + $0x650] sm:$0xff] %vm3727, %v3673
    %3931 = vst.msk [vmem:[#allocation2 + $0x658] sm:$0xff] %vm3727, %v3674
    %3932 = vst.msk [vmem:[#allocation2 + $0x660] sm:$0xff] %vm3727, %v3675
    %3933 = vst.msk [vmem:[#allocation2 + $0x668] sm:$0xff] %vm3727, %v3676
    %3934 = vst.msk [vmem:[#allocation2 + $0x670] sm:$0xff] %vm3727, %v3677
    %3935 = vst.msk [vmem:[#allocation2 + $0x678] sm:$0xff] %vm3727, %v3678
    %3936 = vst.msk [vmem:[#allocation2 + $0x680] sm:$0xff] %vm3727, %v3679
    %3937 = vst.msk [vmem:[#allocation2 + $0x688] sm:$0xff] %vm3727, %v3680
    %3938 = vst.msk [vmem:[#allocation2 + $0x690] sm:$0xff] %vm3727, %v3681
    %3939 = vst.msk [vmem:[#allocation2 + $0x698] sm:$0xff] %vm3727, %v3682
    %3940 = vst.msk [vmem:[#allocation2 + $0x6a0] sm:$0xff] %vm3727, %v3683
    %3941 = vst.msk [vmem:[#allocation2 + $0x6a8] sm:$0xff] %vm3727, %v3684
    %3942 = vst.msk [vmem:[#allocation2 + $0x6b0] sm:$0xff] %vm3727, %v3685
    %3943 = vst.msk [vmem:[#allocation2 + $0x6b8] sm:$0xff] %vm3727, %v3686
    %3944 = vst.msk [vmem:[#allocation2 + $0x6c0] sm:$0xff] %vm3727, %v3687
    %3945 = vst.msk [vmem:[#allocation2 + $0x6c8] sm:$0xff] %vm3727, %v3688
    %3946 = vst.msk [vmem:[#allocation2 + $0x6d0] sm:$0xff] %vm3727, %v3689
    %3947 = vst.msk [vmem:[#allocation2 + $0x6d8] sm:$0xff] %vm3727, %v3690
    %3948 = vst.msk [vmem:[#allocation2 + $0x6e0] sm:$0xff] %vm3727, %v3691
    %3949 = vst.msk [vmem:[#allocation2 + $0x6e8] sm:$0xff] %vm3727, %v3692
    %3950 = vst.msk [vmem:[#allocation2 + $0x6f0] sm:$0xff] %vm3727, %v3693
    %3951 = vst.msk [vmem:[#allocation2 + $0x6f8] sm:$0xff] %vm3727, %v3694
    %3952 = vst.msk [vmem:[#allocation2 + $0x700] sm:$0xff] %vm3727, %v3695
    %3953 = vst.msk [vmem:[#allocation2 + $0x708] sm:$0xff] %vm3727, %v3696
    %3954 = vst.msk [vmem:[#allocation2 + $0x710] sm:$0xff] %vm3727, %v3697
    %3955 = vst.msk [vmem:[#allocation2 + $0x718] sm:$0xff] %vm3727, %v3698
    %3956 = vst.msk [vmem:[#allocation2 + $0x720] sm:$0xff] %vm3727, %v3699
    %3957 = vst.msk [vmem:[#allocation2 + $0x728] sm:$0xff] %vm3727, %v3700
    %3958 = vst.msk [vmem:[#allocation2 + $0x730] sm:$0xff] %vm3727, %v3701
    %3959 = vst.msk [vmem:[#allocation2 + $0x738] sm:$0xff] %vm3727, %v3702
    %3960 = vst.msk [vmem:[#allocation2 + $0x740] sm:$0xff] %vm3727, %v3703
    %3961 = vst.msk [vmem:[#allocation2 + $0x748] sm:$0xff] %vm3727, %v3704
    %3962 = vst.msk [vmem:[#allocation2 + $0x750] sm:$0xff] %vm3727, %v3705
    %3963 = vst.msk [vmem:[#allocation2 + $0x758] sm:$0xff] %vm3727, %v3706
    %3964 = vst.msk [vmem:[#allocation2 + $0x760] sm:$0xff] %vm3727, %v3707
    %3965 = vst.msk [vmem:[#allocation2 + $0x768] sm:$0xff] %vm3727, %v3708
    %3966 = vst.msk [vmem:[#allocation2 + $0x770] sm:$0xff] %vm3727, %v3709
    %3967 = vst.msk [vmem:[#allocation2 + $0x778] sm:$0xff] %vm3727, %v3710
    %3968 = vst.msk [vmem:[#allocation2 + $0x780] sm:$0xff] %vm3727, %v3711
    %3969 = vst.msk [vmem:[#allocation2 + $0x788] sm:$0xff] %vm3727, %v3712
    %3970 = vst.msk [vmem:[#allocation2 + $0x790] sm:$0xff] %vm3727, %v3713
    %3971 = vst.msk [vmem:[#allocation2 + $0x798] sm:$0xff] %vm3727, %v3714
    %3972 = vst.msk [vmem:[#allocation2 + $0x7a0] sm:$0xff] %vm3727, %v3715
    %3973 = vst.msk [vmem:[#allocation2 + $0x7a8] sm:$0xff] %vm3727, %v3716
    %3974 = vst.msk [vmem:[#allocation2 + $0x7b0] sm:$0xff] %vm3727, %v3717
    %3975 = vst.msk [vmem:[#allocation2 + $0x7b8] sm:$0xff] %vm3727, %v3718
    %3976 = vst.msk [vmem:[#allocation2 + $0x7c0] sm:$0xff] %vm3727, %v3719
    %3977 = vst.msk [vmem:[#allocation2 + $0x7c8] sm:$0xff] %vm3727, %v3720
    %3978 = vst.msk [vmem:[#allocation2 + $0x7d0] sm:$0xff] %vm3727, %v3721
    %3979 = vst.msk [vmem:[#allocation2 + $0x7d8] sm:$0xff] %vm3727, %v3722
    %3980 = vst.msk [vmem:[#allocation2 + $0x7e0] sm:$0xff] %vm3727, %v3723
    %3981 = vst.msk [vmem:[#allocation2 + $0x7e8] sm:$0xff] %vm3727, %v3724
    %3982 = vst.msk [vmem:[#allocation2 + $0x7f0] sm:$0xff] %vm3727, %v3725
    %3983 = vst.msk [vmem:[#allocation2 + $0x7f8] sm:$0xff] %vm3727, %v3726
    // Predicated region
    $region22: #{conv_bn.1} parent=1 // pred_check
      _
    $region23: #{conv_bn.1} parent=1 // pred_check_branch
      %3985 = sbr.rel (%p21) target = $region25
    $region24: #{conv_bn.1} parent=1 // pred_region
      %v3986 = vld [vmem:[#allocation2] sm:$0xff]
      %v3987 = vld [vmem:[#allocation2 + $0x8] sm:$0xff]
      %v3988 = vld [vmem:[#allocation2 + $0x10] sm:$0xff]
      %v3989 = vld [vmem:[#allocation2 + $0x18] sm:$0xff]
      %v3990 = vld [vmem:[#allocation2 + $0x20] sm:$0xff]
      %v3991 = vld [vmem:[#allocation2 + $0x28] sm:$0xff]
      %v3992 = vld [vmem:[#allocation2 + $0x30] sm:$0xff]
      %v3993 = vld [vmem:[#allocation2 + $0x38] sm:$0xff]
      %v3994 = vld [vmem:[#allocation2 + $0x40] sm:$0xff]
      %v3995 = vld [vmem:[#allocation2 + $0x48] sm:$0xff]
      %v3996 = vld [vmem:[#allocation2 + $0x50] sm:$0xff]
      %v3997 = vld [vmem:[#allocation2 + $0x58] sm:$0xff]
      %v3998 = vld [vmem:[#allocation2 + $0x60] sm:$0xff]
      %v3999 = vld [vmem:[#allocation2 + $0x68] sm:$0xff]
      %v4000 = vld [vmem:[#allocation2 + $0x70] sm:$0xff]
      %v4001 = vld [vmem:[#allocation2 + $0x78] sm:$0xff]
      %v4002 = vld [vmem:[#allocation2 + $0x80] sm:$0xff]
      %v4003 = vld [vmem:[#allocation2 + $0x88] sm:$0xff]
      %v4004 = vld [vmem:[#allocation2 + $0x90] sm:$0xff]
      %v4005 = vld [vmem:[#allocation2 + $0x98] sm:$0xff]
      %v4006 = vld [vmem:[#allocation2 + $0xa0] sm:$0xff]
      %v4007 = vld [vmem:[#allocation2 + $0xa8] sm:$0xff]
      %v4008 = vld [vmem:[#allocation2 + $0xb0] sm:$0xff]
      %v4009 = vld [vmem:[#allocation2 + $0xb8] sm:$0xff]
      %v4010 = vld [vmem:[#allocation2 + $0xc0] sm:$0xff]
      %v4011 = vld [vmem:[#allocation2 + $0xc8] sm:$0xff]
      %v4012 = vld [vmem:[#allocation2 + $0xd0] sm:$0xff]
      %v4013 = vld [vmem:[#allocation2 + $0xd8] sm:$0xff]
      %v4014 = vld [vmem:[#allocation2 + $0xe0] sm:$0xff]
      %v4015 = vld [vmem:[#allocation2 + $0xe8] sm:$0xff]
      %v4016 = vld [vmem:[#allocation2 + $0xf0] sm:$0xff]
      %v4017 = vld [vmem:[#allocation2 + $0xf8] sm:$0xff]
      %v4018 = vld [vmem:[#allocation2 + $0x100] sm:$0xff]
      %v4019 = vld [vmem:[#allocation2 + $0x108] sm:$0xff]
      %v4020 = vld [vmem:[#allocation2 + $0x110] sm:$0xff]
      %v4021 = vld [vmem:[#allocation2 + $0x118] sm:$0xff]
      %v4022 = vld [vmem:[#allocation2 + $0x120] sm:$0xff]
      %v4023 = vld [vmem:[#allocation2 + $0x128] sm:$0xff]
      %v4024 = vld [vmem:[#allocation2 + $0x130] sm:$0xff]
      %v4025 = vld [vmem:[#allocation2 + $0x138] sm:$0xff]
      %v4026 = vld [vmem:[#allocation2 + $0x140] sm:$0xff]
      %v4027 = vld [vmem:[#allocation2 + $0x148] sm:$0xff]
      %v4028 = vld [vmem:[#allocation2 + $0x150] sm:$0xff]
      %v4029 = vld [vmem:[#allocation2 + $0x158] sm:$0xff]
      %v4030 = vld [vmem:[#allocation2 + $0x160] sm:$0xff]
      %v4031 = vld [vmem:[#allocation2 + $0x168] sm:$0xff]
      %v4032 = vld [vmem:[#allocation2 + $0x170] sm:$0xff]
      %v4033 = vld [vmem:[#allocation2 + $0x178] sm:$0xff]
      %v4034 = vld [vmem:[#allocation2 + $0x180] sm:$0xff]
      %v4035 = vld [vmem:[#allocation2 + $0x188] sm:$0xff]
      %v4036 = vld [vmem:[#allocation2 + $0x190] sm:$0xff]
      %v4037 = vld [vmem:[#allocation2 + $0x198] sm:$0xff]
      %v4038 = vld [vmem:[#allocation2 + $0x1a0] sm:$0xff]
      %v4039 = vld [vmem:[#allocation2 + $0x1a8] sm:$0xff]
      %v4040 = vld [vmem:[#allocation2 + $0x1b0] sm:$0xff]
      %v4041 = vld [vmem:[#allocation2 + $0x1b8] sm:$0xff]
      %v4042 = vld [vmem:[#allocation2 + $0x1c0] sm:$0xff]
      %v4043 = vld [vmem:[#allocation2 + $0x1c8] sm:$0xff]
      %v4044 = vld [vmem:[#allocation2 + $0x1d0] sm:$0xff]
      %v4045 = vld [vmem:[#allocation2 + $0x1d8] sm:$0xff]
      %v4046 = vld [vmem:[#allocation2 + $0x1e0] sm:$0xff]
      %v4047 = vld [vmem:[#allocation2 + $0x1e8] sm:$0xff]
      %v4048 = vld [vmem:[#allocation2 + $0x1f0] sm:$0xff]
      %v4049 = vld [vmem:[#allocation2 + $0x1f8] sm:$0xff]
      %v4050 = vld [vmem:[#allocation2 + $0x200] sm:$0xff]
      %v4051 = vld [vmem:[#allocation2 + $0x208] sm:$0xff]
      %v4052 = vld [vmem:[#allocation2 + $0x210] sm:$0xff]
      %v4053 = vld [vmem:[#allocation2 + $0x218] sm:$0xff]
      %v4054 = vld [vmem:[#allocation2 + $0x220] sm:$0xff]
      %v4055 = vld [vmem:[#allocation2 + $0x228] sm:$0xff]
      %v4056 = vld [vmem:[#allocation2 + $0x230] sm:$0xff]
      %v4057 = vld [vmem:[#allocation2 + $0x238] sm:$0xff]
      %v4058 = vld [vmem:[#allocation2 + $0x240] sm:$0xff]
      %v4059 = vld [vmem:[#allocation2 + $0x248] sm:$0xff]
      %v4060 = vld [vmem:[#allocation2 + $0x250] sm:$0xff]
      %v4061 = vld [vmem:[#allocation2 + $0x258] sm:$0xff]
      %v4062 = vld [vmem:[#allocation2 + $0x260] sm:$0xff]
      %v4063 = vld [vmem:[#allocation2 + $0x268] sm:$0xff]
      %v4064 = vld [vmem:[#allocation2 + $0x270] sm:$0xff]
      %v4065 = vld [vmem:[#allocation2 + $0x278] sm:$0xff]
      %v4066 = vld [vmem:[#allocation2 + $0x280] sm:$0xff]
      %v4067 = vld [vmem:[#allocation2 + $0x288] sm:$0xff]
      %v4068 = vld [vmem:[#allocation2 + $0x290] sm:$0xff]
      %v4069 = vld [vmem:[#allocation2 + $0x298] sm:$0xff]
      %v4070 = vld [vmem:[#allocation2 + $0x2a0] sm:$0xff]
      %v4071 = vld [vmem:[#allocation2 + $0x2a8] sm:$0xff]
      %v4072 = vld [vmem:[#allocation2 + $0x2b0] sm:$0xff]
      %v4073 = vld [vmem:[#allocation2 + $0x2b8] sm:$0xff]
      %v4074 = vld [vmem:[#allocation2 + $0x2c0] sm:$0xff]
      %v4075 = vld [vmem:[#allocation2 + $0x2c8] sm:$0xff]
      %v4076 = vld [vmem:[#allocation2 + $0x2d0] sm:$0xff]
      %v4077 = vld [vmem:[#allocation2 + $0x2d8] sm:$0xff]
      %v4078 = vld [vmem:[#allocation2 + $0x2e0] sm:$0xff]
      %v4079 = vld [vmem:[#allocation2 + $0x2e8] sm:$0xff]
      %v4080 = vld [vmem:[#allocation2 + $0x2f0] sm:$0xff]
      %v4081 = vld [vmem:[#allocation2 + $0x2f8] sm:$0xff]
      %v4082 = vld [vmem:[#allocation2 + $0x300] sm:$0xff]
      %v4083 = vld [vmem:[#allocation2 + $0x308] sm:$0xff]
      %v4084 = vld [vmem:[#allocation2 + $0x310] sm:$0xff]
      %v4085 = vld [vmem:[#allocation2 + $0x318] sm:$0xff]
      %v4086 = vld [vmem:[#allocation2 + $0x320] sm:$0xff]
      %v4087 = vld [vmem:[#allocation2 + $0x328] sm:$0xff]
      %v4088 = vld [vmem:[#allocation2 + $0x330] sm:$0xff]
      %v4089 = vld [vmem:[#allocation2 + $0x338] sm:$0xff]
      %v4090 = vld [vmem:[#allocation2 + $0x340] sm:$0xff]
      %v4091 = vld [vmem:[#allocation2 + $0x348] sm:$0xff]
      %v4092 = vld [vmem:[#allocation2 + $0x350] sm:$0xff]
      %v4093 = vld [vmem:[#allocation2 + $0x358] sm:$0xff]
      %v4094 = vld [vmem:[#allocation2 + $0x360] sm:$0xff]
      %v4095 = vld [vmem:[#allocation2 + $0x368] sm:$0xff]
      %v4096 = vld [vmem:[#allocation2 + $0x370] sm:$0xff]
      %v4097 = vld [vmem:[#allocation2 + $0x378] sm:$0xff]
      %v4098 = vld [vmem:[#allocation2 + $0x380] sm:$0xff]
      %v4099 = vld [vmem:[#allocation2 + $0x388] sm:$0xff]
      %v4100 = vld [vmem:[#allocation2 + $0x390] sm:$0xff]
      %v4101 = vld [vmem:[#allocation2 + $0x398] sm:$0xff]
      %v4102 = vld [vmem:[#allocation2 + $0x3a0] sm:$0xff]
      %v4103 = vld [vmem:[#allocation2 + $0x3a8] sm:$0xff]
      %v4104 = vld [vmem:[#allocation2 + $0x3b0] sm:$0xff]
      %v4105 = vld [vmem:[#allocation2 + $0x3b8] sm:$0xff]
      %v4106 = vld [vmem:[#allocation2 + $0x3c0] sm:$0xff]
      %v4107 = vld [vmem:[#allocation2 + $0x3c8] sm:$0xff]
      %v4108 = vld [vmem:[#allocation2 + $0x3d0] sm:$0xff]
      %v4109 = vld [vmem:[#allocation2 + $0x3d8] sm:$0xff]
      %v4110 = vld [vmem:[#allocation2 + $0x3e0] sm:$0xff]
      %v4111 = vld [vmem:[#allocation2 + $0x3e8] sm:$0xff]
      %v4112 = vld [vmem:[#allocation2 + $0x3f0] sm:$0xff]
      %v4113 = vld [vmem:[#allocation2 + $0x3f8] sm:$0xff]
      %v4114 = vld [vmem:[#allocation2 + $0x400] sm:$0xff]
      %v4115 = vld [vmem:[#allocation2 + $0x408] sm:$0xff]
      %v4116 = vld [vmem:[#allocation2 + $0x410] sm:$0xff]
      %v4117 = vld [vmem:[#allocation2 + $0x418] sm:$0xff]
      %v4118 = vld [vmem:[#allocation2 + $0x420] sm:$0xff]
      %v4119 = vld [vmem:[#allocation2 + $0x428] sm:$0xff]
      %v4120 = vld [vmem:[#allocation2 + $0x430] sm:$0xff]
      %v4121 = vld [vmem:[#allocation2 + $0x438] sm:$0xff]
      %v4122 = vld [vmem:[#allocation2 + $0x440] sm:$0xff]
      %v4123 = vld [vmem:[#allocation2 + $0x448] sm:$0xff]
      %v4124 = vld [vmem:[#allocation2 + $0x450] sm:$0xff]
      %v4125 = vld [vmem:[#allocation2 + $0x458] sm:$0xff]
      %v4126 = vld [vmem:[#allocation2 + $0x460] sm:$0xff]
      %v4127 = vld [vmem:[#allocation2 + $0x468] sm:$0xff]
      %v4128 = vld [vmem:[#allocation2 + $0x470] sm:$0xff]
      %v4129 = vld [vmem:[#allocation2 + $0x478] sm:$0xff]
      %v4130 = vld [vmem:[#allocation2 + $0x480] sm:$0xff]
      %v4131 = vld [vmem:[#allocation2 + $0x488] sm:$0xff]
      %v4132 = vld [vmem:[#allocation2 + $0x490] sm:$0xff]
      %v4133 = vld [vmem:[#allocation2 + $0x498] sm:$0xff]
      %v4134 = vld [vmem:[#allocation2 + $0x4a0] sm:$0xff]
      %v4135 = vld [vmem:[#allocation2 + $0x4a8] sm:$0xff]
      %v4136 = vld [vmem:[#allocation2 + $0x4b0] sm:$0xff]
      %v4137 = vld [vmem:[#allocation2 + $0x4b8] sm:$0xff]
      %v4138 = vld [vmem:[#allocation2 + $0x4c0] sm:$0xff]
      %v4139 = vld [vmem:[#allocation2 + $0x4c8] sm:$0xff]
      %v4140 = vld [vmem:[#allocation2 + $0x4d0] sm:$0xff]
      %v4141 = vld [vmem:[#allocation2 + $0x4d8] sm:$0xff]
      %v4142 = vld [vmem:[#allocation2 + $0x4e0] sm:$0xff]
      %v4143 = vld [vmem:[#allocation2 + $0x4e8] sm:$0xff]
      %v4144 = vld [vmem:[#allocation2 + $0x4f0] sm:$0xff]
      %v4145 = vld [vmem:[#allocation2 + $0x4f8] sm:$0xff]
      %v4146 = vld [vmem:[#allocation2 + $0x500] sm:$0xff]
      %v4147 = vld [vmem:[#allocation2 + $0x508] sm:$0xff]
      %v4148 = vld [vmem:[#allocation2 + $0x510] sm:$0xff]
      %v4149 = vld [vmem:[#allocation2 + $0x518] sm:$0xff]
      %v4150 = vld [vmem:[#allocation2 + $0x520] sm:$0xff]
      %v4151 = vld [vmem:[#allocation2 + $0x528] sm:$0xff]
      %v4152 = vld [vmem:[#allocation2 + $0x530] sm:$0xff]
      %v4153 = vld [vmem:[#allocation2 + $0x538] sm:$0xff]
      %v4154 = vld [vmem:[#allocation2 + $0x540] sm:$0xff]
      %v4155 = vld [vmem:[#allocation2 + $0x548] sm:$0xff]
      %v4156 = vld [vmem:[#allocation2 + $0x550] sm:$0xff]
      %v4157 = vld [vmem:[#allocation2 + $0x558] sm:$0xff]
      %v4158 = vld [vmem:[#allocation2 + $0x560] sm:$0xff]
      %v4159 = vld [vmem:[#allocation2 + $0x568] sm:$0xff]
      %v4160 = vld [vmem:[#allocation2 + $0x570] sm:$0xff]
      %v4161 = vld [vmem:[#allocation2 + $0x578] sm:$0xff]
      %v4162 = vld [vmem:[#allocation2 + $0x580] sm:$0xff]
      %v4163 = vld [vmem:[#allocation2 + $0x588] sm:$0xff]
      %v4164 = vld [vmem:[#allocation2 + $0x590] sm:$0xff]
      %v4165 = vld [vmem:[#allocation2 + $0x598] sm:$0xff]
      %v4166 = vld [vmem:[#allocation2 + $0x5a0] sm:$0xff]
      %v4167 = vld [vmem:[#allocation2 + $0x5a8] sm:$0xff]
      %v4168 = vld [vmem:[#allocation2 + $0x5b0] sm:$0xff]
      %v4169 = vld [vmem:[#allocation2 + $0x5b8] sm:$0xff]
      %v4170 = vld [vmem:[#allocation2 + $0x5c0] sm:$0xff]
      %v4171 = vld [vmem:[#allocation2 + $0x5c8] sm:$0xff]
      %v4172 = vld [vmem:[#allocation2 + $0x5d0] sm:$0xff]
      %v4173 = vld [vmem:[#allocation2 + $0x5d8] sm:$0xff]
      %v4174 = vld [vmem:[#allocation2 + $0x5e0] sm:$0xff]
      %v4175 = vld [vmem:[#allocation2 + $0x5e8] sm:$0xff]
      %v4176 = vld [vmem:[#allocation2 + $0x5f0] sm:$0xff]
      %v4177 = vld [vmem:[#allocation2 + $0x5f8] sm:$0xff]
      %v4178 = vld [vmem:[#allocation2 + $0x600] sm:$0xff]
      %v4179 = vld [vmem:[#allocation2 + $0x608] sm:$0xff]
      %v4180 = vld [vmem:[#allocation2 + $0x610] sm:$0xff]
      %v4181 = vld [vmem:[#allocation2 + $0x618] sm:$0xff]
      %v4182 = vld [vmem:[#allocation2 + $0x620] sm:$0xff]
      %v4183 = vld [vmem:[#allocation2 + $0x628] sm:$0xff]
      %v4184 = vld [vmem:[#allocation2 + $0x630] sm:$0xff]
      %v4185 = vld [vmem:[#allocation2 + $0x638] sm:$0xff]
      %v4186 = vld [vmem:[#allocation2 + $0x640] sm:$0xff]
      %v4187 = vld [vmem:[#allocation2 + $0x648] sm:$0xff]
      %v4188 = vld [vmem:[#allocation2 + $0x650] sm:$0xff]
      %v4189 = vld [vmem:[#allocation2 + $0x658] sm:$0xff]
      %v4190 = vld [vmem:[#allocation2 + $0x660] sm:$0xff]
      %v4191 = vld [vmem:[#allocation2 + $0x668] sm:$0xff]
      %v4192 = vld [vmem:[#allocation2 + $0x670] sm:$0xff]
      %v4193 = vld [vmem:[#allocation2 + $0x678] sm:$0xff]
      %v4194 = vld [vmem:[#allocation2 + $0x680] sm:$0xff]
      %v4195 = vld [vmem:[#allocation2 + $0x688] sm:$0xff]
      %v4196 = vld [vmem:[#allocation2 + $0x690] sm:$0xff]
      %v4197 = vld [vmem:[#allocation2 + $0x698] sm:$0xff]
      %v4198 = vld [vmem:[#allocation2 + $0x6a0] sm:$0xff]
      %v4199 = vld [vmem:[#allocation2 + $0x6a8] sm:$0xff]
      %v4200 = vld [vmem:[#allocation2 + $0x6b0] sm:$0xff]
      %v4201 = vld [vmem:[#allocation2 + $0x6b8] sm:$0xff]
      %v4202 = vld [vmem:[#allocation2 + $0x6c0] sm:$0xff]
      %v4203 = vld [vmem:[#allocation2 + $0x6c8] sm:$0xff]
      %v4204 = vld [vmem:[#allocation2 + $0x6d0] sm:$0xff]
      %v4205 = vld [vmem:[#allocation2 + $0x6d8] sm:$0xff]
      %v4206 = vld [vmem:[#allocation2 + $0x6e0] sm:$0xff]
      %v4207 = vld [vmem:[#allocation2 + $0x6e8] sm:$0xff]
      %v4208 = vld [vmem:[#allocation2 + $0x6f0] sm:$0xff]
      %v4209 = vld [vmem:[#allocation2 + $0x6f8] sm:$0xff]
      %v4210 = vld [vmem:[#allocation2 + $0x700] sm:$0xff]
      %v4211 = vld [vmem:[#allocation2 + $0x708] sm:$0xff]
      %v4212 = vld [vmem:[#allocation2 + $0x710] sm:$0xff]
      %v4213 = vld [vmem:[#allocation2 + $0x718] sm:$0xff]
      %v4214 = vld [vmem:[#allocation2 + $0x720] sm:$0xff]
      %v4215 = vld [vmem:[#allocation2 + $0x728] sm:$0xff]
      %v4216 = vld [vmem:[#allocation2 + $0x730] sm:$0xff]
      %v4217 = vld [vmem:[#allocation2 + $0x738] sm:$0xff]
      %v4218 = vld [vmem:[#allocation2 + $0x740] sm:$0xff]
      %v4219 = vld [vmem:[#allocation2 + $0x748] sm:$0xff]
      %v4220 = vld [vmem:[#allocation2 + $0x750] sm:$0xff]
      %v4221 = vld [vmem:[#allocation2 + $0x758] sm:$0xff]
      %v4222 = vld [vmem:[#allocation2 + $0x760] sm:$0xff]
      %v4223 = vld [vmem:[#allocation2 + $0x768] sm:$0xff]
      %v4224 = vld [vmem:[#allocation2 + $0x770] sm:$0xff]
      %v4225 = vld [vmem:[#allocation2 + $0x778] sm:$0xff]
      %v4226 = vld [vmem:[#allocation2 + $0x780] sm:$0xff]
      %v4227 = vld [vmem:[#allocation2 + $0x788] sm:$0xff]
      %v4228 = vld [vmem:[#allocation2 + $0x790] sm:$0xff]
      %v4229 = vld [vmem:[#allocation2 + $0x798] sm:$0xff]
      %v4230 = vld [vmem:[#allocation2 + $0x7a0] sm:$0xff]
      %v4231 = vld [vmem:[#allocation2 + $0x7a8] sm:$0xff]
      %v4232 = vld [vmem:[#allocation2 + $0x7b0] sm:$0xff]
      %v4233 = vld [vmem:[#allocation2 + $0x7b8] sm:$0xff]
      %v4234 = vld [vmem:[#allocation2 + $0x7c0] sm:$0xff]
      %v4235 = vld [vmem:[#allocation2 + $0x7c8] sm:$0xff]
      %v4236 = vld [vmem:[#allocation2 + $0x7d0] sm:$0xff]
      %v4237 = vld [vmem:[#allocation2 + $0x7d8] sm:$0xff]
      %v4238 = vld [vmem:[#allocation2 + $0x7e0] sm:$0xff]
      %v4239 = vld [vmem:[#allocation2 + $0x7e8] sm:$0xff]
      %v4240 = vld [vmem:[#allocation2 + $0x7f0] sm:$0xff]
      %v4241 = vld [vmem:[#allocation2 + $0x7f8] sm:$0xff]
      %v4242 = vld [vmem:[%s2] sm:$0x1]
      %v4244 = vlaneseq
      %v4245 = vshrl.u32 %v4244, 7
      %v4246 = vsub.s32 0, %v4245
      %v4247 = vrot.slane %v4242, %v4246
      %v4249 = vmul.f32 %v3986, %v4247
      %v4250 = vmul.f32 %v3987, %v4247
      %v4251 = vmul.f32 %v3988, %v4247
      %v4252 = vmul.f32 %v3989, %v4247
      %v4253 = vmul.f32 %v3990, %v4247
      %v4254 = vmul.f32 %v3991, %v4247
      %v4255 = vmul.f32 %v3992, %v4247
      %v4256 = vmul.f32 %v3993, %v4247
      %v4257 = vmul.f32 %v3994, %v4247
      %v4258 = vmul.f32 %v3995, %v4247
      %v4259 = vmul.f32 %v3996, %v4247
      %v4260 = vmul.f32 %v3997, %v4247
      %v4261 = vmul.f32 %v3998, %v4247
      %v4262 = vmul.f32 %v3999, %v4247
      %v4263 = vmul.f32 %v4000, %v4247
      %v4264 = vmul.f32 %v4001, %v4247
      %v4265 = vmul.f32 %v4002, %v4247
      %v4266 = vmul.f32 %v4003, %v4247
      %v4267 = vmul.f32 %v4004, %v4247
      %v4268 = vmul.f32 %v4005, %v4247
      %v4269 = vmul.f32 %v4006, %v4247
      %v4270 = vmul.f32 %v4007, %v4247
      %v4271 = vmul.f32 %v4008, %v4247
      %v4272 = vmul.f32 %v4009, %v4247
      %v4273 = vmul.f32 %v4010, %v4247
      %v4274 = vmul.f32 %v4011, %v4247
      %v4275 = vmul.f32 %v4012, %v4247
      %v4276 = vmul.f32 %v4013, %v4247
      %v4277 = vmul.f32 %v4014, %v4247
      %v4278 = vmul.f32 %v4015, %v4247
      %v4279 = vmul.f32 %v4016, %v4247
      %v4280 = vmul.f32 %v4017, %v4247
      %v4281 = vmul.f32 %v4018, %v4247
      %v4282 = vmul.f32 %v4019, %v4247
      %v4283 = vmul.f32 %v4020, %v4247
      %v4284 = vmul.f32 %v4021, %v4247
      %v4285 = vmul.f32 %v4022, %v4247
      %v4286 = vmul.f32 %v4023, %v4247
      %v4287 = vmul.f32 %v4024, %v4247
      %v4288 = vmul.f32 %v4025, %v4247
      %v4289 = vmul.f32 %v4026, %v4247
      %v4290 = vmul.f32 %v4027, %v4247
      %v4291 = vmul.f32 %v4028, %v4247
      %v4292 = vmul.f32 %v4029, %v4247
      %v4293 = vmul.f32 %v4030, %v4247
      %v4294 = vmul.f32 %v4031, %v4247
      %v4295 = vmul.f32 %v4032, %v4247
      %v4296 = vmul.f32 %v4033, %v4247
      %v4297 = vmul.f32 %v4034, %v4247
      %v4298 = vmul.f32 %v4035, %v4247
      %v4299 = vmul.f32 %v4036, %v4247
      %v4300 = vmul.f32 %v4037, %v4247
      %v4301 = vmul.f32 %v4038, %v4247
      %v4302 = vmul.f32 %v4039, %v4247
      %v4303 = vmul.f32 %v4040, %v4247
      %v4304 = vmul.f32 %v4041, %v4247
      %v4305 = vmul.f32 %v4042, %v4247
      %v4306 = vmul.f32 %v4043, %v4247
      %v4307 = vmul.f32 %v4044, %v4247
      %v4308 = vmul.f32 %v4045, %v4247
      %v4309 = vmul.f32 %v4046, %v4247
      %v4310 = vmul.f32 %v4047, %v4247
      %v4311 = vmul.f32 %v4048, %v4247
      %v4312 = vmul.f32 %v4049, %v4247
      %v4313 = vmul.f32 %v4050, %v4247
      %v4314 = vmul.f32 %v4051, %v4247
      %v4315 = vmul.f32 %v4052, %v4247
      %v4316 = vmul.f32 %v4053, %v4247
      %v4317 = vmul.f32 %v4054, %v4247
      %v4318 = vmul.f32 %v4055, %v4247
      %v4319 = vmul.f32 %v4056, %v4247
      %v4320 = vmul.f32 %v4057, %v4247
      %v4321 = vmul.f32 %v4058, %v4247
      %v4322 = vmul.f32 %v4059, %v4247
      %v4323 = vmul.f32 %v4060, %v4247
      %v4324 = vmul.f32 %v4061, %v4247
      %v4325 = vmul.f32 %v4062, %v4247
      %v4326 = vmul.f32 %v4063, %v4247
      %v4327 = vmul.f32 %v4064, %v4247
      %v4328 = vmul.f32 %v4065, %v4247
      %v4329 = vmul.f32 %v4066, %v4247
      %v4330 = vmul.f32 %v4067, %v4247
      %v4331 = vmul.f32 %v4068, %v4247
      %v4332 = vmul.f32 %v4069, %v4247
      %v4333 = vmul.f32 %v4070, %v4247
      %v4334 = vmul.f32 %v4071, %v4247
      %v4335 = vmul.f32 %v4072, %v4247
      %v4336 = vmul.f32 %v4073, %v4247
      %v4337 = vmul.f32 %v4074, %v4247
      %v4338 = vmul.f32 %v4075, %v4247
      %v4339 = vmul.f32 %v4076, %v4247
      %v4340 = vmul.f32 %v4077, %v4247
      %v4341 = vmul.f32 %v4078, %v4247
      %v4342 = vmul.f32 %v4079, %v4247
      %v4343 = vmul.f32 %v4080, %v4247
      %v4344 = vmul.f32 %v4081, %v4247
      %v4345 = vmul.f32 %v4082, %v4247
      %v4346 = vmul.f32 %v4083, %v4247
      %v4347 = vmul.f32 %v4084, %v4247
      %v4348 = vmul.f32 %v4085, %v4247
      %v4349 = vmul.f32 %v4086, %v4247
      %v4350 = vmul.f32 %v4087, %v4247
      %v4351 = vmul.f32 %v4088, %v4247
      %v4352 = vmul.f32 %v4089, %v4247
      %v4353 = vmul.f32 %v4090, %v4247
      %v4354 = vmul.f32 %v4091, %v4247
      %v4355 = vmul.f32 %v4092, %v4247
      %v4356 = vmul.f32 %v4093, %v4247
      %v4357 = vmul.f32 %v4094, %v4247
      %v4358 = vmul.f32 %v4095, %v4247
      %v4359 = vmul.f32 %v4096, %v4247
      %v4360 = vmul.f32 %v4097, %v4247
      %v4361 = vmul.f32 %v4098, %v4247
      %v4362 = vmul.f32 %v4099, %v4247
      %v4363 = vmul.f32 %v4100, %v4247
      %v4364 = vmul.f32 %v4101, %v4247
      %v4365 = vmul.f32 %v4102, %v4247
      %v4366 = vmul.f32 %v4103, %v4247
      %v4367 = vmul.f32 %v4104, %v4247
      %v4368 = vmul.f32 %v4105, %v4247
      %v4369 = vmul.f32 %v4106, %v4247
      %v4370 = vmul.f32 %v4107, %v4247
      %v4371 = vmul.f32 %v4108, %v4247
      %v4372 = vmul.f32 %v4109, %v4247
      %v4373 = vmul.f32 %v4110, %v4247
      %v4374 = vmul.f32 %v4111, %v4247
      %v4375 = vmul.f32 %v4112, %v4247
      %v4376 = vmul.f32 %v4113, %v4247
      %v4377 = vmul.f32 %v4114, %v4247
      %v4378 = vmul.f32 %v4115, %v4247
      %v4379 = vmul.f32 %v4116, %v4247
      %v4380 = vmul.f32 %v4117, %v4247
      %v4381 = vmul.f32 %v4118, %v4247
      %v4382 = vmul.f32 %v4119, %v4247
      %v4383 = vmul.f32 %v4120, %v4247
      %v4384 = vmul.f32 %v4121, %v4247
      %v4385 = vmul.f32 %v4122, %v4247
      %v4386 = vmul.f32 %v4123, %v4247
      %v4387 = vmul.f32 %v4124, %v4247
      %v4388 = vmul.f32 %v4125, %v4247
      %v4389 = vmul.f32 %v4126, %v4247
      %v4390 = vmul.f32 %v4127, %v4247
      %v4391 = vmul.f32 %v4128, %v4247
      %v4392 = vmul.f32 %v4129, %v4247
      %v4393 = vmul.f32 %v4130, %v4247
      %v4394 = vmul.f32 %v4131, %v4247
      %v4395 = vmul.f32 %v4132, %v4247
      %v4396 = vmul.f32 %v4133, %v4247
      %v4397 = vmul.f32 %v4134, %v4247
      %v4398 = vmul.f32 %v4135, %v4247
      %v4399 = vmul.f32 %v4136, %v4247
      %v4400 = vmul.f32 %v4137, %v4247
      %v4401 = vmul.f32 %v4138, %v4247
      %v4402 = vmul.f32 %v4139, %v4247
      %v4403 = vmul.f32 %v4140, %v4247
      %v4404 = vmul.f32 %v4141, %v4247
      %v4405 = vmul.f32 %v4142, %v4247
      %v4406 = vmul.f32 %v4143, %v4247
      %v4407 = vmul.f32 %v4144, %v4247
      %v4408 = vmul.f32 %v4145, %v4247
      %v4409 = vmul.f32 %v4146, %v4247
      %v4410 = vmul.f32 %v4147, %v4247
      %v4411 = vmul.f32 %v4148, %v4247
      %v4412 = vmul.f32 %v4149, %v4247
      %v4413 = vmul.f32 %v4150, %v4247
      %v4414 = vmul.f32 %v4151, %v4247
      %v4415 = vmul.f32 %v4152, %v4247
      %v4416 = vmul.f32 %v4153, %v4247
      %v4417 = vmul.f32 %v4154, %v4247
      %v4418 = vmul.f32 %v4155, %v4247
      %v4419 = vmul.f32 %v4156, %v4247
      %v4420 = vmul.f32 %v4157, %v4247
      %v4421 = vmul.f32 %v4158, %v4247
      %v4422 = vmul.f32 %v4159, %v4247
      %v4423 = vmul.f32 %v4160, %v4247
      %v4424 = vmul.f32 %v4161, %v4247
      %v4425 = vmul.f32 %v4162, %v4247
      %v4426 = vmul.f32 %v4163, %v4247
      %v4427 = vmul.f32 %v4164, %v4247
      %v4428 = vmul.f32 %v4165, %v4247
      %v4429 = vmul.f32 %v4166, %v4247
      %v4430 = vmul.f32 %v4167, %v4247
      %v4431 = vmul.f32 %v4168, %v4247
      %v4432 = vmul.f32 %v4169, %v4247
      %v4433 = vmul.f32 %v4170, %v4247
      %v4434 = vmul.f32 %v4171, %v4247
      %v4435 = vmul.f32 %v4172, %v4247
      %v4436 = vmul.f32 %v4173, %v4247
      %v4437 = vmul.f32 %v4174, %v4247
      %v4438 = vmul.f32 %v4175, %v4247
      %v4439 = vmul.f32 %v4176, %v4247
      %v4440 = vmul.f32 %v4177, %v4247
      %v4441 = vmul.f32 %v4178, %v4247
      %v4442 = vmul.f32 %v4179, %v4247
      %v4443 = vmul.f32 %v4180, %v4247
      %v4444 = vmul.f32 %v4181, %v4247
      %v4445 = vmul.f32 %v4182, %v4247
      %v4446 = vmul.f32 %v4183, %v4247
      %v4447 = vmul.f32 %v4184, %v4247
      %v4448 = vmul.f32 %v4185, %v4247
      %v4449 = vmul.f32 %v4186, %v4247
      %v4450 = vmul.f32 %v4187, %v4247
      %v4451 = vmul.f32 %v4188, %v4247
      %v4452 = vmul.f32 %v4189, %v4247
      %v4453 = vmul.f32 %v4190, %v4247
      %v4454 = vmul.f32 %v4191, %v4247
      %v4455 = vmul.f32 %v4192, %v4247
      %v4456 = vmul.f32 %v4193, %v4247
      %v4457 = vmul.f32 %v4194, %v4247
      %v4458 = vmul.f32 %v4195, %v4247
      %v4459 = vmul.f32 %v4196, %v4247
      %v4460 = vmul.f32 %v4197, %v4247
      %v4461 = vmul.f32 %v4198, %v4247
      %v4462 = vmul.f32 %v4199, %v4247
      %v4463 = vmul.f32 %v4200, %v4247
      %v4464 = vmul.f32 %v4201, %v4247
      %v4465 = vmul.f32 %v4202, %v4247
      %v4466 = vmul.f32 %v4203, %v4247
      %v4467 = vmul.f32 %v4204, %v4247
      %v4468 = vmul.f32 %v4205, %v4247
      %v4469 = vmul.f32 %v4206, %v4247
      %v4470 = vmul.f32 %v4207, %v4247
      %v4471 = vmul.f32 %v4208, %v4247
      %v4472 = vmul.f32 %v4209, %v4247
      %v4473 = vmul.f32 %v4210, %v4247
      %v4474 = vmul.f32 %v4211, %v4247
      %v4475 = vmul.f32 %v4212, %v4247
      %v4476 = vmul.f32 %v4213, %v4247
      %v4477 = vmul.f32 %v4214, %v4247
      %v4478 = vmul.f32 %v4215, %v4247
      %v4479 = vmul.f32 %v4216, %v4247
      %v4480 = vmul.f32 %v4217, %v4247
      %v4481 = vmul.f32 %v4218, %v4247
      %v4482 = vmul.f32 %v4219, %v4247
      %v4483 = vmul.f32 %v4220, %v4247
      %v4484 = vmul.f32 %v4221, %v4247
      %v4485 = vmul.f32 %v4222, %v4247
      %v4486 = vmul.f32 %v4223, %v4247
      %v4487 = vmul.f32 %v4224, %v4247
      %v4488 = vmul.f32 %v4225, %v4247
      %v4489 = vmul.f32 %v4226, %v4247
      %v4490 = vmul.f32 %v4227, %v4247
      %v4491 = vmul.f32 %v4228, %v4247
      %v4492 = vmul.f32 %v4229, %v4247
      %v4493 = vmul.f32 %v4230, %v4247
      %v4494 = vmul.f32 %v4231, %v4247
      %v4495 = vmul.f32 %v4232, %v4247
      %v4496 = vmul.f32 %v4233, %v4247
      %v4497 = vmul.f32 %v4234, %v4247
      %v4498 = vmul.f32 %v4235, %v4247
      %v4499 = vmul.f32 %v4236, %v4247
      %v4500 = vmul.f32 %v4237, %v4247
      %v4501 = vmul.f32 %v4238, %v4247
      %v4502 = vmul.f32 %v4239, %v4247
      %v4503 = vmul.f32 %v4240, %v4247
      %v4504 = vmul.f32 %v4241, %v4247
      %v4505 = vld [vmem:[%s3] sm:$0x1]
      %v4507 = vlaneseq
      %v4508 = vshrl.u32 %v4507, 7
      %v4509 = vsub.s32 0, %v4508
      %v4510 = vrot.slane %v4505, %v4509
      %v4512 = vadd.f32 %v4249, %v4510
      %v4513 = vadd.f32 %v4250, %v4510
      %v4514 = vadd.f32 %v4251, %v4510
      %v4515 = vadd.f32 %v4252, %v4510
      %v4516 = vadd.f32 %v4253, %v4510
      %v4517 = vadd.f32 %v4254, %v4510
      %v4518 = vadd.f32 %v4255, %v4510
      %v4519 = vadd.f32 %v4256, %v4510
      %v4520 = vadd.f32 %v4257, %v4510
      %v4521 = vadd.f32 %v4258, %v4510
      %v4522 = vadd.f32 %v4259, %v4510
      %v4523 = vadd.f32 %v4260, %v4510
      %v4524 = vadd.f32 %v4261, %v4510
      %v4525 = vadd.f32 %v4262, %v4510
      %v4526 = vadd.f32 %v4263, %v4510
      %v4527 = vadd.f32 %v4264, %v4510
      %v4528 = vadd.f32 %v4265, %v4510
      %v4529 = vadd.f32 %v4266, %v4510
      %v4530 = vadd.f32 %v4267, %v4510
      %v4531 = vadd.f32 %v4268, %v4510
      %v4532 = vadd.f32 %v4269, %v4510
      %v4533 = vadd.f32 %v4270, %v4510
      %v4534 = vadd.f32 %v4271, %v4510
      %v4535 = vadd.f32 %v4272, %v4510
      %v4536 = vadd.f32 %v4273, %v4510
      %v4537 = vadd.f32 %v4274, %v4510
      %v4538 = vadd.f32 %v4275, %v4510
      %v4539 = vadd.f32 %v4276, %v4510
      %v4540 = vadd.f32 %v4277, %v4510
      %v4541 = vadd.f32 %v4278, %v4510
      %v4542 = vadd.f32 %v4279, %v4510
      %v4543 = vadd.f32 %v4280, %v4510
      %v4544 = vadd.f32 %v4281, %v4510
      %v4545 = vadd.f32 %v4282, %v4510
      %v4546 = vadd.f32 %v4283, %v4510
      %v4547 = vadd.f32 %v4284, %v4510
      %v4548 = vadd.f32 %v4285, %v4510
      %v4549 = vadd.f32 %v4286, %v4510
      %v4550 = vadd.f32 %v4287, %v4510
      %v4551 = vadd.f32 %v4288, %v4510
      %v4552 = vadd.f32 %v4289, %v4510
      %v4553 = vadd.f32 %v4290, %v4510
      %v4554 = vadd.f32 %v4291, %v4510
      %v4555 = vadd.f32 %v4292, %v4510
      %v4556 = vadd.f32 %v4293, %v4510
      %v4557 = vadd.f32 %v4294, %v4510
      %v4558 = vadd.f32 %v4295, %v4510
      %v4559 = vadd.f32 %v4296, %v4510
      %v4560 = vadd.f32 %v4297, %v4510
      %v4561 = vadd.f32 %v4298, %v4510
      %v4562 = vadd.f32 %v4299, %v4510
      %v4563 = vadd.f32 %v4300, %v4510
      %v4564 = vadd.f32 %v4301, %v4510
      %v4565 = vadd.f32 %v4302, %v4510
      %v4566 = vadd.f32 %v4303, %v4510
      %v4567 = vadd.f32 %v4304, %v4510
      %v4568 = vadd.f32 %v4305, %v4510
      %v4569 = vadd.f32 %v4306, %v4510
      %v4570 = vadd.f32 %v4307, %v4510
      %v4571 = vadd.f32 %v4308, %v4510
      %v4572 = vadd.f32 %v4309, %v4510
      %v4573 = vadd.f32 %v4310, %v4510
      %v4574 = vadd.f32 %v4311, %v4510
      %v4575 = vadd.f32 %v4312, %v4510
      %v4576 = vadd.f32 %v4313, %v4510
      %v4577 = vadd.f32 %v4314, %v4510
      %v4578 = vadd.f32 %v4315, %v4510
      %v4579 = vadd.f32 %v4316, %v4510
      %v4580 = vadd.f32 %v4317, %v4510
      %v4581 = vadd.f32 %v4318, %v4510
      %v4582 = vadd.f32 %v4319, %v4510
      %v4583 = vadd.f32 %v4320, %v4510
      %v4584 = vadd.f32 %v4321, %v4510
      %v4585 = vadd.f32 %v4322, %v4510
      %v4586 = vadd.f32 %v4323, %v4510
      %v4587 = vadd.f32 %v4324, %v4510
      %v4588 = vadd.f32 %v4325, %v4510
      %v4589 = vadd.f32 %v4326, %v4510
      %v4590 = vadd.f32 %v4327, %v4510
      %v4591 = vadd.f32 %v4328, %v4510
      %v4592 = vadd.f32 %v4329, %v4510
      %v4593 = vadd.f32 %v4330, %v4510
      %v4594 = vadd.f32 %v4331, %v4510
      %v4595 = vadd.f32 %v4332, %v4510
      %v4596 = vadd.f32 %v4333, %v4510
      %v4597 = vadd.f32 %v4334, %v4510
      %v4598 = vadd.f32 %v4335, %v4510
      %v4599 = vadd.f32 %v4336, %v4510
      %v4600 = vadd.f32 %v4337, %v4510
      %v4601 = vadd.f32 %v4338, %v4510
      %v4602 = vadd.f32 %v4339, %v4510
      %v4603 = vadd.f32 %v4340, %v4510
      %v4604 = vadd.f32 %v4341, %v4510
      %v4605 = vadd.f32 %v4342, %v4510
      %v4606 = vadd.f32 %v4343, %v4510
      %v4607 = vadd.f32 %v4344, %v4510
      %v4608 = vadd.f32 %v4345, %v4510
      %v4609 = vadd.f32 %v4346, %v4510
      %v4610 = vadd.f32 %v4347, %v4510
      %v4611 = vadd.f32 %v4348, %v4510
      %v4612 = vadd.f32 %v4349, %v4510
      %v4613 = vadd.f32 %v4350, %v4510
      %v4614 = vadd.f32 %v4351, %v4510
      %v4615 = vadd.f32 %v4352, %v4510
      %v4616 = vadd.f32 %v4353, %v4510
      %v4617 = vadd.f32 %v4354, %v4510
      %v4618 = vadd.f32 %v4355, %v4510
      %v4619 = vadd.f32 %v4356, %v4510
      %v4620 = vadd.f32 %v4357, %v4510
      %v4621 = vadd.f32 %v4358, %v4510
      %v4622 = vadd.f32 %v4359, %v4510
      %v4623 = vadd.f32 %v4360, %v4510
      %v4624 = vadd.f32 %v4361, %v4510
      %v4625 = vadd.f32 %v4362, %v4510
      %v4626 = vadd.f32 %v4363, %v4510
      %v4627 = vadd.f32 %v4364, %v4510
      %v4628 = vadd.f32 %v4365, %v4510
      %v4629 = vadd.f32 %v4366, %v4510
      %v4630 = vadd.f32 %v4367, %v4510
      %v4631 = vadd.f32 %v4368, %v4510
      %v4632 = vadd.f32 %v4369, %v4510
      %v4633 = vadd.f32 %v4370, %v4510
      %v4634 = vadd.f32 %v4371, %v4510
      %v4635 = vadd.f32 %v4372, %v4510
      %v4636 = vadd.f32 %v4373, %v4510
      %v4637 = vadd.f32 %v4374, %v4510
      %v4638 = vadd.f32 %v4375, %v4510
      %v4639 = vadd.f32 %v4376, %v4510
      %v4640 = vadd.f32 %v4377, %v4510
      %v4641 = vadd.f32 %v4378, %v4510
      %v4642 = vadd.f32 %v4379, %v4510
      %v4643 = vadd.f32 %v4380, %v4510
      %v4644 = vadd.f32 %v4381, %v4510
      %v4645 = vadd.f32 %v4382, %v4510
      %v4646 = vadd.f32 %v4383, %v4510
      %v4647 = vadd.f32 %v4384, %v4510
      %v4648 = vadd.f32 %v4385, %v4510
      %v4649 = vadd.f32 %v4386, %v4510
      %v4650 = vadd.f32 %v4387, %v4510
      %v4651 = vadd.f32 %v4388, %v4510
      %v4652 = vadd.f32 %v4389, %v4510
      %v4653 = vadd.f32 %v4390, %v4510
      %v4654 = vadd.f32 %v4391, %v4510
      %v4655 = vadd.f32 %v4392, %v4510
      %v4656 = vadd.f32 %v4393, %v4510
      %v4657 = vadd.f32 %v4394, %v4510
      %v4658 = vadd.f32 %v4395, %v4510
      %v4659 = vadd.f32 %v4396, %v4510
      %v4660 = vadd.f32 %v4397, %v4510
      %v4661 = vadd.f32 %v4398, %v4510
      %v4662 = vadd.f32 %v4399, %v4510
      %v4663 = vadd.f32 %v4400, %v4510
      %v4664 = vadd.f32 %v4401, %v4510
      %v4665 = vadd.f32 %v4402, %v4510
      %v4666 = vadd.f32 %v4403, %v4510
      %v4667 = vadd.f32 %v4404, %v4510
      %v4668 = vadd.f32 %v4405, %v4510
      %v4669 = vadd.f32 %v4406, %v4510
      %v4670 = vadd.f32 %v4407, %v4510
      %v4671 = vadd.f32 %v4408, %v4510
      %v4672 = vadd.f32 %v4409, %v4510
      %v4673 = vadd.f32 %v4410, %v4510
      %v4674 = vadd.f32 %v4411, %v4510
      %v4675 = vadd.f32 %v4412, %v4510
      %v4676 = vadd.f32 %v4413, %v4510
      %v4677 = vadd.f32 %v4414, %v4510
      %v4678 = vadd.f32 %v4415, %v4510
      %v4679 = vadd.f32 %v4416, %v4510
      %v4680 = vadd.f32 %v4417, %v4510
      %v4681 = vadd.f32 %v4418, %v4510
      %v4682 = vadd.f32 %v4419, %v4510
      %v4683 = vadd.f32 %v4420, %v4510
      %v4684 = vadd.f32 %v4421, %v4510
      %v4685 = vadd.f32 %v4422, %v4510
      %v4686 = vadd.f32 %v4423, %v4510
      %v4687 = vadd.f32 %v4424, %v4510
      %v4688 = vadd.f32 %v4425, %v4510
      %v4689 = vadd.f32 %v4426, %v4510
      %v4690 = vadd.f32 %v4427, %v4510
      %v4691 = vadd.f32 %v4428, %v4510
      %v4692 = vadd.f32 %v4429, %v4510
      %v4693 = vadd.f32 %v4430, %v4510
      %v4694 = vadd.f32 %v4431, %v4510
      %v4695 = vadd.f32 %v4432, %v4510
      %v4696 = vadd.f32 %v4433, %v4510
      %v4697 = vadd.f32 %v4434, %v4510
      %v4698 = vadd.f32 %v4435, %v4510
      %v4699 = vadd.f32 %v4436, %v4510
      %v4700 = vadd.f32 %v4437, %v4510
      %v4701 = vadd.f32 %v4438, %v4510
      %v4702 = vadd.f32 %v4439, %v4510
      %v4703 = vadd.f32 %v4440, %v4510
      %v4704 = vadd.f32 %v4441, %v4510
      %v4705 = vadd.f32 %v4442, %v4510
      %v4706 = vadd.f32 %v4443, %v4510
      %v4707 = vadd.f32 %v4444, %v4510
      %v4708 = vadd.f32 %v4445, %v4510
      %v4709 = vadd.f32 %v4446, %v4510
      %v4710 = vadd.f32 %v4447, %v4510
      %v4711 = vadd.f32 %v4448, %v4510
      %v4712 = vadd.f32 %v4449, %v4510
      %v4713 = vadd.f32 %v4450, %v4510
      %v4714 = vadd.f32 %v4451, %v4510
      %v4715 = vadd.f32 %v4452, %v4510
      %v4716 = vadd.f32 %v4453, %v4510
      %v4717 = vadd.f32 %v4454, %v4510
      %v4718 = vadd.f32 %v4455, %v4510
      %v4719 = vadd.f32 %v4456, %v4510
      %v4720 = vadd.f32 %v4457, %v4510
      %v4721 = vadd.f32 %v4458, %v4510
      %v4722 = vadd.f32 %v4459, %v4510
      %v4723 = vadd.f32 %v4460, %v4510
      %v4724 = vadd.f32 %v4461, %v4510
      %v4725 = vadd.f32 %v4462, %v4510
      %v4726 = vadd.f32 %v4463, %v4510
      %v4727 = vadd.f32 %v4464, %v4510
      %v4728 = vadd.f32 %v4465, %v4510
      %v4729 = vadd.f32 %v4466, %v4510
      %v4730 = vadd.f32 %v4467, %v4510
      %v4731 = vadd.f32 %v4468, %v4510
      %v4732 = vadd.f32 %v4469, %v4510
      %v4733 = vadd.f32 %v4470, %v4510
      %v4734 = vadd.f32 %v4471, %v4510
      %v4735 = vadd.f32 %v4472, %v4510
      %v4736 = vadd.f32 %v4473, %v4510
      %v4737 = vadd.f32 %v4474, %v4510
      %v4738 = vadd.f32 %v4475, %v4510
      %v4739 = vadd.f32 %v4476, %v4510
      %v4740 = vadd.f32 %v4477, %v4510
      %v4741 = vadd.f32 %v4478, %v4510
      %v4742 = vadd.f32 %v4479, %v4510
      %v4743 = vadd.f32 %v4480, %v4510
      %v4744 = vadd.f32 %v4481, %v4510
      %v4745 = vadd.f32 %v4482, %v4510
      %v4746 = vadd.f32 %v4483, %v4510
      %v4747 = vadd.f32 %v4484, %v4510
      %v4748 = vadd.f32 %v4485, %v4510
      %v4749 = vadd.f32 %v4486, %v4510
      %v4750 = vadd.f32 %v4487, %v4510
      %v4751 = vadd.f32 %v4488, %v4510
      %v4752 = vadd.f32 %v4489, %v4510
      %v4753 = vadd.f32 %v4490, %v4510
      %v4754 = vadd.f32 %v4491, %v4510
      %v4755 = vadd.f32 %v4492, %v4510
      %v4756 = vadd.f32 %v4493, %v4510
      %v4757 = vadd.f32 %v4494, %v4510
      %v4758 = vadd.f32 %v4495, %v4510
      %v4759 = vadd.f32 %v4496, %v4510
      %v4760 = vadd.f32 %v4497, %v4510
      %v4761 = vadd.f32 %v4498, %v4510
      %v4762 = vadd.f32 %v4499, %v4510
      %v4763 = vadd.f32 %v4500, %v4510
      %v4764 = vadd.f32 %v4501, %v4510
      %v4765 = vadd.f32 %v4502, %v4510
      %v4766 = vadd.f32 %v4503, %v4510
      %v4767 = vadd.f32 %v4504, %v4510
      %v4768 = vmax.f32 %v4512, 0.0
      %v4769 = vmax.f32 %v4513, 0.0
      %v4770 = vmax.f32 %v4514, 0.0
      %v4771 = vmax.f32 %v4515, 0.0
      %v4772 = vmax.f32 %v4516, 0.0
      %v4773 = vmax.f32 %v4517, 0.0
      %v4774 = vmax.f32 %v4518, 0.0
      %v4775 = vmax.f32 %v4519, 0.0
      %v4776 = vmax.f32 %v4520, 0.0
      %v4777 = vmax.f32 %v4521, 0.0
      %v4778 = vmax.f32 %v4522, 0.0
      %v4779 = vmax.f32 %v4523, 0.0
      %v4780 = vmax.f32 %v4524, 0.0
      %v4781 = vmax.f32 %v4525, 0.0
      %v4782 = vmax.f32 %v4526, 0.0
      %v4783 = vmax.f32 %v4527, 0.0
      %v4784 = vmax.f32 %v4528, 0.0
      %v4785 = vmax.f32 %v4529, 0.0
      %v4786 = vmax.f32 %v4530, 0.0
      %v4787 = vmax.f32 %v4531, 0.0
      %v4788 = vmax.f32 %v4532, 0.0
      %v4789 = vmax.f32 %v4533, 0.0
      %v4790 = vmax.f32 %v4534, 0.0
      %v4791 = vmax.f32 %v4535, 0.0
      %v4792 = vmax.f32 %v4536, 0.0
      %v4793 = vmax.f32 %v4537, 0.0
      %v4794 = vmax.f32 %v4538, 0.0
      %v4795 = vmax.f32 %v4539, 0.0
      %v4796 = vmax.f32 %v4540, 0.0
      %v4797 = vmax.f32 %v4541, 0.0
      %v4798 = vmax.f32 %v4542, 0.0
      %v4799 = vmax.f32 %v4543, 0.0
      %v4800 = vmax.f32 %v4544, 0.0
      %v4801 = vmax.f32 %v4545, 0.0
      %v4802 = vmax.f32 %v4546, 0.0
      %v4803 = vmax.f32 %v4547, 0.0
      %v4804 = vmax.f32 %v4548, 0.0
      %v4805 = vmax.f32 %v4549, 0.0
      %v4806 = vmax.f32 %v4550, 0.0
      %v4807 = vmax.f32 %v4551, 0.0
      %v4808 = vmax.f32 %v4552, 0.0
      %v4809 = vmax.f32 %v4553, 0.0
      %v4810 = vmax.f32 %v4554, 0.0
      %v4811 = vmax.f32 %v4555, 0.0
      %v4812 = vmax.f32 %v4556, 0.0
      %v4813 = vmax.f32 %v4557, 0.0
      %v4814 = vmax.f32 %v4558, 0.0
      %v4815 = vmax.f32 %v4559, 0.0
      %v4816 = vmax.f32 %v4560, 0.0
      %v4817 = vmax.f32 %v4561, 0.0
      %v4818 = vmax.f32 %v4562, 0.0
      %v4819 = vmax.f32 %v4563, 0.0
      %v4820 = vmax.f32 %v4564, 0.0
      %v4821 = vmax.f32 %v4565, 0.0
      %v4822 = vmax.f32 %v4566, 0.0
      %v4823 = vmax.f32 %v4567, 0.0
      %v4824 = vmax.f32 %v4568, 0.0
      %v4825 = vmax.f32 %v4569, 0.0
      %v4826 = vmax.f32 %v4570, 0.0
      %v4827 = vmax.f32 %v4571, 0.0
      %v4828 = vmax.f32 %v4572, 0.0
      %v4829 = vmax.f32 %v4573, 0.0
      %v4830 = vmax.f32 %v4574, 0.0
      %v4831 = vmax.f32 %v4575, 0.0
      %v4832 = vmax.f32 %v4576, 0.0
      %v4833 = vmax.f32 %v4577, 0.0
      %v4834 = vmax.f32 %v4578, 0.0
      %v4835 = vmax.f32 %v4579, 0.0
      %v4836 = vmax.f32 %v4580, 0.0
      %v4837 = vmax.f32 %v4581, 0.0
      %v4838 = vmax.f32 %v4582, 0.0
      %v4839 = vmax.f32 %v4583, 0.0
      %v4840 = vmax.f32 %v4584, 0.0
      %v4841 = vmax.f32 %v4585, 0.0
      %v4842 = vmax.f32 %v4586, 0.0
      %v4843 = vmax.f32 %v4587, 0.0
      %v4844 = vmax.f32 %v4588, 0.0
      %v4845 = vmax.f32 %v4589, 0.0
      %v4846 = vmax.f32 %v4590, 0.0
      %v4847 = vmax.f32 %v4591, 0.0
      %v4848 = vmax.f32 %v4592, 0.0
      %v4849 = vmax.f32 %v4593, 0.0
      %v4850 = vmax.f32 %v4594, 0.0
      %v4851 = vmax.f32 %v4595, 0.0
      %v4852 = vmax.f32 %v4596, 0.0
      %v4853 = vmax.f32 %v4597, 0.0
      %v4854 = vmax.f32 %v4598, 0.0
      %v4855 = vmax.f32 %v4599, 0.0
      %v4856 = vmax.f32 %v4600, 0.0
      %v4857 = vmax.f32 %v4601, 0.0
      %v4858 = vmax.f32 %v4602, 0.0
      %v4859 = vmax.f32 %v4603, 0.0
      %v4860 = vmax.f32 %v4604, 0.0
      %v4861 = vmax.f32 %v4605, 0.0
      %v4862 = vmax.f32 %v4606, 0.0
      %v4863 = vmax.f32 %v4607, 0.0
      %v4864 = vmax.f32 %v4608, 0.0
      %v4865 = vmax.f32 %v4609, 0.0
      %v4866 = vmax.f32 %v4610, 0.0
      %v4867 = vmax.f32 %v4611, 0.0
      %v4868 = vmax.f32 %v4612, 0.0
      %v4869 = vmax.f32 %v4613, 0.0
      %v4870 = vmax.f32 %v4614, 0.0
      %v4871 = vmax.f32 %v4615, 0.0
      %v4872 = vmax.f32 %v4616, 0.0
      %v4873 = vmax.f32 %v4617, 0.0
      %v4874 = vmax.f32 %v4618, 0.0
      %v4875 = vmax.f32 %v4619, 0.0
      %v4876 = vmax.f32 %v4620, 0.0
      %v4877 = vmax.f32 %v4621, 0.0
      %v4878 = vmax.f32 %v4622, 0.0
      %v4879 = vmax.f32 %v4623, 0.0
      %v4880 = vmax.f32 %v4624, 0.0
      %v4881 = vmax.f32 %v4625, 0.0
      %v4882 = vmax.f32 %v4626, 0.0
      %v4883 = vmax.f32 %v4627, 0.0
      %v4884 = vmax.f32 %v4628, 0.0
      %v4885 = vmax.f32 %v4629, 0.0
      %v4886 = vmax.f32 %v4630, 0.0
      %v4887 = vmax.f32 %v4631, 0.0
      %v4888 = vmax.f32 %v4632, 0.0
      %v4889 = vmax.f32 %v4633, 0.0
      %v4890 = vmax.f32 %v4634, 0.0
      %v4891 = vmax.f32 %v4635, 0.0
      %v4892 = vmax.f32 %v4636, 0.0
      %v4893 = vmax.f32 %v4637, 0.0
      %v4894 = vmax.f32 %v4638, 0.0
      %v4895 = vmax.f32 %v4639, 0.0
      %v4896 = vmax.f32 %v4640, 0.0
      %v4897 = vmax.f32 %v4641, 0.0
      %v4898 = vmax.f32 %v4642, 0.0
      %v4899 = vmax.f32 %v4643, 0.0
      %v4900 = vmax.f32 %v4644, 0.0
      %v4901 = vmax.f32 %v4645, 0.0
      %v4902 = vmax.f32 %v4646, 0.0
      %v4903 = vmax.f32 %v4647, 0.0
      %v4904 = vmax.f32 %v4648, 0.0
      %v4905 = vmax.f32 %v4649, 0.0
      %v4906 = vmax.f32 %v4650, 0.0
      %v4907 = vmax.f32 %v4651, 0.0
      %v4908 = vmax.f32 %v4652, 0.0
      %v4909 = vmax.f32 %v4653, 0.0
      %v4910 = vmax.f32 %v4654, 0.0
      %v4911 = vmax.f32 %v4655, 0.0
      %v4912 = vmax.f32 %v4656, 0.0
      %v4913 = vmax.f32 %v4657, 0.0
      %v4914 = vmax.f32 %v4658, 0.0
      %v4915 = vmax.f32 %v4659, 0.0
      %v4916 = vmax.f32 %v4660, 0.0
      %v4917 = vmax.f32 %v4661, 0.0
      %v4918 = vmax.f32 %v4662, 0.0
      %v4919 = vmax.f32 %v4663, 0.0
      %v4920 = vmax.f32 %v4664, 0.0
      %v4921 = vmax.f32 %v4665, 0.0
      %v4922 = vmax.f32 %v4666, 0.0
      %v4923 = vmax.f32 %v4667, 0.0
      %v4924 = vmax.f32 %v4668, 0.0
      %v4925 = vmax.f32 %v4669, 0.0
      %v4926 = vmax.f32 %v4670, 0.0
      %v4927 = vmax.f32 %v4671, 0.0
      %v4928 = vmax.f32 %v4672, 0.0
      %v4929 = vmax.f32 %v4673, 0.0
      %v4930 = vmax.f32 %v4674, 0.0
      %v4931 = vmax.f32 %v4675, 0.0
      %v4932 = vmax.f32 %v4676, 0.0
      %v4933 = vmax.f32 %v4677, 0.0
      %v4934 = vmax.f32 %v4678, 0.0
      %v4935 = vmax.f32 %v4679, 0.0
      %v4936 = vmax.f32 %v4680, 0.0
      %v4937 = vmax.f32 %v4681, 0.0
      %v4938 = vmax.f32 %v4682, 0.0
      %v4939 = vmax.f32 %v4683, 0.0
      %v4940 = vmax.f32 %v4684, 0.0
      %v4941 = vmax.f32 %v4685, 0.0
      %v4942 = vmax.f32 %v4686, 0.0
      %v4943 = vmax.f32 %v4687, 0.0
      %v4944 = vmax.f32 %v4688, 0.0
      %v4945 = vmax.f32 %v4689, 0.0
      %v4946 = vmax.f32 %v4690, 0.0
      %v4947 = vmax.f32 %v4691, 0.0
      %v4948 = vmax.f32 %v4692, 0.0
      %v4949 = vmax.f32 %v4693, 0.0
      %v4950 = vmax.f32 %v4694, 0.0
      %v4951 = vmax.f32 %v4695, 0.0
      %v4952 = vmax.f32 %v4696, 0.0
      %v4953 = vmax.f32 %v4697, 0.0
      %v4954 = vmax.f32 %v4698, 0.0
      %v4955 = vmax.f32 %v4699, 0.0
      %v4956 = vmax.f32 %v4700, 0.0
      %v4957 = vmax.f32 %v4701, 0.0
      %v4958 = vmax.f32 %v4702, 0.0
      %v4959 = vmax.f32 %v4703, 0.0
      %v4960 = vmax.f32 %v4704, 0.0
      %v4961 = vmax.f32 %v4705, 0.0
      %v4962 = vmax.f32 %v4706, 0.0
      %v4963 = vmax.f32 %v4707, 0.0
      %v4964 = vmax.f32 %v4708, 0.0
      %v4965 = vmax.f32 %v4709, 0.0
      %v4966 = vmax.f32 %v4710, 0.0
      %v4967 = vmax.f32 %v4711, 0.0
      %v4968 = vmax.f32 %v4712, 0.0
      %v4969 = vmax.f32 %v4713, 0.0
      %v4970 = vmax.f32 %v4714, 0.0
      %v4971 = vmax.f32 %v4715, 0.0
      %v4972 = vmax.f32 %v4716, 0.0
      %v4973 = vmax.f32 %v4717, 0.0
      %v4974 = vmax.f32 %v4718, 0.0
      %v4975 = vmax.f32 %v4719, 0.0
      %v4976 = vmax.f32 %v4720, 0.0
      %v4977 = vmax.f32 %v4721, 0.0
      %v4978 = vmax.f32 %v4722, 0.0
      %v4979 = vmax.f32 %v4723, 0.0
      %v4980 = vmax.f32 %v4724, 0.0
      %v4981 = vmax.f32 %v4725, 0.0
      %v4982 = vmax.f32 %v4726, 0.0
      %v4983 = vmax.f32 %v4727, 0.0
      %v4984 = vmax.f32 %v4728, 0.0
      %v4985 = vmax.f32 %v4729, 0.0
      %v4986 = vmax.f32 %v4730, 0.0
      %v4987 = vmax.f32 %v4731, 0.0
      %v4988 = vmax.f32 %v4732, 0.0
      %v4989 = vmax.f32 %v4733, 0.0
      %v4990 = vmax.f32 %v4734, 0.0
      %v4991 = vmax.f32 %v4735, 0.0
      %v4992 = vmax.f32 %v4736, 0.0
      %v4993 = vmax.f32 %v4737, 0.0
      %v4994 = vmax.f32 %v4738, 0.0
      %v4995 = vmax.f32 %v4739, 0.0
      %v4996 = vmax.f32 %v4740, 0.0
      %v4997 = vmax.f32 %v4741, 0.0
      %v4998 = vmax.f32 %v4742, 0.0
      %v4999 = vmax.f32 %v4743, 0.0
      %v5000 = vmax.f32 %v4744, 0.0
      %v5001 = vmax.f32 %v4745, 0.0
      %v5002 = vmax.f32 %v4746, 0.0
      %v5003 = vmax.f32 %v4747, 0.0
      %v5004 = vmax.f32 %v4748, 0.0
      %v5005 = vmax.f32 %v4749, 0.0
      %v5006 = vmax.f32 %v4750, 0.0
      %v5007 = vmax.f32 %v4751, 0.0
      %v5008 = vmax.f32 %v4752, 0.0
      %v5009 = vmax.f32 %v4753, 0.0
      %v5010 = vmax.f32 %v4754, 0.0
      %v5011 = vmax.f32 %v4755, 0.0
      %v5012 = vmax.f32 %v4756, 0.0
      %v5013 = vmax.f32 %v4757, 0.0
      %v5014 = vmax.f32 %v4758, 0.0
      %v5015 = vmax.f32 %v4759, 0.0
      %v5016 = vmax.f32 %v4760, 0.0
      %v5017 = vmax.f32 %v4761, 0.0
      %v5018 = vmax.f32 %v4762, 0.0
      %v5019 = vmax.f32 %v4763, 0.0
      %v5020 = vmax.f32 %v4764, 0.0
      %v5021 = vmax.f32 %v4765, 0.0
      %v5022 = vmax.f32 %v4766, 0.0
      %v5023 = vmax.f32 %v4767, 0.0
      %v5024 = vpack.c.bf16 %v4769, %v4768
      %v5025 = vpack.c.bf16 %v4771, %v4770
      %v5026 = vpack.c.bf16 %v4773, %v4772
      %v5027 = vpack.c.bf16 %v4775, %v4774
      %v5028 = vpack.c.bf16 %v4777, %v4776
      %v5029 = vpack.c.bf16 %v4779, %v4778
      %v5030 = vpack.c.bf16 %v4781, %v4780
      %v5031 = vpack.c.bf16 %v4783, %v4782
      %v5032 = vpack.c.bf16 %v4785, %v4784
      %v5033 = vpack.c.bf16 %v4787, %v4786
      %v5034 = vpack.c.bf16 %v4789, %v4788
      %v5035 = vpack.c.bf16 %v4791, %v4790
      %v5036 = vpack.c.bf16 %v4793, %v4792
      %v5037 = vpack.c.bf16 %v4795, %v4794
      %v5038 = vpack.c.bf16 %v4797, %v4796
      %v5039 = vpack.c.bf16 %v4799, %v4798
      %v5040 = vpack.c.bf16 %v4801, %v4800
      %v5041 = vpack.c.bf16 %v4803, %v4802
      %v5042 = vpack.c.bf16 %v4805, %v4804
      %v5043 = vpack.c.bf16 %v4807, %v4806
      %v5044 = vpack.c.bf16 %v4809, %v4808
      %v5045 = vpack.c.bf16 %v4811, %v4810
      %v5046 = vpack.c.bf16 %v4813, %v4812
      %v5047 = vpack.c.bf16 %v4815, %v4814
      %v5048 = vpack.c.bf16 %v4817, %v4816
      %v5049 = vpack.c.bf16 %v4819, %v4818
      %v5050 = vpack.c.bf16 %v4821, %v4820
      %v5051 = vpack.c.bf16 %v4823, %v4822
      %v5052 = vpack.c.bf16 %v4825, %v4824
      %v5053 = vpack.c.bf16 %v4827, %v4826
      %v5054 = vpack.c.bf16 %v4829, %v4828
      %v5055 = vpack.c.bf16 %v4831, %v4830
      %v5056 = vpack.c.bf16 %v4833, %v4832
      %v5057 = vpack.c.bf16 %v4835, %v4834
      %v5058 = vpack.c.bf16 %v4837, %v4836
      %v5059 = vpack.c.bf16 %v4839, %v4838
      %v5060 = vpack.c.bf16 %v4841, %v4840
      %v5061 = vpack.c.bf16 %v4843, %v4842
      %v5062 = vpack.c.bf16 %v4845, %v4844
      %v5063 = vpack.c.bf16 %v4847, %v4846
      %v5064 = vpack.c.bf16 %v4849, %v4848
      %v5065 = vpack.c.bf16 %v4851, %v4850
      %v5066 = vpack.c.bf16 %v4853, %v4852
      %v5067 = vpack.c.bf16 %v4855, %v4854
      %v5068 = vpack.c.bf16 %v4857, %v4856
      %v5069 = vpack.c.bf16 %v4859, %v4858
      %v5070 = vpack.c.bf16 %v4861, %v4860
      %v5071 = vpack.c.bf16 %v4863, %v4862
      %v5072 = vpack.c.bf16 %v4865, %v4864
      %v5073 = vpack.c.bf16 %v4867, %v4866
      %v5074 = vpack.c.bf16 %v4869, %v4868
      %v5075 = vpack.c.bf16 %v4871, %v4870
      %v5076 = vpack.c.bf16 %v4873, %v4872
      %v5077 = vpack.c.bf16 %v4875, %v4874
      %v5078 = vpack.c.bf16 %v4877, %v4876
      %v5079 = vpack.c.bf16 %v4879, %v4878
      %v5080 = vpack.c.bf16 %v4881, %v4880
      %v5081 = vpack.c.bf16 %v4883, %v4882
      %v5082 = vpack.c.bf16 %v4885, %v4884
      %v5083 = vpack.c.bf16 %v4887, %v4886
      %v5084 = vpack.c.bf16 %v4889, %v4888
      %v5085 = vpack.c.bf16 %v4891, %v4890
      %v5086 = vpack.c.bf16 %v4893, %v4892
      %v5087 = vpack.c.bf16 %v4895, %v4894
      %v5088 = vpack.c.bf16 %v4897, %v4896
      %v5089 = vpack.c.bf16 %v4899, %v4898
      %v5090 = vpack.c.bf16 %v4901, %v4900
      %v5091 = vpack.c.bf16 %v4903, %v4902
      %v5092 = vpack.c.bf16 %v4905, %v4904
      %v5093 = vpack.c.bf16 %v4907, %v4906
      %v5094 = vpack.c.bf16 %v4909, %v4908
      %v5095 = vpack.c.bf16 %v4911, %v4910
      %v5096 = vpack.c.bf16 %v4913, %v4912
      %v5097 = vpack.c.bf16 %v4915, %v4914
      %v5098 = vpack.c.bf16 %v4917, %v4916
      %v5099 = vpack.c.bf16 %v4919, %v4918
      %v5100 = vpack.c.bf16 %v4921, %v4920
      %v5101 = vpack.c.bf16 %v4923, %v4922
      %v5102 = vpack.c.bf16 %v4925, %v4924
      %v5103 = vpack.c.bf16 %v4927, %v4926
      %v5104 = vpack.c.bf16 %v4929, %v4928
      %v5105 = vpack.c.bf16 %v4931, %v4930
      %v5106 = vpack.c.bf16 %v4933, %v4932
      %v5107 = vpack.c.bf16 %v4935, %v4934
      %v5108 = vpack.c.bf16 %v4937, %v4936
      %v5109 = vpack.c.bf16 %v4939, %v4938
      %v5110 = vpack.c.bf16 %v4941, %v4940
      %v5111 = vpack.c.bf16 %v4943, %v4942
      %v5112 = vpack.c.bf16 %v4945, %v4944
      %v5113 = vpack.c.bf16 %v4947, %v4946
      %v5114 = vpack.c.bf16 %v4949, %v4948
      %v5115 = vpack.c.bf16 %v4951, %v4950
      %v5116 = vpack.c.bf16 %v4953, %v4952
      %v5117 = vpack.c.bf16 %v4955, %v4954
      %v5118 = vpack.c.bf16 %v4957, %v4956
      %v5119 = vpack.c.bf16 %v4959, %v4958
      %v5120 = vpack.c.bf16 %v4961, %v4960
      %v5121 = vpack.c.bf16 %v4963, %v4962
      %v5122 = vpack.c.bf16 %v4965, %v4964
      %v5123 = vpack.c.bf16 %v4967, %v4966
      %v5124 = vpack.c.bf16 %v4969, %v4968
      %v5125 = vpack.c.bf16 %v4971, %v4970
      %v5126 = vpack.c.bf16 %v4973, %v4972
      %v5127 = vpack.c.bf16 %v4975, %v4974
      %v5128 = vpack.c.bf16 %v4977, %v4976
      %v5129 = vpack.c.bf16 %v4979, %v4978
      %v5130 = vpack.c.bf16 %v4981, %v4980
      %v5131 = vpack.c.bf16 %v4983, %v4982
      %v5132 = vpack.c.bf16 %v4985, %v4984
      %v5133 = vpack.c.bf16 %v4987, %v4986
      %v5134 = vpack.c.bf16 %v4989, %v4988
      %v5135 = vpack.c.bf16 %v4991, %v4990
      %v5136 = vpack.c.bf16 %v4993, %v4992
      %v5137 = vpack.c.bf16 %v4995, %v4994
      %v5138 = vpack.c.bf16 %v4997, %v4996
      %v5139 = vpack.c.bf16 %v4999, %v4998
      %v5140 = vpack.c.bf16 %v5001, %v5000
      %v5141 = vpack.c.bf16 %v5003, %v5002
      %v5142 = vpack.c.bf16 %v5005, %v5004
      %v5143 = vpack.c.bf16 %v5007, %v5006
      %v5144 = vpack.c.bf16 %v5009, %v5008
      %v5145 = vpack.c.bf16 %v5011, %v5010
      %v5146 = vpack.c.bf16 %v5013, %v5012
      %v5147 = vpack.c.bf16 %v5015, %v5014
      %v5148 = vpack.c.bf16 %v5017, %v5016
      %v5149 = vpack.c.bf16 %v5019, %v5018
      %v5150 = vpack.c.bf16 %v5021, %v5020
      %v5151 = vpack.c.bf16 %v5023, %v5022
      %v5280 = vunpack.c.l.b16 %v5024
      %v5281 = vunpack.c.h.b16 %v5024
      %v5282 = vunpack.c.l.b16 %v5025
      %v5283 = vunpack.c.h.b16 %v5025
      %v5284 = vunpack.c.l.b16 %v5026
      %v5285 = vunpack.c.h.b16 %v5026
      %v5286 = vunpack.c.l.b16 %v5027
      %v5287 = vunpack.c.h.b16 %v5027
      %v5288 = vunpack.c.l.b16 %v5028
      %v5289 = vunpack.c.h.b16 %v5028
      %v5290 = vunpack.c.l.b16 %v5029
      %v5291 = vunpack.c.h.b16 %v5029
      %v5292 = vunpack.c.l.b16 %v5030
      %v5293 = vunpack.c.h.b16 %v5030
      %v5294 = vunpack.c.l.b16 %v5031
      %v5295 = vunpack.c.h.b16 %v5031
      %v5296 = vunpack.c.l.b16 %v5032
      %v5297 = vunpack.c.h.b16 %v5032
      %v5298 = vunpack.c.l.b16 %v5033
      %v5299 = vunpack.c.h.b16 %v5033
      %v5300 = vunpack.c.l.b16 %v5034
      %v5301 = vunpack.c.h.b16 %v5034
      %v5302 = vunpack.c.l.b16 %v5035
      %v5303 = vunpack.c.h.b16 %v5035
      %v5304 = vunpack.c.l.b16 %v5036
      %v5305 = vunpack.c.h.b16 %v5036
      %v5306 = vunpack.c.l.b16 %v5037
      %v5307 = vunpack.c.h.b16 %v5037
      %v5308 = vunpack.c.l.b16 %v5038
      %v5309 = vunpack.c.h.b16 %v5038
      %v5310 = vunpack.c.l.b16 %v5039
      %v5311 = vunpack.c.h.b16 %v5039
      %v5312 = vunpack.c.l.b16 %v5040
      %v5313 = vunpack.c.h.b16 %v5040
      %v5314 = vunpack.c.l.b16 %v5041
      %v5315 = vunpack.c.h.b16 %v5041
      %v5316 = vunpack.c.l.b16 %v5042
      %v5317 = vunpack.c.h.b16 %v5042
      %v5318 = vunpack.c.l.b16 %v5043
      %v5319 = vunpack.c.h.b16 %v5043
      %v5320 = vunpack.c.l.b16 %v5044
      %v5321 = vunpack.c.h.b16 %v5044
      %v5322 = vunpack.c.l.b16 %v5045
      %v5323 = vunpack.c.h.b16 %v5045
      %v5324 = vunpack.c.l.b16 %v5046
      %v5325 = vunpack.c.h.b16 %v5046
      %v5326 = vunpack.c.l.b16 %v5047
      %v5327 = vunpack.c.h.b16 %v5047
      %v5328 = vunpack.c.l.b16 %v5048
      %v5329 = vunpack.c.h.b16 %v5048
      %v5330 = vunpack.c.l.b16 %v5049
      %v5331 = vunpack.c.h.b16 %v5049
      %v5332 = vunpack.c.l.b16 %v5050
      %v5333 = vunpack.c.h.b16 %v5050
      %v5334 = vunpack.c.l.b16 %v5051
      %v5335 = vunpack.c.h.b16 %v5051
      %v5336 = vunpack.c.l.b16 %v5052
      %v5337 = vunpack.c.h.b16 %v5052
      %v5338 = vunpack.c.l.b16 %v5053
      %v5339 = vunpack.c.h.b16 %v5053
      %v5340 = vunpack.c.l.b16 %v5054
      %v5341 = vunpack.c.h.b16 %v5054
      %v5342 = vunpack.c.l.b16 %v5055
      %v5343 = vunpack.c.h.b16 %v5055
      %v5344 = vunpack.c.l.b16 %v5056
      %v5345 = vunpack.c.h.b16 %v5056
      %v5346 = vunpack.c.l.b16 %v5057
      %v5347 = vunpack.c.h.b16 %v5057
      %v5348 = vunpack.c.l.b16 %v5058
      %v5349 = vunpack.c.h.b16 %v5058
      %v5350 = vunpack.c.l.b16 %v5059
      %v5351 = vunpack.c.h.b16 %v5059
      %v5352 = vunpack.c.l.b16 %v5060
      %v5353 = vunpack.c.h.b16 %v5060
      %v5354 = vunpack.c.l.b16 %v5061
      %v5355 = vunpack.c.h.b16 %v5061
      %v5356 = vunpack.c.l.b16 %v5062
      %v5357 = vunpack.c.h.b16 %v5062
      %v5358 = vunpack.c.l.b16 %v5063
      %v5359 = vunpack.c.h.b16 %v5063
      %v5360 = vunpack.c.l.b16 %v5064
      %v5361 = vunpack.c.h.b16 %v5064
      %v5362 = vunpack.c.l.b16 %v5065
      %v5363 = vunpack.c.h.b16 %v5065
      %v5364 = vunpack.c.l.b16 %v5066
      %v5365 = vunpack.c.h.b16 %v5066
      %v5366 = vunpack.c.l.b16 %v5067
      %v5367 = vunpack.c.h.b16 %v5067
      %v5368 = vunpack.c.l.b16 %v5068
      %v5369 = vunpack.c.h.b16 %v5068
      %v5370 = vunpack.c.l.b16 %v5069
      %v5371 = vunpack.c.h.b16 %v5069
      %v5372 = vunpack.c.l.b16 %v5070
      %v5373 = vunpack.c.h.b16 %v5070
      %v5374 = vunpack.c.l.b16 %v5071
      %v5375 = vunpack.c.h.b16 %v5071
      %v5376 = vunpack.c.l.b16 %v5072
      %v5377 = vunpack.c.h.b16 %v5072
      %v5378 = vunpack.c.l.b16 %v5073
      %v5379 = vunpack.c.h.b16 %v5073
      %v5380 = vunpack.c.l.b16 %v5074
      %v5381 = vunpack.c.h.b16 %v5074
      %v5382 = vunpack.c.l.b16 %v5075
      %v5383 = vunpack.c.h.b16 %v5075
      %v5384 = vunpack.c.l.b16 %v5076
      %v5385 = vunpack.c.h.b16 %v5076
      %v5386 = vunpack.c.l.b16 %v5077
      %v5387 = vunpack.c.h.b16 %v5077
      %v5388 = vunpack.c.l.b16 %v5078
      %v5389 = vunpack.c.h.b16 %v5078
      %v5390 = vunpack.c.l.b16 %v5079
      %v5391 = vunpack.c.h.b16 %v5079
      %v5392 = vunpack.c.l.b16 %v5080
      %v5393 = vunpack.c.h.b16 %v5080
      %v5394 = vunpack.c.l.b16 %v5081
      %v5395 = vunpack.c.h.b16 %v5081
      %v5396 = vunpack.c.l.b16 %v5082
      %v5397 = vunpack.c.h.b16 %v5082
      %v5398 = vunpack.c.l.b16 %v5083
      %v5399 = vunpack.c.h.b16 %v5083
      %v5400 = vunpack.c.l.b16 %v5084
      %v5401 = vunpack.c.h.b16 %v5084
      %v5402 = vunpack.c.l.b16 %v5085
      %v5403 = vunpack.c.h.b16 %v5085
      %v5404 = vunpack.c.l.b16 %v5086
      %v5405 = vunpack.c.h.b16 %v5086
      %v5406 = vunpack.c.l.b16 %v5087
      %v5407 = vunpack.c.h.b16 %v5087
      %v5408 = vunpack.c.l.b16 %v5088
      %v5409 = vunpack.c.h.b16 %v5088
      %v5410 = vunpack.c.l.b16 %v5089
      %v5411 = vunpack.c.h.b16 %v5089
      %v5412 = vunpack.c.l.b16 %v5090
      %v5413 = vunpack.c.h.b16 %v5090
      %v5414 = vunpack.c.l.b16 %v5091
      %v5415 = vunpack.c.h.b16 %v5091
      %v5416 = vunpack.c.l.b16 %v5092
      %v5417 = vunpack.c.h.b16 %v5092
      %v5418 = vunpack.c.l.b16 %v5093
      %v5419 = vunpack.c.h.b16 %v5093
      %v5420 = vunpack.c.l.b16 %v5094
      %v5421 = vunpack.c.h.b16 %v5094
      %v5422 = vunpack.c.l.b16 %v5095
      %v5423 = vunpack.c.h.b16 %v5095
      %v5424 = vunpack.c.l.b16 %v5096
      %v5425 = vunpack.c.h.b16 %v5096
      %v5426 = vunpack.c.l.b16 %v5097
      %v5427 = vunpack.c.h.b16 %v5097
      %v5428 = vunpack.c.l.b16 %v5098
      %v5429 = vunpack.c.h.b16 %v5098
      %v5430 = vunpack.c.l.b16 %v5099
      %v5431 = vunpack.c.h.b16 %v5099
      %v5432 = vunpack.c.l.b16 %v5100
      %v5433 = vunpack.c.h.b16 %v5100
      %v5434 = vunpack.c.l.b16 %v5101
      %v5435 = vunpack.c.h.b16 %v5101
      %v5436 = vunpack.c.l.b16 %v5102
      %v5437 = vunpack.c.h.b16 %v5102
      %v5438 = vunpack.c.l.b16 %v5103
      %v5439 = vunpack.c.h.b16 %v5103
      %v5440 = vunpack.c.l.b16 %v5104
      %v5441 = vunpack.c.h.b16 %v5104
      %v5442 = vunpack.c.l.b16 %v5105
      %v5443 = vunpack.c.h.b16 %v5105
      %v5444 = vunpack.c.l.b16 %v5106
      %v5445 = vunpack.c.h.b16 %v5106
      %v5446 = vunpack.c.l.b16 %v5107
      %v5447 = vunpack.c.h.b16 %v5107
      %v5448 = vunpack.c.l.b16 %v5108
      %v5449 = vunpack.c.h.b16 %v5108
      %v5450 = vunpack.c.l.b16 %v5109
      %v5451 = vunpack.c.h.b16 %v5109
      %v5452 = vunpack.c.l.b16 %v5110
      %v5453 = vunpack.c.h.b16 %v5110
      %v5454 = vunpack.c.l.b16 %v5111
      %v5455 = vunpack.c.h.b16 %v5111
      %v5456 = vunpack.c.l.b16 %v5112
      %v5457 = vunpack.c.h.b16 %v5112
      %v5458 = vunpack.c.l.b16 %v5113
      %v5459 = vunpack.c.h.b16 %v5113
      %v5460 = vunpack.c.l.b16 %v5114
      %v5461 = vunpack.c.h.b16 %v5114
      %v5462 = vunpack.c.l.b16 %v5115
      %v5463 = vunpack.c.h.b16 %v5115
      %v5464 = vunpack.c.l.b16 %v5116
      %v5465 = vunpack.c.h.b16 %v5116
      %v5466 = vunpack.c.l.b16 %v5117
      %v5467 = vunpack.c.h.b16 %v5117
      %v5468 = vunpack.c.l.b16 %v5118
      %v5469 = vunpack.c.h.b16 %v5118
      %v5470 = vunpack.c.l.b16 %v5119
      %v5471 = vunpack.c.h.b16 %v5119
      %v5472 = vunpack.c.l.b16 %v5120
      %v5473 = vunpack.c.h.b16 %v5120
      %v5474 = vunpack.c.l.b16 %v5121
      %v5475 = vunpack.c.h.b16 %v5121
      %v5476 = vunpack.c.l.b16 %v5122
      %v5477 = vunpack.c.h.b16 %v5122
      %v5478 = vunpack.c.l.b16 %v5123
      %v5479 = vunpack.c.h.b16 %v5123
      %v5480 = vunpack.c.l.b16 %v5124
      %v5481 = vunpack.c.h.b16 %v5124
      %v5482 = vunpack.c.l.b16 %v5125
      %v5483 = vunpack.c.h.b16 %v5125
      %v5484 = vunpack.c.l.b16 %v5126
      %v5485 = vunpack.c.h.b16 %v5126
      %v5486 = vunpack.c.l.b16 %v5127
      %v5487 = vunpack.c.h.b16 %v5127
      %v5488 = vunpack.c.l.b16 %v5128
      %v5489 = vunpack.c.h.b16 %v5128
      %v5490 = vunpack.c.l.b16 %v5129
      %v5491 = vunpack.c.h.b16 %v5129
      %v5492 = vunpack.c.l.b16 %v5130
      %v5493 = vunpack.c.h.b16 %v5130
      %v5494 = vunpack.c.l.b16 %v5131
      %v5495 = vunpack.c.h.b16 %v5131
      %v5496 = vunpack.c.l.b16 %v5132
      %v5497 = vunpack.c.h.b16 %v5132
      %v5498 = vunpack.c.l.b16 %v5133
      %v5499 = vunpack.c.h.b16 %v5133
      %v5500 = vunpack.c.l.b16 %v5134
      %v5501 = vunpack.c.h.b16 %v5134
      %v5502 = vunpack.c.l.b16 %v5135
      %v5503 = vunpack.c.h.b16 %v5135
      %v5504 = vunpack.c.l.b16 %v5136
      %v5505 = vunpack.c.h.b16 %v5136
      %v5506 = vunpack.c.l.b16 %v5137
      %v5507 = vunpack.c.h.b16 %v5137
      %v5508 = vunpack.c.l.b16 %v5138
      %v5509 = vunpack.c.h.b16 %v5138
      %v5510 = vunpack.c.l.b16 %v5139
      %v5511 = vunpack.c.h.b16 %v5139
      %v5512 = vunpack.c.l.b16 %v5140
      %v5513 = vunpack.c.h.b16 %v5140
      %v5514 = vunpack.c.l.b16 %v5141
      %v5515 = vunpack.c.h.b16 %v5141
      %v5516 = vunpack.c.l.b16 %v5142
      %v5517 = vunpack.c.h.b16 %v5142
      %v5518 = vunpack.c.l.b16 %v5143
      %v5519 = vunpack.c.h.b16 %v5143
      %v5520 = vunpack.c.l.b16 %v5144
      %v5521 = vunpack.c.h.b16 %v5144
      %v5522 = vunpack.c.l.b16 %v5145
      %v5523 = vunpack.c.h.b16 %v5145
      %v5524 = vunpack.c.l.b16 %v5146
      %v5525 = vunpack.c.h.b16 %v5146
      %v5526 = vunpack.c.l.b16 %v5147
      %v5527 = vunpack.c.h.b16 %v5147
      %v5528 = vunpack.c.l.b16 %v5148
      %v5529 = vunpack.c.h.b16 %v5148
      %v5530 = vunpack.c.l.b16 %v5149
      %v5531 = vunpack.c.h.b16 %v5149
      %v5532 = vunpack.c.l.b16 %v5150
      %v5533 = vunpack.c.h.b16 %v5150
      %v5534 = vunpack.c.l.b16 %v5151
      %v5535 = vunpack.c.h.b16 %v5151
      %v5536 = vpack.c.b16 %v5280, %v5280
      %v5537 = vpack.c.b16 %v5281, %v5281
      %v5538 = vpack.c.b16 %v5282, %v5282
      %v5539 = vpack.c.b16 %v5283, %v5283
      %v5540 = vpack.c.b16 %v5284, %v5284
      %v5541 = vpack.c.b16 %v5285, %v5285
      %v5542 = vpack.c.b16 %v5286, %v5286
      %v5543 = vpack.c.b16 %v5287, %v5287
      %v5544 = vpack.c.b16 %v5288, %v5288
      %v5545 = vpack.c.b16 %v5289, %v5289
      %v5546 = vpack.c.b16 %v5290, %v5290
      %v5547 = vpack.c.b16 %v5291, %v5291
      %v5548 = vpack.c.b16 %v5292, %v5292
      %v5549 = vpack.c.b16 %v5293, %v5293
      %v5550 = vpack.c.b16 %v5294, %v5294
      %v5551 = vpack.c.b16 %v5295, %v5295
      %v5552 = vpack.c.b16 %v5296, %v5296
      %v5553 = vpack.c.b16 %v5297, %v5297
      %v5554 = vpack.c.b16 %v5298, %v5298
      %v5555 = vpack.c.b16 %v5299, %v5299
      %v5556 = vpack.c.b16 %v5300, %v5300
      %v5557 = vpack.c.b16 %v5301, %v5301
      %v5558 = vpack.c.b16 %v5302, %v5302
      %v5559 = vpack.c.b16 %v5303, %v5303
      %v5560 = vpack.c.b16 %v5304, %v5304
      %v5561 = vpack.c.b16 %v5305, %v5305
      %v5562 = vpack.c.b16 %v5306, %v5306
      %v5563 = vpack.c.b16 %v5307, %v5307
      %v5564 = vpack.c.b16 %v5308, %v5308
      %v5565 = vpack.c.b16 %v5309, %v5309
      %v5566 = vpack.c.b16 %v5310, %v5310
      %v5567 = vpack.c.b16 %v5311, %v5311
      %v5568 = vpack.c.b16 %v5312, %v5312
      %v5569 = vpack.c.b16 %v5313, %v5313
      %v5570 = vpack.c.b16 %v5314, %v5314
      %v5571 = vpack.c.b16 %v5315, %v5315
      %v5572 = vpack.c.b16 %v5316, %v5316
      %v5573 = vpack.c.b16 %v5317, %v5317
      %v5574 = vpack.c.b16 %v5318, %v5318
      %v5575 = vpack.c.b16 %v5319, %v5319
      %v5576 = vpack.c.b16 %v5320, %v5320
      %v5577 = vpack.c.b16 %v5321, %v5321
      %v5578 = vpack.c.b16 %v5322, %v5322
      %v5579 = vpack.c.b16 %v5323, %v5323
      %v5580 = vpack.c.b16 %v5324, %v5324
      %v5581 = vpack.c.b16 %v5325, %v5325
      %v5582 = vpack.c.b16 %v5326, %v5326
      %v5583 = vpack.c.b16 %v5327, %v5327
      %v5584 = vpack.c.b16 %v5328, %v5328
      %v5585 = vpack.c.b16 %v5329, %v5329
      %v5586 = vpack.c.b16 %v5330, %v5330
      %v5587 = vpack.c.b16 %v5331, %v5331
      %v5588 = vpack.c.b16 %v5332, %v5332
      %v5589 = vpack.c.b16 %v5333, %v5333
      %v5590 = vpack.c.b16 %v5334, %v5334
      %v5591 = vpack.c.b16 %v5335, %v5335
      %v5592 = vpack.c.b16 %v5336, %v5336
      %v5593 = vpack.c.b16 %v5337, %v5337
      %v5594 = vpack.c.b16 %v5338, %v5338
      %v5595 = vpack.c.b16 %v5339, %v5339
      %v5596 = vpack.c.b16 %v5340, %v5340
      %v5597 = vpack.c.b16 %v5341, %v5341
      %v5598 = vpack.c.b16 %v5342, %v5342
      %v5599 = vpack.c.b16 %v5343, %v5343
      %v5600 = vpack.c.b16 %v5344, %v5344
      %v5601 = vpack.c.b16 %v5345, %v5345
      %v5602 = vpack.c.b16 %v5346, %v5346
      %v5603 = vpack.c.b16 %v5347, %v5347
      %v5604 = vpack.c.b16 %v5348, %v5348
      %v5605 = vpack.c.b16 %v5349, %v5349
      %v5606 = vpack.c.b16 %v5350, %v5350
      %v5607 = vpack.c.b16 %v5351, %v5351
      %v5608 = vpack.c.b16 %v5352, %v5352
      %v5609 = vpack.c.b16 %v5353, %v5353
      %v5610 = vpack.c.b16 %v5354, %v5354
      %v5611 = vpack.c.b16 %v5355, %v5355
      %v5612 = vpack.c.b16 %v5356, %v5356
      %v5613 = vpack.c.b16 %v5357, %v5357
      %v5614 = vpack.c.b16 %v5358, %v5358
      %v5615 = vpack.c.b16 %v5359, %v5359
      %v5616 = vpack.c.b16 %v5360, %v5360
      %v5617 = vpack.c.b16 %v5361, %v5361
      %v5618 = vpack.c.b16 %v5362, %v5362
      %v5619 = vpack.c.b16 %v5363, %v5363
      %v5620 = vpack.c.b16 %v5364, %v5364
      %v5621 = vpack.c.b16 %v5365, %v5365
      %v5622 = vpack.c.b16 %v5366, %v5366
      %v5623 = vpack.c.b16 %v5367, %v5367
      %v5624 = vpack.c.b16 %v5368, %v5368
      %v5625 = vpack.c.b16 %v5369, %v5369
      %v5626 = vpack.c.b16 %v5370, %v5370
      %v5627 = vpack.c.b16 %v5371, %v5371
      %v5628 = vpack.c.b16 %v5372, %v5372
      %v5629 = vpack.c.b16 %v5373, %v5373
      %v5630 = vpack.c.b16 %v5374, %v5374
      %v5631 = vpack.c.b16 %v5375, %v5375
      %v5632 = vpack.c.b16 %v5376, %v5376
      %v5633 = vpack.c.b16 %v5377, %v5377
      %v5634 = vpack.c.b16 %v5378, %v5378
      %v5635 = vpack.c.b16 %v5379, %v5379
      %v5636 = vpack.c.b16 %v5380, %v5380
      %v5637 = vpack.c.b16 %v5381, %v5381
      %v5638 = vpack.c.b16 %v5382, %v5382
      %v5639 = vpack.c.b16 %v5383, %v5383
      %v5640 = vpack.c.b16 %v5384, %v5384
      %v5641 = vpack.c.b16 %v5385, %v5385
      %v5642 = vpack.c.b16 %v5386, %v5386
      %v5643 = vpack.c.b16 %v5387, %v5387
      %v5644 = vpack.c.b16 %v5388, %v5388
      %v5645 = vpack.c.b16 %v5389, %v5389
      %v5646 = vpack.c.b16 %v5390, %v5390
      %v5647 = vpack.c.b16 %v5391, %v5391
      %v5648 = vpack.c.b16 %v5392, %v5392
      %v5649 = vpack.c.b16 %v5393, %v5393
      %v5650 = vpack.c.b16 %v5394, %v5394
      %v5651 = vpack.c.b16 %v5395, %v5395
      %v5652 = vpack.c.b16 %v5396, %v5396
      %v5653 = vpack.c.b16 %v5397, %v5397
      %v5654 = vpack.c.b16 %v5398, %v5398
      %v5655 = vpack.c.b16 %v5399, %v5399
      %v5656 = vpack.c.b16 %v5400, %v5400
      %v5657 = vpack.c.b16 %v5401, %v5401
      %v5658 = vpack.c.b16 %v5402, %v5402
      %v5659 = vpack.c.b16 %v5403, %v5403
      %v5660 = vpack.c.b16 %v5404, %v5404
      %v5661 = vpack.c.b16 %v5405, %v5405
      %v5662 = vpack.c.b16 %v5406, %v5406
      %v5663 = vpack.c.b16 %v5407, %v5407
      %v5664 = vpack.c.b16 %v5408, %v5408
      %v5665 = vpack.c.b16 %v5409, %v5409
      %v5666 = vpack.c.b16 %v5410, %v5410
      %v5667 = vpack.c.b16 %v5411, %v5411
      %v5668 = vpack.c.b16 %v5412, %v5412
      %v5669 = vpack.c.b16 %v5413, %v5413
      %v5670 = vpack.c.b16 %v5414, %v5414
      %v5671 = vpack.c.b16 %v5415, %v5415
      %v5672 = vpack.c.b16 %v5416, %v5416
      %v5673 = vpack.c.b16 %v5417, %v5417
      %v5674 = vpack.c.b16 %v5418, %v5418
      %v5675 = vpack.c.b16 %v5419, %v5419
      %v5676 = vpack.c.b16 %v5420, %v5420
      %v5677 = vpack.c.b16 %v5421, %v5421
      %v5678 = vpack.c.b16 %v5422, %v5422
      %v5679 = vpack.c.b16 %v5423, %v5423
      %v5680 = vpack.c.b16 %v5424, %v5424
      %v5681 = vpack.c.b16 %v5425, %v5425
      %v5682 = vpack.c.b16 %v5426, %v5426
      %v5683 = vpack.c.b16 %v5427, %v5427
      %v5684 = vpack.c.b16 %v5428, %v5428
      %v5685 = vpack.c.b16 %v5429, %v5429
      %v5686 = vpack.c.b16 %v5430, %v5430
      %v5687 = vpack.c.b16 %v5431, %v5431
      %v5688 = vpack.c.b16 %v5432, %v5432
      %v5689 = vpack.c.b16 %v5433, %v5433
      %v5690 = vpack.c.b16 %v5434, %v5434
      %v5691 = vpack.c.b16 %v5435, %v5435
      %v5692 = vpack.c.b16 %v5436, %v5436
      %v5693 = vpack.c.b16 %v5437, %v5437
      %v5694 = vpack.c.b16 %v5438, %v5438
      %v5695 = vpack.c.b16 %v5439, %v5439
      %v5696 = vpack.c.b16 %v5440, %v5440
      %v5697 = vpack.c.b16 %v5441, %v5441
      %v5698 = vpack.c.b16 %v5442, %v5442
      %v5699 = vpack.c.b16 %v5443, %v5443
      %v5700 = vpack.c.b16 %v5444, %v5444
      %v5701 = vpack.c.b16 %v5445, %v5445
      %v5702 = vpack.c.b16 %v5446, %v5446
      %v5703 = vpack.c.b16 %v5447, %v5447
      %v5704 = vpack.c.b16 %v5448, %v5448
      %v5705 = vpack.c.b16 %v5449, %v5449
      %v5706 = vpack.c.b16 %v5450, %v5450
      %v5707 = vpack.c.b16 %v5451, %v5451
      %v5708 = vpack.c.b16 %v5452, %v5452
      %v5709 = vpack.c.b16 %v5453, %v5453
      %v5710 = vpack.c.b16 %v5454, %v5454
      %v5711 = vpack.c.b16 %v5455, %v5455
      %v5712 = vpack.c.b16 %v5456, %v5456
      %v5713 = vpack.c.b16 %v5457, %v5457
      %v5714 = vpack.c.b16 %v5458, %v5458
      %v5715 = vpack.c.b16 %v5459, %v5459
      %v5716 = vpack.c.b16 %v5460, %v5460
      %v5717 = vpack.c.b16 %v5461, %v5461
      %v5718 = vpack.c.b16 %v5462, %v5462
      %v5719 = vpack.c.b16 %v5463, %v5463
      %v5720 = vpack.c.b16 %v5464, %v5464
      %v5721 = vpack.c.b16 %v5465, %v5465
      %v5722 = vpack.c.b16 %v5466, %v5466
      %v5723 = vpack.c.b16 %v5467, %v5467
      %v5724 = vpack.c.b16 %v5468, %v5468
      %v5725 = vpack.c.b16 %v5469, %v5469
      %v5726 = vpack.c.b16 %v5470, %v5470
      %v5727 = vpack.c.b16 %v5471, %v5471
      %v5728 = vpack.c.b16 %v5472, %v5472
      %v5729 = vpack.c.b16 %v5473, %v5473
      %v5730 = vpack.c.b16 %v5474, %v5474
      %v5731 = vpack.c.b16 %v5475, %v5475
      %v5732 = vpack.c.b16 %v5476, %v5476
      %v5733 = vpack.c.b16 %v5477, %v5477
      %v5734 = vpack.c.b16 %v5478, %v5478
      %v5735 = vpack.c.b16 %v5479, %v5479
      %v5736 = vpack.c.b16 %v5480, %v5480
      %v5737 = vpack.c.b16 %v5481, %v5481
      %v5738 = vpack.c.b16 %v5482, %v5482
      %v5739 = vpack.c.b16 %v5483, %v5483
      %v5740 = vpack.c.b16 %v5484, %v5484
      %v5741 = vpack.c.b16 %v5485, %v5485
      %v5742 = vpack.c.b16 %v5486, %v5486
      %v5743 = vpack.c.b16 %v5487, %v5487
      %v5744 = vpack.c.b16 %v5488, %v5488
      %v5745 = vpack.c.b16 %v5489, %v5489
      %v5746 = vpack.c.b16 %v5490, %v5490
      %v5747 = vpack.c.b16 %v5491, %v5491
      %v5748 = vpack.c.b16 %v5492, %v5492
      %v5749 = vpack.c.b16 %v5493, %v5493
      %v5750 = vpack.c.b16 %v5494, %v5494
      %v5751 = vpack.c.b16 %v5495, %v5495
      %v5752 = vpack.c.b16 %v5496, %v5496
      %v5753 = vpack.c.b16 %v5497, %v5497
      %v5754 = vpack.c.b16 %v5498, %v5498
      %v5755 = vpack.c.b16 %v5499, %v5499
      %v5756 = vpack.c.b16 %v5500, %v5500
      %v5757 = vpack.c.b16 %v5501, %v5501
      %v5758 = vpack.c.b16 %v5502, %v5502
      %v5759 = vpack.c.b16 %v5503, %v5503
      %v5760 = vpack.c.b16 %v5504, %v5504
      %v5761 = vpack.c.b16 %v5505, %v5505
      %v5762 = vpack.c.b16 %v5506, %v5506
      %v5763 = vpack.c.b16 %v5507, %v5507
      %v5764 = vpack.c.b16 %v5508, %v5508
      %v5765 = vpack.c.b16 %v5509, %v5509
      %v5766 = vpack.c.b16 %v5510, %v5510
      %v5767 = vpack.c.b16 %v5511, %v5511
      %v5768 = vpack.c.b16 %v5512, %v5512
      %v5769 = vpack.c.b16 %v5513, %v5513
      %v5770 = vpack.c.b16 %v5514, %v5514
      %v5771 = vpack.c.b16 %v5515, %v5515
      %v5772 = vpack.c.b16 %v5516, %v5516
      %v5773 = vpack.c.b16 %v5517, %v5517
      %v5774 = vpack.c.b16 %v5518, %v5518
      %v5775 = vpack.c.b16 %v5519, %v5519
      %v5776 = vpack.c.b16 %v5520, %v5520
      %v5777 = vpack.c.b16 %v5521, %v5521
      %v5778 = vpack.c.b16 %v5522, %v5522
      %v5779 = vpack.c.b16 %v5523, %v5523
      %v5780 = vpack.c.b16 %v5524, %v5524
      %v5781 = vpack.c.b16 %v5525, %v5525
      %v5782 = vpack.c.b16 %v5526, %v5526
      %v5783 = vpack.c.b16 %v5527, %v5527
      %v5784 = vpack.c.b16 %v5528, %v5528
      %v5785 = vpack.c.b16 %v5529, %v5529
      %v5786 = vpack.c.b16 %v5530, %v5530
      %v5787 = vpack.c.b16 %v5531, %v5531
      %v5788 = vpack.c.b16 %v5532, %v5532
      %v5789 = vpack.c.b16 %v5533, %v5533
      %v5790 = vpack.c.b16 %v5534, %v5534
      %v5791 = vpack.c.b16 %v5535, %v5535
      %vm6048 = vcmask 519168
      %6049 = vst.msk [vmem:[#allocation3] sm:$0xf] %vm6048, %v5536
      %6050 = vst.msk [vmem:[#allocation3 + $0x4] sm:$0xf] %vm6048, %v5537
      %6051 = vst.msk [vmem:[#allocation3 + $0x8] sm:$0xf] %vm6048, %v5538
      %6052 = vst.msk [vmem:[#allocation3 + $0xc] sm:$0xf] %vm6048, %v5539
      %6053 = vst.msk [vmem:[#allocation3 + $0x10] sm:$0xf] %vm6048, %v5540
      %6054 = vst.msk [vmem:[#allocation3 + $0x14] sm:$0xf] %vm6048, %v5541
      %6055 = vst.msk [vmem:[#allocation3 + $0x18] sm:$0xf] %vm6048, %v5542
      %6056 = vst.msk [vmem:[#allocation3 + $0x1c] sm:$0xf] %vm6048, %v5543
      %6057 = vst.msk [vmem:[#allocation3 + $0x20] sm:$0xf] %vm6048, %v5544
      %6058 = vst.msk [vmem:[#allocation3 + $0x24] sm:$0xf] %vm6048, %v5545
      %6059 = vst.msk [vmem:[#allocation3 + $0x28] sm:$0xf] %vm6048, %v5546
      %6060 = vst.msk [vmem:[#allocation3 + $0x2c] sm:$0xf] %vm6048, %v5547
      %6061 = vst.msk [vmem:[#allocation3 + $0x30] sm:$0xf] %vm6048, %v5548
      %6062 = vst.msk [vmem:[#allocation3 + $0x34] sm:$0xf] %vm6048, %v5549
      %6063 = vst.msk [vmem:[#allocation3 + $0x38] sm:$0xf] %vm6048, %v5550
      %6064 = vst.msk [vmem:[#allocation3 + $0x3c] sm:$0xf] %vm6048, %v5551
      %6065 = vst.msk [vmem:[#allocation3 + $0x40] sm:$0xf] %vm6048, %v5552
      %6066 = vst.msk [vmem:[#allocation3 + $0x44] sm:$0xf] %vm6048, %v5553
      %6067 = vst.msk [vmem:[#allocation3 + $0x48] sm:$0xf] %vm6048, %v5554
      %6068 = vst.msk [vmem:[#allocation3 + $0x4c] sm:$0xf] %vm6048, %v5555
      %6069 = vst.msk [vmem:[#allocation3 + $0x50] sm:$0xf] %vm6048, %v5556
      %6070 = vst.msk [vmem:[#allocation3 + $0x54] sm:$0xf] %vm6048, %v5557
      %6071 = vst.msk [vmem:[#allocation3 + $0x58] sm:$0xf] %vm6048, %v5558
      %6072 = vst.msk [vmem:[#allocation3 + $0x5c] sm:$0xf] %vm6048, %v5559
      %6073 = vst.msk [vmem:[#allocation3 + $0x60] sm:$0xf] %vm6048, %v5560
      %6074 = vst.msk [vmem:[#allocation3 + $0x64] sm:$0xf] %vm6048, %v5561
      %6075 = vst.msk [vmem:[#allocation3 + $0x68] sm:$0xf] %vm6048, %v5562
      %6076 = vst.msk [vmem:[#allocation3 + $0x6c] sm:$0xf] %vm6048, %v5563
      %6077 = vst.msk [vmem:[#allocation3 + $0x70] sm:$0xf] %vm6048, %v5564
      %6078 = vst.msk [vmem:[#allocation3 + $0x74] sm:$0xf] %vm6048, %v5565
      %6079 = vst.msk [vmem:[#allocation3 + $0x78] sm:$0xf] %vm6048, %v5566
      %6080 = vst.msk [vmem:[#allocation3 + $0x7c] sm:$0xf] %vm6048, %v5567
      %6081 = vst.msk [vmem:[#allocation3 + $0x80] sm:$0xf] %vm6048, %v5568
      %6082 = vst.msk [vmem:[#allocation3 + $0x84] sm:$0xf] %vm6048, %v5569
      %6083 = vst.msk [vmem:[#allocation3 + $0x88] sm:$0xf] %vm6048, %v5570
      %6084 = vst.msk [vmem:[#allocation3 + $0x8c] sm:$0xf] %vm6048, %v5571
      %6085 = vst.msk [vmem:[#allocation3 + $0x90] sm:$0xf] %vm6048, %v5572
      %6086 = vst.msk [vmem:[#allocation3 + $0x94] sm:$0xf] %vm6048, %v5573
      %6087 = vst.msk [vmem:[#allocation3 + $0x98] sm:$0xf] %vm6048, %v5574
      %6088 = vst.msk [vmem:[#allocation3 + $0x9c] sm:$0xf] %vm6048, %v5575
      %6089 = vst.msk [vmem:[#allocation3 + $0xa0] sm:$0xf] %vm6048, %v5576
      %6090 = vst.msk [vmem:[#allocation3 + $0xa4] sm:$0xf] %vm6048, %v5577
      %6091 = vst.msk [vmem:[#allocation3 + $0xa8] sm:$0xf] %vm6048, %v5578
      %6092 = vst.msk [vmem:[#allocation3 + $0xac] sm:$0xf] %vm6048, %v5579
      %6093 = vst.msk [vmem:[#allocation3 + $0xb0] sm:$0xf] %vm6048, %v5580
      %6094 = vst.msk [vmem:[#allocation3 + $0xb4] sm:$0xf] %vm6048, %v5581
      %6095 = vst.msk [vmem:[#allocation3 + $0xb8] sm:$0xf] %vm6048, %v5582
      %6096 = vst.msk [vmem:[#allocation3 + $0xbc] sm:$0xf] %vm6048, %v5583
      %6097 = vst.msk [vmem:[#allocation3 + $0xc0] sm:$0xf] %vm6048, %v5584
      %6098 = vst.msk [vmem:[#allocation3 + $0xc4] sm:$0xf] %vm6048, %v5585
      %6099 = vst.msk [vmem:[#allocation3 + $0xc8] sm:$0xf] %vm6048, %v5586
      %6100 = vst.msk [vmem:[#allocation3 + $0xcc] sm:$0xf] %vm6048, %v5587
      %6101 = vst.msk [vmem:[#allocation3 + $0xd0] sm:$0xf] %vm6048, %v5588
      %6102 = vst.msk [vmem:[#allocation3 + $0xd4] sm:$0xf] %vm6048, %v5589
      %6103 = vst.msk [vmem:[#allocation3 + $0xd8] sm:$0xf] %vm6048, %v5590
      %6104 = vst.msk [vmem:[#allocation3 + $0xdc] sm:$0xf] %vm6048, %v5591
      %6105 = vst.msk [vmem:[#allocation3 + $0xe0] sm:$0xf] %vm6048, %v5592
      %6106 = vst.msk [vmem:[#allocation3 + $0xe4] sm:$0xf] %vm6048, %v5593
      %6107 = vst.msk [vmem:[#allocation3 + $0xe8] sm:$0xf] %vm6048, %v5594
      %6108 = vst.msk [vmem:[#allocation3 + $0xec] sm:$0xf] %vm6048, %v5595
      %6109 = vst.msk [vmem:[#allocation3 + $0xf0] sm:$0xf] %vm6048, %v5596
      %6110 = vst.msk [vmem:[#allocation3 + $0xf4] sm:$0xf] %vm6048, %v5597
      %6111 = vst.msk [vmem:[#allocation3 + $0xf8] sm:$0xf] %vm6048, %v5598
      %6112 = vst.msk [vmem:[#allocation3 + $0xfc] sm:$0xf] %vm6048, %v5599
      %6113 = vst.msk [vmem:[#allocation3 + $0x100] sm:$0xf] %vm6048, %v5600
      %6114 = vst.msk [vmem:[#allocation3 + $0x104] sm:$0xf] %vm6048, %v5601
      %6115 = vst.msk [vmem:[#allocation3 + $0x108] sm:$0xf] %vm6048, %v5602
      %6116 = vst.msk [vmem:[#allocation3 + $0x10c] sm:$0xf] %vm6048, %v5603
      %6117 = vst.msk [vmem:[#allocation3 + $0x110] sm:$0xf] %vm6048, %v5604
      %6118 = vst.msk [vmem:[#allocation3 + $0x114] sm:$0xf] %vm6048, %v5605
      %6119 = vst.msk [vmem:[#allocation3 + $0x118] sm:$0xf] %vm6048, %v5606
      %6120 = vst.msk [vmem:[#allocation3 + $0x11c] sm:$0xf] %vm6048, %v5607
      %6121 = vst.msk [vmem:[#allocation3 + $0x120] sm:$0xf] %vm6048, %v5608
      %6122 = vst.msk [vmem:[#allocation3 + $0x124] sm:$0xf] %vm6048, %v5609
      %6123 = vst.msk [vmem:[#allocation3 + $0x128] sm:$0xf] %vm6048, %v5610
      %6124 = vst.msk [vmem:[#allocation3 + $0x12c] sm:$0xf] %vm6048, %v5611
      %6125 = vst.msk [vmem:[#allocation3 + $0x130] sm:$0xf] %vm6048, %v5612
      %6126 = vst.msk [vmem:[#allocation3 + $0x134] sm:$0xf] %vm6048, %v5613
      %6127 = vst.msk [vmem:[#allocation3 + $0x138] sm:$0xf] %vm6048, %v5614
      %6128 = vst.msk [vmem:[#allocation3 + $0x13c] sm:$0xf] %vm6048, %v5615
      %6129 = vst.msk [vmem:[#allocation3 + $0x140] sm:$0xf] %vm6048, %v5616
      %6130 = vst.msk [vmem:[#allocation3 + $0x144] sm:$0xf] %vm6048, %v5617
      %6131 = vst.msk [vmem:[#allocation3 + $0x148] sm:$0xf] %vm6048, %v5618
      %6132 = vst.msk [vmem:[#allocation3 + $0x14c] sm:$0xf] %vm6048, %v5619
      %6133 = vst.msk [vmem:[#allocation3 + $0x150] sm:$0xf] %vm6048, %v5620
      %6134 = vst.msk [vmem:[#allocation3 + $0x154] sm:$0xf] %vm6048, %v5621
      %6135 = vst.msk [vmem:[#allocation3 + $0x158] sm:$0xf] %vm6048, %v5622
      %6136 = vst.msk [vmem:[#allocation3 + $0x15c] sm:$0xf] %vm6048, %v5623
      %6137 = vst.msk [vmem:[#allocation3 + $0x160] sm:$0xf] %vm6048, %v5624
      %6138 = vst.msk [vmem:[#allocation3 + $0x164] sm:$0xf] %vm6048, %v5625
      %6139 = vst.msk [vmem:[#allocation3 + $0x168] sm:$0xf] %vm6048, %v5626
      %6140 = vst.msk [vmem:[#allocation3 + $0x16c] sm:$0xf] %vm6048, %v5627
      %6141 = vst.msk [vmem:[#allocation3 + $0x170] sm:$0xf] %vm6048, %v5628
      %6142 = vst.msk [vmem:[#allocation3 + $0x174] sm:$0xf] %vm6048, %v5629
      %6143 = vst.msk [vmem:[#allocation3 + $0x178] sm:$0xf] %vm6048, %v5630
      %6144 = vst.msk [vmem:[#allocation3 + $0x17c] sm:$0xf] %vm6048, %v5631
      %6145 = vst.msk [vmem:[#allocation3 + $0x180] sm:$0xf] %vm6048, %v5632
      %6146 = vst.msk [vmem:[#allocation3 + $0x184] sm:$0xf] %vm6048, %v5633
      %6147 = vst.msk [vmem:[#allocation3 + $0x188] sm:$0xf] %vm6048, %v5634
      %6148 = vst.msk [vmem:[#allocation3 + $0x18c] sm:$0xf] %vm6048, %v5635
      %6149 = vst.msk [vmem:[#allocation3 + $0x190] sm:$0xf] %vm6048, %v5636
      %6150 = vst.msk [vmem:[#allocation3 + $0x194] sm:$0xf] %vm6048, %v5637
      %6151 = vst.msk [vmem:[#allocation3 + $0x198] sm:$0xf] %vm6048, %v5638
      %6152 = vst.msk [vmem:[#allocation3 + $0x19c] sm:$0xf] %vm6048, %v5639
      %6153 = vst.msk [vmem:[#allocation3 + $0x1a0] sm:$0xf] %vm6048, %v5640
      %6154 = vst.msk [vmem:[#allocation3 + $0x1a4] sm:$0xf] %vm6048, %v5641
      %6155 = vst.msk [vmem:[#allocation3 + $0x1a8] sm:$0xf] %vm6048, %v5642
      %6156 = vst.msk [vmem:[#allocation3 + $0x1ac] sm:$0xf] %vm6048, %v5643
      %6157 = vst.msk [vmem:[#allocation3 + $0x1b0] sm:$0xf] %vm6048, %v5644
      %6158 = vst.msk [vmem:[#allocation3 + $0x1b4] sm:$0xf] %vm6048, %v5645
      %6159 = vst.msk [vmem:[#allocation3 + $0x1b8] sm:$0xf] %vm6048, %v5646
      %6160 = vst.msk [vmem:[#allocation3 + $0x1bc] sm:$0xf] %vm6048, %v5647
      %6161 = vst.msk [vmem:[#allocation3 + $0x1c0] sm:$0xf] %vm6048, %v5648
      %6162 = vst.msk [vmem:[#allocation3 + $0x1c4] sm:$0xf] %vm6048, %v5649
      %6163 = vst.msk [vmem:[#allocation3 + $0x1c8] sm:$0xf] %vm6048, %v5650
      %6164 = vst.msk [vmem:[#allocation3 + $0x1cc] sm:$0xf] %vm6048, %v5651
      %6165 = vst.msk [vmem:[#allocation3 + $0x1d0] sm:$0xf] %vm6048, %v5652
      %6166 = vst.msk [vmem:[#allocation3 + $0x1d4] sm:$0xf] %vm6048, %v5653
      %6167 = vst.msk [vmem:[#allocation3 + $0x1d8] sm:$0xf] %vm6048, %v5654
      %6168 = vst.msk [vmem:[#allocation3 + $0x1dc] sm:$0xf] %vm6048, %v5655
      %6169 = vst.msk [vmem:[#allocation3 + $0x1e0] sm:$0xf] %vm6048, %v5656
      %6170 = vst.msk [vmem:[#allocation3 + $0x1e4] sm:$0xf] %vm6048, %v5657
      %6171 = vst.msk [vmem:[#allocation3 + $0x1e8] sm:$0xf] %vm6048, %v5658
      %6172 = vst.msk [vmem:[#allocation3 + $0x1ec] sm:$0xf] %vm6048, %v5659
      %6173 = vst.msk [vmem:[#allocation3 + $0x1f0] sm:$0xf] %vm6048, %v5660
      %6174 = vst.msk [vmem:[#allocation3 + $0x1f4] sm:$0xf] %vm6048, %v5661
      %6175 = vst.msk [vmem:[#allocation3 + $0x1f8] sm:$0xf] %vm6048, %v5662
      %6176 = vst.msk [vmem:[#allocation3 + $0x1fc] sm:$0xf] %vm6048, %v5663
      %6177 = vst.msk [vmem:[#allocation3 + $0x200] sm:$0xf] %vm6048, %v5664
      %6178 = vst.msk [vmem:[#allocation3 + $0x204] sm:$0xf] %vm6048, %v5665
      %6179 = vst.msk [vmem:[#allocation3 + $0x208] sm:$0xf] %vm6048, %v5666
      %6180 = vst.msk [vmem:[#allocation3 + $0x20c] sm:$0xf] %vm6048, %v5667
      %6181 = vst.msk [vmem:[#allocation3 + $0x210] sm:$0xf] %vm6048, %v5668
      %6182 = vst.msk [vmem:[#allocation3 + $0x214] sm:$0xf] %vm6048, %v5669
      %6183 = vst.msk [vmem:[#allocation3 + $0x218] sm:$0xf] %vm6048, %v5670
      %6184 = vst.msk [vmem:[#allocation3 + $0x21c] sm:$0xf] %vm6048, %v5671
      %6185 = vst.msk [vmem:[#allocation3 + $0x220] sm:$0xf] %vm6048, %v5672
      %6186 = vst.msk [vmem:[#allocation3 + $0x224] sm:$0xf] %vm6048, %v5673
      %6187 = vst.msk [vmem:[#allocation3 + $0x228] sm:$0xf] %vm6048, %v5674
      %6188 = vst.msk [vmem:[#allocation3 + $0x22c] sm:$0xf] %vm6048, %v5675
      %6189 = vst.msk [vmem:[#allocation3 + $0x230] sm:$0xf] %vm6048, %v5676
      %6190 = vst.msk [vmem:[#allocation3 + $0x234] sm:$0xf] %vm6048, %v5677
      %6191 = vst.msk [vmem:[#allocation3 + $0x238] sm:$0xf] %vm6048, %v5678
      %6192 = vst.msk [vmem:[#allocation3 + $0x23c] sm:$0xf] %vm6048, %v5679
      %6193 = vst.msk [vmem:[#allocation3 + $0x240] sm:$0xf] %vm6048, %v5680
      %6194 = vst.msk [vmem:[#allocation3 + $0x244] sm:$0xf] %vm6048, %v5681
      %6195 = vst.msk [vmem:[#allocation3 + $0x248] sm:$0xf] %vm6048, %v5682
      %6196 = vst.msk [vmem:[#allocation3 + $0x24c] sm:$0xf] %vm6048, %v5683
      %6197 = vst.msk [vmem:[#allocation3 + $0x250] sm:$0xf] %vm6048, %v5684
      %6198 = vst.msk [vmem:[#allocation3 + $0x254] sm:$0xf] %vm6048, %v5685
      %6199 = vst.msk [vmem:[#allocation3 + $0x258] sm:$0xf] %vm6048, %v5686
      %6200 = vst.msk [vmem:[#allocation3 + $0x25c] sm:$0xf] %vm6048, %v5687
      %6201 = vst.msk [vmem:[#allocation3 + $0x260] sm:$0xf] %vm6048, %v5688
      %6202 = vst.msk [vmem:[#allocation3 + $0x264] sm:$0xf] %vm6048, %v5689
      %6203 = vst.msk [vmem:[#allocation3 + $0x268] sm:$0xf] %vm6048, %v5690
      %6204 = vst.msk [vmem:[#allocation3 + $0x26c] sm:$0xf] %vm6048, %v5691
      %6205 = vst.msk [vmem:[#allocation3 + $0x270] sm:$0xf] %vm6048, %v5692
      %6206 = vst.msk [vmem:[#allocation3 + $0x274] sm:$0xf] %vm6048, %v5693
      %6207 = vst.msk [vmem:[#allocation3 + $0x278] sm:$0xf] %vm6048, %v5694
      %6208 = vst.msk [vmem:[#allocation3 + $0x27c] sm:$0xf] %vm6048, %v5695
      %6209 = vst.msk [vmem:[#allocation3 + $0x280] sm:$0xf] %vm6048, %v5696
      %6210 = vst.msk [vmem:[#allocation3 + $0x284] sm:$0xf] %vm6048, %v5697
      %6211 = vst.msk [vmem:[#allocation3 + $0x288] sm:$0xf] %vm6048, %v5698
      %6212 = vst.msk [vmem:[#allocation3 + $0x28c] sm:$0xf] %vm6048, %v5699
      %6213 = vst.msk [vmem:[#allocation3 + $0x290] sm:$0xf] %vm6048, %v5700
      %6214 = vst.msk [vmem:[#allocation3 + $0x294] sm:$0xf] %vm6048, %v5701
      %6215 = vst.msk [vmem:[#allocation3 + $0x298] sm:$0xf] %vm6048, %v5702
      %6216 = vst.msk [vmem:[#allocation3 + $0x29c] sm:$0xf] %vm6048, %v5703
      %6217 = vst.msk [vmem:[#allocation3 + $0x2a0] sm:$0xf] %vm6048, %v5704
      %6218 = vst.msk [vmem:[#allocation3 + $0x2a4] sm:$0xf] %vm6048, %v5705
      %6219 = vst.msk [vmem:[#allocation3 + $0x2a8] sm:$0xf] %vm6048, %v5706
      %6220 = vst.msk [vmem:[#allocation3 + $0x2ac] sm:$0xf] %vm6048, %v5707
      %6221 = vst.msk [vmem:[#allocation3 + $0x2b0] sm:$0xf] %vm6048, %v5708
      %6222 = vst.msk [vmem:[#allocation3 + $0x2b4] sm:$0xf] %vm6048, %v5709
      %6223 = vst.msk [vmem:[#allocation3 + $0x2b8] sm:$0xf] %vm6048, %v5710
      %6224 = vst.msk [vmem:[#allocation3 + $0x2bc] sm:$0xf] %vm6048, %v5711
      %6225 = vst.msk [vmem:[#allocation3 + $0x2c0] sm:$0xf] %vm6048, %v5712
      %6226 = vst.msk [vmem:[#allocation3 + $0x2c4] sm:$0xf] %vm6048, %v5713
      %6227 = vst.msk [vmem:[#allocation3 + $0x2c8] sm:$0xf] %vm6048, %v5714
      %6228 = vst.msk [vmem:[#allocation3 + $0x2cc] sm:$0xf] %vm6048, %v5715
      %6229 = vst.msk [vmem:[#allocation3 + $0x2d0] sm:$0xf] %vm6048, %v5716
      %6230 = vst.msk [vmem:[#allocation3 + $0x2d4] sm:$0xf] %vm6048, %v5717
      %6231 = vst.msk [vmem:[#allocation3 + $0x2d8] sm:$0xf] %vm6048, %v5718
      %6232 = vst.msk [vmem:[#allocation3 + $0x2dc] sm:$0xf] %vm6048, %v5719
      %6233 = vst.msk [vmem:[#allocation3 + $0x2e0] sm:$0xf] %vm6048, %v5720
      %6234 = vst.msk [vmem:[#allocation3 + $0x2e4] sm:$0xf] %vm6048, %v5721
      %6235 = vst.msk [vmem:[#allocation3 + $0x2e8] sm:$0xf] %vm6048, %v5722
      %6236 = vst.msk [vmem:[#allocation3 + $0x2ec] sm:$0xf] %vm6048, %v5723
      %6237 = vst.msk [vmem:[#allocation3 + $0x2f0] sm:$0xf] %vm6048, %v5724
      %6238 = vst.msk [vmem:[#allocation3 + $0x2f4] sm:$0xf] %vm6048, %v5725
      %6239 = vst.msk [vmem:[#allocation3 + $0x2f8] sm:$0xf] %vm6048, %v5726
      %6240 = vst.msk [vmem:[#allocation3 + $0x2fc] sm:$0xf] %vm6048, %v5727
      %6241 = vst.msk [vmem:[#allocation3 + $0x300] sm:$0xf] %vm6048, %v5728
      %6242 = vst.msk [vmem:[#allocation3 + $0x304] sm:$0xf] %vm6048, %v5729
      %6243 = vst.msk [vmem:[#allocation3 + $0x308] sm:$0xf] %vm6048, %v5730
      %6244 = vst.msk [vmem:[#allocation3 + $0x30c] sm:$0xf] %vm6048, %v5731
      %6245 = vst.msk [vmem:[#allocation3 + $0x310] sm:$0xf] %vm6048, %v5732
      %6246 = vst.msk [vmem:[#allocation3 + $0x314] sm:$0xf] %vm6048, %v5733
      %6247 = vst.msk [vmem:[#allocation3 + $0x318] sm:$0xf] %vm6048, %v5734
      %6248 = vst.msk [vmem:[#allocation3 + $0x31c] sm:$0xf] %vm6048, %v5735
      %6249 = vst.msk [vmem:[#allocation3 + $0x320] sm:$0xf] %vm6048, %v5736
      %6250 = vst.msk [vmem:[#allocation3 + $0x324] sm:$0xf] %vm6048, %v5737
      %6251 = vst.msk [vmem:[#allocation3 + $0x328] sm:$0xf] %vm6048, %v5738
      %6252 = vst.msk [vmem:[#allocation3 + $0x32c] sm:$0xf] %vm6048, %v5739
      %6253 = vst.msk [vmem:[#allocation3 + $0x330] sm:$0xf] %vm6048, %v5740
      %6254 = vst.msk [vmem:[#allocation3 + $0x334] sm:$0xf] %vm6048, %v5741
      %6255 = vst.msk [vmem:[#allocation3 + $0x338] sm:$0xf] %vm6048, %v5742
      %6256 = vst.msk [vmem:[#allocation3 + $0x33c] sm:$0xf] %vm6048, %v5743
      %6257 = vst.msk [vmem:[#allocation3 + $0x340] sm:$0xf] %vm6048, %v5744
      %6258 = vst.msk [vmem:[#allocation3 + $0x344] sm:$0xf] %vm6048, %v5745
      %6259 = vst.msk [vmem:[#allocation3 + $0x348] sm:$0xf] %vm6048, %v5746
      %6260 = vst.msk [vmem:[#allocation3 + $0x34c] sm:$0xf] %vm6048, %v5747
      %6261 = vst.msk [vmem:[#allocation3 + $0x350] sm:$0xf] %vm6048, %v5748
      %6262 = vst.msk [vmem:[#allocation3 + $0x354] sm:$0xf] %vm6048, %v5749
      %6263 = vst.msk [vmem:[#allocation3 + $0x358] sm:$0xf] %vm6048, %v5750
      %6264 = vst.msk [vmem:[#allocation3 + $0x35c] sm:$0xf] %vm6048, %v5751
      %6265 = vst.msk [vmem:[#allocation3 + $0x360] sm:$0xf] %vm6048, %v5752
      %6266 = vst.msk [vmem:[#allocation3 + $0x364] sm:$0xf] %vm6048, %v5753
      %6267 = vst.msk [vmem:[#allocation3 + $0x368] sm:$0xf] %vm6048, %v5754
      %6268 = vst.msk [vmem:[#allocation3 + $0x36c] sm:$0xf] %vm6048, %v5755
      %6269 = vst.msk [vmem:[#allocation3 + $0x370] sm:$0xf] %vm6048, %v5756
      %6270 = vst.msk [vmem:[#allocation3 + $0x374] sm:$0xf] %vm6048, %v5757
      %6271 = vst.msk [vmem:[#allocation3 + $0x378] sm:$0xf] %vm6048, %v5758
      %6272 = vst.msk [vmem:[#allocation3 + $0x37c] sm:$0xf] %vm6048, %v5759
      %6273 = vst.msk [vmem:[#allocation3 + $0x380] sm:$0xf] %vm6048, %v5760
      %6274 = vst.msk [vmem:[#allocation3 + $0x384] sm:$0xf] %vm6048, %v5761
      %6275 = vst.msk [vmem:[#allocation3 + $0x388] sm:$0xf] %vm6048, %v5762
      %6276 = vst.msk [vmem:[#allocation3 + $0x38c] sm:$0xf] %vm6048, %v5763
      %6277 = vst.msk [vmem:[#allocation3 + $0x390] sm:$0xf] %vm6048, %v5764
      %6278 = vst.msk [vmem:[#allocation3 + $0x394] sm:$0xf] %vm6048, %v5765
      %6279 = vst.msk [vmem:[#allocation3 + $0x398] sm:$0xf] %vm6048, %v5766
      %6280 = vst.msk [vmem:[#allocation3 + $0x39c] sm:$0xf] %vm6048, %v5767
      %6281 = vst.msk [vmem:[#allocation3 + $0x3a0] sm:$0xf] %vm6048, %v5768
      %6282 = vst.msk [vmem:[#allocation3 + $0x3a4] sm:$0xf] %vm6048, %v5769
      %6283 = vst.msk [vmem:[#allocation3 + $0x3a8] sm:$0xf] %vm6048, %v5770
      %6284 = vst.msk [vmem:[#allocation3 + $0x3ac] sm:$0xf] %vm6048, %v5771
      %6285 = vst.msk [vmem:[#allocation3 + $0x3b0] sm:$0xf] %vm6048, %v5772
      %6286 = vst.msk [vmem:[#allocation3 + $0x3b4] sm:$0xf] %vm6048, %v5773
      %6287 = vst.msk [vmem:[#allocation3 + $0x3b8] sm:$0xf] %vm6048, %v5774
      %6288 = vst.msk [vmem:[#allocation3 + $0x3bc] sm:$0xf] %vm6048, %v5775
      %6289 = vst.msk [vmem:[#allocation3 + $0x3c0] sm:$0xf] %vm6048, %v5776
      %6290 = vst.msk [vmem:[#allocation3 + $0x3c4] sm:$0xf] %vm6048, %v5777
      %6291 = vst.msk [vmem:[#allocation3 + $0x3c8] sm:$0xf] %vm6048, %v5778
      %6292 = vst.msk [vmem:[#allocation3 + $0x3cc] sm:$0xf] %vm6048, %v5779
      %6293 = vst.msk [vmem:[#allocation3 + $0x3d0] sm:$0xf] %vm6048, %v5780
      %6294 = vst.msk [vmem:[#allocation3 + $0x3d4] sm:$0xf] %vm6048, %v5781
      %6295 = vst.msk [vmem:[#allocation3 + $0x3d8] sm:$0xf] %vm6048, %v5782
      %6296 = vst.msk [vmem:[#allocation3 + $0x3dc] sm:$0xf] %vm6048, %v5783
      %6297 = vst.msk [vmem:[#allocation3 + $0x3e0] sm:$0xf] %vm6048, %v5784
      %6298 = vst.msk [vmem:[#allocation3 + $0x3e4] sm:$0xf] %vm6048, %v5785
      %6299 = vst.msk [vmem:[#allocation3 + $0x3e8] sm:$0xf] %vm6048, %v5786
      %6300 = vst.msk [vmem:[#allocation3 + $0x3ec] sm:$0xf] %vm6048, %v5787
      %6301 = vst.msk [vmem:[#allocation3 + $0x3f0] sm:$0xf] %vm6048, %v5788
      %6302 = vst.msk [vmem:[#allocation3 + $0x3f4] sm:$0xf] %vm6048, %v5789
      %6303 = vst.msk [vmem:[#allocation3 + $0x3f8] sm:$0xf] %vm6048, %v5790
      %6304 = vst.msk [vmem:[#allocation3 + $0x3fc] sm:$0xf] %vm6048, %v5791
    $region25: #{conv_bn.1} parent=1 // pred_fallthru
      _
    // Predicated region
    $region26: #{conv_bn.1} parent=1 // pred_check
      _
    $region27: #{conv_bn.1} parent=1 // pred_check_branch
      %6306 = sbr.rel (0) target = $region29
    $region28: #{conv_bn.1} parent=1 // pred_region
      %s6308 = ssub.s32 16384, 16384
      %6309 = vsyncadd [#allocation4], %s6308
      %s6310 = sshll.u32 [#allocation3], 4
      %s6311 = int_to_ptr.vmem [resolvable:$true] %s6310
      %6316 = dma.vmem_to_hbm [thread:$0]  %s6311, 16384, %s4, [#allocation4], 64, 64, 4
    $region29: #{conv_bn.1} parent=1 // pred_fallthru
      _
    // Predicated region
    $region30: #{conv_bn.1} parent=1 // pred_check
      _
    $region31: #{conv_bn.1} parent=1 // pred_check_branch
      %6318 = sbr.rel (0) target = $region33
    $region32: #{conv_bn.1} parent=1 // pred_region
      %6319 = dma.done [#allocation4], 16384
    $region33: #{conv_bn.1} parent=1 // pred_fallthru
      _
    %6320 = vsyncpa [#allocation4], 1

</llo_original>
